<compile_context>
chip_gen: v7x
topology: tpu7x:2x2x1
jax: 0.10.0
libtpu: 0.0.40
codegen_flags: <defaults>
</compile_context>

<pallas_src>
import jax
import jax.numpy as jnp
from jax.experimental import pallas as pl
from jax.experimental.pallas import tpu as pltpu


# ----------------------------------------------------------------------------
# Fused 3-layer conv kernel (one batch chunk per grid step)
# ----------------------------------------------------------------------------
def _make_fused_kernel(bn, H, W, chans):
    """chans = (c0, c1, c2, c3): channel counts through the 3 conv layers."""
    c0, c1, c2, c3 = chans
    Wp = W + 2
    Lp = bn * Wp  # lanes used by one packed batch chunk

    def _conv_layer(xwide, w_ref, b_ref, cin, cout):
        # xwide: list of cin planes, each (H+2, Lp+2), zero-ringed per image.
        # Returns cout accumulators of shape (H, Lp) (valid at interior lanes).
        accs = [jnp.full((H, Lp), b_ref[co], dtype=jnp.float32)
                for co in range(cout)]
        for ci in range(cin):
            xw = xwide[ci]
            # 3 lane-shifted views (hoisted out of the co loop), then the 9
            # row-band taps -- each materialized exactly once per ci.
            shifted = [xw[:, kw:kw + Lp] for kw in range(3)]
            taps = [[shifted[kw][kh:kh + H, :] for kw in range(3)]
                    for kh in range(3)]
            for co in range(cout):
                base = (co * cin + ci) * 9
                acc = accs[co]
                for kh in range(3):
                    for kw in range(3):
                        acc = acc + w_ref[base + kh * 3 + kw] * taps[kh][kw]
                accs[co] = acc
        return accs

    def kernel(x_ref, w1_ref, b1_ref, w2_ref, b2_ref, w3_ref, b3_ref, o_ref):
        # x_ref : VMEM (bn, c0, H, W)   one batch chunk
        # w*_ref: SMEM flattened OIHW weights;  b*_ref: SMEM biases
        # o_ref : VMEM (1, H, Lp)       packed padded-layout output slab
        f32 = jnp.float32
        zc = jnp.zeros((H, 1), f32)

        # interior-lane mask: 1 at real pixels, 0 at each image's pad columns
        mask = jnp.concatenate(
            [zc, jnp.ones((H, W), f32), zc] * bn, axis=1)          # (H, Lp)

        def widen(rows):
            # rows: (H, Lp) with per-image pad columns already zero
            # -> (H+2, Lp+2): extra zero column each side + zero top/bottom row
            r = jnp.concatenate([zc, rows, zc], axis=1)            # (H, Lp+2)
            zr = jnp.zeros((1, Lp + 2), f32)
            return jnp.concatenate([zr, r, zr], axis=0)            # (H+2, Lp+2)

        # ---- layer-0 input: pack bn images side by side on the lane axis ----
        x0 = []
        for ci in range(c0):
            pieces = []
            for n in range(bn):
                pieces += [zc, x_ref[n, ci].astype(f32), zc]
            x0.append(widen(jnp.concatenate(pieces, axis=1)))

        # ---- conv1 -> conv2 -> out; activations stay on-chip ----
        a1 = _conv_layer(x0, w1_ref, b1_ref, c0, c1)
        x1 = [widen(a * mask) for a in a1]
        a2 = _conv_layer(x1, w2_ref, b2_ref, c1, c2)
        x2 = [widen(a * mask) for a in a2]
        a3 = _conv_layer(x2, w3_ref, b3_ref, c2, c3)               # c3 == 1

        o_ref[0, :, :] = a3[0].astype(o_ref.dtype)

    return kernel


def _alinet_pallas(x, w1, b1, w2, b2, w3, b3, bn):
    N, c0, H, W = x.shape
    Wp = W + 2
    G = -(-N // bn)                 # number of batch chunks (grid steps)
    Npad = G * bn
    if Npad != N:                   # pad batch up to a multiple of bn
        x = jnp.pad(x, ((0, Npad - N), (0, 0), (0, 0), (0, 0)))
    Lp = bn * Wp

    chans = (c0, w1.shape[0], w2.shape[0], w3.shape[0])
    kernel = _make_fused_kernel(bn, H, W, chans)

    def flat(a):
        return a.astype(jnp.float32).reshape(-1)

    out = pl.pallas_call(
        kernel,
        out_shape=jax.ShapeDtypeStruct((G, H, Lp), jnp.float32),
        grid_spec=pltpu.PrefetchScalarGridSpec(
            num_scalar_prefetch=0,
            grid=(G,),
            in_specs=[
                pl.BlockSpec((bn, c0, H, W), lambda g: (g, 0, 0, 0)),
                pl.BlockSpec(memory_space=pltpu.SMEM),   # w1
                pl.BlockSpec(memory_space=pltpu.SMEM),   # b1
                pl.BlockSpec(memory_space=pltpu.SMEM),   # w2
                pl.BlockSpec(memory_space=pltpu.SMEM),   # b2
                pl.BlockSpec(memory_space=pltpu.SMEM),   # w3
                pl.BlockSpec(memory_space=pltpu.SMEM),   # b3
            ],
            out_specs=pl.BlockSpec((1, H, Lp), lambda g: (g, 0, 0)),
        ),
        compiler_params=pltpu.CompilerParams(
            dimension_semantics=("parallel",)),
    )(x.astype(jnp.float32), flat(w1), flat(b1), flat(w2), flat(b2),
      flat(w3), flat(b3))

    # Unpack the lane-packed padded slab back to NCHW (cheap layout plumbing).
    y = out.reshape(G, H, bn, Wp).transpose(0, 2, 1, 3)   # (G, bn, H, Wp)
    y = y.reshape(Npad, 1, H, Wp)[:N, :, :, 1:W + 1]      # (N, 1, H, W)
    return y


@jax.jit
def alinet_forward(params, x):
    N, _, H, W = x.shape
    # Pack as many images per grid step as fit in one 128-lane tile; with
    # larger N the grid still has multiple chunks for v7x megacore sharding.
    bn = max(1, min(N, 126 // (W + 2)))
    return _alinet_pallas(x, params["w1"], params["b1"], params["w2"],
                          params["b2"], params["w3"], params["b3"], bn)


# ----------------------------------------------------------------------------
# Parameter init (matches PyTorch default Conv2d init range) + JAX reference
# ----------------------------------------------------------------------------
def init_alinet_params(key):
    ks = jax.random.split(key, 6)

    def conv_init(kw_key, kb_key, cout, cin):
        fan_in = cin * 3 * 3
        bound = 1.0 / jnp.sqrt(fan_in)
        w = jax.random.uniform(kw_key, (cout, cin, 3, 3), jnp.float32, -bound, bound)
        b = jax.random.uniform(kb_key, (cout,), jnp.float32, -bound, bound)
        return w, b

    w1, b1 = conv_init(ks[0], ks[1], 6, 3)
    w2, b2 = conv_init(ks[2], ks[3], 6, 6)
    w3, b3 = conv_init(ks[4], ks[5], 1, 6)
    return {"w1": w1, "b1": b1, "w2": w2, "b2": b2, "w3": w3, "b3": b3}


def _conv_ref(x, w, b):
    y = jax.lax.conv_general_dilated(
        x, w, window_strides=(1, 1), padding="SAME",
        dimension_numbers=("NCHW", "OIHW", "NCHW"))
    return y + b[None, :, None, None]


def alinet_ref(params, x):
    x = _conv_ref(x, params["w1"], params["b1"])
    x = _conv_ref(x, params["w2"], params["b2"])
    x = _conv_ref(x, params["w3"], params["b3"])
    return x


if __name__ == "__main__":
    key = jax.random.PRNGKey(0)
    pkey, xkey = jax.random.split(key)

    params = init_alinet_params(pkey)
    x = jax.random.normal(xkey, (2, 3, 16, 16), dtype=jnp.float32)

    out = jax.block_until_ready(alinet_forward(params, x))
    ref = alinet_ref(params, x)

    assert out.shape == (2, 1, 16, 16), out.shape
    assert jnp.allclose(out, ref, atol=1e-4, rtol=1e-4), "mismatch vs reference"

    print("KERNEL_OK")
</pallas_src>

<mosaic_0001>
module attributes {stable_mosaic.version = 11 : i64} {
  func.func @kernel(%arg0: i32, %arg1: memref<2x3x16x16xf32, #tpu.memory_space<vmem>>, %arg2: memref<162xf32, #tpu.memory_space<smem>>, %arg3: memref<6xf32, #tpu.memory_space<smem>>, %arg4: memref<324xf32, #tpu.memory_space<smem>>, %arg5: memref<6xf32, #tpu.memory_space<smem>>, %arg6: memref<54xf32, #tpu.memory_space<smem>>, %arg7: memref<1xf32, #tpu.memory_space<smem>>, %arg8: memref<1x16x36xf32, #tpu.memory_space<vmem>>) attributes {dimension_semantics = [#tpu.dimension_semantics<parallel>], iteration_bounds = array<i64: 1>, scalar_prefetch = 0 : i64, scratch_operands = 0 : i64, tpu.core_type = #tpu.core_type<tc>, window_params = [{transform_indices = @transform_0, window_bounds = array<i64: 2, 3, 16, 16>}, {transform_indices = @transform_1, window_bounds = array<i64: 162>}, {transform_indices = @transform_2, window_bounds = array<i64: 6>}, {transform_indices = @transform_3, window_bounds = array<i64: 324>}, {transform_indices = @transform_4, window_bounds = array<i64: 6>}, {transform_indices = @transform_5, window_bounds = array<i64: 54>}, {transform_indices = @transform_6, window_bounds = array<i64: 1>}, {transform_indices = @transform_7, window_bounds = array<i64: 1, 16, 36>}]} {
    %cst = arith.constant 0.000000e+00 : f32
    %0 = vector.broadcast %cst : f32 to vector<16x1xf32>
    %cst_0 = arith.constant 1.000000e+00 : f32
    %1 = vector.broadcast %cst_0 : f32 to vector<16x16xf32>
    %2 = tpu.concatenate %0, %1, %0, %0, %1, %0 in 1 : vector<16x1xf32>, vector<16x16xf32>, vector<16x1xf32>, vector<16x1xf32>, vector<16x16xf32>, vector<16x1xf32> -> vector<16x36xf32>
    %c0 = arith.constant 0 : index
    %c0_1 = arith.constant 0 : index
    %c0_2 = arith.constant 0 : index
    %c0_3 = arith.constant 0 : index
    %3 = vector.load %arg1[%c0, %c0_1, %c0_2, %c0_3] : memref<2x3x16x16xf32, #tpu.memory_space<vmem>>, vector<1x1x16x16xf32>
    %4 = vector.shape_cast %3 : vector<1x1x16x16xf32> to vector<16x16xf32>
    %c1 = arith.constant 1 : index
    %c0_4 = arith.constant 0 : index
    %c0_5 = arith.constant 0 : index
    %c0_6 = arith.constant 0 : index
    %5 = vector.load %arg1[%c1, %c0_4, %c0_5, %c0_6] : memref<2x3x16x16xf32, #tpu.memory_space<vmem>>, vector<1x1x16x16xf32>
    %6 = vector.shape_cast %5 : vector<1x1x16x16xf32> to vector<16x16xf32>
    %7 = tpu.concatenate %0, %4, %0, %0, %6, %0 in 1 : vector<16x1xf32>, vector<16x16xf32>, vector<16x1xf32>, vector<16x1xf32>, vector<16x16xf32>, vector<16x1xf32> -> vector<16x36xf32>
    %8 = tpu.concatenate %0, %7, %0 in 1 : vector<16x1xf32>, vector<16x36xf32>, vector<16x1xf32> -> vector<16x38xf32>
    %cst_7 = arith.constant 0.000000e+00 : f32
    %9 = vector.broadcast %cst_7 : f32 to vector<1x38xf32>
    %10 = tpu.concatenate %9, %8, %9 in 0 : vector<1x38xf32>, vector<16x38xf32>, vector<1x38xf32> -> vector<18x38xf32>
    %c0_8 = arith.constant 0 : index
    %c1_9 = arith.constant 1 : index
    %c0_10 = arith.constant 0 : index
    %c0_11 = arith.constant 0 : index
    %11 = vector.load %arg1[%c0_8, %c1_9, %c0_10, %c0_11] : memref<2x3x16x16xf32, #tpu.memory_space<vmem>>, vector<1x1x16x16xf32>
    %12 = vector.shape_cast %11 : vector<1x1x16x16xf32> to vector<16x16xf32>
    %c1_12 = arith.constant 1 : index
    %c1_13 = arith.constant 1 : index
    %c0_14 = arith.constant 0 : index
    %c0_15 = arith.constant 0 : index
    %13 = vector.load %arg1[%c1_12, %c1_13, %c0_14, %c0_15] : memref<2x3x16x16xf32, #tpu.memory_space<vmem>>, vector<1x1x16x16xf32>
    %14 = vector.shape_cast %13 : vector<1x1x16x16xf32> to vector<16x16xf32>
    %15 = tpu.concatenate %0, %12, %0, %0, %14, %0 in 1 : vector<16x1xf32>, vector<16x16xf32>, vector<16x1xf32>, vector<16x1xf32>, vector<16x16xf32>, vector<16x1xf32> -> vector<16x36xf32>
    %16 = tpu.concatenate %0, %15, %0 in 1 : vector<16x1xf32>, vector<16x36xf32>, vector<16x1xf32> -> vector<16x38xf32>
    %cst_16 = arith.constant 0.000000e+00 : f32
    %17 = vector.broadcast %cst_16 : f32 to vector<1x38xf32>
    %18 = tpu.concatenate %17, %16, %17 in 0 : vector<1x38xf32>, vector<16x38xf32>, vector<1x38xf32> -> vector<18x38xf32>
    %c0_17 = arith.constant 0 : index
    %c2 = arith.constant 2 : index
    %c0_18 = arith.constant 0 : index
    %c0_19 = arith.constant 0 : index
    %19 = vector.load %arg1[%c0_17, %c2, %c0_18, %c0_19] : memref<2x3x16x16xf32, #tpu.memory_space<vmem>>, vector<1x1x16x16xf32>
    %20 = vector.shape_cast %19 : vector<1x1x16x16xf32> to vector<16x16xf32>
    %c1_20 = arith.constant 1 : index
    %c2_21 = arith.constant 2 : index
    %c0_22 = arith.constant 0 : index
    %c0_23 = arith.constant 0 : index
    %21 = vector.load %arg1[%c1_20, %c2_21, %c0_22, %c0_23] : memref<2x3x16x16xf32, #tpu.memory_space<vmem>>, vector<1x1x16x16xf32>
    %22 = vector.shape_cast %21 : vector<1x1x16x16xf32> to vector<16x16xf32>
    %23 = tpu.concatenate %0, %20, %0, %0, %22, %0 in 1 : vector<16x1xf32>, vector<16x16xf32>, vector<16x1xf32>, vector<16x1xf32>, vector<16x16xf32>, vector<16x1xf32> -> vector<16x36xf32>
    %24 = tpu.concatenate %0, %23, %0 in 1 : vector<16x1xf32>, vector<16x36xf32>, vector<16x1xf32> -> vector<16x38xf32>
    %cst_24 = arith.constant 0.000000e+00 : f32
    %25 = vector.broadcast %cst_24 : f32 to vector<1x38xf32>
    %26 = tpu.concatenate %25, %24, %25 in 0 : vector<1x38xf32>, vector<16x38xf32>, vector<1x38xf32> -> vector<18x38xf32>
    %c0_25 = arith.constant 0 : index
    %27 = memref.load %arg3[%c0_25] : memref<6xf32, #tpu.memory_space<smem>>
    %28 = vector.broadcast %27 : f32 to vector<16x36xf32>
    %c1_26 = arith.constant 1 : index
    %29 = memref.load %arg3[%c1_26] : memref<6xf32, #tpu.memory_space<smem>>
    %30 = vector.broadcast %29 : f32 to vector<16x36xf32>
    %c2_27 = arith.constant 2 : index
    %31 = memref.load %arg3[%c2_27] : memref<6xf32, #tpu.memory_space<smem>>
    %32 = vector.broadcast %31 : f32 to vector<16x36xf32>
    %c3 = arith.constant 3 : index
    %33 = memref.load %arg3[%c3] : memref<6xf32, #tpu.memory_space<smem>>
    %34 = vector.broadcast %33 : f32 to vector<16x36xf32>
    %c4 = arith.constant 4 : index
    %35 = memref.load %arg3[%c4] : memref<6xf32, #tpu.memory_space<smem>>
    %36 = vector.broadcast %35 : f32 to vector<16x36xf32>
    %c5 = arith.constant 5 : index
    %37 = memref.load %arg3[%c5] : memref<6xf32, #tpu.memory_space<smem>>
    %38 = vector.broadcast %37 : f32 to vector<16x36xf32>
    %39 = vector.extract_strided_slice %10 {offsets = [0, 0], sizes = [18, 36], strides = [1, 1]} : vector<18x38xf32> to vector<18x36xf32>
    %40 = vector.extract_strided_slice %10 {offsets = [0, 1], sizes = [18, 36], strides = [1, 1]} : vector<18x38xf32> to vector<18x36xf32>
    %41 = vector.extract_strided_slice %10 {offsets = [0, 2], sizes = [18, 36], strides = [1, 1]} : vector<18x38xf32> to vector<18x36xf32>
    %42 = vector.extract_strided_slice %39 {offsets = [0, 0], sizes = [16, 36], strides = [1, 1]} : vector<18x36xf32> to vector<16x36xf32>
    %43 = vector.extract_strided_slice %40 {offsets = [0, 0], sizes = [16, 36], strides = [1, 1]} : vector<18x36xf32> to vector<16x36xf32>
    %44 = vector.extract_strided_slice %41 {offsets = [0, 0], sizes = [16, 36], strides = [1, 1]} : vector<18x36xf32> to vector<16x36xf32>
    %45 = vector.extract_strided_slice %39 {offsets = [1, 0], sizes = [16, 36], strides = [1, 1]} : vector<18x36xf32> to vector<16x36xf32>
    %46 = vector.extract_strided_slice %40 {offsets = [1, 0], sizes = [16, 36], strides = [1, 1]} : vector<18x36xf32> to vector<16x36xf32>
    %47 = vector.extract_strided_slice %41 {offsets = [1, 0], sizes = [16, 36], strides = [1, 1]} : vector<18x36xf32> to vector<16x36xf32>
    %48 = vector.extract_strided_slice %39 {offsets = [2, 0], sizes = [16, 36], strides = [1, 1]} : vector<18x36xf32> to vector<16x36xf32>
    %49 = vector.extract_strided_slice %40 {offsets = [2, 0], sizes = [16, 36], strides = [1, 1]} : vector<18x36xf32> to vector<16x36xf32>
    %50 = vector.extract_strided_slice %41 {offsets = [2, 0], sizes = [16, 36], strides = [1, 1]} : vector<18x36xf32> to vector<16x36xf32>
    %c0_28 = arith.constant 0 : index
    %51 = memref.load %arg2[%c0_28] : memref<162xf32, #tpu.memory_space<smem>>
    %52 = vector.broadcast %51 : f32 to vector<16x36xf32>
    %53 = arith.mulf %52, %42 : vector<16x36xf32>
    %54 = arith.addf %28, %53 : vector<16x36xf32>
    %c1_29 = arith.constant 1 : index
    %55 = memref.load %arg2[%c1_29] : memref<162xf32, #tpu.memory_space<smem>>
    %56 = vector.broadcast %55 : f32 to vector<16x36xf32>
    %57 = arith.mulf %56, %43 : vector<16x36xf32>
    %58 = arith.addf %54, %57 : vector<16x36xf32>
    %c2_30 = arith.constant 2 : index
    %59 = memref.load %arg2[%c2_30] : memref<162xf32, #tpu.memory_space<smem>>
    %60 = vector.broadcast %59 : f32 to vector<16x36xf32>
    %61 = arith.mulf %60, %44 : vector<16x36xf32>
    %62 = arith.addf %58, %61 : vector<16x36xf32>
    %c3_31 = arith.constant 3 : index
    %63 = memref.load %arg2[%c3_31] : memref<162xf32, #tpu.memory_space<smem>>
    %64 = vector.broadcast %63 : f32 to vector<16x36xf32>
    %65 = arith.mulf %64, %45 : vector<16x36xf32>
    %66 = arith.addf %62, %65 : vector<16x36xf32>
    %c4_32 = arith.constant 4 : index
    %67 = memref.load %arg2[%c4_32] : memref<162xf32, #tpu.memory_space<smem>>
    %68 = vector.broadcast %67 : f32 to vector<16x36xf32>
    %69 = arith.mulf %68, %46 : vector<16x36xf32>
    %70 = arith.addf %66, %69 : vector<16x36xf32>
    %c5_33 = arith.constant 5 : index
    %71 = memref.load %arg2[%c5_33] : memref<162xf32, #tpu.memory_space<smem>>
    %72 = vector.broadcast %71 : f32 to vector<16x36xf32>
    %73 = arith.mulf %72, %47 : vector<16x36xf32>
    %74 = arith.addf %70, %73 : vector<16x36xf32>
    %c6 = arith.constant 6 : index
    %75 = memref.load %arg2[%c6] : memref<162xf32, #tpu.memory_space<smem>>
    %76 = vector.broadcast %75 : f32 to vector<16x36xf32>
    %77 = arith.mulf %76, %48 : vector<16x36xf32>
    %78 = arith.addf %74, %77 : vector<16x36xf32>
    %c7 = arith.constant 7 : index
    %79 = memref.load %arg2[%c7] : memref<162xf32, #tpu.memory_space<smem>>
    %80 = vector.broadcast %79 : f32 to vector<16x36xf32>
    %81 = arith.mulf %80, %49 : vector<16x36xf32>
    %82 = arith.addf %78, %81 : vector<16x36xf32>
    %c8 = arith.constant 8 : index
    %83 = memref.load %arg2[%c8] : memref<162xf32, #tpu.memory_space<smem>>
    %84 = vector.broadcast %83 : f32 to vector<16x36xf32>
    %85 = arith.mulf %84, %50 : vector<16x36xf32>
    %86 = arith.addf %82, %85 : vector<16x36xf32>
    %c27 = arith.constant 27 : index
    %87 = memref.load %arg2[%c27] : memref<162xf32, #tpu.memory_space<smem>>
    %88 = vector.broadcast %87 : f32 to vector<16x36xf32>
    %89 = arith.mulf %88, %42 : vector<16x36xf32>
    %90 = arith.addf %30, %89 : vector<16x36xf32>
    %c28 = arith.constant 28 : index
    %91 = memref.load %arg2[%c28] : memref<162xf32, #tpu.memory_space<smem>>
    %92 = vector.broadcast %91 : f32 to vector<16x36xf32>
    %93 = arith.mulf %92, %43 : vector<16x36xf32>
    %94 = arith.addf %90, %93 : vector<16x36xf32>
    %c29 = arith.constant 29 : index
    %95 = memref.load %arg2[%c29] : memref<162xf32, #tpu.memory_space<smem>>
    %96 = vector.broadcast %95 : f32 to vector<16x36xf32>
    %97 = arith.mulf %96, %44 : vector<16x36xf32>
    %98 = arith.addf %94, %97 : vector<16x36xf32>
    %c30 = arith.constant 30 : index
    %99 = memref.load %arg2[%c30] : memref<162xf32, #tpu.memory_space<smem>>
    %100 = vector.broadcast %99 : f32 to vector<16x36xf32>
    %101 = arith.mulf %100, %45 : vector<16x36xf32>
    %102 = arith.addf %98, %101 : vector<16x36xf32>
    %c31 = arith.constant 31 : index
    %103 = memref.load %arg2[%c31] : memref<162xf32, #tpu.memory_space<smem>>
    %104 = vector.broadcast %103 : f32 to vector<16x36xf32>
    %105 = arith.mulf %104, %46 : vector<16x36xf32>
    %106 = arith.addf %102, %105 : vector<16x36xf32>
    %c32 = arith.constant 32 : index
    %107 = memref.load %arg2[%c32] : memref<162xf32, #tpu.memory_space<smem>>
    %108 = vector.broadcast %107 : f32 to vector<16x36xf32>
    %109 = arith.mulf %108, %47 : vector<16x36xf32>
    %110 = arith.addf %106, %109 : vector<16x36xf32>
    %c33 = arith.constant 33 : index
    %111 = memref.load %arg2[%c33] : memref<162xf32, #tpu.memory_space<smem>>
    %112 = vector.broadcast %111 : f32 to vector<16x36xf32>
    %113 = arith.mulf %112, %48 : vector<16x36xf32>
    %114 = arith.addf %110, %113 : vector<16x36xf32>
    %c34 = arith.constant 34 : index
    %115 = memref.load %arg2[%c34] : memref<162xf32, #tpu.memory_space<smem>>
    %116 = vector.broadcast %115 : f32 to vector<16x36xf32>
    %117 = arith.mulf %116, %49 : vector<16x36xf32>
    %118 = arith.addf %114, %117 : vector<16x36xf32>
    %c35 = arith.constant 35 : index
    %119 = memref.load %arg2[%c35] : memref<162xf32, #tpu.memory_space<smem>>
    %120 = vector.broadcast %119 : f32 to vector<16x36xf32>
    %121 = arith.mulf %120, %50 : vector<16x36xf32>
    %122 = arith.addf %118, %121 : vector<16x36xf32>
    %c54 = arith.constant 54 : index
    %123 = memref.load %arg2[%c54] : memref<162xf32, #tpu.memory_space<smem>>
    %124 = vector.broadcast %123 : f32 to vector<16x36xf32>
    %125 = arith.mulf %124, %42 : vector<16x36xf32>
    %126 = arith.addf %32, %125 : vector<16x36xf32>
    %c55 = arith.constant 55 : index
    %127 = memref.load %arg2[%c55] : memref<162xf32, #tpu.memory_space<smem>>
    %128 = vector.broadcast %127 : f32 to vector<16x36xf32>
    %129 = arith.mulf %128, %43 : vector<16x36xf32>
    %130 = arith.addf %126, %129 : vector<16x36xf32>
    %c56 = arith.constant 56 : index
    %131 = memref.load %arg2[%c56] : memref<162xf32, #tpu.memory_space<smem>>
    %132 = vector.broadcast %131 : f32 to vector<16x36xf32>
    %133 = arith.mulf %132, %44 : vector<16x36xf32>
    %134 = arith.addf %130, %133 : vector<16x36xf32>
    %c57 = arith.constant 57 : index
    %135 = memref.load %arg2[%c57] : memref<162xf32, #tpu.memory_space<smem>>
    %136 = vector.broadcast %135 : f32 to vector<16x36xf32>
    %137 = arith.mulf %136, %45 : vector<16x36xf32>
    %138 = arith.addf %134, %137 : vector<16x36xf32>
    %c58 = arith.constant 58 : index
    %139 = memref.load %arg2[%c58] : memref<162xf32, #tpu.memory_space<smem>>
    %140 = vector.broadcast %139 : f32 to vector<16x36xf32>
    %141 = arith.mulf %140, %46 : vector<16x36xf32>
    %142 = arith.addf %138, %141 : vector<16x36xf32>
    %c59 = arith.constant 59 : index
    %143 = memref.load %arg2[%c59] : memref<162xf32, #tpu.memory_space<smem>>
    %144 = vector.broadcast %143 : f32 to vector<16x36xf32>
    %145 = arith.mulf %144, %47 : vector<16x36xf32>
    %146 = arith.addf %142, %145 : vector<16x36xf32>
    %c60 = arith.constant 60 : index
    %147 = memref.load %arg2[%c60] : memref<162xf32, #tpu.memory_space<smem>>
    %148 = vector.broadcast %147 : f32 to vector<16x36xf32>
    %149 = arith.mulf %148, %48 : vector<16x36xf32>
    %150 = arith.addf %146, %149 : vector<16x36xf32>
    %c61 = arith.constant 61 : index
    %151 = memref.load %arg2[%c61] : memref<162xf32, #tpu.memory_space<smem>>
    %152 = vector.broadcast %151 : f32 to vector<16x36xf32>
    %153 = arith.mulf %152, %49 : vector<16x36xf32>
    %154 = arith.addf %150, %153 : vector<16x36xf32>
    %c62 = arith.constant 62 : index
    %155 = memref.load %arg2[%c62] : memref<162xf32, #tpu.memory_space<smem>>
    %156 = vector.broadcast %155 : f32 to vector<16x36xf32>
    %157 = arith.mulf %156, %50 : vector<16x36xf32>
    %158 = arith.addf %154, %157 : vector<16x36xf32>
    %c81 = arith.constant 81 : index
    %159 = memref.load %arg2[%c81] : memref<162xf32, #tpu.memory_space<smem>>
    %160 = vector.broadcast %159 : f32 to vector<16x36xf32>
    %161 = arith.mulf %160, %42 : vector<16x36xf32>
    %162 = arith.addf %34, %161 : vector<16x36xf32>
    %c82 = arith.constant 82 : index
    %163 = memref.load %arg2[%c82] : memref<162xf32, #tpu.memory_space<smem>>
    %164 = vector.broadcast %163 : f32 to vector<16x36xf32>
    %165 = arith.mulf %164, %43 : vector<16x36xf32>
    %166 = arith.addf %162, %165 : vector<16x36xf32>
    %c83 = arith.constant 83 : index
    %167 = memref.load %arg2[%c83] : memref<162xf32, #tpu.memory_space<smem>>
    %168 = vector.broadcast %167 : f32 to vector<16x36xf32>
    %169 = arith.mulf %168, %44 : vector<16x36xf32>
    %170 = arith.addf %166, %169 : vector<16x36xf32>
    %c84 = arith.constant 84 : index
    %171 = memref.load %arg2[%c84] : memref<162xf32, #tpu.memory_space<smem>>
    %172 = vector.broadcast %171 : f32 to vector<16x36xf32>
    %173 = arith.mulf %172, %45 : vector<16x36xf32>
    %174 = arith.addf %170, %173 : vector<16x36xf32>
    %c85 = arith.constant 85 : index
    %175 = memref.load %arg2[%c85] : memref<162xf32, #tpu.memory_space<smem>>
    %176 = vector.broadcast %175 : f32 to vector<16x36xf32>
    %177 = arith.mulf %176, %46 : vector<16x36xf32>
    %178 = arith.addf %174, %177 : vector<16x36xf32>
    %c86 = arith.constant 86 : index
    %179 = memref.load %arg2[%c86] : memref<162xf32, #tpu.memory_space<smem>>
    %180 = vector.broadcast %179 : f32 to vector<16x36xf32>
    %181 = arith.mulf %180, %47 : vector<16x36xf32>
    %182 = arith.addf %178, %181 : vector<16x36xf32>
    %c87 = arith.constant 87 : index
    %183 = memref.load %arg2[%c87] : memref<162xf32, #tpu.memory_space<smem>>
    %184 = vector.broadcast %183 : f32 to vector<16x36xf32>
    %185 = arith.mulf %184, %48 : vector<16x36xf32>
    %186 = arith.addf %182, %185 : vector<16x36xf32>
    %c88 = arith.constant 88 : index
    %187 = memref.load %arg2[%c88] : memref<162xf32, #tpu.memory_space<smem>>
    %188 = vector.broadcast %187 : f32 to vector<16x36xf32>
    %189 = arith.mulf %188, %49 : vector<16x36xf32>
    %190 = arith.addf %186, %189 : vector<16x36xf32>
    %c89 = arith.constant 89 : index
    %191 = memref.load %arg2[%c89] : memref<162xf32, #tpu.memory_space<smem>>
    %192 = vector.broadcast %191 : f32 to vector<16x36xf32>
    %193 = arith.mulf %192, %50 : vector<16x36xf32>
    %194 = arith.addf %190, %193 : vector<16x36xf32>
    %c108 = arith.constant 108 : index
    %195 = memref.load %arg2[%c108] : memref<162xf32, #tpu.memory_space<smem>>
    %196 = vector.broadcast %195 : f32 to vector<16x36xf32>
    %197 = arith.mulf %196, %42 : vector<16x36xf32>
    %198 = arith.addf %36, %197 : vector<16x36xf32>
    %c109 = arith.constant 109 : index
    %199 = memref.load %arg2[%c109] : memref<162xf32, #tpu.memory_space<smem>>
    %200 = vector.broadcast %199 : f32 to vector<16x36xf32>
    %201 = arith.mulf %200, %43 : vector<16x36xf32>
    %202 = arith.addf %198, %201 : vector<16x36xf32>
    %c110 = arith.constant 110 : index
    %203 = memref.load %arg2[%c110] : memref<162xf32, #tpu.memory_space<smem>>
    %204 = vector.broadcast %203 : f32 to vector<16x36xf32>
    %205 = arith.mulf %204, %44 : vector<16x36xf32>
    %206 = arith.addf %202, %205 : vector<16x36xf32>
    %c111 = arith.constant 111 : index
    %207 = memref.load %arg2[%c111] : memref<162xf32, #tpu.memory_space<smem>>
    %208 = vector.broadcast %207 : f32 to vector<16x36xf32>
    %209 = arith.mulf %208, %45 : vector<16x36xf32>
    %210 = arith.addf %206, %209 : vector<16x36xf32>
    %c112 = arith.constant 112 : index
    %211 = memref.load %arg2[%c112] : memref<162xf32, #tpu.memory_space<smem>>
    %212 = vector.broadcast %211 : f32 to vector<16x36xf32>
    %213 = arith.mulf %212, %46 : vector<16x36xf32>
    %214 = arith.addf %210, %213 : vector<16x36xf32>
    %c113 = arith.constant 113 : index
    %215 = memref.load %arg2[%c113] : memref<162xf32, #tpu.memory_space<smem>>
    %216 = vector.broadcast %215 : f32 to vector<16x36xf32>
    %217 = arith.mulf %216, %47 : vector<16x36xf32>
    %218 = arith.addf %214, %217 : vector<16x36xf32>
    %c114 = arith.constant 114 : index
    %219 = memref.load %arg2[%c114] : memref<162xf32, #tpu.memory_space<smem>>
    %220 = vector.broadcast %219 : f32 to vector<16x36xf32>
    %221 = arith.mulf %220, %48 : vector<16x36xf32>
    %222 = arith.addf %218, %221 : vector<16x36xf32>
    %c115 = arith.constant 115 : index
    %223 = memref.load %arg2[%c115] : memref<162xf32, #tpu.memory_space<smem>>
    %224 = vector.broadcast %223 : f32 to vector<16x36xf32>
    %225 = arith.mulf %224, %49 : vector<16x36xf32>
    %226 = arith.addf %222, %225 : vector<16x36xf32>
    %c116 = arith.constant 116 : index
    %227 = memref.load %arg2[%c116] : memref<162xf32, #tpu.memory_space<smem>>
    %228 = vector.broadcast %227 : f32 to vector<16x36xf32>
    %229 = arith.mulf %228, %50 : vector<16x36xf32>
    %230 = arith.addf %226, %229 : vector<16x36xf32>
    %c135 = arith.constant 135 : index
    %231 = memref.load %arg2[%c135] : memref<162xf32, #tpu.memory_space<smem>>
    %232 = vector.broadcast %231 : f32 to vector<16x36xf32>
    %233 = arith.mulf %232, %42 : vector<16x36xf32>
    %234 = arith.addf %38, %233 : vector<16x36xf32>
    %c136 = arith.constant 136 : index
    %235 = memref.load %arg2[%c136] : memref<162xf32, #tpu.memory_space<smem>>
    %236 = vector.broadcast %235 : f32 to vector<16x36xf32>
    %237 = arith.mulf %236, %43 : vector<16x36xf32>
    %238 = arith.addf %234, %237 : vector<16x36xf32>
    %c137 = arith.constant 137 : index
    %239 = memref.load %arg2[%c137] : memref<162xf32, #tpu.memory_space<smem>>
    %240 = vector.broadcast %239 : f32 to vector<16x36xf32>
    %241 = arith.mulf %240, %44 : vector<16x36xf32>
    %242 = arith.addf %238, %241 : vector<16x36xf32>
    %c138 = arith.constant 138 : index
    %243 = memref.load %arg2[%c138] : memref<162xf32, #tpu.memory_space<smem>>
    %244 = vector.broadcast %243 : f32 to vector<16x36xf32>
    %245 = arith.mulf %244, %45 : vector<16x36xf32>
    %246 = arith.addf %242, %245 : vector<16x36xf32>
    %c139 = arith.constant 139 : index
    %247 = memref.load %arg2[%c139] : memref<162xf32, #tpu.memory_space<smem>>
    %248 = vector.broadcast %247 : f32 to vector<16x36xf32>
    %249 = arith.mulf %248, %46 : vector<16x36xf32>
    %250 = arith.addf %246, %249 : vector<16x36xf32>
    %c140 = arith.constant 140 : index
    %251 = memref.load %arg2[%c140] : memref<162xf32, #tpu.memory_space<smem>>
    %252 = vector.broadcast %251 : f32 to vector<16x36xf32>
    %253 = arith.mulf %252, %47 : vector<16x36xf32>
    %254 = arith.addf %250, %253 : vector<16x36xf32>
    %c141 = arith.constant 141 : index
    %255 = memref.load %arg2[%c141] : memref<162xf32, #tpu.memory_space<smem>>
    %256 = vector.broadcast %255 : f32 to vector<16x36xf32>
    %257 = arith.mulf %256, %48 : vector<16x36xf32>
    %258 = arith.addf %254, %257 : vector<16x36xf32>
    %c142 = arith.constant 142 : index
    %259 = memref.load %arg2[%c142] : memref<162xf32, #tpu.memory_space<smem>>
    %260 = vector.broadcast %259 : f32 to vector<16x36xf32>
    %261 = arith.mulf %260, %49 : vector<16x36xf32>
    %262 = arith.addf %258, %261 : vector<16x36xf32>
    %c143 = arith.constant 143 : index
    %263 = memref.load %arg2[%c143] : memref<162xf32, #tpu.memory_space<smem>>
    %264 = vector.broadcast %263 : f32 to vector<16x36xf32>
    %265 = arith.mulf %264, %50 : vector<16x36xf32>
    %266 = arith.addf %262, %265 : vector<16x36xf32>
    %267 = vector.extract_strided_slice %18 {offsets = [0, 0], sizes = [18, 36], strides = [1, 1]} : vector<18x38xf32> to vector<18x36xf32>
    %268 = vector.extract_strided_slice %18 {offsets = [0, 1], sizes = [18, 36], strides = [1, 1]} : vector<18x38xf32> to vector<18x36xf32>
    %269 = vector.extract_strided_slice %18 {offsets = [0, 2], sizes = [18, 36], strides = [1, 1]} : vector<18x38xf32> to vector<18x36xf32>
    %270 = vector.extract_strided_slice %267 {offsets = [0, 0], sizes = [16, 36], strides = [1, 1]} : vector<18x36xf32> to vector<16x36xf32>
    %271 = vector.extract_strided_slice %268 {offsets = [0, 0], sizes = [16, 36], strides = [1, 1]} : vector<18x36xf32> to vector<16x36xf32>
    %272 = vector.extract_strided_slice %269 {offsets = [0, 0], sizes = [16, 36], strides = [1, 1]} : vector<18x36xf32> to vector<16x36xf32>
    %273 = vector.extract_strided_slice %267 {offsets = [1, 0], sizes = [16, 36], strides = [1, 1]} : vector<18x36xf32> to vector<16x36xf32>
    %274 = vector.extract_strided_slice %268 {offsets = [1, 0], sizes = [16, 36], strides = [1, 1]} : vector<18x36xf32> to vector<16x36xf32>
    %275 = vector.extract_strided_slice %269 {offsets = [1, 0], sizes = [16, 36], strides = [1, 1]} : vector<18x36xf32> to vector<16x36xf32>
    %276 = vector.extract_strided_slice %267 {offsets = [2, 0], sizes = [16, 36], strides = [1, 1]} : vector<18x36xf32> to vector<16x36xf32>
    %277 = vector.extract_strided_slice %268 {offsets = [2, 0], sizes = [16, 36], strides = [1, 1]} : vector<18x36xf32> to vector<16x36xf32>
    %278 = vector.extract_strided_slice %269 {offsets = [2, 0], sizes = [16, 36], strides = [1, 1]} : vector<18x36xf32> to vector<16x36xf32>
    %c9 = arith.constant 9 : index
    %279 = memref.load %arg2[%c9] : memref<162xf32, #tpu.memory_space<smem>>
    %280 = vector.broadcast %279 : f32 to vector<16x36xf32>
    %281 = arith.mulf %280, %270 : vector<16x36xf32>
    %282 = arith.addf %86, %281 : vector<16x36xf32>
    %c10 = arith.constant 10 : index
    %283 = memref.load %arg2[%c10] : memref<162xf32, #tpu.memory_space<smem>>
    %284 = vector.broadcast %283 : f32 to vector<16x36xf32>
    %285 = arith.mulf %284, %271 : vector<16x36xf32>
    %286 = arith.addf %282, %285 : vector<16x36xf32>
    %c11 = arith.constant 11 : index
    %287 = memref.load %arg2[%c11] : memref<162xf32, #tpu.memory_space<smem>>
    %288 = vector.broadcast %287 : f32 to vector<16x36xf32>
    %289 = arith.mulf %288, %272 : vector<16x36xf32>
    %290 = arith.addf %286, %289 : vector<16x36xf32>
    %c12 = arith.constant 12 : index
    %291 = memref.load %arg2[%c12] : memref<162xf32, #tpu.memory_space<smem>>
    %292 = vector.broadcast %291 : f32 to vector<16x36xf32>
    %293 = arith.mulf %292, %273 : vector<16x36xf32>
    %294 = arith.addf %290, %293 : vector<16x36xf32>
    %c13 = arith.constant 13 : index
    %295 = memref.load %arg2[%c13] : memref<162xf32, #tpu.memory_space<smem>>
    %296 = vector.broadcast %295 : f32 to vector<16x36xf32>
    %297 = arith.mulf %296, %274 : vector<16x36xf32>
    %298 = arith.addf %294, %297 : vector<16x36xf32>
    %c14 = arith.constant 14 : index
    %299 = memref.load %arg2[%c14] : memref<162xf32, #tpu.memory_space<smem>>
    %300 = vector.broadcast %299 : f32 to vector<16x36xf32>
    %301 = arith.mulf %300, %275 : vector<16x36xf32>
    %302 = arith.addf %298, %301 : vector<16x36xf32>
    %c15 = arith.constant 15 : index
    %303 = memref.load %arg2[%c15] : memref<162xf32, #tpu.memory_space<smem>>
    %304 = vector.broadcast %303 : f32 to vector<16x36xf32>
    %305 = arith.mulf %304, %276 : vector<16x36xf32>
    %306 = arith.addf %302, %305 : vector<16x36xf32>
    %c16 = arith.constant 16 : index
    %307 = memref.load %arg2[%c16] : memref<162xf32, #tpu.memory_space<smem>>
    %308 = vector.broadcast %307 : f32 to vector<16x36xf32>
    %309 = arith.mulf %308, %277 : vector<16x36xf32>
    %310 = arith.addf %306, %309 : vector<16x36xf32>
    %c17 = arith.constant 17 : index
    %311 = memref.load %arg2[%c17] : memref<162xf32, #tpu.memory_space<smem>>
    %312 = vector.broadcast %311 : f32 to vector<16x36xf32>
    %313 = arith.mulf %312, %278 : vector<16x36xf32>
    %314 = arith.addf %310, %313 : vector<16x36xf32>
    %c36 = arith.constant 36 : index
    %315 = memref.load %arg2[%c36] : memref<162xf32, #tpu.memory_space<smem>>
    %316 = vector.broadcast %315 : f32 to vector<16x36xf32>
    %317 = arith.mulf %316, %270 : vector<16x36xf32>
    %318 = arith.addf %122, %317 : vector<16x36xf32>
    %c37 = arith.constant 37 : index
    %319 = memref.load %arg2[%c37] : memref<162xf32, #tpu.memory_space<smem>>
    %320 = vector.broadcast %319 : f32 to vector<16x36xf32>
    %321 = arith.mulf %320, %271 : vector<16x36xf32>
    %322 = arith.addf %318, %321 : vector<16x36xf32>
    %c38 = arith.constant 38 : index
    %323 = memref.load %arg2[%c38] : memref<162xf32, #tpu.memory_space<smem>>
    %324 = vector.broadcast %323 : f32 to vector<16x36xf32>
    %325 = arith.mulf %324, %272 : vector<16x36xf32>
    %326 = arith.addf %322, %325 : vector<16x36xf32>
    %c39 = arith.constant 39 : index
    %327 = memref.load %arg2[%c39] : memref<162xf32, #tpu.memory_space<smem>>
    %328 = vector.broadcast %327 : f32 to vector<16x36xf32>
    %329 = arith.mulf %328, %273 : vector<16x36xf32>
    %330 = arith.addf %326, %329 : vector<16x36xf32>
    %c40 = arith.constant 40 : index
    %331 = memref.load %arg2[%c40] : memref<162xf32, #tpu.memory_space<smem>>
    %332 = vector.broadcast %331 : f32 to vector<16x36xf32>
    %333 = arith.mulf %332, %274 : vector<16x36xf32>
    %334 = arith.addf %330, %333 : vector<16x36xf32>
    %c41 = arith.constant 41 : index
    %335 = memref.load %arg2[%c41] : memref<162xf32, #tpu.memory_space<smem>>
    %336 = vector.broadcast %335 : f32 to vector<16x36xf32>
    %337 = arith.mulf %336, %275 : vector<16x36xf32>
    %338 = arith.addf %334, %337 : vector<16x36xf32>
    %c42 = arith.constant 42 : index
    %339 = memref.load %arg2[%c42] : memref<162xf32, #tpu.memory_space<smem>>
    %340 = vector.broadcast %339 : f32 to vector<16x36xf32>
    %341 = arith.mulf %340, %276 : vector<16x36xf32>
    %342 = arith.addf %338, %341 : vector<16x36xf32>
    %c43 = arith.constant 43 : index
    %343 = memref.load %arg2[%c43] : memref<162xf32, #tpu.memory_space<smem>>
    %344 = vector.broadcast %343 : f32 to vector<16x36xf32>
    %345 = arith.mulf %344, %277 : vector<16x36xf32>
    %346 = arith.addf %342, %345 : vector<16x36xf32>
    %c44 = arith.constant 44 : index
    %347 = memref.load %arg2[%c44] : memref<162xf32, #tpu.memory_space<smem>>
    %348 = vector.broadcast %347 : f32 to vector<16x36xf32>
    %349 = arith.mulf %348, %278 : vector<16x36xf32>
    %350 = arith.addf %346, %349 : vector<16x36xf32>
    %c63 = arith.constant 63 : index
    %351 = memref.load %arg2[%c63] : memref<162xf32, #tpu.memory_space<smem>>
    %352 = vector.broadcast %351 : f32 to vector<16x36xf32>
    %353 = arith.mulf %352, %270 : vector<16x36xf32>
    %354 = arith.addf %158, %353 : vector<16x36xf32>
    %c64 = arith.constant 64 : index
    %355 = memref.load %arg2[%c64] : memref<162xf32, #tpu.memory_space<smem>>
    %356 = vector.broadcast %355 : f32 to vector<16x36xf32>
    %357 = arith.mulf %356, %271 : vector<16x36xf32>
    %358 = arith.addf %354, %357 : vector<16x36xf32>
    %c65 = arith.constant 65 : index
    %359 = memref.load %arg2[%c65] : memref<162xf32, #tpu.memory_space<smem>>
    %360 = vector.broadcast %359 : f32 to vector<16x36xf32>
    %361 = arith.mulf %360, %272 : vector<16x36xf32>
    %362 = arith.addf %358, %361 : vector<16x36xf32>
    %c66 = arith.constant 66 : index
    %363 = memref.load %arg2[%c66] : memref<162xf32, #tpu.memory_space<smem>>
    %364 = vector.broadcast %363 : f32 to vector<16x36xf32>
    %365 = arith.mulf %364, %273 : vector<16x36xf32>
    %366 = arith.addf %362, %365 : vector<16x36xf32>
    %c67 = arith.constant 67 : index
    %367 = memref.load %arg2[%c67] : memref<162xf32, #tpu.memory_space<smem>>
    %368 = vector.broadcast %367 : f32 to vector<16x36xf32>
    %369 = arith.mulf %368, %274 : vector<16x36xf32>
    %370 = arith.addf %366, %369 : vector<16x36xf32>
    %c68 = arith.constant 68 : index
    %371 = memref.load %arg2[%c68] : memref<162xf32, #tpu.memory_space<smem>>
    %372 = vector.broadcast %371 : f32 to vector<16x36xf32>
    %373 = arith.mulf %372, %275 : vector<16x36xf32>
    %374 = arith.addf %370, %373 : vector<16x36xf32>
    %c69 = arith.constant 69 : index
    %375 = memref.load %arg2[%c69] : memref<162xf32, #tpu.memory_space<smem>>
    %376 = vector.broadcast %375 : f32 to vector<16x36xf32>
    %377 = arith.mulf %376, %276 : vector<16x36xf32>
    %378 = arith.addf %374, %377 : vector<16x36xf32>
    %c70 = arith.constant 70 : index
    %379 = memref.load %arg2[%c70] : memref<162xf32, #tpu.memory_space<smem>>
    %380 = vector.broadcast %379 : f32 to vector<16x36xf32>
    %381 = arith.mulf %380, %277 : vector<16x36xf32>
    %382 = arith.addf %378, %381 : vector<16x36xf32>
    %c71 = arith.constant 71 : index
    %383 = memref.load %arg2[%c71] : memref<162xf32, #tpu.memory_space<smem>>
    %384 = vector.broadcast %383 : f32 to vector<16x36xf32>
    %385 = arith.mulf %384, %278 : vector<16x36xf32>
    %386 = arith.addf %382, %385 : vector<16x36xf32>
    %c90 = arith.constant 90 : index
    %387 = memref.load %arg2[%c90] : memref<162xf32, #tpu.memory_space<smem>>
    %388 = vector.broadcast %387 : f32 to vector<16x36xf32>
    %389 = arith.mulf %388, %270 : vector<16x36xf32>
    %390 = arith.addf %194, %389 : vector<16x36xf32>
    %c91 = arith.constant 91 : index
    %391 = memref.load %arg2[%c91] : memref<162xf32, #tpu.memory_space<smem>>
    %392 = vector.broadcast %391 : f32 to vector<16x36xf32>
    %393 = arith.mulf %392, %271 : vector<16x36xf32>
    %394 = arith.addf %390, %393 : vector<16x36xf32>
    %c92 = arith.constant 92 : index
    %395 = memref.load %arg2[%c92] : memref<162xf32, #tpu.memory_space<smem>>
    %396 = vector.broadcast %395 : f32 to vector<16x36xf32>
    %397 = arith.mulf %396, %272 : vector<16x36xf32>
    %398 = arith.addf %394, %397 : vector<16x36xf32>
    %c93 = arith.constant 93 : index
    %399 = memref.load %arg2[%c93] : memref<162xf32, #tpu.memory_space<smem>>
    %400 = vector.broadcast %399 : f32 to vector<16x36xf32>
    %401 = arith.mulf %400, %273 : vector<16x36xf32>
    %402 = arith.addf %398, %401 : vector<16x36xf32>
    %c94 = arith.constant 94 : index
    %403 = memref.load %arg2[%c94] : memref<162xf32, #tpu.memory_space<smem>>
    %404 = vector.broadcast %403 : f32 to vector<16x36xf32>
    %405 = arith.mulf %404, %274 : vector<16x36xf32>
    %406 = arith.addf %402, %405 : vector<16x36xf32>
    %c95 = arith.constant 95 : index
    %407 = memref.load %arg2[%c95] : memref<162xf32, #tpu.memory_space<smem>>
    %408 = vector.broadcast %407 : f32 to vector<16x36xf32>
    %409 = arith.mulf %408, %275 : vector<16x36xf32>
    %410 = arith.addf %406, %409 : vector<16x36xf32>
    %c96 = arith.constant 96 : index
    %411 = memref.load %arg2[%c96] : memref<162xf32, #tpu.memory_space<smem>>
    %412 = vector.broadcast %411 : f32 to vector<16x36xf32>
    %413 = arith.mulf %412, %276 : vector<16x36xf32>
    %414 = arith.addf %410, %413 : vector<16x36xf32>
    %c97 = arith.constant 97 : index
    %415 = memref.load %arg2[%c97] : memref<162xf32, #tpu.memory_space<smem>>
    %416 = vector.broadcast %415 : f32 to vector<16x36xf32>
    %417 = arith.mulf %416, %277 : vector<16x36xf32>
    %418 = arith.addf %414, %417 : vector<16x36xf32>
    %c98 = arith.constant 98 : index
    %419 = memref.load %arg2[%c98] : memref<162xf32, #tpu.memory_space<smem>>
    %420 = vector.broadcast %419 : f32 to vector<16x36xf32>
    %421 = arith.mulf %420, %278 : vector<16x36xf32>
    %422 = arith.addf %418, %421 : vector<16x36xf32>
    %c117 = arith.constant 117 : index
    %423 = memref.load %arg2[%c117] : memref<162xf32, #tpu.memory_space<smem>>
    %424 = vector.broadcast %423 : f32 to vector<16x36xf32>
    %425 = arith.mulf %424, %270 : vector<16x36xf32>
    %426 = arith.addf %230, %425 : vector<16x36xf32>
    %c118 = arith.constant 118 : index
    %427 = memref.load %arg2[%c118] : memref<162xf32, #tpu.memory_space<smem>>
    %428 = vector.broadcast %427 : f32 to vector<16x36xf32>
    %429 = arith.mulf %428, %271 : vector<16x36xf32>
    %430 = arith.addf %426, %429 : vector<16x36xf32>
    %c119 = arith.constant 119 : index
    %431 = memref.load %arg2[%c119] : memref<162xf32, #tpu.memory_space<smem>>
    %432 = vector.broadcast %431 : f32 to vector<16x36xf32>
    %433 = arith.mulf %432, %272 : vector<16x36xf32>
    %434 = arith.addf %430, %433 : vector<16x36xf32>
    %c120 = arith.constant 120 : index
    %435 = memref.load %arg2[%c120] : memref<162xf32, #tpu.memory_space<smem>>
    %436 = vector.broadcast %435 : f32 to vector<16x36xf32>
    %437 = arith.mulf %436, %273 : vector<16x36xf32>
    %438 = arith.addf %434, %437 : vector<16x36xf32>
    %c121 = arith.constant 121 : index
    %439 = memref.load %arg2[%c121] : memref<162xf32, #tpu.memory_space<smem>>
    %440 = vector.broadcast %439 : f32 to vector<16x36xf32>
    %441 = arith.mulf %440, %274 : vector<16x36xf32>
    %442 = arith.addf %438, %441 : vector<16x36xf32>
    %c122 = arith.constant 122 : index
    %443 = memref.load %arg2[%c122] : memref<162xf32, #tpu.memory_space<smem>>
    %444 = vector.broadcast %443 : f32 to vector<16x36xf32>
    %445 = arith.mulf %444, %275 : vector<16x36xf32>
    %446 = arith.addf %442, %445 : vector<16x36xf32>
    %c123 = arith.constant 123 : index
    %447 = memref.load %arg2[%c123] : memref<162xf32, #tpu.memory_space<smem>>
    %448 = vector.broadcast %447 : f32 to vector<16x36xf32>
    %449 = arith.mulf %448, %276 : vector<16x36xf32>
    %450 = arith.addf %446, %449 : vector<16x36xf32>
    %c124 = arith.constant 124 : index
    %451 = memref.load %arg2[%c124] : memref<162xf32, #tpu.memory_space<smem>>
    %452 = vector.broadcast %451 : f32 to vector<16x36xf32>
    %453 = arith.mulf %452, %277 : vector<16x36xf32>
    %454 = arith.addf %450, %453 : vector<16x36xf32>
    %c125 = arith.constant 125 : index
    %455 = memref.load %arg2[%c125] : memref<162xf32, #tpu.memory_space<smem>>
    %456 = vector.broadcast %455 : f32 to vector<16x36xf32>
    %457 = arith.mulf %456, %278 : vector<16x36xf32>
    %458 = arith.addf %454, %457 : vector<16x36xf32>
    %c144 = arith.constant 144 : index
    %459 = memref.load %arg2[%c144] : memref<162xf32, #tpu.memory_space<smem>>
    %460 = vector.broadcast %459 : f32 to vector<16x36xf32>
    %461 = arith.mulf %460, %270 : vector<16x36xf32>
    %462 = arith.addf %266, %461 : vector<16x36xf32>
    %c145 = arith.constant 145 : index
    %463 = memref.load %arg2[%c145] : memref<162xf32, #tpu.memory_space<smem>>
    %464 = vector.broadcast %463 : f32 to vector<16x36xf32>
    %465 = arith.mulf %464, %271 : vector<16x36xf32>
    %466 = arith.addf %462, %465 : vector<16x36xf32>
    %c146 = arith.constant 146 : index
    %467 = memref.load %arg2[%c146] : memref<162xf32, #tpu.memory_space<smem>>
    %468 = vector.broadcast %467 : f32 to vector<16x36xf32>
    %469 = arith.mulf %468, %272 : vector<16x36xf32>
    %470 = arith.addf %466, %469 : vector<16x36xf32>
    %c147 = arith.constant 147 : index
    %471 = memref.load %arg2[%c147] : memref<162xf32, #tpu.memory_space<smem>>
    %472 = vector.broadcast %471 : f32 to vector<16x36xf32>
    %473 = arith.mulf %472, %273 : vector<16x36xf32>
    %474 = arith.addf %470, %473 : vector<16x36xf32>
    %c148 = arith.constant 148 : index
    %475 = memref.load %arg2[%c148] : memref<162xf32, #tpu.memory_space<smem>>
    %476 = vector.broadcast %475 : f32 to vector<16x36xf32>
    %477 = arith.mulf %476, %274 : vector<16x36xf32>
    %478 = arith.addf %474, %477 : vector<16x36xf32>
    %c149 = arith.constant 149 : index
    %479 = memref.load %arg2[%c149] : memref<162xf32, #tpu.memory_space<smem>>
    %480 = vector.broadcast %479 : f32 to vector<16x36xf32>
    %481 = arith.mulf %480, %275 : vector<16x36xf32>
    %482 = arith.addf %478, %481 : vector<16x36xf32>
    %c150 = arith.constant 150 : index
    %483 = memref.load %arg2[%c150] : memref<162xf32, #tpu.memory_space<smem>>
    %484 = vector.broadcast %483 : f32 to vector<16x36xf32>
    %485 = arith.mulf %484, %276 : vector<16x36xf32>
    %486 = arith.addf %482, %485 : vector<16x36xf32>
    %c151 = arith.constant 151 : index
    %487 = memref.load %arg2[%c151] : memref<162xf32, #tpu.memory_space<smem>>
    %488 = vector.broadcast %487 : f32 to vector<16x36xf32>
    %489 = arith.mulf %488, %277 : vector<16x36xf32>
    %490 = arith.addf %486, %489 : vector<16x36xf32>
    %c152 = arith.constant 152 : index
    %491 = memref.load %arg2[%c152] : memref<162xf32, #tpu.memory_space<smem>>
    %492 = vector.broadcast %491 : f32 to vector<16x36xf32>
    %493 = arith.mulf %492, %278 : vector<16x36xf32>
    %494 = arith.addf %490, %493 : vector<16x36xf32>
    %495 = vector.extract_strided_slice %26 {offsets = [0, 0], sizes = [18, 36], strides = [1, 1]} : vector<18x38xf32> to vector<18x36xf32>
    %496 = vector.extract_strided_slice %26 {offsets = [0, 1], sizes = [18, 36], strides = [1, 1]} : vector<18x38xf32> to vector<18x36xf32>
    %497 = vector.extract_strided_slice %26 {offsets = [0, 2], sizes = [18, 36], strides = [1, 1]} : vector<18x38xf32> to vector<18x36xf32>
    %498 = vector.extract_strided_slice %495 {offsets = [0, 0], sizes = [16, 36], strides = [1, 1]} : vector<18x36xf32> to vector<16x36xf32>
    %499 = vector.extract_strided_slice %496 {offsets = [0, 0], sizes = [16, 36], strides = [1, 1]} : vector<18x36xf32> to vector<16x36xf32>
    %500 = vector.extract_strided_slice %497 {offsets = [0, 0], sizes = [16, 36], strides = [1, 1]} : vector<18x36xf32> to vector<16x36xf32>
    %501 = vector.extract_strided_slice %495 {offsets = [1, 0], sizes = [16, 36], strides = [1, 1]} : vector<18x36xf32> to vector<16x36xf32>
    %502 = vector.extract_strided_slice %496 {offsets = [1, 0], sizes = [16, 36], strides = [1, 1]} : vector<18x36xf32> to vector<16x36xf32>
    %503 = vector.extract_strided_slice %497 {offsets = [1, 0], sizes = [16, 36], strides = [1, 1]} : vector<18x36xf32> to vector<16x36xf32>
    %504 = vector.extract_strided_slice %495 {offsets = [2, 0], sizes = [16, 36], strides = [1, 1]} : vector<18x36xf32> to vector<16x36xf32>
    %505 = vector.extract_strided_slice %496 {offsets = [2, 0], sizes = [16, 36], strides = [1, 1]} : vector<18x36xf32> to vector<16x36xf32>
    %506 = vector.extract_strided_slice %497 {offsets = [2, 0], sizes = [16, 36], strides = [1, 1]} : vector<18x36xf32> to vector<16x36xf32>
    %c18 = arith.constant 18 : index
    %507 = memref.load %arg2[%c18] : memref<162xf32, #tpu.memory_space<smem>>
    %508 = vector.broadcast %507 : f32 to vector<16x36xf32>
    %509 = arith.mulf %508, %498 : vector<16x36xf32>
    %510 = arith.addf %314, %509 : vector<16x36xf32>
    %c19 = arith.constant 19 : index
    %511 = memref.load %arg2[%c19] : memref<162xf32, #tpu.memory_space<smem>>
    %512 = vector.broadcast %511 : f32 to vector<16x36xf32>
    %513 = arith.mulf %512, %499 : vector<16x36xf32>
    %514 = arith.addf %510, %513 : vector<16x36xf32>
    %c20 = arith.constant 20 : index
    %515 = memref.load %arg2[%c20] : memref<162xf32, #tpu.memory_space<smem>>
    %516 = vector.broadcast %515 : f32 to vector<16x36xf32>
    %517 = arith.mulf %516, %500 : vector<16x36xf32>
    %518 = arith.addf %514, %517 : vector<16x36xf32>
    %c21 = arith.constant 21 : index
    %519 = memref.load %arg2[%c21] : memref<162xf32, #tpu.memory_space<smem>>
    %520 = vector.broadcast %519 : f32 to vector<16x36xf32>
    %521 = arith.mulf %520, %501 : vector<16x36xf32>
    %522 = arith.addf %518, %521 : vector<16x36xf32>
    %c22 = arith.constant 22 : index
    %523 = memref.load %arg2[%c22] : memref<162xf32, #tpu.memory_space<smem>>
    %524 = vector.broadcast %523 : f32 to vector<16x36xf32>
    %525 = arith.mulf %524, %502 : vector<16x36xf32>
    %526 = arith.addf %522, %525 : vector<16x36xf32>
    %c23 = arith.constant 23 : index
    %527 = memref.load %arg2[%c23] : memref<162xf32, #tpu.memory_space<smem>>
    %528 = vector.broadcast %527 : f32 to vector<16x36xf32>
    %529 = arith.mulf %528, %503 : vector<16x36xf32>
    %530 = arith.addf %526, %529 : vector<16x36xf32>
    %c24 = arith.constant 24 : index
    %531 = memref.load %arg2[%c24] : memref<162xf32, #tpu.memory_space<smem>>
    %532 = vector.broadcast %531 : f32 to vector<16x36xf32>
    %533 = arith.mulf %532, %504 : vector<16x36xf32>
    %534 = arith.addf %530, %533 : vector<16x36xf32>
    %c25 = arith.constant 25 : index
    %535 = memref.load %arg2[%c25] : memref<162xf32, #tpu.memory_space<smem>>
    %536 = vector.broadcast %535 : f32 to vector<16x36xf32>
    %537 = arith.mulf %536, %505 : vector<16x36xf32>
    %538 = arith.addf %534, %537 : vector<16x36xf32>
    %c26 = arith.constant 26 : index
    %539 = memref.load %arg2[%c26] : memref<162xf32, #tpu.memory_space<smem>>
    %540 = vector.broadcast %539 : f32 to vector<16x36xf32>
    %541 = arith.mulf %540, %506 : vector<16x36xf32>
    %542 = arith.addf %538, %541 : vector<16x36xf32>
    %c45 = arith.constant 45 : index
    %543 = memref.load %arg2[%c45] : memref<162xf32, #tpu.memory_space<smem>>
    %544 = vector.broadcast %543 : f32 to vector<16x36xf32>
    %545 = arith.mulf %544, %498 : vector<16x36xf32>
    %546 = arith.addf %350, %545 : vector<16x36xf32>
    %c46 = arith.constant 46 : index
    %547 = memref.load %arg2[%c46] : memref<162xf32, #tpu.memory_space<smem>>
    %548 = vector.broadcast %547 : f32 to vector<16x36xf32>
    %549 = arith.mulf %548, %499 : vector<16x36xf32>
    %550 = arith.addf %546, %549 : vector<16x36xf32>
    %c47 = arith.constant 47 : index
    %551 = memref.load %arg2[%c47] : memref<162xf32, #tpu.memory_space<smem>>
    %552 = vector.broadcast %551 : f32 to vector<16x36xf32>
    %553 = arith.mulf %552, %500 : vector<16x36xf32>
    %554 = arith.addf %550, %553 : vector<16x36xf32>
    %c48 = arith.constant 48 : index
    %555 = memref.load %arg2[%c48] : memref<162xf32, #tpu.memory_space<smem>>
    %556 = vector.broadcast %555 : f32 to vector<16x36xf32>
    %557 = arith.mulf %556, %501 : vector<16x36xf32>
    %558 = arith.addf %554, %557 : vector<16x36xf32>
    %c49 = arith.constant 49 : index
    %559 = memref.load %arg2[%c49] : memref<162xf32, #tpu.memory_space<smem>>
    %560 = vector.broadcast %559 : f32 to vector<16x36xf32>
    %561 = arith.mulf %560, %502 : vector<16x36xf32>
    %562 = arith.addf %558, %561 : vector<16x36xf32>
    %c50 = arith.constant 50 : index
    %563 = memref.load %arg2[%c50] : memref<162xf32, #tpu.memory_space<smem>>
    %564 = vector.broadcast %563 : f32 to vector<16x36xf32>
    %565 = arith.mulf %564, %503 : vector<16x36xf32>
    %566 = arith.addf %562, %565 : vector<16x36xf32>
    %c51 = arith.constant 51 : index
    %567 = memref.load %arg2[%c51] : memref<162xf32, #tpu.memory_space<smem>>
    %568 = vector.broadcast %567 : f32 to vector<16x36xf32>
    %569 = arith.mulf %568, %504 : vector<16x36xf32>
    %570 = arith.addf %566, %569 : vector<16x36xf32>
    %c52 = arith.constant 52 : index
    %571 = memref.load %arg2[%c52] : memref<162xf32, #tpu.memory_space<smem>>
    %572 = vector.broadcast %571 : f32 to vector<16x36xf32>
    %573 = arith.mulf %572, %505 : vector<16x36xf32>
    %574 = arith.addf %570, %573 : vector<16x36xf32>
    %c53 = arith.constant 53 : index
    %575 = memref.load %arg2[%c53] : memref<162xf32, #tpu.memory_space<smem>>
    %576 = vector.broadcast %575 : f32 to vector<16x36xf32>
    %577 = arith.mulf %576, %506 : vector<16x36xf32>
    %578 = arith.addf %574, %577 : vector<16x36xf32>
    %c72 = arith.constant 72 : index
    %579 = memref.load %arg2[%c72] : memref<162xf32, #tpu.memory_space<smem>>
    %580 = vector.broadcast %579 : f32 to vector<16x36xf32>
    %581 = arith.mulf %580, %498 : vector<16x36xf32>
    %582 = arith.addf %386, %581 : vector<16x36xf32>
    %c73 = arith.constant 73 : index
    %583 = memref.load %arg2[%c73] : memref<162xf32, #tpu.memory_space<smem>>
    %584 = vector.broadcast %583 : f32 to vector<16x36xf32>
    %585 = arith.mulf %584, %499 : vector<16x36xf32>
    %586 = arith.addf %582, %585 : vector<16x36xf32>
    %c74 = arith.constant 74 : index
    %587 = memref.load %arg2[%c74] : memref<162xf32, #tpu.memory_space<smem>>
    %588 = vector.broadcast %587 : f32 to vector<16x36xf32>
    %589 = arith.mulf %588, %500 : vector<16x36xf32>
    %590 = arith.addf %586, %589 : vector<16x36xf32>
    %c75 = arith.constant 75 : index
    %591 = memref.load %arg2[%c75] : memref<162xf32, #tpu.memory_space<smem>>
    %592 = vector.broadcast %591 : f32 to vector<16x36xf32>
    %593 = arith.mulf %592, %501 : vector<16x36xf32>
    %594 = arith.addf %590, %593 : vector<16x36xf32>
    %c76 = arith.constant 76 : index
    %595 = memref.load %arg2[%c76] : memref<162xf32, #tpu.memory_space<smem>>
    %596 = vector.broadcast %595 : f32 to vector<16x36xf32>
    %597 = arith.mulf %596, %502 : vector<16x36xf32>
    %598 = arith.addf %594, %597 : vector<16x36xf32>
    %c77 = arith.constant 77 : index
    %599 = memref.load %arg2[%c77] : memref<162xf32, #tpu.memory_space<smem>>
    %600 = vector.broadcast %599 : f32 to vector<16x36xf32>
    %601 = arith.mulf %600, %503 : vector<16x36xf32>
    %602 = arith.addf %598, %601 : vector<16x36xf32>
    %c78 = arith.constant 78 : index
    %603 = memref.load %arg2[%c78] : memref<162xf32, #tpu.memory_space<smem>>
    %604 = vector.broadcast %603 : f32 to vector<16x36xf32>
    %605 = arith.mulf %604, %504 : vector<16x36xf32>
    %606 = arith.addf %602, %605 : vector<16x36xf32>
    %c79 = arith.constant 79 : index
    %607 = memref.load %arg2[%c79] : memref<162xf32, #tpu.memory_space<smem>>
    %608 = vector.broadcast %607 : f32 to vector<16x36xf32>
    %609 = arith.mulf %608, %505 : vector<16x36xf32>
    %610 = arith.addf %606, %609 : vector<16x36xf32>
    %c80 = arith.constant 80 : index
    %611 = memref.load %arg2[%c80] : memref<162xf32, #tpu.memory_space<smem>>
    %612 = vector.broadcast %611 : f32 to vector<16x36xf32>
    %613 = arith.mulf %612, %506 : vector<16x36xf32>
    %614 = arith.addf %610, %613 : vector<16x36xf32>
    %c99 = arith.constant 99 : index
    %615 = memref.load %arg2[%c99] : memref<162xf32, #tpu.memory_space<smem>>
    %616 = vector.broadcast %615 : f32 to vector<16x36xf32>
    %617 = arith.mulf %616, %498 : vector<16x36xf32>
    %618 = arith.addf %422, %617 : vector<16x36xf32>
    %c100 = arith.constant 100 : index
    %619 = memref.load %arg2[%c100] : memref<162xf32, #tpu.memory_space<smem>>
    %620 = vector.broadcast %619 : f32 to vector<16x36xf32>
    %621 = arith.mulf %620, %499 : vector<16x36xf32>
    %622 = arith.addf %618, %621 : vector<16x36xf32>
    %c101 = arith.constant 101 : index
    %623 = memref.load %arg2[%c101] : memref<162xf32, #tpu.memory_space<smem>>
    %624 = vector.broadcast %623 : f32 to vector<16x36xf32>
    %625 = arith.mulf %624, %500 : vector<16x36xf32>
    %626 = arith.addf %622, %625 : vector<16x36xf32>
    %c102 = arith.constant 102 : index
    %627 = memref.load %arg2[%c102] : memref<162xf32, #tpu.memory_space<smem>>
    %628 = vector.broadcast %627 : f32 to vector<16x36xf32>
    %629 = arith.mulf %628, %501 : vector<16x36xf32>
    %630 = arith.addf %626, %629 : vector<16x36xf32>
    %c103 = arith.constant 103 : index
    %631 = memref.load %arg2[%c103] : memref<162xf32, #tpu.memory_space<smem>>
    %632 = vector.broadcast %631 : f32 to vector<16x36xf32>
    %633 = arith.mulf %632, %502 : vector<16x36xf32>
    %634 = arith.addf %630, %633 : vector<16x36xf32>
    %c104 = arith.constant 104 : index
    %635 = memref.load %arg2[%c104] : memref<162xf32, #tpu.memory_space<smem>>
    %636 = vector.broadcast %635 : f32 to vector<16x36xf32>
    %637 = arith.mulf %636, %503 : vector<16x36xf32>
    %638 = arith.addf %634, %637 : vector<16x36xf32>
    %c105 = arith.constant 105 : index
    %639 = memref.load %arg2[%c105] : memref<162xf32, #tpu.memory_space<smem>>
    %640 = vector.broadcast %639 : f32 to vector<16x36xf32>
    %641 = arith.mulf %640, %504 : vector<16x36xf32>
    %642 = arith.addf %638, %641 : vector<16x36xf32>
    %c106 = arith.constant 106 : index
    %643 = memref.load %arg2[%c106] : memref<162xf32, #tpu.memory_space<smem>>
    %644 = vector.broadcast %643 : f32 to vector<16x36xf32>
    %645 = arith.mulf %644, %505 : vector<16x36xf32>
    %646 = arith.addf %642, %645 : vector<16x36xf32>
    %c107 = arith.constant 107 : index
    %647 = memref.load %arg2[%c107] : memref<162xf32, #tpu.memory_space<smem>>
    %648 = vector.broadcast %647 : f32 to vector<16x36xf32>
    %649 = arith.mulf %648, %506 : vector<16x36xf32>
    %650 = arith.addf %646, %649 : vector<16x36xf32>
    %c126 = arith.constant 126 : index
    %651 = memref.load %arg2[%c126] : memref<162xf32, #tpu.memory_space<smem>>
    %652 = vector.broadcast %651 : f32 to vector<16x36xf32>
    %653 = arith.mulf %652, %498 : vector<16x36xf32>
    %654 = arith.addf %458, %653 : vector<16x36xf32>
    %c127 = arith.constant 127 : index
    %655 = memref.load %arg2[%c127] : memref<162xf32, #tpu.memory_space<smem>>
    %656 = vector.broadcast %655 : f32 to vector<16x36xf32>
    %657 = arith.mulf %656, %499 : vector<16x36xf32>
    %658 = arith.addf %654, %657 : vector<16x36xf32>
    %c128 = arith.constant 128 : index
    %659 = memref.load %arg2[%c128] : memref<162xf32, #tpu.memory_space<smem>>
    %660 = vector.broadcast %659 : f32 to vector<16x36xf32>
    %661 = arith.mulf %660, %500 : vector<16x36xf32>
    %662 = arith.addf %658, %661 : vector<16x36xf32>
    %c129 = arith.constant 129 : index
    %663 = memref.load %arg2[%c129] : memref<162xf32, #tpu.memory_space<smem>>
    %664 = vector.broadcast %663 : f32 to vector<16x36xf32>
    %665 = arith.mulf %664, %501 : vector<16x36xf32>
    %666 = arith.addf %662, %665 : vector<16x36xf32>
    %c130 = arith.constant 130 : index
    %667 = memref.load %arg2[%c130] : memref<162xf32, #tpu.memory_space<smem>>
    %668 = vector.broadcast %667 : f32 to vector<16x36xf32>
    %669 = arith.mulf %668, %502 : vector<16x36xf32>
    %670 = arith.addf %666, %669 : vector<16x36xf32>
    %c131 = arith.constant 131 : index
    %671 = memref.load %arg2[%c131] : memref<162xf32, #tpu.memory_space<smem>>
    %672 = vector.broadcast %671 : f32 to vector<16x36xf32>
    %673 = arith.mulf %672, %503 : vector<16x36xf32>
    %674 = arith.addf %670, %673 : vector<16x36xf32>
    %c132 = arith.constant 132 : index
    %675 = memref.load %arg2[%c132] : memref<162xf32, #tpu.memory_space<smem>>
    %676 = vector.broadcast %675 : f32 to vector<16x36xf32>
    %677 = arith.mulf %676, %504 : vector<16x36xf32>
    %678 = arith.addf %674, %677 : vector<16x36xf32>
    %c133 = arith.constant 133 : index
    %679 = memref.load %arg2[%c133] : memref<162xf32, #tpu.memory_space<smem>>
    %680 = vector.broadcast %679 : f32 to vector<16x36xf32>
    %681 = arith.mulf %680, %505 : vector<16x36xf32>
    %682 = arith.addf %678, %681 : vector<16x36xf32>
    %c134 = arith.constant 134 : index
    %683 = memref.load %arg2[%c134] : memref<162xf32, #tpu.memory_space<smem>>
    %684 = vector.broadcast %683 : f32 to vector<16x36xf32>
    %685 = arith.mulf %684, %506 : vector<16x36xf32>
    %686 = arith.addf %682, %685 : vector<16x36xf32>
    %c153 = arith.constant 153 : index
    %687 = memref.load %arg2[%c153] : memref<162xf32, #tpu.memory_space<smem>>
    %688 = vector.broadcast %687 : f32 to vector<16x36xf32>
    %689 = arith.mulf %688, %498 : vector<16x36xf32>
    %690 = arith.addf %494, %689 : vector<16x36xf32>
    %c154 = arith.constant 154 : index
    %691 = memref.load %arg2[%c154] : memref<162xf32, #tpu.memory_space<smem>>
    %692 = vector.broadcast %691 : f32 to vector<16x36xf32>
    %693 = arith.mulf %692, %499 : vector<16x36xf32>
    %694 = arith.addf %690, %693 : vector<16x36xf32>
    %c155 = arith.constant 155 : index
    %695 = memref.load %arg2[%c155] : memref<162xf32, #tpu.memory_space<smem>>
    %696 = vector.broadcast %695 : f32 to vector<16x36xf32>
    %697 = arith.mulf %696, %500 : vector<16x36xf32>
    %698 = arith.addf %694, %697 : vector<16x36xf32>
    %c156 = arith.constant 156 : index
    %699 = memref.load %arg2[%c156] : memref<162xf32, #tpu.memory_space<smem>>
    %700 = vector.broadcast %699 : f32 to vector<16x36xf32>
    %701 = arith.mulf %700, %501 : vector<16x36xf32>
    %702 = arith.addf %698, %701 : vector<16x36xf32>
    %c157 = arith.constant 157 : index
    %703 = memref.load %arg2[%c157] : memref<162xf32, #tpu.memory_space<smem>>
    %704 = vector.broadcast %703 : f32 to vector<16x36xf32>
    %705 = arith.mulf %704, %502 : vector<16x36xf32>
    %706 = arith.addf %702, %705 : vector<16x36xf32>
    %c158 = arith.constant 158 : index
    %707 = memref.load %arg2[%c158] : memref<162xf32, #tpu.memory_space<smem>>
    %708 = vector.broadcast %707 : f32 to vector<16x36xf32>
    %709 = arith.mulf %708, %503 : vector<16x36xf32>
    %710 = arith.addf %706, %709 : vector<16x36xf32>
    %c159 = arith.constant 159 : index
    %711 = memref.load %arg2[%c159] : memref<162xf32, #tpu.memory_space<smem>>
    %712 = vector.broadcast %711 : f32 to vector<16x36xf32>
    %713 = arith.mulf %712, %504 : vector<16x36xf32>
    %714 = arith.addf %710, %713 : vector<16x36xf32>
    %c160 = arith.constant 160 : index
    %715 = memref.load %arg2[%c160] : memref<162xf32, #tpu.memory_space<smem>>
    %716 = vector.broadcast %715 : f32 to vector<16x36xf32>
    %717 = arith.mulf %716, %505 : vector<16x36xf32>
    %718 = arith.addf %714, %717 : vector<16x36xf32>
    %c161 = arith.constant 161 : index
    %719 = memref.load %arg2[%c161] : memref<162xf32, #tpu.memory_space<smem>>
    %720 = vector.broadcast %719 : f32 to vector<16x36xf32>
    %721 = arith.mulf %720, %506 : vector<16x36xf32>
    %722 = arith.addf %718, %721 : vector<16x36xf32>
    %723 = arith.mulf %542, %2 : vector<16x36xf32>
    %724 = tpu.concatenate %0, %723, %0 in 1 : vector<16x1xf32>, vector<16x36xf32>, vector<16x1xf32> -> vector<16x38xf32>
    %cst_34 = arith.constant 0.000000e+00 : f32
    %725 = vector.broadcast %cst_34 : f32 to vector<1x38xf32>
    %726 = tpu.concatenate %725, %724, %725 in 0 : vector<1x38xf32>, vector<16x38xf32>, vector<1x38xf32> -> vector<18x38xf32>
    %727 = arith.mulf %578, %2 : vector<16x36xf32>
    %728 = tpu.concatenate %0, %727, %0 in 1 : vector<16x1xf32>, vector<16x36xf32>, vector<16x1xf32> -> vector<16x38xf32>
    %cst_35 = arith.constant 0.000000e+00 : f32
    %729 = vector.broadcast %cst_35 : f32 to vector<1x38xf32>
    %730 = tpu.concatenate %729, %728, %729 in 0 : vector<1x38xf32>, vector<16x38xf32>, vector<1x38xf32> -> vector<18x38xf32>
    %731 = arith.mulf %614, %2 : vector<16x36xf32>
    %732 = tpu.concatenate %0, %731, %0 in 1 : vector<16x1xf32>, vector<16x36xf32>, vector<16x1xf32> -> vector<16x38xf32>
    %cst_36 = arith.constant 0.000000e+00 : f32
    %733 = vector.broadcast %cst_36 : f32 to vector<1x38xf32>
    %734 = tpu.concatenate %733, %732, %733 in 0 : vector<1x38xf32>, vector<16x38xf32>, vector<1x38xf32> -> vector<18x38xf32>
    %735 = arith.mulf %650, %2 : vector<16x36xf32>
    %736 = tpu.concatenate %0, %735, %0 in 1 : vector<16x1xf32>, vector<16x36xf32>, vector<16x1xf32> -> vector<16x38xf32>
    %cst_37 = arith.constant 0.000000e+00 : f32
    %737 = vector.broadcast %cst_37 : f32 to vector<1x38xf32>
    %738 = tpu.concatenate %737, %736, %737 in 0 : vector<1x38xf32>, vector<16x38xf32>, vector<1x38xf32> -> vector<18x38xf32>
    %739 = arith.mulf %686, %2 : vector<16x36xf32>
    %740 = tpu.concatenate %0, %739, %0 in 1 : vector<16x1xf32>, vector<16x36xf32>, vector<16x1xf32> -> vector<16x38xf32>
    %cst_38 = arith.constant 0.000000e+00 : f32
    %741 = vector.broadcast %cst_38 : f32 to vector<1x38xf32>
    %742 = tpu.concatenate %741, %740, %741 in 0 : vector<1x38xf32>, vector<16x38xf32>, vector<1x38xf32> -> vector<18x38xf32>
    %743 = arith.mulf %722, %2 : vector<16x36xf32>
    %744 = tpu.concatenate %0, %743, %0 in 1 : vector<16x1xf32>, vector<16x36xf32>, vector<16x1xf32> -> vector<16x38xf32>
    %cst_39 = arith.constant 0.000000e+00 : f32
    %745 = vector.broadcast %cst_39 : f32 to vector<1x38xf32>
    %746 = tpu.concatenate %745, %744, %745 in 0 : vector<1x38xf32>, vector<16x38xf32>, vector<1x38xf32> -> vector<18x38xf32>
    %c0_40 = arith.constant 0 : index
    %747 = memref.load %arg5[%c0_40] : memref<6xf32, #tpu.memory_space<smem>>
    %748 = vector.broadcast %747 : f32 to vector<16x36xf32>
    %c1_41 = arith.constant 1 : index
    %749 = memref.load %arg5[%c1_41] : memref<6xf32, #tpu.memory_space<smem>>
    %750 = vector.broadcast %749 : f32 to vector<16x36xf32>
    %c2_42 = arith.constant 2 : index
    %751 = memref.load %arg5[%c2_42] : memref<6xf32, #tpu.memory_space<smem>>
    %752 = vector.broadcast %751 : f32 to vector<16x36xf32>
    %c3_43 = arith.constant 3 : index
    %753 = memref.load %arg5[%c3_43] : memref<6xf32, #tpu.memory_space<smem>>
    %754 = vector.broadcast %753 : f32 to vector<16x36xf32>
    %c4_44 = arith.constant 4 : index
    %755 = memref.load %arg5[%c4_44] : memref<6xf32, #tpu.memory_space<smem>>
    %756 = vector.broadcast %755 : f32 to vector<16x36xf32>
    %c5_45 = arith.constant 5 : index
    %757 = memref.load %arg5[%c5_45] : memref<6xf32, #tpu.memory_space<smem>>
    %758 = vector.broadcast %757 : f32 to vector<16x36xf32>
    %759 = vector.extract_strided_slice %726 {offsets = [0, 0], sizes = [18, 36], strides = [1, 1]} : vector<18x38xf32> to vector<18x36xf32>
    %760 = vector.extract_strided_slice %726 {offsets = [0, 1], sizes = [18, 36], strides = [1, 1]} : vector<18x38xf32> to vector<18x36xf32>
    %761 = vector.extract_strided_slice %726 {offsets = [0, 2], sizes = [18, 36], strides = [1, 1]} : vector<18x38xf32> to vector<18x36xf32>
    %762 = vector.extract_strided_slice %759 {offsets = [0, 0], sizes = [16, 36], strides = [1, 1]} : vector<18x36xf32> to vector<16x36xf32>
    %763 = vector.extract_strided_slice %760 {offsets = [0, 0], sizes = [16, 36], strides = [1, 1]} : vector<18x36xf32> to vector<16x36xf32>
    %764 = vector.extract_strided_slice %761 {offsets = [0, 0], sizes = [16, 36], strides = [1, 1]} : vector<18x36xf32> to vector<16x36xf32>
    %765 = vector.extract_strided_slice %759 {offsets = [1, 0], sizes = [16, 36], strides = [1, 1]} : vector<18x36xf32> to vector<16x36xf32>
    %766 = vector.extract_strided_slice %760 {offsets = [1, 0], sizes = [16, 36], strides = [1, 1]} : vector<18x36xf32> to vector<16x36xf32>
    %767 = vector.extract_strided_slice %761 {offsets = [1, 0], sizes = [16, 36], strides = [1, 1]} : vector<18x36xf32> to vector<16x36xf32>
    %768 = vector.extract_strided_slice %759 {offsets = [2, 0], sizes = [16, 36], strides = [1, 1]} : vector<18x36xf32> to vector<16x36xf32>
    %769 = vector.extract_strided_slice %760 {offsets = [2, 0], sizes = [16, 36], strides = [1, 1]} : vector<18x36xf32> to vector<16x36xf32>
    %770 = vector.extract_strided_slice %761 {offsets = [2, 0], sizes = [16, 36], strides = [1, 1]} : vector<18x36xf32> to vector<16x36xf32>
    %c0_46 = arith.constant 0 : index
    %771 = memref.load %arg4[%c0_46] : memref<324xf32, #tpu.memory_space<smem>>
    %772 = vector.broadcast %771 : f32 to vector<16x36xf32>
    %773 = arith.mulf %772, %762 : vector<16x36xf32>
    %774 = arith.addf %748, %773 : vector<16x36xf32>
    %c1_47 = arith.constant 1 : index
    %775 = memref.load %arg4[%c1_47] : memref<324xf32, #tpu.memory_space<smem>>
    %776 = vector.broadcast %775 : f32 to vector<16x36xf32>
    %777 = arith.mulf %776, %763 : vector<16x36xf32>
    %778 = arith.addf %774, %777 : vector<16x36xf32>
    %c2_48 = arith.constant 2 : index
    %779 = memref.load %arg4[%c2_48] : memref<324xf32, #tpu.memory_space<smem>>
    %780 = vector.broadcast %779 : f32 to vector<16x36xf32>
    %781 = arith.mulf %780, %764 : vector<16x36xf32>
    %782 = arith.addf %778, %781 : vector<16x36xf32>
    %c3_49 = arith.constant 3 : index
    %783 = memref.load %arg4[%c3_49] : memref<324xf32, #tpu.memory_space<smem>>
    %784 = vector.broadcast %783 : f32 to vector<16x36xf32>
    %785 = arith.mulf %784, %765 : vector<16x36xf32>
    %786 = arith.addf %782, %785 : vector<16x36xf32>
    %c4_50 = arith.constant 4 : index
    %787 = memref.load %arg4[%c4_50] : memref<324xf32, #tpu.memory_space<smem>>
    %788 = vector.broadcast %787 : f32 to vector<16x36xf32>
    %789 = arith.mulf %788, %766 : vector<16x36xf32>
    %790 = arith.addf %786, %789 : vector<16x36xf32>
    %c5_51 = arith.constant 5 : index
    %791 = memref.load %arg4[%c5_51] : memref<324xf32, #tpu.memory_space<smem>>
    %792 = vector.broadcast %791 : f32 to vector<16x36xf32>
    %793 = arith.mulf %792, %767 : vector<16x36xf32>
    %794 = arith.addf %790, %793 : vector<16x36xf32>
    %c6_52 = arith.constant 6 : index
    %795 = memref.load %arg4[%c6_52] : memref<324xf32, #tpu.memory_space<smem>>
    %796 = vector.broadcast %795 : f32 to vector<16x36xf32>
    %797 = arith.mulf %796, %768 : vector<16x36xf32>
    %798 = arith.addf %794, %797 : vector<16x36xf32>
    %c7_53 = arith.constant 7 : index
    %799 = memref.load %arg4[%c7_53] : memref<324xf32, #tpu.memory_space<smem>>
    %800 = vector.broadcast %799 : f32 to vector<16x36xf32>
    %801 = arith.mulf %800, %769 : vector<16x36xf32>
    %802 = arith.addf %798, %801 : vector<16x36xf32>
    %c8_54 = arith.constant 8 : index
    %803 = memref.load %arg4[%c8_54] : memref<324xf32, #tpu.memory_space<smem>>
    %804 = vector.broadcast %803 : f32 to vector<16x36xf32>
    %805 = arith.mulf %804, %770 : vector<16x36xf32>
    %806 = arith.addf %802, %805 : vector<16x36xf32>
    %c54_55 = arith.constant 54 : index
    %807 = memref.load %arg4[%c54_55] : memref<324xf32, #tpu.memory_space<smem>>
    %808 = vector.broadcast %807 : f32 to vector<16x36xf32>
    %809 = arith.mulf %808, %762 : vector<16x36xf32>
    %810 = arith.addf %750, %809 : vector<16x36xf32>
    %c55_56 = arith.constant 55 : index
    %811 = memref.load %arg4[%c55_56] : memref<324xf32, #tpu.memory_space<smem>>
    %812 = vector.broadcast %811 : f32 to vector<16x36xf32>
    %813 = arith.mulf %812, %763 : vector<16x36xf32>
    %814 = arith.addf %810, %813 : vector<16x36xf32>
    %c56_57 = arith.constant 56 : index
    %815 = memref.load %arg4[%c56_57] : memref<324xf32, #tpu.memory_space<smem>>
    %816 = vector.broadcast %815 : f32 to vector<16x36xf32>
    %817 = arith.mulf %816, %764 : vector<16x36xf32>
    %818 = arith.addf %814, %817 : vector<16x36xf32>
    %c57_58 = arith.constant 57 : index
    %819 = memref.load %arg4[%c57_58] : memref<324xf32, #tpu.memory_space<smem>>
    %820 = vector.broadcast %819 : f32 to vector<16x36xf32>
    %821 = arith.mulf %820, %765 : vector<16x36xf32>
    %822 = arith.addf %818, %821 : vector<16x36xf32>
    %c58_59 = arith.constant 58 : index
    %823 = memref.load %arg4[%c58_59] : memref<324xf32, #tpu.memory_space<smem>>
    %824 = vector.broadcast %823 : f32 to vector<16x36xf32>
    %825 = arith.mulf %824, %766 : vector<16x36xf32>
    %826 = arith.addf %822, %825 : vector<16x36xf32>
    %c59_60 = arith.constant 59 : index
    %827 = memref.load %arg4[%c59_60] : memref<324xf32, #tpu.memory_space<smem>>
    %828 = vector.broadcast %827 : f32 to vector<16x36xf32>
    %829 = arith.mulf %828, %767 : vector<16x36xf32>
    %830 = arith.addf %826, %829 : vector<16x36xf32>
    %c60_61 = arith.constant 60 : index
    %831 = memref.load %arg4[%c60_61] : memref<324xf32, #tpu.memory_space<smem>>
    %832 = vector.broadcast %831 : f32 to vector<16x36xf32>
    %833 = arith.mulf %832, %768 : vector<16x36xf32>
    %834 = arith.addf %830, %833 : vector<16x36xf32>
    %c61_62 = arith.constant 61 : index
    %835 = memref.load %arg4[%c61_62] : memref<324xf32, #tpu.memory_space<smem>>
    %836 = vector.broadcast %835 : f32 to vector<16x36xf32>
    %837 = arith.mulf %836, %769 : vector<16x36xf32>
    %838 = arith.addf %834, %837 : vector<16x36xf32>
    %c62_63 = arith.constant 62 : index
    %839 = memref.load %arg4[%c62_63] : memref<324xf32, #tpu.memory_space<smem>>
    %840 = vector.broadcast %839 : f32 to vector<16x36xf32>
    %841 = arith.mulf %840, %770 : vector<16x36xf32>
    %842 = arith.addf %838, %841 : vector<16x36xf32>
    %c108_64 = arith.constant 108 : index
    %843 = memref.load %arg4[%c108_64] : memref<324xf32, #tpu.memory_space<smem>>
    %844 = vector.broadcast %843 : f32 to vector<16x36xf32>
    %845 = arith.mulf %844, %762 : vector<16x36xf32>
    %846 = arith.addf %752, %845 : vector<16x36xf32>
    %c109_65 = arith.constant 109 : index
    %847 = memref.load %arg4[%c109_65] : memref<324xf32, #tpu.memory_space<smem>>
    %848 = vector.broadcast %847 : f32 to vector<16x36xf32>
    %849 = arith.mulf %848, %763 : vector<16x36xf32>
    %850 = arith.addf %846, %849 : vector<16x36xf32>
    %c110_66 = arith.constant 110 : index
    %851 = memref.load %arg4[%c110_66] : memref<324xf32, #tpu.memory_space<smem>>
    %852 = vector.broadcast %851 : f32 to vector<16x36xf32>
    %853 = arith.mulf %852, %764 : vector<16x36xf32>
    %854 = arith.addf %850, %853 : vector<16x36xf32>
    %c111_67 = arith.constant 111 : index
    %855 = memref.load %arg4[%c111_67] : memref<324xf32, #tpu.memory_space<smem>>
    %856 = vector.broadcast %855 : f32 to vector<16x36xf32>
    %857 = arith.mulf %856, %765 : vector<16x36xf32>
    %858 = arith.addf %854, %857 : vector<16x36xf32>
    %c112_68 = arith.constant 112 : index
    %859 = memref.load %arg4[%c112_68] : memref<324xf32, #tpu.memory_space<smem>>
    %860 = vector.broadcast %859 : f32 to vector<16x36xf32>
    %861 = arith.mulf %860, %766 : vector<16x36xf32>
    %862 = arith.addf %858, %861 : vector<16x36xf32>
    %c113_69 = arith.constant 113 : index
    %863 = memref.load %arg4[%c113_69] : memref<324xf32, #tpu.memory_space<smem>>
    %864 = vector.broadcast %863 : f32 to vector<16x36xf32>
    %865 = arith.mulf %864, %767 : vector<16x36xf32>
    %866 = arith.addf %862, %865 : vector<16x36xf32>
    %c114_70 = arith.constant 114 : index
    %867 = memref.load %arg4[%c114_70] : memref<324xf32, #tpu.memory_space<smem>>
    %868 = vector.broadcast %867 : f32 to vector<16x36xf32>
    %869 = arith.mulf %868, %768 : vector<16x36xf32>
    %870 = arith.addf %866, %869 : vector<16x36xf32>
    %c115_71 = arith.constant 115 : index
    %871 = memref.load %arg4[%c115_71] : memref<324xf32, #tpu.memory_space<smem>>
    %872 = vector.broadcast %871 : f32 to vector<16x36xf32>
    %873 = arith.mulf %872, %769 : vector<16x36xf32>
    %874 = arith.addf %870, %873 : vector<16x36xf32>
    %c116_72 = arith.constant 116 : index
    %875 = memref.load %arg4[%c116_72] : memref<324xf32, #tpu.memory_space<smem>>
    %876 = vector.broadcast %875 : f32 to vector<16x36xf32>
    %877 = arith.mulf %876, %770 : vector<16x36xf32>
    %878 = arith.addf %874, %877 : vector<16x36xf32>
    %c162 = arith.constant 162 : index
    %879 = memref.load %arg4[%c162] : memref<324xf32, #tpu.memory_space<smem>>
    %880 = vector.broadcast %879 : f32 to vector<16x36xf32>
    %881 = arith.mulf %880, %762 : vector<16x36xf32>
    %882 = arith.addf %754, %881 : vector<16x36xf32>
    %c163 = arith.constant 163 : index
    %883 = memref.load %arg4[%c163] : memref<324xf32, #tpu.memory_space<smem>>
    %884 = vector.broadcast %883 : f32 to vector<16x36xf32>
    %885 = arith.mulf %884, %763 : vector<16x36xf32>
    %886 = arith.addf %882, %885 : vector<16x36xf32>
    %c164 = arith.constant 164 : index
    %887 = memref.load %arg4[%c164] : memref<324xf32, #tpu.memory_space<smem>>
    %888 = vector.broadcast %887 : f32 to vector<16x36xf32>
    %889 = arith.mulf %888, %764 : vector<16x36xf32>
    %890 = arith.addf %886, %889 : vector<16x36xf32>
    %c165 = arith.constant 165 : index
    %891 = memref.load %arg4[%c165] : memref<324xf32, #tpu.memory_space<smem>>
    %892 = vector.broadcast %891 : f32 to vector<16x36xf32>
    %893 = arith.mulf %892, %765 : vector<16x36xf32>
    %894 = arith.addf %890, %893 : vector<16x36xf32>
    %c166 = arith.constant 166 : index
    %895 = memref.load %arg4[%c166] : memref<324xf32, #tpu.memory_space<smem>>
    %896 = vector.broadcast %895 : f32 to vector<16x36xf32>
    %897 = arith.mulf %896, %766 : vector<16x36xf32>
    %898 = arith.addf %894, %897 : vector<16x36xf32>
    %c167 = arith.constant 167 : index
    %899 = memref.load %arg4[%c167] : memref<324xf32, #tpu.memory_space<smem>>
    %900 = vector.broadcast %899 : f32 to vector<16x36xf32>
    %901 = arith.mulf %900, %767 : vector<16x36xf32>
    %902 = arith.addf %898, %901 : vector<16x36xf32>
    %c168 = arith.constant 168 : index
    %903 = memref.load %arg4[%c168] : memref<324xf32, #tpu.memory_space<smem>>
    %904 = vector.broadcast %903 : f32 to vector<16x36xf32>
    %905 = arith.mulf %904, %768 : vector<16x36xf32>
    %906 = arith.addf %902, %905 : vector<16x36xf32>
    %c169 = arith.constant 169 : index
    %907 = memref.load %arg4[%c169] : memref<324xf32, #tpu.memory_space<smem>>
    %908 = vector.broadcast %907 : f32 to vector<16x36xf32>
    %909 = arith.mulf %908, %769 : vector<16x36xf32>
    %910 = arith.addf %906, %909 : vector<16x36xf32>
    %c170 = arith.constant 170 : index
    %911 = memref.load %arg4[%c170] : memref<324xf32, #tpu.memory_space<smem>>
    %912 = vector.broadcast %911 : f32 to vector<16x36xf32>
    %913 = arith.mulf %912, %770 : vector<16x36xf32>
    %914 = arith.addf %910, %913 : vector<16x36xf32>
    %c216 = arith.constant 216 : index
    %915 = memref.load %arg4[%c216] : memref<324xf32, #tpu.memory_space<smem>>
    %916 = vector.broadcast %915 : f32 to vector<16x36xf32>
    %917 = arith.mulf %916, %762 : vector<16x36xf32>
    %918 = arith.addf %756, %917 : vector<16x36xf32>
    %c217 = arith.constant 217 : index
    %919 = memref.load %arg4[%c217] : memref<324xf32, #tpu.memory_space<smem>>
    %920 = vector.broadcast %919 : f32 to vector<16x36xf32>
    %921 = arith.mulf %920, %763 : vector<16x36xf32>
    %922 = arith.addf %918, %921 : vector<16x36xf32>
    %c218 = arith.constant 218 : index
    %923 = memref.load %arg4[%c218] : memref<324xf32, #tpu.memory_space<smem>>
    %924 = vector.broadcast %923 : f32 to vector<16x36xf32>
    %925 = arith.mulf %924, %764 : vector<16x36xf32>
    %926 = arith.addf %922, %925 : vector<16x36xf32>
    %c219 = arith.constant 219 : index
    %927 = memref.load %arg4[%c219] : memref<324xf32, #tpu.memory_space<smem>>
    %928 = vector.broadcast %927 : f32 to vector<16x36xf32>
    %929 = arith.mulf %928, %765 : vector<16x36xf32>
    %930 = arith.addf %926, %929 : vector<16x36xf32>
    %c220 = arith.constant 220 : index
    %931 = memref.load %arg4[%c220] : memref<324xf32, #tpu.memory_space<smem>>
    %932 = vector.broadcast %931 : f32 to vector<16x36xf32>
    %933 = arith.mulf %932, %766 : vector<16x36xf32>
    %934 = arith.addf %930, %933 : vector<16x36xf32>
    %c221 = arith.constant 221 : index
    %935 = memref.load %arg4[%c221] : memref<324xf32, #tpu.memory_space<smem>>
    %936 = vector.broadcast %935 : f32 to vector<16x36xf32>
    %937 = arith.mulf %936, %767 : vector<16x36xf32>
    %938 = arith.addf %934, %937 : vector<16x36xf32>
    %c222 = arith.constant 222 : index
    %939 = memref.load %arg4[%c222] : memref<324xf32, #tpu.memory_space<smem>>
    %940 = vector.broadcast %939 : f32 to vector<16x36xf32>
    %941 = arith.mulf %940, %768 : vector<16x36xf32>
    %942 = arith.addf %938, %941 : vector<16x36xf32>
    %c223 = arith.constant 223 : index
    %943 = memref.load %arg4[%c223] : memref<324xf32, #tpu.memory_space<smem>>
    %944 = vector.broadcast %943 : f32 to vector<16x36xf32>
    %945 = arith.mulf %944, %769 : vector<16x36xf32>
    %946 = arith.addf %942, %945 : vector<16x36xf32>
    %c224 = arith.constant 224 : index
    %947 = memref.load %arg4[%c224] : memref<324xf32, #tpu.memory_space<smem>>
    %948 = vector.broadcast %947 : f32 to vector<16x36xf32>
    %949 = arith.mulf %948, %770 : vector<16x36xf32>
    %950 = arith.addf %946, %949 : vector<16x36xf32>
    %c270 = arith.constant 270 : index
    %951 = memref.load %arg4[%c270] : memref<324xf32, #tpu.memory_space<smem>>
    %952 = vector.broadcast %951 : f32 to vector<16x36xf32>
    %953 = arith.mulf %952, %762 : vector<16x36xf32>
    %954 = arith.addf %758, %953 : vector<16x36xf32>
    %c271 = arith.constant 271 : index
    %955 = memref.load %arg4[%c271] : memref<324xf32, #tpu.memory_space<smem>>
    %956 = vector.broadcast %955 : f32 to vector<16x36xf32>
    %957 = arith.mulf %956, %763 : vector<16x36xf32>
    %958 = arith.addf %954, %957 : vector<16x36xf32>
    %c272 = arith.constant 272 : index
    %959 = memref.load %arg4[%c272] : memref<324xf32, #tpu.memory_space<smem>>
    %960 = vector.broadcast %959 : f32 to vector<16x36xf32>
    %961 = arith.mulf %960, %764 : vector<16x36xf32>
    %962 = arith.addf %958, %961 : vector<16x36xf32>
    %c273 = arith.constant 273 : index
    %963 = memref.load %arg4[%c273] : memref<324xf32, #tpu.memory_space<smem>>
    %964 = vector.broadcast %963 : f32 to vector<16x36xf32>
    %965 = arith.mulf %964, %765 : vector<16x36xf32>
    %966 = arith.addf %962, %965 : vector<16x36xf32>
    %c274 = arith.constant 274 : index
    %967 = memref.load %arg4[%c274] : memref<324xf32, #tpu.memory_space<smem>>
    %968 = vector.broadcast %967 : f32 to vector<16x36xf32>
    %969 = arith.mulf %968, %766 : vector<16x36xf32>
    %970 = arith.addf %966, %969 : vector<16x36xf32>
    %c275 = arith.constant 275 : index
    %971 = memref.load %arg4[%c275] : memref<324xf32, #tpu.memory_space<smem>>
    %972 = vector.broadcast %971 : f32 to vector<16x36xf32>
    %973 = arith.mulf %972, %767 : vector<16x36xf32>
    %974 = arith.addf %970, %973 : vector<16x36xf32>
    %c276 = arith.constant 276 : index
    %975 = memref.load %arg4[%c276] : memref<324xf32, #tpu.memory_space<smem>>
    %976 = vector.broadcast %975 : f32 to vector<16x36xf32>
    %977 = arith.mulf %976, %768 : vector<16x36xf32>
    %978 = arith.addf %974, %977 : vector<16x36xf32>
    %c277 = arith.constant 277 : index
    %979 = memref.load %arg4[%c277] : memref<324xf32, #tpu.memory_space<smem>>
    %980 = vector.broadcast %979 : f32 to vector<16x36xf32>
    %981 = arith.mulf %980, %769 : vector<16x36xf32>
    %982 = arith.addf %978, %981 : vector<16x36xf32>
    %c278 = arith.constant 278 : index
    %983 = memref.load %arg4[%c278] : memref<324xf32, #tpu.memory_space<smem>>
    %984 = vector.broadcast %983 : f32 to vector<16x36xf32>
    %985 = arith.mulf %984, %770 : vector<16x36xf32>
    %986 = arith.addf %982, %985 : vector<16x36xf32>
    %987 = vector.extract_strided_slice %730 {offsets = [0, 0], sizes = [18, 36], strides = [1, 1]} : vector<18x38xf32> to vector<18x36xf32>
    %988 = vector.extract_strided_slice %730 {offsets = [0, 1], sizes = [18, 36], strides = [1, 1]} : vector<18x38xf32> to vector<18x36xf32>
    %989 = vector.extract_strided_slice %730 {offsets = [0, 2], sizes = [18, 36], strides = [1, 1]} : vector<18x38xf32> to vector<18x36xf32>
    %990 = vector.extract_strided_slice %987 {offsets = [0, 0], sizes = [16, 36], strides = [1, 1]} : vector<18x36xf32> to vector<16x36xf32>
    %991 = vector.extract_strided_slice %988 {offsets = [0, 0], sizes = [16, 36], strides = [1, 1]} : vector<18x36xf32> to vector<16x36xf32>
    %992 = vector.extract_strided_slice %989 {offsets = [0, 0], sizes = [16, 36], strides = [1, 1]} : vector<18x36xf32> to vector<16x36xf32>
    %993 = vector.extract_strided_slice %987 {offsets = [1, 0], sizes = [16, 36], strides = [1, 1]} : vector<18x36xf32> to vector<16x36xf32>
    %994 = vector.extract_strided_slice %988 {offsets = [1, 0], sizes = [16, 36], strides = [1, 1]} : vector<18x36xf32> to vector<16x36xf32>
    %995 = vector.extract_strided_slice %989 {offsets = [1, 0], sizes = [16, 36], strides = [1, 1]} : vector<18x36xf32> to vector<16x36xf32>
    %996 = vector.extract_strided_slice %987 {offsets = [2, 0], sizes = [16, 36], strides = [1, 1]} : vector<18x36xf32> to vector<16x36xf32>
    %997 = vector.extract_strided_slice %988 {offsets = [2, 0], sizes = [16, 36], strides = [1, 1]} : vector<18x36xf32> to vector<16x36xf32>
    %998 = vector.extract_strided_slice %989 {offsets = [2, 0], sizes = [16, 36], strides = [1, 1]} : vector<18x36xf32> to vector<16x36xf32>
    %c9_73 = arith.constant 9 : index
    %999 = memref.load %arg4[%c9_73] : memref<324xf32, #tpu.memory_space<smem>>
    %1000 = vector.broadcast %999 : f32 to vector<16x36xf32>
    %1001 = arith.mulf %1000, %990 : vector<16x36xf32>
    %1002 = arith.addf %806, %1001 : vector<16x36xf32>
    %c10_74 = arith.constant 10 : index
    %1003 = memref.load %arg4[%c10_74] : memref<324xf32, #tpu.memory_space<smem>>
    %1004 = vector.broadcast %1003 : f32 to vector<16x36xf32>
    %1005 = arith.mulf %1004, %991 : vector<16x36xf32>
    %1006 = arith.addf %1002, %1005 : vector<16x36xf32>
    %c11_75 = arith.constant 11 : index
    %1007 = memref.load %arg4[%c11_75] : memref<324xf32, #tpu.memory_space<smem>>
    %1008 = vector.broadcast %1007 : f32 to vector<16x36xf32>
    %1009 = arith.mulf %1008, %992 : vector<16x36xf32>
    %1010 = arith.addf %1006, %1009 : vector<16x36xf32>
    %c12_76 = arith.constant 12 : index
    %1011 = memref.load %arg4[%c12_76] : memref<324xf32, #tpu.memory_space<smem>>
    %1012 = vector.broadcast %1011 : f32 to vector<16x36xf32>
    %1013 = arith.mulf %1012, %993 : vector<16x36xf32>
    %1014 = arith.addf %1010, %1013 : vector<16x36xf32>
    %c13_77 = arith.constant 13 : index
    %1015 = memref.load %arg4[%c13_77] : memref<324xf32, #tpu.memory_space<smem>>
    %1016 = vector.broadcast %1015 : f32 to vector<16x36xf32>
    %1017 = arith.mulf %1016, %994 : vector<16x36xf32>
    %1018 = arith.addf %1014, %1017 : vector<16x36xf32>
    %c14_78 = arith.constant 14 : index
    %1019 = memref.load %arg4[%c14_78] : memref<324xf32, #tpu.memory_space<smem>>
    %1020 = vector.broadcast %1019 : f32 to vector<16x36xf32>
    %1021 = arith.mulf %1020, %995 : vector<16x36xf32>
    %1022 = arith.addf %1018, %1021 : vector<16x36xf32>
    %c15_79 = arith.constant 15 : index
    %1023 = memref.load %arg4[%c15_79] : memref<324xf32, #tpu.memory_space<smem>>
    %1024 = vector.broadcast %1023 : f32 to vector<16x36xf32>
    %1025 = arith.mulf %1024, %996 : vector<16x36xf32>
    %1026 = arith.addf %1022, %1025 : vector<16x36xf32>
    %c16_80 = arith.constant 16 : index
    %1027 = memref.load %arg4[%c16_80] : memref<324xf32, #tpu.memory_space<smem>>
    %1028 = vector.broadcast %1027 : f32 to vector<16x36xf32>
    %1029 = arith.mulf %1028, %997 : vector<16x36xf32>
    %1030 = arith.addf %1026, %1029 : vector<16x36xf32>
    %c17_81 = arith.constant 17 : index
    %1031 = memref.load %arg4[%c17_81] : memref<324xf32, #tpu.memory_space<smem>>
    %1032 = vector.broadcast %1031 : f32 to vector<16x36xf32>
    %1033 = arith.mulf %1032, %998 : vector<16x36xf32>
    %1034 = arith.addf %1030, %1033 : vector<16x36xf32>
    %c63_82 = arith.constant 63 : index
    %1035 = memref.load %arg4[%c63_82] : memref<324xf32, #tpu.memory_space<smem>>
    %1036 = vector.broadcast %1035 : f32 to vector<16x36xf32>
    %1037 = arith.mulf %1036, %990 : vector<16x36xf32>
    %1038 = arith.addf %842, %1037 : vector<16x36xf32>
    %c64_83 = arith.constant 64 : index
    %1039 = memref.load %arg4[%c64_83] : memref<324xf32, #tpu.memory_space<smem>>
    %1040 = vector.broadcast %1039 : f32 to vector<16x36xf32>
    %1041 = arith.mulf %1040, %991 : vector<16x36xf32>
    %1042 = arith.addf %1038, %1041 : vector<16x36xf32>
    %c65_84 = arith.constant 65 : index
    %1043 = memref.load %arg4[%c65_84] : memref<324xf32, #tpu.memory_space<smem>>
    %1044 = vector.broadcast %1043 : f32 to vector<16x36xf32>
    %1045 = arith.mulf %1044, %992 : vector<16x36xf32>
    %1046 = arith.addf %1042, %1045 : vector<16x36xf32>
    %c66_85 = arith.constant 66 : index
    %1047 = memref.load %arg4[%c66_85] : memref<324xf32, #tpu.memory_space<smem>>
    %1048 = vector.broadcast %1047 : f32 to vector<16x36xf32>
    %1049 = arith.mulf %1048, %993 : vector<16x36xf32>
    %1050 = arith.addf %1046, %1049 : vector<16x36xf32>
    %c67_86 = arith.constant 67 : index
    %1051 = memref.load %arg4[%c67_86] : memref<324xf32, #tpu.memory_space<smem>>
    %1052 = vector.broadcast %1051 : f32 to vector<16x36xf32>
    %1053 = arith.mulf %1052, %994 : vector<16x36xf32>
    %1054 = arith.addf %1050, %1053 : vector<16x36xf32>
    %c68_87 = arith.constant 68 : index
    %1055 = memref.load %arg4[%c68_87] : memref<324xf32, #tpu.memory_space<smem>>
    %1056 = vector.broadcast %1055 : f32 to vector<16x36xf32>
    %1057 = arith.mulf %1056, %995 : vector<16x36xf32>
    %1058 = arith.addf %1054, %1057 : vector<16x36xf32>
    %c69_88 = arith.constant 69 : index
    %1059 = memref.load %arg4[%c69_88] : memref<324xf32, #tpu.memory_space<smem>>
    %1060 = vector.broadcast %1059 : f32 to vector<16x36xf32>
    %1061 = arith.mulf %1060, %996 : vector<16x36xf32>
    %1062 = arith.addf %1058, %1061 : vector<16x36xf32>
    %c70_89 = arith.constant 70 : index
    %1063 = memref.load %arg4[%c70_89] : memref<324xf32, #tpu.memory_space<smem>>
    %1064 = vector.broadcast %1063 : f32 to vector<16x36xf32>
    %1065 = arith.mulf %1064, %997 : vector<16x36xf32>
    %1066 = arith.addf %1062, %1065 : vector<16x36xf32>
    %c71_90 = arith.constant 71 : index
    %1067 = memref.load %arg4[%c71_90] : memref<324xf32, #tpu.memory_space<smem>>
    %1068 = vector.broadcast %1067 : f32 to vector<16x36xf32>
    %1069 = arith.mulf %1068, %998 : vector<16x36xf32>
    %1070 = arith.addf %1066, %1069 : vector<16x36xf32>
    %c117_91 = arith.constant 117 : index
    %1071 = memref.load %arg4[%c117_91] : memref<324xf32, #tpu.memory_space<smem>>
    %1072 = vector.broadcast %1071 : f32 to vector<16x36xf32>
    %1073 = arith.mulf %1072, %990 : vector<16x36xf32>
    %1074 = arith.addf %878, %1073 : vector<16x36xf32>
    %c118_92 = arith.constant 118 : index
    %1075 = memref.load %arg4[%c118_92] : memref<324xf32, #tpu.memory_space<smem>>
    %1076 = vector.broadcast %1075 : f32 to vector<16x36xf32>
    %1077 = arith.mulf %1076, %991 : vector<16x36xf32>
    %1078 = arith.addf %1074, %1077 : vector<16x36xf32>
    %c119_93 = arith.constant 119 : index
    %1079 = memref.load %arg4[%c119_93] : memref<324xf32, #tpu.memory_space<smem>>
    %1080 = vector.broadcast %1079 : f32 to vector<16x36xf32>
    %1081 = arith.mulf %1080, %992 : vector<16x36xf32>
    %1082 = arith.addf %1078, %1081 : vector<16x36xf32>
    %c120_94 = arith.constant 120 : index
    %1083 = memref.load %arg4[%c120_94] : memref<324xf32, #tpu.memory_space<smem>>
    %1084 = vector.broadcast %1083 : f32 to vector<16x36xf32>
    %1085 = arith.mulf %1084, %993 : vector<16x36xf32>
    %1086 = arith.addf %1082, %1085 : vector<16x36xf32>
    %c121_95 = arith.constant 121 : index
    %1087 = memref.load %arg4[%c121_95] : memref<324xf32, #tpu.memory_space<smem>>
    %1088 = vector.broadcast %1087 : f32 to vector<16x36xf32>
    %1089 = arith.mulf %1088, %994 : vector<16x36xf32>
    %1090 = arith.addf %1086, %1089 : vector<16x36xf32>
    %c122_96 = arith.constant 122 : index
    %1091 = memref.load %arg4[%c122_96] : memref<324xf32, #tpu.memory_space<smem>>
    %1092 = vector.broadcast %1091 : f32 to vector<16x36xf32>
    %1093 = arith.mulf %1092, %995 : vector<16x36xf32>
    %1094 = arith.addf %1090, %1093 : vector<16x36xf32>
    %c123_97 = arith.constant 123 : index
    %1095 = memref.load %arg4[%c123_97] : memref<324xf32, #tpu.memory_space<smem>>
    %1096 = vector.broadcast %1095 : f32 to vector<16x36xf32>
    %1097 = arith.mulf %1096, %996 : vector<16x36xf32>
    %1098 = arith.addf %1094, %1097 : vector<16x36xf32>
    %c124_98 = arith.constant 124 : index
    %1099 = memref.load %arg4[%c124_98] : memref<324xf32, #tpu.memory_space<smem>>
    %1100 = vector.broadcast %1099 : f32 to vector<16x36xf32>
    %1101 = arith.mulf %1100, %997 : vector<16x36xf32>
    %1102 = arith.addf %1098, %1101 : vector<16x36xf32>
    %c125_99 = arith.constant 125 : index
    %1103 = memref.load %arg4[%c125_99] : memref<324xf32, #tpu.memory_space<smem>>
    %1104 = vector.broadcast %1103 : f32 to vector<16x36xf32>
    %1105 = arith.mulf %1104, %998 : vector<16x36xf32>
    %1106 = arith.addf %1102, %1105 : vector<16x36xf32>
    %c171 = arith.constant 171 : index
    %1107 = memref.load %arg4[%c171] : memref<324xf32, #tpu.memory_space<smem>>
    %1108 = vector.broadcast %1107 : f32 to vector<16x36xf32>
    %1109 = arith.mulf %1108, %990 : vector<16x36xf32>
    %1110 = arith.addf %914, %1109 : vector<16x36xf32>
    %c172 = arith.constant 172 : index
    %1111 = memref.load %arg4[%c172] : memref<324xf32, #tpu.memory_space<smem>>
    %1112 = vector.broadcast %1111 : f32 to vector<16x36xf32>
    %1113 = arith.mulf %1112, %991 : vector<16x36xf32>
    %1114 = arith.addf %1110, %1113 : vector<16x36xf32>
    %c173 = arith.constant 173 : index
    %1115 = memref.load %arg4[%c173] : memref<324xf32, #tpu.memory_space<smem>>
    %1116 = vector.broadcast %1115 : f32 to vector<16x36xf32>
    %1117 = arith.mulf %1116, %992 : vector<16x36xf32>
    %1118 = arith.addf %1114, %1117 : vector<16x36xf32>
    %c174 = arith.constant 174 : index
    %1119 = memref.load %arg4[%c174] : memref<324xf32, #tpu.memory_space<smem>>
    %1120 = vector.broadcast %1119 : f32 to vector<16x36xf32>
    %1121 = arith.mulf %1120, %993 : vector<16x36xf32>
    %1122 = arith.addf %1118, %1121 : vector<16x36xf32>
    %c175 = arith.constant 175 : index
    %1123 = memref.load %arg4[%c175] : memref<324xf32, #tpu.memory_space<smem>>
    %1124 = vector.broadcast %1123 : f32 to vector<16x36xf32>
    %1125 = arith.mulf %1124, %994 : vector<16x36xf32>
    %1126 = arith.addf %1122, %1125 : vector<16x36xf32>
    %c176 = arith.constant 176 : index
    %1127 = memref.load %arg4[%c176] : memref<324xf32, #tpu.memory_space<smem>>
    %1128 = vector.broadcast %1127 : f32 to vector<16x36xf32>
    %1129 = arith.mulf %1128, %995 : vector<16x36xf32>
    %1130 = arith.addf %1126, %1129 : vector<16x36xf32>
    %c177 = arith.constant 177 : index
    %1131 = memref.load %arg4[%c177] : memref<324xf32, #tpu.memory_space<smem>>
    %1132 = vector.broadcast %1131 : f32 to vector<16x36xf32>
    %1133 = arith.mulf %1132, %996 : vector<16x36xf32>
    %1134 = arith.addf %1130, %1133 : vector<16x36xf32>
    %c178 = arith.constant 178 : index
    %1135 = memref.load %arg4[%c178] : memref<324xf32, #tpu.memory_space<smem>>
    %1136 = vector.broadcast %1135 : f32 to vector<16x36xf32>
    %1137 = arith.mulf %1136, %997 : vector<16x36xf32>
    %1138 = arith.addf %1134, %1137 : vector<16x36xf32>
    %c179 = arith.constant 179 : index
    %1139 = memref.load %arg4[%c179] : memref<324xf32, #tpu.memory_space<smem>>
    %1140 = vector.broadcast %1139 : f32 to vector<16x36xf32>
    %1141 = arith.mulf %1140, %998 : vector<16x36xf32>
    %1142 = arith.addf %1138, %1141 : vector<16x36xf32>
    %c225 = arith.constant 225 : index
    %1143 = memref.load %arg4[%c225] : memref<324xf32, #tpu.memory_space<smem>>
    %1144 = vector.broadcast %1143 : f32 to vector<16x36xf32>
    %1145 = arith.mulf %1144, %990 : vector<16x36xf32>
    %1146 = arith.addf %950, %1145 : vector<16x36xf32>
    %c226 = arith.constant 226 : index
    %1147 = memref.load %arg4[%c226] : memref<324xf32, #tpu.memory_space<smem>>
    %1148 = vector.broadcast %1147 : f32 to vector<16x36xf32>
    %1149 = arith.mulf %1148, %991 : vector<16x36xf32>
    %1150 = arith.addf %1146, %1149 : vector<16x36xf32>
    %c227 = arith.constant 227 : index
    %1151 = memref.load %arg4[%c227] : memref<324xf32, #tpu.memory_space<smem>>
    %1152 = vector.broadcast %1151 : f32 to vector<16x36xf32>
    %1153 = arith.mulf %1152, %992 : vector<16x36xf32>
    %1154 = arith.addf %1150, %1153 : vector<16x36xf32>
    %c228 = arith.constant 228 : index
    %1155 = memref.load %arg4[%c228] : memref<324xf32, #tpu.memory_space<smem>>
    %1156 = vector.broadcast %1155 : f32 to vector<16x36xf32>
    %1157 = arith.mulf %1156, %993 : vector<16x36xf32>
    %1158 = arith.addf %1154, %1157 : vector<16x36xf32>
    %c229 = arith.constant 229 : index
    %1159 = memref.load %arg4[%c229] : memref<324xf32, #tpu.memory_space<smem>>
    %1160 = vector.broadcast %1159 : f32 to vector<16x36xf32>
    %1161 = arith.mulf %1160, %994 : vector<16x36xf32>
    %1162 = arith.addf %1158, %1161 : vector<16x36xf32>
    %c230 = arith.constant 230 : index
    %1163 = memref.load %arg4[%c230] : memref<324xf32, #tpu.memory_space<smem>>
    %1164 = vector.broadcast %1163 : f32 to vector<16x36xf32>
    %1165 = arith.mulf %1164, %995 : vector<16x36xf32>
    %1166 = arith.addf %1162, %1165 : vector<16x36xf32>
    %c231 = arith.constant 231 : index
    %1167 = memref.load %arg4[%c231] : memref<324xf32, #tpu.memory_space<smem>>
    %1168 = vector.broadcast %1167 : f32 to vector<16x36xf32>
    %1169 = arith.mulf %1168, %996 : vector<16x36xf32>
    %1170 = arith.addf %1166, %1169 : vector<16x36xf32>
    %c232 = arith.constant 232 : index
    %1171 = memref.load %arg4[%c232] : memref<324xf32, #tpu.memory_space<smem>>
    %1172 = vector.broadcast %1171 : f32 to vector<16x36xf32>
    %1173 = arith.mulf %1172, %997 : vector<16x36xf32>
    %1174 = arith.addf %1170, %1173 : vector<16x36xf32>
    %c233 = arith.constant 233 : index
    %1175 = memref.load %arg4[%c233] : memref<324xf32, #tpu.memory_space<smem>>
    %1176 = vector.broadcast %1175 : f32 to vector<16x36xf32>
    %1177 = arith.mulf %1176, %998 : vector<16x36xf32>
    %1178 = arith.addf %1174, %1177 : vector<16x36xf32>
    %c279 = arith.constant 279 : index
    %1179 = memref.load %arg4[%c279] : memref<324xf32, #tpu.memory_space<smem>>
    %1180 = vector.broadcast %1179 : f32 to vector<16x36xf32>
    %1181 = arith.mulf %1180, %990 : vector<16x36xf32>
    %1182 = arith.addf %986, %1181 : vector<16x36xf32>
    %c280 = arith.constant 280 : index
    %1183 = memref.load %arg4[%c280] : memref<324xf32, #tpu.memory_space<smem>>
    %1184 = vector.broadcast %1183 : f32 to vector<16x36xf32>
    %1185 = arith.mulf %1184, %991 : vector<16x36xf32>
    %1186 = arith.addf %1182, %1185 : vector<16x36xf32>
    %c281 = arith.constant 281 : index
    %1187 = memref.load %arg4[%c281] : memref<324xf32, #tpu.memory_space<smem>>
    %1188 = vector.broadcast %1187 : f32 to vector<16x36xf32>
    %1189 = arith.mulf %1188, %992 : vector<16x36xf32>
    %1190 = arith.addf %1186, %1189 : vector<16x36xf32>
    %c282 = arith.constant 282 : index
    %1191 = memref.load %arg4[%c282] : memref<324xf32, #tpu.memory_space<smem>>
    %1192 = vector.broadcast %1191 : f32 to vector<16x36xf32>
    %1193 = arith.mulf %1192, %993 : vector<16x36xf32>
    %1194 = arith.addf %1190, %1193 : vector<16x36xf32>
    %c283 = arith.constant 283 : index
    %1195 = memref.load %arg4[%c283] : memref<324xf32, #tpu.memory_space<smem>>
    %1196 = vector.broadcast %1195 : f32 to vector<16x36xf32>
    %1197 = arith.mulf %1196, %994 : vector<16x36xf32>
    %1198 = arith.addf %1194, %1197 : vector<16x36xf32>
    %c284 = arith.constant 284 : index
    %1199 = memref.load %arg4[%c284] : memref<324xf32, #tpu.memory_space<smem>>
    %1200 = vector.broadcast %1199 : f32 to vector<16x36xf32>
    %1201 = arith.mulf %1200, %995 : vector<16x36xf32>
    %1202 = arith.addf %1198, %1201 : vector<16x36xf32>
    %c285 = arith.constant 285 : index
    %1203 = memref.load %arg4[%c285] : memref<324xf32, #tpu.memory_space<smem>>
    %1204 = vector.broadcast %1203 : f32 to vector<16x36xf32>
    %1205 = arith.mulf %1204, %996 : vector<16x36xf32>
    %1206 = arith.addf %1202, %1205 : vector<16x36xf32>
    %c286 = arith.constant 286 : index
    %1207 = memref.load %arg4[%c286] : memref<324xf32, #tpu.memory_space<smem>>
    %1208 = vector.broadcast %1207 : f32 to vector<16x36xf32>
    %1209 = arith.mulf %1208, %997 : vector<16x36xf32>
    %1210 = arith.addf %1206, %1209 : vector<16x36xf32>
    %c287 = arith.constant 287 : index
    %1211 = memref.load %arg4[%c287] : memref<324xf32, #tpu.memory_space<smem>>
    %1212 = vector.broadcast %1211 : f32 to vector<16x36xf32>
    %1213 = arith.mulf %1212, %998 : vector<16x36xf32>
    %1214 = arith.addf %1210, %1213 : vector<16x36xf32>
    %1215 = vector.extract_strided_slice %734 {offsets = [0, 0], sizes = [18, 36], strides = [1, 1]} : vector<18x38xf32> to vector<18x36xf32>
    %1216 = vector.extract_strided_slice %734 {offsets = [0, 1], sizes = [18, 36], strides = [1, 1]} : vector<18x38xf32> to vector<18x36xf32>
    %1217 = vector.extract_strided_slice %734 {offsets = [0, 2], sizes = [18, 36], strides = [1, 1]} : vector<18x38xf32> to vector<18x36xf32>
    %1218 = vector.extract_strided_slice %1215 {offsets = [0, 0], sizes = [16, 36], strides = [1, 1]} : vector<18x36xf32> to vector<16x36xf32>
    %1219 = vector.extract_strided_slice %1216 {offsets = [0, 0], sizes = [16, 36], strides = [1, 1]} : vector<18x36xf32> to vector<16x36xf32>
    %1220 = vector.extract_strided_slice %1217 {offsets = [0, 0], sizes = [16, 36], strides = [1, 1]} : vector<18x36xf32> to vector<16x36xf32>
    %1221 = vector.extract_strided_slice %1215 {offsets = [1, 0], sizes = [16, 36], strides = [1, 1]} : vector<18x36xf32> to vector<16x36xf32>
    %1222 = vector.extract_strided_slice %1216 {offsets = [1, 0], sizes = [16, 36], strides = [1, 1]} : vector<18x36xf32> to vector<16x36xf32>
    %1223 = vector.extract_strided_slice %1217 {offsets = [1, 0], sizes = [16, 36], strides = [1, 1]} : vector<18x36xf32> to vector<16x36xf32>
    %1224 = vector.extract_strided_slice %1215 {offsets = [2, 0], sizes = [16, 36], strides = [1, 1]} : vector<18x36xf32> to vector<16x36xf32>
    %1225 = vector.extract_strided_slice %1216 {offsets = [2, 0], sizes = [16, 36], strides = [1, 1]} : vector<18x36xf32> to vector<16x36xf32>
    %1226 = vector.extract_strided_slice %1217 {offsets = [2, 0], sizes = [16, 36], strides = [1, 1]} : vector<18x36xf32> to vector<16x36xf32>
    %c18_100 = arith.constant 18 : index
    %1227 = memref.load %arg4[%c18_100] : memref<324xf32, #tpu.memory_space<smem>>
    %1228 = vector.broadcast %1227 : f32 to vector<16x36xf32>
    %1229 = arith.mulf %1228, %1218 : vector<16x36xf32>
    %1230 = arith.addf %1034, %1229 : vector<16x36xf32>
    %c19_101 = arith.constant 19 : index
    %1231 = memref.load %arg4[%c19_101] : memref<324xf32, #tpu.memory_space<smem>>
    %1232 = vector.broadcast %1231 : f32 to vector<16x36xf32>
    %1233 = arith.mulf %1232, %1219 : vector<16x36xf32>
    %1234 = arith.addf %1230, %1233 : vector<16x36xf32>
    %c20_102 = arith.constant 20 : index
    %1235 = memref.load %arg4[%c20_102] : memref<324xf32, #tpu.memory_space<smem>>
    %1236 = vector.broadcast %1235 : f32 to vector<16x36xf32>
    %1237 = arith.mulf %1236, %1220 : vector<16x36xf32>
    %1238 = arith.addf %1234, %1237 : vector<16x36xf32>
    %c21_103 = arith.constant 21 : index
    %1239 = memref.load %arg4[%c21_103] : memref<324xf32, #tpu.memory_space<smem>>
    %1240 = vector.broadcast %1239 : f32 to vector<16x36xf32>
    %1241 = arith.mulf %1240, %1221 : vector<16x36xf32>
    %1242 = arith.addf %1238, %1241 : vector<16x36xf32>
    %c22_104 = arith.constant 22 : index
    %1243 = memref.load %arg4[%c22_104] : memref<324xf32, #tpu.memory_space<smem>>
    %1244 = vector.broadcast %1243 : f32 to vector<16x36xf32>
    %1245 = arith.mulf %1244, %1222 : vector<16x36xf32>
    %1246 = arith.addf %1242, %1245 : vector<16x36xf32>
    %c23_105 = arith.constant 23 : index
    %1247 = memref.load %arg4[%c23_105] : memref<324xf32, #tpu.memory_space<smem>>
    %1248 = vector.broadcast %1247 : f32 to vector<16x36xf32>
    %1249 = arith.mulf %1248, %1223 : vector<16x36xf32>
    %1250 = arith.addf %1246, %1249 : vector<16x36xf32>
    %c24_106 = arith.constant 24 : index
    %1251 = memref.load %arg4[%c24_106] : memref<324xf32, #tpu.memory_space<smem>>
    %1252 = vector.broadcast %1251 : f32 to vector<16x36xf32>
    %1253 = arith.mulf %1252, %1224 : vector<16x36xf32>
    %1254 = arith.addf %1250, %1253 : vector<16x36xf32>
    %c25_107 = arith.constant 25 : index
    %1255 = memref.load %arg4[%c25_107] : memref<324xf32, #tpu.memory_space<smem>>
    %1256 = vector.broadcast %1255 : f32 to vector<16x36xf32>
    %1257 = arith.mulf %1256, %1225 : vector<16x36xf32>
    %1258 = arith.addf %1254, %1257 : vector<16x36xf32>
    %c26_108 = arith.constant 26 : index
    %1259 = memref.load %arg4[%c26_108] : memref<324xf32, #tpu.memory_space<smem>>
    %1260 = vector.broadcast %1259 : f32 to vector<16x36xf32>
    %1261 = arith.mulf %1260, %1226 : vector<16x36xf32>
    %1262 = arith.addf %1258, %1261 : vector<16x36xf32>
    %c72_109 = arith.constant 72 : index
    %1263 = memref.load %arg4[%c72_109] : memref<324xf32, #tpu.memory_space<smem>>
    %1264 = vector.broadcast %1263 : f32 to vector<16x36xf32>
    %1265 = arith.mulf %1264, %1218 : vector<16x36xf32>
    %1266 = arith.addf %1070, %1265 : vector<16x36xf32>
    %c73_110 = arith.constant 73 : index
    %1267 = memref.load %arg4[%c73_110] : memref<324xf32, #tpu.memory_space<smem>>
    %1268 = vector.broadcast %1267 : f32 to vector<16x36xf32>
    %1269 = arith.mulf %1268, %1219 : vector<16x36xf32>
    %1270 = arith.addf %1266, %1269 : vector<16x36xf32>
    %c74_111 = arith.constant 74 : index
    %1271 = memref.load %arg4[%c74_111] : memref<324xf32, #tpu.memory_space<smem>>
    %1272 = vector.broadcast %1271 : f32 to vector<16x36xf32>
    %1273 = arith.mulf %1272, %1220 : vector<16x36xf32>
    %1274 = arith.addf %1270, %1273 : vector<16x36xf32>
    %c75_112 = arith.constant 75 : index
    %1275 = memref.load %arg4[%c75_112] : memref<324xf32, #tpu.memory_space<smem>>
    %1276 = vector.broadcast %1275 : f32 to vector<16x36xf32>
    %1277 = arith.mulf %1276, %1221 : vector<16x36xf32>
    %1278 = arith.addf %1274, %1277 : vector<16x36xf32>
    %c76_113 = arith.constant 76 : index
    %1279 = memref.load %arg4[%c76_113] : memref<324xf32, #tpu.memory_space<smem>>
    %1280 = vector.broadcast %1279 : f32 to vector<16x36xf32>
    %1281 = arith.mulf %1280, %1222 : vector<16x36xf32>
    %1282 = arith.addf %1278, %1281 : vector<16x36xf32>
    %c77_114 = arith.constant 77 : index
    %1283 = memref.load %arg4[%c77_114] : memref<324xf32, #tpu.memory_space<smem>>
    %1284 = vector.broadcast %1283 : f32 to vector<16x36xf32>
    %1285 = arith.mulf %1284, %1223 : vector<16x36xf32>
    %1286 = arith.addf %1282, %1285 : vector<16x36xf32>
    %c78_115 = arith.constant 78 : index
    %1287 = memref.load %arg4[%c78_115] : memref<324xf32, #tpu.memory_space<smem>>
    %1288 = vector.broadcast %1287 : f32 to vector<16x36xf32>
    %1289 = arith.mulf %1288, %1224 : vector<16x36xf32>
    %1290 = arith.addf %1286, %1289 : vector<16x36xf32>
    %c79_116 = arith.constant 79 : index
    %1291 = memref.load %arg4[%c79_116] : memref<324xf32, #tpu.memory_space<smem>>
    %1292 = vector.broadcast %1291 : f32 to vector<16x36xf32>
    %1293 = arith.mulf %1292, %1225 : vector<16x36xf32>
    %1294 = arith.addf %1290, %1293 : vector<16x36xf32>
    %c80_117 = arith.constant 80 : index
    %1295 = memref.load %arg4[%c80_117] : memref<324xf32, #tpu.memory_space<smem>>
    %1296 = vector.broadcast %1295 : f32 to vector<16x36xf32>
    %1297 = arith.mulf %1296, %1226 : vector<16x36xf32>
    %1298 = arith.addf %1294, %1297 : vector<16x36xf32>
    %c126_118 = arith.constant 126 : index
    %1299 = memref.load %arg4[%c126_118] : memref<324xf32, #tpu.memory_space<smem>>
    %1300 = vector.broadcast %1299 : f32 to vector<16x36xf32>
    %1301 = arith.mulf %1300, %1218 : vector<16x36xf32>
    %1302 = arith.addf %1106, %1301 : vector<16x36xf32>
    %c127_119 = arith.constant 127 : index
    %1303 = memref.load %arg4[%c127_119] : memref<324xf32, #tpu.memory_space<smem>>
    %1304 = vector.broadcast %1303 : f32 to vector<16x36xf32>
    %1305 = arith.mulf %1304, %1219 : vector<16x36xf32>
    %1306 = arith.addf %1302, %1305 : vector<16x36xf32>
    %c128_120 = arith.constant 128 : index
    %1307 = memref.load %arg4[%c128_120] : memref<324xf32, #tpu.memory_space<smem>>
    %1308 = vector.broadcast %1307 : f32 to vector<16x36xf32>
    %1309 = arith.mulf %1308, %1220 : vector<16x36xf32>
    %1310 = arith.addf %1306, %1309 : vector<16x36xf32>
    %c129_121 = arith.constant 129 : index
    %1311 = memref.load %arg4[%c129_121] : memref<324xf32, #tpu.memory_space<smem>>
    %1312 = vector.broadcast %1311 : f32 to vector<16x36xf32>
    %1313 = arith.mulf %1312, %1221 : vector<16x36xf32>
    %1314 = arith.addf %1310, %1313 : vector<16x36xf32>
    %c130_122 = arith.constant 130 : index
    %1315 = memref.load %arg4[%c130_122] : memref<324xf32, #tpu.memory_space<smem>>
    %1316 = vector.broadcast %1315 : f32 to vector<16x36xf32>
    %1317 = arith.mulf %1316, %1222 : vector<16x36xf32>
    %1318 = arith.addf %1314, %1317 : vector<16x36xf32>
    %c131_123 = arith.constant 131 : index
    %1319 = memref.load %arg4[%c131_123] : memref<324xf32, #tpu.memory_space<smem>>
    %1320 = vector.broadcast %1319 : f32 to vector<16x36xf32>
    %1321 = arith.mulf %1320, %1223 : vector<16x36xf32>
    %1322 = arith.addf %1318, %1321 : vector<16x36xf32>
    %c132_124 = arith.constant 132 : index
    %1323 = memref.load %arg4[%c132_124] : memref<324xf32, #tpu.memory_space<smem>>
    %1324 = vector.broadcast %1323 : f32 to vector<16x36xf32>
    %1325 = arith.mulf %1324, %1224 : vector<16x36xf32>
    %1326 = arith.addf %1322, %1325 : vector<16x36xf32>
    %c133_125 = arith.constant 133 : index
    %1327 = memref.load %arg4[%c133_125] : memref<324xf32, #tpu.memory_space<smem>>
    %1328 = vector.broadcast %1327 : f32 to vector<16x36xf32>
    %1329 = arith.mulf %1328, %1225 : vector<16x36xf32>
    %1330 = arith.addf %1326, %1329 : vector<16x36xf32>
    %c134_126 = arith.constant 134 : index
    %1331 = memref.load %arg4[%c134_126] : memref<324xf32, #tpu.memory_space<smem>>
    %1332 = vector.broadcast %1331 : f32 to vector<16x36xf32>
    %1333 = arith.mulf %1332, %1226 : vector<16x36xf32>
    %1334 = arith.addf %1330, %1333 : vector<16x36xf32>
    %c180 = arith.constant 180 : index
    %1335 = memref.load %arg4[%c180] : memref<324xf32, #tpu.memory_space<smem>>
    %1336 = vector.broadcast %1335 : f32 to vector<16x36xf32>
    %1337 = arith.mulf %1336, %1218 : vector<16x36xf32>
    %1338 = arith.addf %1142, %1337 : vector<16x36xf32>
    %c181 = arith.constant 181 : index
    %1339 = memref.load %arg4[%c181] : memref<324xf32, #tpu.memory_space<smem>>
    %1340 = vector.broadcast %1339 : f32 to vector<16x36xf32>
    %1341 = arith.mulf %1340, %1219 : vector<16x36xf32>
    %1342 = arith.addf %1338, %1341 : vector<16x36xf32>
    %c182 = arith.constant 182 : index
    %1343 = memref.load %arg4[%c182] : memref<324xf32, #tpu.memory_space<smem>>
    %1344 = vector.broadcast %1343 : f32 to vector<16x36xf32>
    %1345 = arith.mulf %1344, %1220 : vector<16x36xf32>
    %1346 = arith.addf %1342, %1345 : vector<16x36xf32>
    %c183 = arith.constant 183 : index
    %1347 = memref.load %arg4[%c183] : memref<324xf32, #tpu.memory_space<smem>>
    %1348 = vector.broadcast %1347 : f32 to vector<16x36xf32>
    %1349 = arith.mulf %1348, %1221 : vector<16x36xf32>
    %1350 = arith.addf %1346, %1349 : vector<16x36xf32>
    %c184 = arith.constant 184 : index
    %1351 = memref.load %arg4[%c184] : memref<324xf32, #tpu.memory_space<smem>>
    %1352 = vector.broadcast %1351 : f32 to vector<16x36xf32>
    %1353 = arith.mulf %1352, %1222 : vector<16x36xf32>
    %1354 = arith.addf %1350, %1353 : vector<16x36xf32>
    %c185 = arith.constant 185 : index
    %1355 = memref.load %arg4[%c185] : memref<324xf32, #tpu.memory_space<smem>>
    %1356 = vector.broadcast %1355 : f32 to vector<16x36xf32>
    %1357 = arith.mulf %1356, %1223 : vector<16x36xf32>
    %1358 = arith.addf %1354, %1357 : vector<16x36xf32>
    %c186 = arith.constant 186 : index
    %1359 = memref.load %arg4[%c186] : memref<324xf32, #tpu.memory_space<smem>>
    %1360 = vector.broadcast %1359 : f32 to vector<16x36xf32>
    %1361 = arith.mulf %1360, %1224 : vector<16x36xf32>
    %1362 = arith.addf %1358, %1361 : vector<16x36xf32>
    %c187 = arith.constant 187 : index
    %1363 = memref.load %arg4[%c187] : memref<324xf32, #tpu.memory_space<smem>>
    %1364 = vector.broadcast %1363 : f32 to vector<16x36xf32>
    %1365 = arith.mulf %1364, %1225 : vector<16x36xf32>
    %1366 = arith.addf %1362, %1365 : vector<16x36xf32>
    %c188 = arith.constant 188 : index
    %1367 = memref.load %arg4[%c188] : memref<324xf32, #tpu.memory_space<smem>>
    %1368 = vector.broadcast %1367 : f32 to vector<16x36xf32>
    %1369 = arith.mulf %1368, %1226 : vector<16x36xf32>
    %1370 = arith.addf %1366, %1369 : vector<16x36xf32>
    %c234 = arith.constant 234 : index
    %1371 = memref.load %arg4[%c234] : memref<324xf32, #tpu.memory_space<smem>>
    %1372 = vector.broadcast %1371 : f32 to vector<16x36xf32>
    %1373 = arith.mulf %1372, %1218 : vector<16x36xf32>
    %1374 = arith.addf %1178, %1373 : vector<16x36xf32>
    %c235 = arith.constant 235 : index
    %1375 = memref.load %arg4[%c235] : memref<324xf32, #tpu.memory_space<smem>>
    %1376 = vector.broadcast %1375 : f32 to vector<16x36xf32>
    %1377 = arith.mulf %1376, %1219 : vector<16x36xf32>
    %1378 = arith.addf %1374, %1377 : vector<16x36xf32>
    %c236 = arith.constant 236 : index
    %1379 = memref.load %arg4[%c236] : memref<324xf32, #tpu.memory_space<smem>>
    %1380 = vector.broadcast %1379 : f32 to vector<16x36xf32>
    %1381 = arith.mulf %1380, %1220 : vector<16x36xf32>
    %1382 = arith.addf %1378, %1381 : vector<16x36xf32>
    %c237 = arith.constant 237 : index
    %1383 = memref.load %arg4[%c237] : memref<324xf32, #tpu.memory_space<smem>>
    %1384 = vector.broadcast %1383 : f32 to vector<16x36xf32>
    %1385 = arith.mulf %1384, %1221 : vector<16x36xf32>
    %1386 = arith.addf %1382, %1385 : vector<16x36xf32>
    %c238 = arith.constant 238 : index
    %1387 = memref.load %arg4[%c238] : memref<324xf32, #tpu.memory_space<smem>>
    %1388 = vector.broadcast %1387 : f32 to vector<16x36xf32>
    %1389 = arith.mulf %1388, %1222 : vector<16x36xf32>
    %1390 = arith.addf %1386, %1389 : vector<16x36xf32>
    %c239 = arith.constant 239 : index
    %1391 = memref.load %arg4[%c239] : memref<324xf32, #tpu.memory_space<smem>>
    %1392 = vector.broadcast %1391 : f32 to vector<16x36xf32>
    %1393 = arith.mulf %1392, %1223 : vector<16x36xf32>
    %1394 = arith.addf %1390, %1393 : vector<16x36xf32>
    %c240 = arith.constant 240 : index
    %1395 = memref.load %arg4[%c240] : memref<324xf32, #tpu.memory_space<smem>>
    %1396 = vector.broadcast %1395 : f32 to vector<16x36xf32>
    %1397 = arith.mulf %1396, %1224 : vector<16x36xf32>
    %1398 = arith.addf %1394, %1397 : vector<16x36xf32>
    %c241 = arith.constant 241 : index
    %1399 = memref.load %arg4[%c241] : memref<324xf32, #tpu.memory_space<smem>>
    %1400 = vector.broadcast %1399 : f32 to vector<16x36xf32>
    %1401 = arith.mulf %1400, %1225 : vector<16x36xf32>
    %1402 = arith.addf %1398, %1401 : vector<16x36xf32>
    %c242 = arith.constant 242 : index
    %1403 = memref.load %arg4[%c242] : memref<324xf32, #tpu.memory_space<smem>>
    %1404 = vector.broadcast %1403 : f32 to vector<16x36xf32>
    %1405 = arith.mulf %1404, %1226 : vector<16x36xf32>
    %1406 = arith.addf %1402, %1405 : vector<16x36xf32>
    %c288 = arith.constant 288 : index
    %1407 = memref.load %arg4[%c288] : memref<324xf32, #tpu.memory_space<smem>>
    %1408 = vector.broadcast %1407 : f32 to vector<16x36xf32>
    %1409 = arith.mulf %1408, %1218 : vector<16x36xf32>
    %1410 = arith.addf %1214, %1409 : vector<16x36xf32>
    %c289 = arith.constant 289 : index
    %1411 = memref.load %arg4[%c289] : memref<324xf32, #tpu.memory_space<smem>>
    %1412 = vector.broadcast %1411 : f32 to vector<16x36xf32>
    %1413 = arith.mulf %1412, %1219 : vector<16x36xf32>
    %1414 = arith.addf %1410, %1413 : vector<16x36xf32>
    %c290 = arith.constant 290 : index
    %1415 = memref.load %arg4[%c290] : memref<324xf32, #tpu.memory_space<smem>>
    %1416 = vector.broadcast %1415 : f32 to vector<16x36xf32>
    %1417 = arith.mulf %1416, %1220 : vector<16x36xf32>
    %1418 = arith.addf %1414, %1417 : vector<16x36xf32>
    %c291 = arith.constant 291 : index
    %1419 = memref.load %arg4[%c291] : memref<324xf32, #tpu.memory_space<smem>>
    %1420 = vector.broadcast %1419 : f32 to vector<16x36xf32>
    %1421 = arith.mulf %1420, %1221 : vector<16x36xf32>
    %1422 = arith.addf %1418, %1421 : vector<16x36xf32>
    %c292 = arith.constant 292 : index
    %1423 = memref.load %arg4[%c292] : memref<324xf32, #tpu.memory_space<smem>>
    %1424 = vector.broadcast %1423 : f32 to vector<16x36xf32>
    %1425 = arith.mulf %1424, %1222 : vector<16x36xf32>
    %1426 = arith.addf %1422, %1425 : vector<16x36xf32>
    %c293 = arith.constant 293 : index
    %1427 = memref.load %arg4[%c293] : memref<324xf32, #tpu.memory_space<smem>>
    %1428 = vector.broadcast %1427 : f32 to vector<16x36xf32>
    %1429 = arith.mulf %1428, %1223 : vector<16x36xf32>
    %1430 = arith.addf %1426, %1429 : vector<16x36xf32>
    %c294 = arith.constant 294 : index
    %1431 = memref.load %arg4[%c294] : memref<324xf32, #tpu.memory_space<smem>>
    %1432 = vector.broadcast %1431 : f32 to vector<16x36xf32>
    %1433 = arith.mulf %1432, %1224 : vector<16x36xf32>
    %1434 = arith.addf %1430, %1433 : vector<16x36xf32>
    %c295 = arith.constant 295 : index
    %1435 = memref.load %arg4[%c295] : memref<324xf32, #tpu.memory_space<smem>>
    %1436 = vector.broadcast %1435 : f32 to vector<16x36xf32>
    %1437 = arith.mulf %1436, %1225 : vector<16x36xf32>
    %1438 = arith.addf %1434, %1437 : vector<16x36xf32>
    %c296 = arith.constant 296 : index
    %1439 = memref.load %arg4[%c296] : memref<324xf32, #tpu.memory_space<smem>>
    %1440 = vector.broadcast %1439 : f32 to vector<16x36xf32>
    %1441 = arith.mulf %1440, %1226 : vector<16x36xf32>
    %1442 = arith.addf %1438, %1441 : vector<16x36xf32>
    %1443 = vector.extract_strided_slice %738 {offsets = [0, 0], sizes = [18, 36], strides = [1, 1]} : vector<18x38xf32> to vector<18x36xf32>
    %1444 = vector.extract_strided_slice %738 {offsets = [0, 1], sizes = [18, 36], strides = [1, 1]} : vector<18x38xf32> to vector<18x36xf32>
    %1445 = vector.extract_strided_slice %738 {offsets = [0, 2], sizes = [18, 36], strides = [1, 1]} : vector<18x38xf32> to vector<18x36xf32>
    %1446 = vector.extract_strided_slice %1443 {offsets = [0, 0], sizes = [16, 36], strides = [1, 1]} : vector<18x36xf32> to vector<16x36xf32>
    %1447 = vector.extract_strided_slice %1444 {offsets = [0, 0], sizes = [16, 36], strides = [1, 1]} : vector<18x36xf32> to vector<16x36xf32>
    %1448 = vector.extract_strided_slice %1445 {offsets = [0, 0], sizes = [16, 36], strides = [1, 1]} : vector<18x36xf32> to vector<16x36xf32>
    %1449 = vector.extract_strided_slice %1443 {offsets = [1, 0], sizes = [16, 36], strides = [1, 1]} : vector<18x36xf32> to vector<16x36xf32>
    %1450 = vector.extract_strided_slice %1444 {offsets = [1, 0], sizes = [16, 36], strides = [1, 1]} : vector<18x36xf32> to vector<16x36xf32>
    %1451 = vector.extract_strided_slice %1445 {offsets = [1, 0], sizes = [16, 36], strides = [1, 1]} : vector<18x36xf32> to vector<16x36xf32>
    %1452 = vector.extract_strided_slice %1443 {offsets = [2, 0], sizes = [16, 36], strides = [1, 1]} : vector<18x36xf32> to vector<16x36xf32>
    %1453 = vector.extract_strided_slice %1444 {offsets = [2, 0], sizes = [16, 36], strides = [1, 1]} : vector<18x36xf32> to vector<16x36xf32>
    %1454 = vector.extract_strided_slice %1445 {offsets = [2, 0], sizes = [16, 36], strides = [1, 1]} : vector<18x36xf32> to vector<16x36xf32>
    %c27_127 = arith.constant 27 : index
    %1455 = memref.load %arg4[%c27_127] : memref<324xf32, #tpu.memory_space<smem>>
    %1456 = vector.broadcast %1455 : f32 to vector<16x36xf32>
    %1457 = arith.mulf %1456, %1446 : vector<16x36xf32>
    %1458 = arith.addf %1262, %1457 : vector<16x36xf32>
    %c28_128 = arith.constant 28 : index
    %1459 = memref.load %arg4[%c28_128] : memref<324xf32, #tpu.memory_space<smem>>
    %1460 = vector.broadcast %1459 : f32 to vector<16x36xf32>
    %1461 = arith.mulf %1460, %1447 : vector<16x36xf32>
    %1462 = arith.addf %1458, %1461 : vector<16x36xf32>
    %c29_129 = arith.constant 29 : index
    %1463 = memref.load %arg4[%c29_129] : memref<324xf32, #tpu.memory_space<smem>>
    %1464 = vector.broadcast %1463 : f32 to vector<16x36xf32>
    %1465 = arith.mulf %1464, %1448 : vector<16x36xf32>
    %1466 = arith.addf %1462, %1465 : vector<16x36xf32>
    %c30_130 = arith.constant 30 : index
    %1467 = memref.load %arg4[%c30_130] : memref<324xf32, #tpu.memory_space<smem>>
    %1468 = vector.broadcast %1467 : f32 to vector<16x36xf32>
    %1469 = arith.mulf %1468, %1449 : vector<16x36xf32>
    %1470 = arith.addf %1466, %1469 : vector<16x36xf32>
    %c31_131 = arith.constant 31 : index
    %1471 = memref.load %arg4[%c31_131] : memref<324xf32, #tpu.memory_space<smem>>
    %1472 = vector.broadcast %1471 : f32 to vector<16x36xf32>
    %1473 = arith.mulf %1472, %1450 : vector<16x36xf32>
    %1474 = arith.addf %1470, %1473 : vector<16x36xf32>
    %c32_132 = arith.constant 32 : index
    %1475 = memref.load %arg4[%c32_132] : memref<324xf32, #tpu.memory_space<smem>>
    %1476 = vector.broadcast %1475 : f32 to vector<16x36xf32>
    %1477 = arith.mulf %1476, %1451 : vector<16x36xf32>
    %1478 = arith.addf %1474, %1477 : vector<16x36xf32>
    %c33_133 = arith.constant 33 : index
    %1479 = memref.load %arg4[%c33_133] : memref<324xf32, #tpu.memory_space<smem>>
    %1480 = vector.broadcast %1479 : f32 to vector<16x36xf32>
    %1481 = arith.mulf %1480, %1452 : vector<16x36xf32>
    %1482 = arith.addf %1478, %1481 : vector<16x36xf32>
    %c34_134 = arith.constant 34 : index
    %1483 = memref.load %arg4[%c34_134] : memref<324xf32, #tpu.memory_space<smem>>
    %1484 = vector.broadcast %1483 : f32 to vector<16x36xf32>
    %1485 = arith.mulf %1484, %1453 : vector<16x36xf32>
    %1486 = arith.addf %1482, %1485 : vector<16x36xf32>
    %c35_135 = arith.constant 35 : index
    %1487 = memref.load %arg4[%c35_135] : memref<324xf32, #tpu.memory_space<smem>>
    %1488 = vector.broadcast %1487 : f32 to vector<16x36xf32>
    %1489 = arith.mulf %1488, %1454 : vector<16x36xf32>
    %1490 = arith.addf %1486, %1489 : vector<16x36xf32>
    %c81_136 = arith.constant 81 : index
    %1491 = memref.load %arg4[%c81_136] : memref<324xf32, #tpu.memory_space<smem>>
    %1492 = vector.broadcast %1491 : f32 to vector<16x36xf32>
    %1493 = arith.mulf %1492, %1446 : vector<16x36xf32>
    %1494 = arith.addf %1298, %1493 : vector<16x36xf32>
    %c82_137 = arith.constant 82 : index
    %1495 = memref.load %arg4[%c82_137] : memref<324xf32, #tpu.memory_space<smem>>
    %1496 = vector.broadcast %1495 : f32 to vector<16x36xf32>
    %1497 = arith.mulf %1496, %1447 : vector<16x36xf32>
    %1498 = arith.addf %1494, %1497 : vector<16x36xf32>
    %c83_138 = arith.constant 83 : index
    %1499 = memref.load %arg4[%c83_138] : memref<324xf32, #tpu.memory_space<smem>>
    %1500 = vector.broadcast %1499 : f32 to vector<16x36xf32>
    %1501 = arith.mulf %1500, %1448 : vector<16x36xf32>
    %1502 = arith.addf %1498, %1501 : vector<16x36xf32>
    %c84_139 = arith.constant 84 : index
    %1503 = memref.load %arg4[%c84_139] : memref<324xf32, #tpu.memory_space<smem>>
    %1504 = vector.broadcast %1503 : f32 to vector<16x36xf32>
    %1505 = arith.mulf %1504, %1449 : vector<16x36xf32>
    %1506 = arith.addf %1502, %1505 : vector<16x36xf32>
    %c85_140 = arith.constant 85 : index
    %1507 = memref.load %arg4[%c85_140] : memref<324xf32, #tpu.memory_space<smem>>
    %1508 = vector.broadcast %1507 : f32 to vector<16x36xf32>
    %1509 = arith.mulf %1508, %1450 : vector<16x36xf32>
    %1510 = arith.addf %1506, %1509 : vector<16x36xf32>
    %c86_141 = arith.constant 86 : index
    %1511 = memref.load %arg4[%c86_141] : memref<324xf32, #tpu.memory_space<smem>>
    %1512 = vector.broadcast %1511 : f32 to vector<16x36xf32>
    %1513 = arith.mulf %1512, %1451 : vector<16x36xf32>
    %1514 = arith.addf %1510, %1513 : vector<16x36xf32>
    %c87_142 = arith.constant 87 : index
    %1515 = memref.load %arg4[%c87_142] : memref<324xf32, #tpu.memory_space<smem>>
    %1516 = vector.broadcast %1515 : f32 to vector<16x36xf32>
    %1517 = arith.mulf %1516, %1452 : vector<16x36xf32>
    %1518 = arith.addf %1514, %1517 : vector<16x36xf32>
    %c88_143 = arith.constant 88 : index
    %1519 = memref.load %arg4[%c88_143] : memref<324xf32, #tpu.memory_space<smem>>
    %1520 = vector.broadcast %1519 : f32 to vector<16x36xf32>
    %1521 = arith.mulf %1520, %1453 : vector<16x36xf32>
    %1522 = arith.addf %1518, %1521 : vector<16x36xf32>
    %c89_144 = arith.constant 89 : index
    %1523 = memref.load %arg4[%c89_144] : memref<324xf32, #tpu.memory_space<smem>>
    %1524 = vector.broadcast %1523 : f32 to vector<16x36xf32>
    %1525 = arith.mulf %1524, %1454 : vector<16x36xf32>
    %1526 = arith.addf %1522, %1525 : vector<16x36xf32>
    %c135_145 = arith.constant 135 : index
    %1527 = memref.load %arg4[%c135_145] : memref<324xf32, #tpu.memory_space<smem>>
    %1528 = vector.broadcast %1527 : f32 to vector<16x36xf32>
    %1529 = arith.mulf %1528, %1446 : vector<16x36xf32>
    %1530 = arith.addf %1334, %1529 : vector<16x36xf32>
    %c136_146 = arith.constant 136 : index
    %1531 = memref.load %arg4[%c136_146] : memref<324xf32, #tpu.memory_space<smem>>
    %1532 = vector.broadcast %1531 : f32 to vector<16x36xf32>
    %1533 = arith.mulf %1532, %1447 : vector<16x36xf32>
    %1534 = arith.addf %1530, %1533 : vector<16x36xf32>
    %c137_147 = arith.constant 137 : index
    %1535 = memref.load %arg4[%c137_147] : memref<324xf32, #tpu.memory_space<smem>>
    %1536 = vector.broadcast %1535 : f32 to vector<16x36xf32>
    %1537 = arith.mulf %1536, %1448 : vector<16x36xf32>
    %1538 = arith.addf %1534, %1537 : vector<16x36xf32>
    %c138_148 = arith.constant 138 : index
    %1539 = memref.load %arg4[%c138_148] : memref<324xf32, #tpu.memory_space<smem>>
    %1540 = vector.broadcast %1539 : f32 to vector<16x36xf32>
    %1541 = arith.mulf %1540, %1449 : vector<16x36xf32>
    %1542 = arith.addf %1538, %1541 : vector<16x36xf32>
    %c139_149 = arith.constant 139 : index
    %1543 = memref.load %arg4[%c139_149] : memref<324xf32, #tpu.memory_space<smem>>
    %1544 = vector.broadcast %1543 : f32 to vector<16x36xf32>
    %1545 = arith.mulf %1544, %1450 : vector<16x36xf32>
    %1546 = arith.addf %1542, %1545 : vector<16x36xf32>
    %c140_150 = arith.constant 140 : index
    %1547 = memref.load %arg4[%c140_150] : memref<324xf32, #tpu.memory_space<smem>>
    %1548 = vector.broadcast %1547 : f32 to vector<16x36xf32>
    %1549 = arith.mulf %1548, %1451 : vector<16x36xf32>
    %1550 = arith.addf %1546, %1549 : vector<16x36xf32>
    %c141_151 = arith.constant 141 : index
    %1551 = memref.load %arg4[%c141_151] : memref<324xf32, #tpu.memory_space<smem>>
    %1552 = vector.broadcast %1551 : f32 to vector<16x36xf32>
    %1553 = arith.mulf %1552, %1452 : vector<16x36xf32>
    %1554 = arith.addf %1550, %1553 : vector<16x36xf32>
    %c142_152 = arith.constant 142 : index
    %1555 = memref.load %arg4[%c142_152] : memref<324xf32, #tpu.memory_space<smem>>
    %1556 = vector.broadcast %1555 : f32 to vector<16x36xf32>
    %1557 = arith.mulf %1556, %1453 : vector<16x36xf32>
    %1558 = arith.addf %1554, %1557 : vector<16x36xf32>
    %c143_153 = arith.constant 143 : index
    %1559 = memref.load %arg4[%c143_153] : memref<324xf32, #tpu.memory_space<smem>>
    %1560 = vector.broadcast %1559 : f32 to vector<16x36xf32>
    %1561 = arith.mulf %1560, %1454 : vector<16x36xf32>
    %1562 = arith.addf %1558, %1561 : vector<16x36xf32>
    %c189 = arith.constant 189 : index
    %1563 = memref.load %arg4[%c189] : memref<324xf32, #tpu.memory_space<smem>>
    %1564 = vector.broadcast %1563 : f32 to vector<16x36xf32>
    %1565 = arith.mulf %1564, %1446 : vector<16x36xf32>
    %1566 = arith.addf %1370, %1565 : vector<16x36xf32>
    %c190 = arith.constant 190 : index
    %1567 = memref.load %arg4[%c190] : memref<324xf32, #tpu.memory_space<smem>>
    %1568 = vector.broadcast %1567 : f32 to vector<16x36xf32>
    %1569 = arith.mulf %1568, %1447 : vector<16x36xf32>
    %1570 = arith.addf %1566, %1569 : vector<16x36xf32>
    %c191 = arith.constant 191 : index
    %1571 = memref.load %arg4[%c191] : memref<324xf32, #tpu.memory_space<smem>>
    %1572 = vector.broadcast %1571 : f32 to vector<16x36xf32>
    %1573 = arith.mulf %1572, %1448 : vector<16x36xf32>
    %1574 = arith.addf %1570, %1573 : vector<16x36xf32>
    %c192 = arith.constant 192 : index
    %1575 = memref.load %arg4[%c192] : memref<324xf32, #tpu.memory_space<smem>>
    %1576 = vector.broadcast %1575 : f32 to vector<16x36xf32>
    %1577 = arith.mulf %1576, %1449 : vector<16x36xf32>
    %1578 = arith.addf %1574, %1577 : vector<16x36xf32>
    %c193 = arith.constant 193 : index
    %1579 = memref.load %arg4[%c193] : memref<324xf32, #tpu.memory_space<smem>>
    %1580 = vector.broadcast %1579 : f32 to vector<16x36xf32>
    %1581 = arith.mulf %1580, %1450 : vector<16x36xf32>
    %1582 = arith.addf %1578, %1581 : vector<16x36xf32>
    %c194 = arith.constant 194 : index
    %1583 = memref.load %arg4[%c194] : memref<324xf32, #tpu.memory_space<smem>>
    %1584 = vector.broadcast %1583 : f32 to vector<16x36xf32>
    %1585 = arith.mulf %1584, %1451 : vector<16x36xf32>
    %1586 = arith.addf %1582, %1585 : vector<16x36xf32>
    %c195 = arith.constant 195 : index
    %1587 = memref.load %arg4[%c195] : memref<324xf32, #tpu.memory_space<smem>>
    %1588 = vector.broadcast %1587 : f32 to vector<16x36xf32>
    %1589 = arith.mulf %1588, %1452 : vector<16x36xf32>
    %1590 = arith.addf %1586, %1589 : vector<16x36xf32>
    %c196 = arith.constant 196 : index
    %1591 = memref.load %arg4[%c196] : memref<324xf32, #tpu.memory_space<smem>>
    %1592 = vector.broadcast %1591 : f32 to vector<16x36xf32>
    %1593 = arith.mulf %1592, %1453 : vector<16x36xf32>
    %1594 = arith.addf %1590, %1593 : vector<16x36xf32>
    %c197 = arith.constant 197 : index
    %1595 = memref.load %arg4[%c197] : memref<324xf32, #tpu.memory_space<smem>>
    %1596 = vector.broadcast %1595 : f32 to vector<16x36xf32>
    %1597 = arith.mulf %1596, %1454 : vector<16x36xf32>
    %1598 = arith.addf %1594, %1597 : vector<16x36xf32>
    %c243 = arith.constant 243 : index
    %1599 = memref.load %arg4[%c243] : memref<324xf32, #tpu.memory_space<smem>>
    %1600 = vector.broadcast %1599 : f32 to vector<16x36xf32>
    %1601 = arith.mulf %1600, %1446 : vector<16x36xf32>
    %1602 = arith.addf %1406, %1601 : vector<16x36xf32>
    %c244 = arith.constant 244 : index
    %1603 = memref.load %arg4[%c244] : memref<324xf32, #tpu.memory_space<smem>>
    %1604 = vector.broadcast %1603 : f32 to vector<16x36xf32>
    %1605 = arith.mulf %1604, %1447 : vector<16x36xf32>
    %1606 = arith.addf %1602, %1605 : vector<16x36xf32>
    %c245 = arith.constant 245 : index
    %1607 = memref.load %arg4[%c245] : memref<324xf32, #tpu.memory_space<smem>>
    %1608 = vector.broadcast %1607 : f32 to vector<16x36xf32>
    %1609 = arith.mulf %1608, %1448 : vector<16x36xf32>
    %1610 = arith.addf %1606, %1609 : vector<16x36xf32>
    %c246 = arith.constant 246 : index
    %1611 = memref.load %arg4[%c246] : memref<324xf32, #tpu.memory_space<smem>>
    %1612 = vector.broadcast %1611 : f32 to vector<16x36xf32>
    %1613 = arith.mulf %1612, %1449 : vector<16x36xf32>
    %1614 = arith.addf %1610, %1613 : vector<16x36xf32>
    %c247 = arith.constant 247 : index
    %1615 = memref.load %arg4[%c247] : memref<324xf32, #tpu.memory_space<smem>>
    %1616 = vector.broadcast %1615 : f32 to vector<16x36xf32>
    %1617 = arith.mulf %1616, %1450 : vector<16x36xf32>
    %1618 = arith.addf %1614, %1617 : vector<16x36xf32>
    %c248 = arith.constant 248 : index
    %1619 = memref.load %arg4[%c248] : memref<324xf32, #tpu.memory_space<smem>>
    %1620 = vector.broadcast %1619 : f32 to vector<16x36xf32>
    %1621 = arith.mulf %1620, %1451 : vector<16x36xf32>
    %1622 = arith.addf %1618, %1621 : vector<16x36xf32>
    %c249 = arith.constant 249 : index
    %1623 = memref.load %arg4[%c249] : memref<324xf32, #tpu.memory_space<smem>>
    %1624 = vector.broadcast %1623 : f32 to vector<16x36xf32>
    %1625 = arith.mulf %1624, %1452 : vector<16x36xf32>
    %1626 = arith.addf %1622, %1625 : vector<16x36xf32>
    %c250 = arith.constant 250 : index
    %1627 = memref.load %arg4[%c250] : memref<324xf32, #tpu.memory_space<smem>>
    %1628 = vector.broadcast %1627 : f32 to vector<16x36xf32>
    %1629 = arith.mulf %1628, %1453 : vector<16x36xf32>
    %1630 = arith.addf %1626, %1629 : vector<16x36xf32>
    %c251 = arith.constant 251 : index
    %1631 = memref.load %arg4[%c251] : memref<324xf32, #tpu.memory_space<smem>>
    %1632 = vector.broadcast %1631 : f32 to vector<16x36xf32>
    %1633 = arith.mulf %1632, %1454 : vector<16x36xf32>
    %1634 = arith.addf %1630, %1633 : vector<16x36xf32>
    %c297 = arith.constant 297 : index
    %1635 = memref.load %arg4[%c297] : memref<324xf32, #tpu.memory_space<smem>>
    %1636 = vector.broadcast %1635 : f32 to vector<16x36xf32>
    %1637 = arith.mulf %1636, %1446 : vector<16x36xf32>
    %1638 = arith.addf %1442, %1637 : vector<16x36xf32>
    %c298 = arith.constant 298 : index
    %1639 = memref.load %arg4[%c298] : memref<324xf32, #tpu.memory_space<smem>>
    %1640 = vector.broadcast %1639 : f32 to vector<16x36xf32>
    %1641 = arith.mulf %1640, %1447 : vector<16x36xf32>
    %1642 = arith.addf %1638, %1641 : vector<16x36xf32>
    %c299 = arith.constant 299 : index
    %1643 = memref.load %arg4[%c299] : memref<324xf32, #tpu.memory_space<smem>>
    %1644 = vector.broadcast %1643 : f32 to vector<16x36xf32>
    %1645 = arith.mulf %1644, %1448 : vector<16x36xf32>
    %1646 = arith.addf %1642, %1645 : vector<16x36xf32>
    %c300 = arith.constant 300 : index
    %1647 = memref.load %arg4[%c300] : memref<324xf32, #tpu.memory_space<smem>>
    %1648 = vector.broadcast %1647 : f32 to vector<16x36xf32>
    %1649 = arith.mulf %1648, %1449 : vector<16x36xf32>
    %1650 = arith.addf %1646, %1649 : vector<16x36xf32>
    %c301 = arith.constant 301 : index
    %1651 = memref.load %arg4[%c301] : memref<324xf32, #tpu.memory_space<smem>>
    %1652 = vector.broadcast %1651 : f32 to vector<16x36xf32>
    %1653 = arith.mulf %1652, %1450 : vector<16x36xf32>
    %1654 = arith.addf %1650, %1653 : vector<16x36xf32>
    %c302 = arith.constant 302 : index
    %1655 = memref.load %arg4[%c302] : memref<324xf32, #tpu.memory_space<smem>>
    %1656 = vector.broadcast %1655 : f32 to vector<16x36xf32>
    %1657 = arith.mulf %1656, %1451 : vector<16x36xf32>
    %1658 = arith.addf %1654, %1657 : vector<16x36xf32>
    %c303 = arith.constant 303 : index
    %1659 = memref.load %arg4[%c303] : memref<324xf32, #tpu.memory_space<smem>>
    %1660 = vector.broadcast %1659 : f32 to vector<16x36xf32>
    %1661 = arith.mulf %1660, %1452 : vector<16x36xf32>
    %1662 = arith.addf %1658, %1661 : vector<16x36xf32>
    %c304 = arith.constant 304 : index
    %1663 = memref.load %arg4[%c304] : memref<324xf32, #tpu.memory_space<smem>>
    %1664 = vector.broadcast %1663 : f32 to vector<16x36xf32>
    %1665 = arith.mulf %1664, %1453 : vector<16x36xf32>
    %1666 = arith.addf %1662, %1665 : vector<16x36xf32>
    %c305 = arith.constant 305 : index
    %1667 = memref.load %arg4[%c305] : memref<324xf32, #tpu.memory_space<smem>>
    %1668 = vector.broadcast %1667 : f32 to vector<16x36xf32>
    %1669 = arith.mulf %1668, %1454 : vector<16x36xf32>
    %1670 = arith.addf %1666, %1669 : vector<16x36xf32>
    %1671 = vector.extract_strided_slice %742 {offsets = [0, 0], sizes = [18, 36], strides = [1, 1]} : vector<18x38xf32> to vector<18x36xf32>
    %1672 = vector.extract_strided_slice %742 {offsets = [0, 1], sizes = [18, 36], strides = [1, 1]} : vector<18x38xf32> to vector<18x36xf32>
    %1673 = vector.extract_strided_slice %742 {offsets = [0, 2], sizes = [18, 36], strides = [1, 1]} : vector<18x38xf32> to vector<18x36xf32>
    %1674 = vector.extract_strided_slice %1671 {offsets = [0, 0], sizes = [16, 36], strides = [1, 1]} : vector<18x36xf32> to vector<16x36xf32>
    %1675 = vector.extract_strided_slice %1672 {offsets = [0, 0], sizes = [16, 36], strides = [1, 1]} : vector<18x36xf32> to vector<16x36xf32>
    %1676 = vector.extract_strided_slice %1673 {offsets = [0, 0], sizes = [16, 36], strides = [1, 1]} : vector<18x36xf32> to vector<16x36xf32>
    %1677 = vector.extract_strided_slice %1671 {offsets = [1, 0], sizes = [16, 36], strides = [1, 1]} : vector<18x36xf32> to vector<16x36xf32>
    %1678 = vector.extract_strided_slice %1672 {offsets = [1, 0], sizes = [16, 36], strides = [1, 1]} : vector<18x36xf32> to vector<16x36xf32>
    %1679 = vector.extract_strided_slice %1673 {offsets = [1, 0], sizes = [16, 36], strides = [1, 1]} : vector<18x36xf32> to vector<16x36xf32>
    %1680 = vector.extract_strided_slice %1671 {offsets = [2, 0], sizes = [16, 36], strides = [1, 1]} : vector<18x36xf32> to vector<16x36xf32>
    %1681 = vector.extract_strided_slice %1672 {offsets = [2, 0], sizes = [16, 36], strides = [1, 1]} : vector<18x36xf32> to vector<16x36xf32>
    %1682 = vector.extract_strided_slice %1673 {offsets = [2, 0], sizes = [16, 36], strides = [1, 1]} : vector<18x36xf32> to vector<16x36xf32>
    %c36_154 = arith.constant 36 : index
    %1683 = memref.load %arg4[%c36_154] : memref<324xf32, #tpu.memory_space<smem>>
    %1684 = vector.broadcast %1683 : f32 to vector<16x36xf32>
    %1685 = arith.mulf %1684, %1674 : vector<16x36xf32>
    %1686 = arith.addf %1490, %1685 : vector<16x36xf32>
    %c37_155 = arith.constant 37 : index
    %1687 = memref.load %arg4[%c37_155] : memref<324xf32, #tpu.memory_space<smem>>
    %1688 = vector.broadcast %1687 : f32 to vector<16x36xf32>
    %1689 = arith.mulf %1688, %1675 : vector<16x36xf32>
    %1690 = arith.addf %1686, %1689 : vector<16x36xf32>
    %c38_156 = arith.constant 38 : index
    %1691 = memref.load %arg4[%c38_156] : memref<324xf32, #tpu.memory_space<smem>>
    %1692 = vector.broadcast %1691 : f32 to vector<16x36xf32>
    %1693 = arith.mulf %1692, %1676 : vector<16x36xf32>
    %1694 = arith.addf %1690, %1693 : vector<16x36xf32>
    %c39_157 = arith.constant 39 : index
    %1695 = memref.load %arg4[%c39_157] : memref<324xf32, #tpu.memory_space<smem>>
    %1696 = vector.broadcast %1695 : f32 to vector<16x36xf32>
    %1697 = arith.mulf %1696, %1677 : vector<16x36xf32>
    %1698 = arith.addf %1694, %1697 : vector<16x36xf32>
    %c40_158 = arith.constant 40 : index
    %1699 = memref.load %arg4[%c40_158] : memref<324xf32, #tpu.memory_space<smem>>
    %1700 = vector.broadcast %1699 : f32 to vector<16x36xf32>
    %1701 = arith.mulf %1700, %1678 : vector<16x36xf32>
    %1702 = arith.addf %1698, %1701 : vector<16x36xf32>
    %c41_159 = arith.constant 41 : index
    %1703 = memref.load %arg4[%c41_159] : memref<324xf32, #tpu.memory_space<smem>>
    %1704 = vector.broadcast %1703 : f32 to vector<16x36xf32>
    %1705 = arith.mulf %1704, %1679 : vector<16x36xf32>
    %1706 = arith.addf %1702, %1705 : vector<16x36xf32>
    %c42_160 = arith.constant 42 : index
    %1707 = memref.load %arg4[%c42_160] : memref<324xf32, #tpu.memory_space<smem>>
    %1708 = vector.broadcast %1707 : f32 to vector<16x36xf32>
    %1709 = arith.mulf %1708, %1680 : vector<16x36xf32>
    %1710 = arith.addf %1706, %1709 : vector<16x36xf32>
    %c43_161 = arith.constant 43 : index
    %1711 = memref.load %arg4[%c43_161] : memref<324xf32, #tpu.memory_space<smem>>
    %1712 = vector.broadcast %1711 : f32 to vector<16x36xf32>
    %1713 = arith.mulf %1712, %1681 : vector<16x36xf32>
    %1714 = arith.addf %1710, %1713 : vector<16x36xf32>
    %c44_162 = arith.constant 44 : index
    %1715 = memref.load %arg4[%c44_162] : memref<324xf32, #tpu.memory_space<smem>>
    %1716 = vector.broadcast %1715 : f32 to vector<16x36xf32>
    %1717 = arith.mulf %1716, %1682 : vector<16x36xf32>
    %1718 = arith.addf %1714, %1717 : vector<16x36xf32>
    %c90_163 = arith.constant 90 : index
    %1719 = memref.load %arg4[%c90_163] : memref<324xf32, #tpu.memory_space<smem>>
    %1720 = vector.broadcast %1719 : f32 to vector<16x36xf32>
    %1721 = arith.mulf %1720, %1674 : vector<16x36xf32>
    %1722 = arith.addf %1526, %1721 : vector<16x36xf32>
    %c91_164 = arith.constant 91 : index
    %1723 = memref.load %arg4[%c91_164] : memref<324xf32, #tpu.memory_space<smem>>
    %1724 = vector.broadcast %1723 : f32 to vector<16x36xf32>
    %1725 = arith.mulf %1724, %1675 : vector<16x36xf32>
    %1726 = arith.addf %1722, %1725 : vector<16x36xf32>
    %c92_165 = arith.constant 92 : index
    %1727 = memref.load %arg4[%c92_165] : memref<324xf32, #tpu.memory_space<smem>>
    %1728 = vector.broadcast %1727 : f32 to vector<16x36xf32>
    %1729 = arith.mulf %1728, %1676 : vector<16x36xf32>
    %1730 = arith.addf %1726, %1729 : vector<16x36xf32>
    %c93_166 = arith.constant 93 : index
    %1731 = memref.load %arg4[%c93_166] : memref<324xf32, #tpu.memory_space<smem>>
    %1732 = vector.broadcast %1731 : f32 to vector<16x36xf32>
    %1733 = arith.mulf %1732, %1677 : vector<16x36xf32>
    %1734 = arith.addf %1730, %1733 : vector<16x36xf32>
    %c94_167 = arith.constant 94 : index
    %1735 = memref.load %arg4[%c94_167] : memref<324xf32, #tpu.memory_space<smem>>
    %1736 = vector.broadcast %1735 : f32 to vector<16x36xf32>
    %1737 = arith.mulf %1736, %1678 : vector<16x36xf32>
    %1738 = arith.addf %1734, %1737 : vector<16x36xf32>
    %c95_168 = arith.constant 95 : index
    %1739 = memref.load %arg4[%c95_168] : memref<324xf32, #tpu.memory_space<smem>>
    %1740 = vector.broadcast %1739 : f32 to vector<16x36xf32>
    %1741 = arith.mulf %1740, %1679 : vector<16x36xf32>
    %1742 = arith.addf %1738, %1741 : vector<16x36xf32>
    %c96_169 = arith.constant 96 : index
    %1743 = memref.load %arg4[%c96_169] : memref<324xf32, #tpu.memory_space<smem>>
    %1744 = vector.broadcast %1743 : f32 to vector<16x36xf32>
    %1745 = arith.mulf %1744, %1680 : vector<16x36xf32>
    %1746 = arith.addf %1742, %1745 : vector<16x36xf32>
    %c97_170 = arith.constant 97 : index
    %1747 = memref.load %arg4[%c97_170] : memref<324xf32, #tpu.memory_space<smem>>
    %1748 = vector.broadcast %1747 : f32 to vector<16x36xf32>
    %1749 = arith.mulf %1748, %1681 : vector<16x36xf32>
    %1750 = arith.addf %1746, %1749 : vector<16x36xf32>
    %c98_171 = arith.constant 98 : index
    %1751 = memref.load %arg4[%c98_171] : memref<324xf32, #tpu.memory_space<smem>>
    %1752 = vector.broadcast %1751 : f32 to vector<16x36xf32>
    %1753 = arith.mulf %1752, %1682 : vector<16x36xf32>
    %1754 = arith.addf %1750, %1753 : vector<16x36xf32>
    %c144_172 = arith.constant 144 : index
    %1755 = memref.load %arg4[%c144_172] : memref<324xf32, #tpu.memory_space<smem>>
    %1756 = vector.broadcast %1755 : f32 to vector<16x36xf32>
    %1757 = arith.mulf %1756, %1674 : vector<16x36xf32>
    %1758 = arith.addf %1562, %1757 : vector<16x36xf32>
    %c145_173 = arith.constant 145 : index
    %1759 = memref.load %arg4[%c145_173] : memref<324xf32, #tpu.memory_space<smem>>
    %1760 = vector.broadcast %1759 : f32 to vector<16x36xf32>
    %1761 = arith.mulf %1760, %1675 : vector<16x36xf32>
    %1762 = arith.addf %1758, %1761 : vector<16x36xf32>
    %c146_174 = arith.constant 146 : index
    %1763 = memref.load %arg4[%c146_174] : memref<324xf32, #tpu.memory_space<smem>>
    %1764 = vector.broadcast %1763 : f32 to vector<16x36xf32>
    %1765 = arith.mulf %1764, %1676 : vector<16x36xf32>
    %1766 = arith.addf %1762, %1765 : vector<16x36xf32>
    %c147_175 = arith.constant 147 : index
    %1767 = memref.load %arg4[%c147_175] : memref<324xf32, #tpu.memory_space<smem>>
    %1768 = vector.broadcast %1767 : f32 to vector<16x36xf32>
    %1769 = arith.mulf %1768, %1677 : vector<16x36xf32>
    %1770 = arith.addf %1766, %1769 : vector<16x36xf32>
    %c148_176 = arith.constant 148 : index
    %1771 = memref.load %arg4[%c148_176] : memref<324xf32, #tpu.memory_space<smem>>
    %1772 = vector.broadcast %1771 : f32 to vector<16x36xf32>
    %1773 = arith.mulf %1772, %1678 : vector<16x36xf32>
    %1774 = arith.addf %1770, %1773 : vector<16x36xf32>
    %c149_177 = arith.constant 149 : index
    %1775 = memref.load %arg4[%c149_177] : memref<324xf32, #tpu.memory_space<smem>>
    %1776 = vector.broadcast %1775 : f32 to vector<16x36xf32>
    %1777 = arith.mulf %1776, %1679 : vector<16x36xf32>
    %1778 = arith.addf %1774, %1777 : vector<16x36xf32>
    %c150_178 = arith.constant 150 : index
    %1779 = memref.load %arg4[%c150_178] : memref<324xf32, #tpu.memory_space<smem>>
    %1780 = vector.broadcast %1779 : f32 to vector<16x36xf32>
    %1781 = arith.mulf %1780, %1680 : vector<16x36xf32>
    %1782 = arith.addf %1778, %1781 : vector<16x36xf32>
    %c151_179 = arith.constant 151 : index
    %1783 = memref.load %arg4[%c151_179] : memref<324xf32, #tpu.memory_space<smem>>
    %1784 = vector.broadcast %1783 : f32 to vector<16x36xf32>
    %1785 = arith.mulf %1784, %1681 : vector<16x36xf32>
    %1786 = arith.addf %1782, %1785 : vector<16x36xf32>
    %c152_180 = arith.constant 152 : index
    %1787 = memref.load %arg4[%c152_180] : memref<324xf32, #tpu.memory_space<smem>>
    %1788 = vector.broadcast %1787 : f32 to vector<16x36xf32>
    %1789 = arith.mulf %1788, %1682 : vector<16x36xf32>
    %1790 = arith.addf %1786, %1789 : vector<16x36xf32>
    %c198 = arith.constant 198 : index
    %1791 = memref.load %arg4[%c198] : memref<324xf32, #tpu.memory_space<smem>>
    %1792 = vector.broadcast %1791 : f32 to vector<16x36xf32>
    %1793 = arith.mulf %1792, %1674 : vector<16x36xf32>
    %1794 = arith.addf %1598, %1793 : vector<16x36xf32>
    %c199 = arith.constant 199 : index
    %1795 = memref.load %arg4[%c199] : memref<324xf32, #tpu.memory_space<smem>>
    %1796 = vector.broadcast %1795 : f32 to vector<16x36xf32>
    %1797 = arith.mulf %1796, %1675 : vector<16x36xf32>
    %1798 = arith.addf %1794, %1797 : vector<16x36xf32>
    %c200 = arith.constant 200 : index
    %1799 = memref.load %arg4[%c200] : memref<324xf32, #tpu.memory_space<smem>>
    %1800 = vector.broadcast %1799 : f32 to vector<16x36xf32>
    %1801 = arith.mulf %1800, %1676 : vector<16x36xf32>
    %1802 = arith.addf %1798, %1801 : vector<16x36xf32>
    %c201 = arith.constant 201 : index
    %1803 = memref.load %arg4[%c201] : memref<324xf32, #tpu.memory_space<smem>>
    %1804 = vector.broadcast %1803 : f32 to vector<16x36xf32>
    %1805 = arith.mulf %1804, %1677 : vector<16x36xf32>
    %1806 = arith.addf %1802, %1805 : vector<16x36xf32>
    %c202 = arith.constant 202 : index
    %1807 = memref.load %arg4[%c202] : memref<324xf32, #tpu.memory_space<smem>>
    %1808 = vector.broadcast %1807 : f32 to vector<16x36xf32>
    %1809 = arith.mulf %1808, %1678 : vector<16x36xf32>
    %1810 = arith.addf %1806, %1809 : vector<16x36xf32>
    %c203 = arith.constant 203 : index
    %1811 = memref.load %arg4[%c203] : memref<324xf32, #tpu.memory_space<smem>>
    %1812 = vector.broadcast %1811 : f32 to vector<16x36xf32>
    %1813 = arith.mulf %1812, %1679 : vector<16x36xf32>
    %1814 = arith.addf %1810, %1813 : vector<16x36xf32>
    %c204 = arith.constant 204 : index
    %1815 = memref.load %arg4[%c204] : memref<324xf32, #tpu.memory_space<smem>>
    %1816 = vector.broadcast %1815 : f32 to vector<16x36xf32>
    %1817 = arith.mulf %1816, %1680 : vector<16x36xf32>
    %1818 = arith.addf %1814, %1817 : vector<16x36xf32>
    %c205 = arith.constant 205 : index
    %1819 = memref.load %arg4[%c205] : memref<324xf32, #tpu.memory_space<smem>>
    %1820 = vector.broadcast %1819 : f32 to vector<16x36xf32>
    %1821 = arith.mulf %1820, %1681 : vector<16x36xf32>
    %1822 = arith.addf %1818, %1821 : vector<16x36xf32>
    %c206 = arith.constant 206 : index
    %1823 = memref.load %arg4[%c206] : memref<324xf32, #tpu.memory_space<smem>>
    %1824 = vector.broadcast %1823 : f32 to vector<16x36xf32>
    %1825 = arith.mulf %1824, %1682 : vector<16x36xf32>
    %1826 = arith.addf %1822, %1825 : vector<16x36xf32>
    %c252 = arith.constant 252 : index
    %1827 = memref.load %arg4[%c252] : memref<324xf32, #tpu.memory_space<smem>>
    %1828 = vector.broadcast %1827 : f32 to vector<16x36xf32>
    %1829 = arith.mulf %1828, %1674 : vector<16x36xf32>
    %1830 = arith.addf %1634, %1829 : vector<16x36xf32>
    %c253 = arith.constant 253 : index
    %1831 = memref.load %arg4[%c253] : memref<324xf32, #tpu.memory_space<smem>>
    %1832 = vector.broadcast %1831 : f32 to vector<16x36xf32>
    %1833 = arith.mulf %1832, %1675 : vector<16x36xf32>
    %1834 = arith.addf %1830, %1833 : vector<16x36xf32>
    %c254 = arith.constant 254 : index
    %1835 = memref.load %arg4[%c254] : memref<324xf32, #tpu.memory_space<smem>>
    %1836 = vector.broadcast %1835 : f32 to vector<16x36xf32>
    %1837 = arith.mulf %1836, %1676 : vector<16x36xf32>
    %1838 = arith.addf %1834, %1837 : vector<16x36xf32>
    %c255 = arith.constant 255 : index
    %1839 = memref.load %arg4[%c255] : memref<324xf32, #tpu.memory_space<smem>>
    %1840 = vector.broadcast %1839 : f32 to vector<16x36xf32>
    %1841 = arith.mulf %1840, %1677 : vector<16x36xf32>
    %1842 = arith.addf %1838, %1841 : vector<16x36xf32>
    %c256 = arith.constant 256 : index
    %1843 = memref.load %arg4[%c256] : memref<324xf32, #tpu.memory_space<smem>>
    %1844 = vector.broadcast %1843 : f32 to vector<16x36xf32>
    %1845 = arith.mulf %1844, %1678 : vector<16x36xf32>
    %1846 = arith.addf %1842, %1845 : vector<16x36xf32>
    %c257 = arith.constant 257 : index
    %1847 = memref.load %arg4[%c257] : memref<324xf32, #tpu.memory_space<smem>>
    %1848 = vector.broadcast %1847 : f32 to vector<16x36xf32>
    %1849 = arith.mulf %1848, %1679 : vector<16x36xf32>
    %1850 = arith.addf %1846, %1849 : vector<16x36xf32>
    %c258 = arith.constant 258 : index
    %1851 = memref.load %arg4[%c258] : memref<324xf32, #tpu.memory_space<smem>>
    %1852 = vector.broadcast %1851 : f32 to vector<16x36xf32>
    %1853 = arith.mulf %1852, %1680 : vector<16x36xf32>
    %1854 = arith.addf %1850, %1853 : vector<16x36xf32>
    %c259 = arith.constant 259 : index
    %1855 = memref.load %arg4[%c259] : memref<324xf32, #tpu.memory_space<smem>>
    %1856 = vector.broadcast %1855 : f32 to vector<16x36xf32>
    %1857 = arith.mulf %1856, %1681 : vector<16x36xf32>
    %1858 = arith.addf %1854, %1857 : vector<16x36xf32>
    %c260 = arith.constant 260 : index
    %1859 = memref.load %arg4[%c260] : memref<324xf32, #tpu.memory_space<smem>>
    %1860 = vector.broadcast %1859 : f32 to vector<16x36xf32>
    %1861 = arith.mulf %1860, %1682 : vector<16x36xf32>
    %1862 = arith.addf %1858, %1861 : vector<16x36xf32>
    %c306 = arith.constant 306 : index
    %1863 = memref.load %arg4[%c306] : memref<324xf32, #tpu.memory_space<smem>>
    %1864 = vector.broadcast %1863 : f32 to vector<16x36xf32>
    %1865 = arith.mulf %1864, %1674 : vector<16x36xf32>
    %1866 = arith.addf %1670, %1865 : vector<16x36xf32>
    %c307 = arith.constant 307 : index
    %1867 = memref.load %arg4[%c307] : memref<324xf32, #tpu.memory_space<smem>>
    %1868 = vector.broadcast %1867 : f32 to vector<16x36xf32>
    %1869 = arith.mulf %1868, %1675 : vector<16x36xf32>
    %1870 = arith.addf %1866, %1869 : vector<16x36xf32>
    %c308 = arith.constant 308 : index
    %1871 = memref.load %arg4[%c308] : memref<324xf32, #tpu.memory_space<smem>>
    %1872 = vector.broadcast %1871 : f32 to vector<16x36xf32>
    %1873 = arith.mulf %1872, %1676 : vector<16x36xf32>
    %1874 = arith.addf %1870, %1873 : vector<16x36xf32>
    %c309 = arith.constant 309 : index
    %1875 = memref.load %arg4[%c309] : memref<324xf32, #tpu.memory_space<smem>>
    %1876 = vector.broadcast %1875 : f32 to vector<16x36xf32>
    %1877 = arith.mulf %1876, %1677 : vector<16x36xf32>
    %1878 = arith.addf %1874, %1877 : vector<16x36xf32>
    %c310 = arith.constant 310 : index
    %1879 = memref.load %arg4[%c310] : memref<324xf32, #tpu.memory_space<smem>>
    %1880 = vector.broadcast %1879 : f32 to vector<16x36xf32>
    %1881 = arith.mulf %1880, %1678 : vector<16x36xf32>
    %1882 = arith.addf %1878, %1881 : vector<16x36xf32>
    %c311 = arith.constant 311 : index
    %1883 = memref.load %arg4[%c311] : memref<324xf32, #tpu.memory_space<smem>>
    %1884 = vector.broadcast %1883 : f32 to vector<16x36xf32>
    %1885 = arith.mulf %1884, %1679 : vector<16x36xf32>
    %1886 = arith.addf %1882, %1885 : vector<16x36xf32>
    %c312 = arith.constant 312 : index
    %1887 = memref.load %arg4[%c312] : memref<324xf32, #tpu.memory_space<smem>>
    %1888 = vector.broadcast %1887 : f32 to vector<16x36xf32>
    %1889 = arith.mulf %1888, %1680 : vector<16x36xf32>
    %1890 = arith.addf %1886, %1889 : vector<16x36xf32>
    %c313 = arith.constant 313 : index
    %1891 = memref.load %arg4[%c313] : memref<324xf32, #tpu.memory_space<smem>>
    %1892 = vector.broadcast %1891 : f32 to vector<16x36xf32>
    %1893 = arith.mulf %1892, %1681 : vector<16x36xf32>
    %1894 = arith.addf %1890, %1893 : vector<16x36xf32>
    %c314 = arith.constant 314 : index
    %1895 = memref.load %arg4[%c314] : memref<324xf32, #tpu.memory_space<smem>>
    %1896 = vector.broadcast %1895 : f32 to vector<16x36xf32>
    %1897 = arith.mulf %1896, %1682 : vector<16x36xf32>
    %1898 = arith.addf %1894, %1897 : vector<16x36xf32>
    %1899 = vector.extract_strided_slice %746 {offsets = [0, 0], sizes = [18, 36], strides = [1, 1]} : vector<18x38xf32> to vector<18x36xf32>
    %1900 = vector.extract_strided_slice %746 {offsets = [0, 1], sizes = [18, 36], strides = [1, 1]} : vector<18x38xf32> to vector<18x36xf32>
    %1901 = vector.extract_strided_slice %746 {offsets = [0, 2], sizes = [18, 36], strides = [1, 1]} : vector<18x38xf32> to vector<18x36xf32>
    %1902 = vector.extract_strided_slice %1899 {offsets = [0, 0], sizes = [16, 36], strides = [1, 1]} : vector<18x36xf32> to vector<16x36xf32>
    %1903 = vector.extract_strided_slice %1900 {offsets = [0, 0], sizes = [16, 36], strides = [1, 1]} : vector<18x36xf32> to vector<16x36xf32>
    %1904 = vector.extract_strided_slice %1901 {offsets = [0, 0], sizes = [16, 36], strides = [1, 1]} : vector<18x36xf32> to vector<16x36xf32>
    %1905 = vector.extract_strided_slice %1899 {offsets = [1, 0], sizes = [16, 36], strides = [1, 1]} : vector<18x36xf32> to vector<16x36xf32>
    %1906 = vector.extract_strided_slice %1900 {offsets = [1, 0], sizes = [16, 36], strides = [1, 1]} : vector<18x36xf32> to vector<16x36xf32>
    %1907 = vector.extract_strided_slice %1901 {offsets = [1, 0], sizes = [16, 36], strides = [1, 1]} : vector<18x36xf32> to vector<16x36xf32>
    %1908 = vector.extract_strided_slice %1899 {offsets = [2, 0], sizes = [16, 36], strides = [1, 1]} : vector<18x36xf32> to vector<16x36xf32>
    %1909 = vector.extract_strided_slice %1900 {offsets = [2, 0], sizes = [16, 36], strides = [1, 1]} : vector<18x36xf32> to vector<16x36xf32>
    %1910 = vector.extract_strided_slice %1901 {offsets = [2, 0], sizes = [16, 36], strides = [1, 1]} : vector<18x36xf32> to vector<16x36xf32>
    %c45_181 = arith.constant 45 : index
    %1911 = memref.load %arg4[%c45_181] : memref<324xf32, #tpu.memory_space<smem>>
    %1912 = vector.broadcast %1911 : f32 to vector<16x36xf32>
    %1913 = arith.mulf %1912, %1902 : vector<16x36xf32>
    %1914 = arith.addf %1718, %1913 : vector<16x36xf32>
    %c46_182 = arith.constant 46 : index
    %1915 = memref.load %arg4[%c46_182] : memref<324xf32, #tpu.memory_space<smem>>
    %1916 = vector.broadcast %1915 : f32 to vector<16x36xf32>
    %1917 = arith.mulf %1916, %1903 : vector<16x36xf32>
    %1918 = arith.addf %1914, %1917 : vector<16x36xf32>
    %c47_183 = arith.constant 47 : index
    %1919 = memref.load %arg4[%c47_183] : memref<324xf32, #tpu.memory_space<smem>>
    %1920 = vector.broadcast %1919 : f32 to vector<16x36xf32>
    %1921 = arith.mulf %1920, %1904 : vector<16x36xf32>
    %1922 = arith.addf %1918, %1921 : vector<16x36xf32>
    %c48_184 = arith.constant 48 : index
    %1923 = memref.load %arg4[%c48_184] : memref<324xf32, #tpu.memory_space<smem>>
    %1924 = vector.broadcast %1923 : f32 to vector<16x36xf32>
    %1925 = arith.mulf %1924, %1905 : vector<16x36xf32>
    %1926 = arith.addf %1922, %1925 : vector<16x36xf32>
    %c49_185 = arith.constant 49 : index
    %1927 = memref.load %arg4[%c49_185] : memref<324xf32, #tpu.memory_space<smem>>
    %1928 = vector.broadcast %1927 : f32 to vector<16x36xf32>
    %1929 = arith.mulf %1928, %1906 : vector<16x36xf32>
    %1930 = arith.addf %1926, %1929 : vector<16x36xf32>
    %c50_186 = arith.constant 50 : index
    %1931 = memref.load %arg4[%c50_186] : memref<324xf32, #tpu.memory_space<smem>>
    %1932 = vector.broadcast %1931 : f32 to vector<16x36xf32>
    %1933 = arith.mulf %1932, %1907 : vector<16x36xf32>
    %1934 = arith.addf %1930, %1933 : vector<16x36xf32>
    %c51_187 = arith.constant 51 : index
    %1935 = memref.load %arg4[%c51_187] : memref<324xf32, #tpu.memory_space<smem>>
    %1936 = vector.broadcast %1935 : f32 to vector<16x36xf32>
    %1937 = arith.mulf %1936, %1908 : vector<16x36xf32>
    %1938 = arith.addf %1934, %1937 : vector<16x36xf32>
    %c52_188 = arith.constant 52 : index
    %1939 = memref.load %arg4[%c52_188] : memref<324xf32, #tpu.memory_space<smem>>
    %1940 = vector.broadcast %1939 : f32 to vector<16x36xf32>
    %1941 = arith.mulf %1940, %1909 : vector<16x36xf32>
    %1942 = arith.addf %1938, %1941 : vector<16x36xf32>
    %c53_189 = arith.constant 53 : index
    %1943 = memref.load %arg4[%c53_189] : memref<324xf32, #tpu.memory_space<smem>>
    %1944 = vector.broadcast %1943 : f32 to vector<16x36xf32>
    %1945 = arith.mulf %1944, %1910 : vector<16x36xf32>
    %1946 = arith.addf %1942, %1945 : vector<16x36xf32>
    %c99_190 = arith.constant 99 : index
    %1947 = memref.load %arg4[%c99_190] : memref<324xf32, #tpu.memory_space<smem>>
    %1948 = vector.broadcast %1947 : f32 to vector<16x36xf32>
    %1949 = arith.mulf %1948, %1902 : vector<16x36xf32>
    %1950 = arith.addf %1754, %1949 : vector<16x36xf32>
    %c100_191 = arith.constant 100 : index
    %1951 = memref.load %arg4[%c100_191] : memref<324xf32, #tpu.memory_space<smem>>
    %1952 = vector.broadcast %1951 : f32 to vector<16x36xf32>
    %1953 = arith.mulf %1952, %1903 : vector<16x36xf32>
    %1954 = arith.addf %1950, %1953 : vector<16x36xf32>
    %c101_192 = arith.constant 101 : index
    %1955 = memref.load %arg4[%c101_192] : memref<324xf32, #tpu.memory_space<smem>>
    %1956 = vector.broadcast %1955 : f32 to vector<16x36xf32>
    %1957 = arith.mulf %1956, %1904 : vector<16x36xf32>
    %1958 = arith.addf %1954, %1957 : vector<16x36xf32>
    %c102_193 = arith.constant 102 : index
    %1959 = memref.load %arg4[%c102_193] : memref<324xf32, #tpu.memory_space<smem>>
    %1960 = vector.broadcast %1959 : f32 to vector<16x36xf32>
    %1961 = arith.mulf %1960, %1905 : vector<16x36xf32>
    %1962 = arith.addf %1958, %1961 : vector<16x36xf32>
    %c103_194 = arith.constant 103 : index
    %1963 = memref.load %arg4[%c103_194] : memref<324xf32, #tpu.memory_space<smem>>
    %1964 = vector.broadcast %1963 : f32 to vector<16x36xf32>
    %1965 = arith.mulf %1964, %1906 : vector<16x36xf32>
    %1966 = arith.addf %1962, %1965 : vector<16x36xf32>
    %c104_195 = arith.constant 104 : index
    %1967 = memref.load %arg4[%c104_195] : memref<324xf32, #tpu.memory_space<smem>>
    %1968 = vector.broadcast %1967 : f32 to vector<16x36xf32>
    %1969 = arith.mulf %1968, %1907 : vector<16x36xf32>
    %1970 = arith.addf %1966, %1969 : vector<16x36xf32>
    %c105_196 = arith.constant 105 : index
    %1971 = memref.load %arg4[%c105_196] : memref<324xf32, #tpu.memory_space<smem>>
    %1972 = vector.broadcast %1971 : f32 to vector<16x36xf32>
    %1973 = arith.mulf %1972, %1908 : vector<16x36xf32>
    %1974 = arith.addf %1970, %1973 : vector<16x36xf32>
    %c106_197 = arith.constant 106 : index
    %1975 = memref.load %arg4[%c106_197] : memref<324xf32, #tpu.memory_space<smem>>
    %1976 = vector.broadcast %1975 : f32 to vector<16x36xf32>
    %1977 = arith.mulf %1976, %1909 : vector<16x36xf32>
    %1978 = arith.addf %1974, %1977 : vector<16x36xf32>
    %c107_198 = arith.constant 107 : index
    %1979 = memref.load %arg4[%c107_198] : memref<324xf32, #tpu.memory_space<smem>>
    %1980 = vector.broadcast %1979 : f32 to vector<16x36xf32>
    %1981 = arith.mulf %1980, %1910 : vector<16x36xf32>
    %1982 = arith.addf %1978, %1981 : vector<16x36xf32>
    %c153_199 = arith.constant 153 : index
    %1983 = memref.load %arg4[%c153_199] : memref<324xf32, #tpu.memory_space<smem>>
    %1984 = vector.broadcast %1983 : f32 to vector<16x36xf32>
    %1985 = arith.mulf %1984, %1902 : vector<16x36xf32>
    %1986 = arith.addf %1790, %1985 : vector<16x36xf32>
    %c154_200 = arith.constant 154 : index
    %1987 = memref.load %arg4[%c154_200] : memref<324xf32, #tpu.memory_space<smem>>
    %1988 = vector.broadcast %1987 : f32 to vector<16x36xf32>
    %1989 = arith.mulf %1988, %1903 : vector<16x36xf32>
    %1990 = arith.addf %1986, %1989 : vector<16x36xf32>
    %c155_201 = arith.constant 155 : index
    %1991 = memref.load %arg4[%c155_201] : memref<324xf32, #tpu.memory_space<smem>>
    %1992 = vector.broadcast %1991 : f32 to vector<16x36xf32>
    %1993 = arith.mulf %1992, %1904 : vector<16x36xf32>
    %1994 = arith.addf %1990, %1993 : vector<16x36xf32>
    %c156_202 = arith.constant 156 : index
    %1995 = memref.load %arg4[%c156_202] : memref<324xf32, #tpu.memory_space<smem>>
    %1996 = vector.broadcast %1995 : f32 to vector<16x36xf32>
    %1997 = arith.mulf %1996, %1905 : vector<16x36xf32>
    %1998 = arith.addf %1994, %1997 : vector<16x36xf32>
    %c157_203 = arith.constant 157 : index
    %1999 = memref.load %arg4[%c157_203] : memref<324xf32, #tpu.memory_space<smem>>
    %2000 = vector.broadcast %1999 : f32 to vector<16x36xf32>
    %2001 = arith.mulf %2000, %1906 : vector<16x36xf32>
    %2002 = arith.addf %1998, %2001 : vector<16x36xf32>
    %c158_204 = arith.constant 158 : index
    %2003 = memref.load %arg4[%c158_204] : memref<324xf32, #tpu.memory_space<smem>>
    %2004 = vector.broadcast %2003 : f32 to vector<16x36xf32>
    %2005 = arith.mulf %2004, %1907 : vector<16x36xf32>
    %2006 = arith.addf %2002, %2005 : vector<16x36xf32>
    %c159_205 = arith.constant 159 : index
    %2007 = memref.load %arg4[%c159_205] : memref<324xf32, #tpu.memory_space<smem>>
    %2008 = vector.broadcast %2007 : f32 to vector<16x36xf32>
    %2009 = arith.mulf %2008, %1908 : vector<16x36xf32>
    %2010 = arith.addf %2006, %2009 : vector<16x36xf32>
    %c160_206 = arith.constant 160 : index
    %2011 = memref.load %arg4[%c160_206] : memref<324xf32, #tpu.memory_space<smem>>
    %2012 = vector.broadcast %2011 : f32 to vector<16x36xf32>
    %2013 = arith.mulf %2012, %1909 : vector<16x36xf32>
    %2014 = arith.addf %2010, %2013 : vector<16x36xf32>
    %c161_207 = arith.constant 161 : index
    %2015 = memref.load %arg4[%c161_207] : memref<324xf32, #tpu.memory_space<smem>>
    %2016 = vector.broadcast %2015 : f32 to vector<16x36xf32>
    %2017 = arith.mulf %2016, %1910 : vector<16x36xf32>
    %2018 = arith.addf %2014, %2017 : vector<16x36xf32>
    %c207 = arith.constant 207 : index
    %2019 = memref.load %arg4[%c207] : memref<324xf32, #tpu.memory_space<smem>>
    %2020 = vector.broadcast %2019 : f32 to vector<16x36xf32>
    %2021 = arith.mulf %2020, %1902 : vector<16x36xf32>
    %2022 = arith.addf %1826, %2021 : vector<16x36xf32>
    %c208 = arith.constant 208 : index
    %2023 = memref.load %arg4[%c208] : memref<324xf32, #tpu.memory_space<smem>>
    %2024 = vector.broadcast %2023 : f32 to vector<16x36xf32>
    %2025 = arith.mulf %2024, %1903 : vector<16x36xf32>
    %2026 = arith.addf %2022, %2025 : vector<16x36xf32>
    %c209 = arith.constant 209 : index
    %2027 = memref.load %arg4[%c209] : memref<324xf32, #tpu.memory_space<smem>>
    %2028 = vector.broadcast %2027 : f32 to vector<16x36xf32>
    %2029 = arith.mulf %2028, %1904 : vector<16x36xf32>
    %2030 = arith.addf %2026, %2029 : vector<16x36xf32>
    %c210 = arith.constant 210 : index
    %2031 = memref.load %arg4[%c210] : memref<324xf32, #tpu.memory_space<smem>>
    %2032 = vector.broadcast %2031 : f32 to vector<16x36xf32>
    %2033 = arith.mulf %2032, %1905 : vector<16x36xf32>
    %2034 = arith.addf %2030, %2033 : vector<16x36xf32>
    %c211 = arith.constant 211 : index
    %2035 = memref.load %arg4[%c211] : memref<324xf32, #tpu.memory_space<smem>>
    %2036 = vector.broadcast %2035 : f32 to vector<16x36xf32>
    %2037 = arith.mulf %2036, %1906 : vector<16x36xf32>
    %2038 = arith.addf %2034, %2037 : vector<16x36xf32>
    %c212 = arith.constant 212 : index
    %2039 = memref.load %arg4[%c212] : memref<324xf32, #tpu.memory_space<smem>>
    %2040 = vector.broadcast %2039 : f32 to vector<16x36xf32>
    %2041 = arith.mulf %2040, %1907 : vector<16x36xf32>
    %2042 = arith.addf %2038, %2041 : vector<16x36xf32>
    %c213 = arith.constant 213 : index
    %2043 = memref.load %arg4[%c213] : memref<324xf32, #tpu.memory_space<smem>>
    %2044 = vector.broadcast %2043 : f32 to vector<16x36xf32>
    %2045 = arith.mulf %2044, %1908 : vector<16x36xf32>
    %2046 = arith.addf %2042, %2045 : vector<16x36xf32>
    %c214 = arith.constant 214 : index
    %2047 = memref.load %arg4[%c214] : memref<324xf32, #tpu.memory_space<smem>>
    %2048 = vector.broadcast %2047 : f32 to vector<16x36xf32>
    %2049 = arith.mulf %2048, %1909 : vector<16x36xf32>
    %2050 = arith.addf %2046, %2049 : vector<16x36xf32>
    %c215 = arith.constant 215 : index
    %2051 = memref.load %arg4[%c215] : memref<324xf32, #tpu.memory_space<smem>>
    %2052 = vector.broadcast %2051 : f32 to vector<16x36xf32>
    %2053 = arith.mulf %2052, %1910 : vector<16x36xf32>
    %2054 = arith.addf %2050, %2053 : vector<16x36xf32>
    %c261 = arith.constant 261 : index
    %2055 = memref.load %arg4[%c261] : memref<324xf32, #tpu.memory_space<smem>>
    %2056 = vector.broadcast %2055 : f32 to vector<16x36xf32>
    %2057 = arith.mulf %2056, %1902 : vector<16x36xf32>
    %2058 = arith.addf %1862, %2057 : vector<16x36xf32>
    %c262 = arith.constant 262 : index
    %2059 = memref.load %arg4[%c262] : memref<324xf32, #tpu.memory_space<smem>>
    %2060 = vector.broadcast %2059 : f32 to vector<16x36xf32>
    %2061 = arith.mulf %2060, %1903 : vector<16x36xf32>
    %2062 = arith.addf %2058, %2061 : vector<16x36xf32>
    %c263 = arith.constant 263 : index
    %2063 = memref.load %arg4[%c263] : memref<324xf32, #tpu.memory_space<smem>>
    %2064 = vector.broadcast %2063 : f32 to vector<16x36xf32>
    %2065 = arith.mulf %2064, %1904 : vector<16x36xf32>
    %2066 = arith.addf %2062, %2065 : vector<16x36xf32>
    %c264 = arith.constant 264 : index
    %2067 = memref.load %arg4[%c264] : memref<324xf32, #tpu.memory_space<smem>>
    %2068 = vector.broadcast %2067 : f32 to vector<16x36xf32>
    %2069 = arith.mulf %2068, %1905 : vector<16x36xf32>
    %2070 = arith.addf %2066, %2069 : vector<16x36xf32>
    %c265 = arith.constant 265 : index
    %2071 = memref.load %arg4[%c265] : memref<324xf32, #tpu.memory_space<smem>>
    %2072 = vector.broadcast %2071 : f32 to vector<16x36xf32>
    %2073 = arith.mulf %2072, %1906 : vector<16x36xf32>
    %2074 = arith.addf %2070, %2073 : vector<16x36xf32>
    %c266 = arith.constant 266 : index
    %2075 = memref.load %arg4[%c266] : memref<324xf32, #tpu.memory_space<smem>>
    %2076 = vector.broadcast %2075 : f32 to vector<16x36xf32>
    %2077 = arith.mulf %2076, %1907 : vector<16x36xf32>
    %2078 = arith.addf %2074, %2077 : vector<16x36xf32>
    %c267 = arith.constant 267 : index
    %2079 = memref.load %arg4[%c267] : memref<324xf32, #tpu.memory_space<smem>>
    %2080 = vector.broadcast %2079 : f32 to vector<16x36xf32>
    %2081 = arith.mulf %2080, %1908 : vector<16x36xf32>
    %2082 = arith.addf %2078, %2081 : vector<16x36xf32>
    %c268 = arith.constant 268 : index
    %2083 = memref.load %arg4[%c268] : memref<324xf32, #tpu.memory_space<smem>>
    %2084 = vector.broadcast %2083 : f32 to vector<16x36xf32>
    %2085 = arith.mulf %2084, %1909 : vector<16x36xf32>
    %2086 = arith.addf %2082, %2085 : vector<16x36xf32>
    %c269 = arith.constant 269 : index
    %2087 = memref.load %arg4[%c269] : memref<324xf32, #tpu.memory_space<smem>>
    %2088 = vector.broadcast %2087 : f32 to vector<16x36xf32>
    %2089 = arith.mulf %2088, %1910 : vector<16x36xf32>
    %2090 = arith.addf %2086, %2089 : vector<16x36xf32>
    %c315 = arith.constant 315 : index
    %2091 = memref.load %arg4[%c315] : memref<324xf32, #tpu.memory_space<smem>>
    %2092 = vector.broadcast %2091 : f32 to vector<16x36xf32>
    %2093 = arith.mulf %2092, %1902 : vector<16x36xf32>
    %2094 = arith.addf %1898, %2093 : vector<16x36xf32>
    %c316 = arith.constant 316 : index
    %2095 = memref.load %arg4[%c316] : memref<324xf32, #tpu.memory_space<smem>>
    %2096 = vector.broadcast %2095 : f32 to vector<16x36xf32>
    %2097 = arith.mulf %2096, %1903 : vector<16x36xf32>
    %2098 = arith.addf %2094, %2097 : vector<16x36xf32>
    %c317 = arith.constant 317 : index
    %2099 = memref.load %arg4[%c317] : memref<324xf32, #tpu.memory_space<smem>>
    %2100 = vector.broadcast %2099 : f32 to vector<16x36xf32>
    %2101 = arith.mulf %2100, %1904 : vector<16x36xf32>
    %2102 = arith.addf %2098, %2101 : vector<16x36xf32>
    %c318 = arith.constant 318 : index
    %2103 = memref.load %arg4[%c318] : memref<324xf32, #tpu.memory_space<smem>>
    %2104 = vector.broadcast %2103 : f32 to vector<16x36xf32>
    %2105 = arith.mulf %2104, %1905 : vector<16x36xf32>
    %2106 = arith.addf %2102, %2105 : vector<16x36xf32>
    %c319 = arith.constant 319 : index
    %2107 = memref.load %arg4[%c319] : memref<324xf32, #tpu.memory_space<smem>>
    %2108 = vector.broadcast %2107 : f32 to vector<16x36xf32>
    %2109 = arith.mulf %2108, %1906 : vector<16x36xf32>
    %2110 = arith.addf %2106, %2109 : vector<16x36xf32>
    %c320 = arith.constant 320 : index
    %2111 = memref.load %arg4[%c320] : memref<324xf32, #tpu.memory_space<smem>>
    %2112 = vector.broadcast %2111 : f32 to vector<16x36xf32>
    %2113 = arith.mulf %2112, %1907 : vector<16x36xf32>
    %2114 = arith.addf %2110, %2113 : vector<16x36xf32>
    %c321 = arith.constant 321 : index
    %2115 = memref.load %arg4[%c321] : memref<324xf32, #tpu.memory_space<smem>>
    %2116 = vector.broadcast %2115 : f32 to vector<16x36xf32>
    %2117 = arith.mulf %2116, %1908 : vector<16x36xf32>
    %2118 = arith.addf %2114, %2117 : vector<16x36xf32>
    %c322 = arith.constant 322 : index
    %2119 = memref.load %arg4[%c322] : memref<324xf32, #tpu.memory_space<smem>>
    %2120 = vector.broadcast %2119 : f32 to vector<16x36xf32>
    %2121 = arith.mulf %2120, %1909 : vector<16x36xf32>
    %2122 = arith.addf %2118, %2121 : vector<16x36xf32>
    %c323 = arith.constant 323 : index
    %2123 = memref.load %arg4[%c323] : memref<324xf32, #tpu.memory_space<smem>>
    %2124 = vector.broadcast %2123 : f32 to vector<16x36xf32>
    %2125 = arith.mulf %2124, %1910 : vector<16x36xf32>
    %2126 = arith.addf %2122, %2125 : vector<16x36xf32>
    %2127 = arith.mulf %1946, %2 : vector<16x36xf32>
    %2128 = tpu.concatenate %0, %2127, %0 in 1 : vector<16x1xf32>, vector<16x36xf32>, vector<16x1xf32> -> vector<16x38xf32>
    %cst_208 = arith.constant 0.000000e+00 : f32
    %2129 = vector.broadcast %cst_208 : f32 to vector<1x38xf32>
    %2130 = tpu.concatenate %2129, %2128, %2129 in 0 : vector<1x38xf32>, vector<16x38xf32>, vector<1x38xf32> -> vector<18x38xf32>
    %2131 = arith.mulf %1982, %2 : vector<16x36xf32>
    %2132 = tpu.concatenate %0, %2131, %0 in 1 : vector<16x1xf32>, vector<16x36xf32>, vector<16x1xf32> -> vector<16x38xf32>
    %cst_209 = arith.constant 0.000000e+00 : f32
    %2133 = vector.broadcast %cst_209 : f32 to vector<1x38xf32>
    %2134 = tpu.concatenate %2133, %2132, %2133 in 0 : vector<1x38xf32>, vector<16x38xf32>, vector<1x38xf32> -> vector<18x38xf32>
    %2135 = arith.mulf %2018, %2 : vector<16x36xf32>
    %2136 = tpu.concatenate %0, %2135, %0 in 1 : vector<16x1xf32>, vector<16x36xf32>, vector<16x1xf32> -> vector<16x38xf32>
    %cst_210 = arith.constant 0.000000e+00 : f32
    %2137 = vector.broadcast %cst_210 : f32 to vector<1x38xf32>
    %2138 = tpu.concatenate %2137, %2136, %2137 in 0 : vector<1x38xf32>, vector<16x38xf32>, vector<1x38xf32> -> vector<18x38xf32>
    %2139 = arith.mulf %2054, %2 : vector<16x36xf32>
    %2140 = tpu.concatenate %0, %2139, %0 in 1 : vector<16x1xf32>, vector<16x36xf32>, vector<16x1xf32> -> vector<16x38xf32>
    %cst_211 = arith.constant 0.000000e+00 : f32
    %2141 = vector.broadcast %cst_211 : f32 to vector<1x38xf32>
    %2142 = tpu.concatenate %2141, %2140, %2141 in 0 : vector<1x38xf32>, vector<16x38xf32>, vector<1x38xf32> -> vector<18x38xf32>
    %2143 = arith.mulf %2090, %2 : vector<16x36xf32>
    %2144 = tpu.concatenate %0, %2143, %0 in 1 : vector<16x1xf32>, vector<16x36xf32>, vector<16x1xf32> -> vector<16x38xf32>
    %cst_212 = arith.constant 0.000000e+00 : f32
    %2145 = vector.broadcast %cst_212 : f32 to vector<1x38xf32>
    %2146 = tpu.concatenate %2145, %2144, %2145 in 0 : vector<1x38xf32>, vector<16x38xf32>, vector<1x38xf32> -> vector<18x38xf32>
    %2147 = arith.mulf %2126, %2 : vector<16x36xf32>
    %2148 = tpu.concatenate %0, %2147, %0 in 1 : vector<16x1xf32>, vector<16x36xf32>, vector<16x1xf32> -> vector<16x38xf32>
    %cst_213 = arith.constant 0.000000e+00 : f32
    %2149 = vector.broadcast %cst_213 : f32 to vector<1x38xf32>
    %2150 = tpu.concatenate %2149, %2148, %2149 in 0 : vector<1x38xf32>, vector<16x38xf32>, vector<1x38xf32> -> vector<18x38xf32>
    %c0_214 = arith.constant 0 : index
    %2151 = memref.load %arg7[%c0_214] : memref<1xf32, #tpu.memory_space<smem>>
    %2152 = vector.broadcast %2151 : f32 to vector<16x36xf32>
    %2153 = vector.extract_strided_slice %2130 {offsets = [0, 0], sizes = [18, 36], strides = [1, 1]} : vector<18x38xf32> to vector<18x36xf32>
    %2154 = vector.extract_strided_slice %2130 {offsets = [0, 1], sizes = [18, 36], strides = [1, 1]} : vector<18x38xf32> to vector<18x36xf32>
    %2155 = vector.extract_strided_slice %2130 {offsets = [0, 2], sizes = [18, 36], strides = [1, 1]} : vector<18x38xf32> to vector<18x36xf32>
    %2156 = vector.extract_strided_slice %2153 {offsets = [0, 0], sizes = [16, 36], strides = [1, 1]} : vector<18x36xf32> to vector<16x36xf32>
    %2157 = vector.extract_strided_slice %2154 {offsets = [0, 0], sizes = [16, 36], strides = [1, 1]} : vector<18x36xf32> to vector<16x36xf32>
    %2158 = vector.extract_strided_slice %2155 {offsets = [0, 0], sizes = [16, 36], strides = [1, 1]} : vector<18x36xf32> to vector<16x36xf32>
    %2159 = vector.extract_strided_slice %2153 {offsets = [1, 0], sizes = [16, 36], strides = [1, 1]} : vector<18x36xf32> to vector<16x36xf32>
    %2160 = vector.extract_strided_slice %2154 {offsets = [1, 0], sizes = [16, 36], strides = [1, 1]} : vector<18x36xf32> to vector<16x36xf32>
    %2161 = vector.extract_strided_slice %2155 {offsets = [1, 0], sizes = [16, 36], strides = [1, 1]} : vector<18x36xf32> to vector<16x36xf32>
    %2162 = vector.extract_strided_slice %2153 {offsets = [2, 0], sizes = [16, 36], strides = [1, 1]} : vector<18x36xf32> to vector<16x36xf32>
    %2163 = vector.extract_strided_slice %2154 {offsets = [2, 0], sizes = [16, 36], strides = [1, 1]} : vector<18x36xf32> to vector<16x36xf32>
    %2164 = vector.extract_strided_slice %2155 {offsets = [2, 0], sizes = [16, 36], strides = [1, 1]} : vector<18x36xf32> to vector<16x36xf32>
    %c0_215 = arith.constant 0 : index
    %2165 = memref.load %arg6[%c0_215] : memref<54xf32, #tpu.memory_space<smem>>
    %2166 = vector.broadcast %2165 : f32 to vector<16x36xf32>
    %2167 = arith.mulf %2166, %2156 : vector<16x36xf32>
    %2168 = arith.addf %2152, %2167 : vector<16x36xf32>
    %c1_216 = arith.constant 1 : index
    %2169 = memref.load %arg6[%c1_216] : memref<54xf32, #tpu.memory_space<smem>>
    %2170 = vector.broadcast %2169 : f32 to vector<16x36xf32>
    %2171 = arith.mulf %2170, %2157 : vector<16x36xf32>
    %2172 = arith.addf %2168, %2171 : vector<16x36xf32>
    %c2_217 = arith.constant 2 : index
    %2173 = memref.load %arg6[%c2_217] : memref<54xf32, #tpu.memory_space<smem>>
    %2174 = vector.broadcast %2173 : f32 to vector<16x36xf32>
    %2175 = arith.mulf %2174, %2158 : vector<16x36xf32>
    %2176 = arith.addf %2172, %2175 : vector<16x36xf32>
    %c3_218 = arith.constant 3 : index
    %2177 = memref.load %arg6[%c3_218] : memref<54xf32, #tpu.memory_space<smem>>
    %2178 = vector.broadcast %2177 : f32 to vector<16x36xf32>
    %2179 = arith.mulf %2178, %2159 : vector<16x36xf32>
    %2180 = arith.addf %2176, %2179 : vector<16x36xf32>
    %c4_219 = arith.constant 4 : index
    %2181 = memref.load %arg6[%c4_219] : memref<54xf32, #tpu.memory_space<smem>>
    %2182 = vector.broadcast %2181 : f32 to vector<16x36xf32>
    %2183 = arith.mulf %2182, %2160 : vector<16x36xf32>
    %2184 = arith.addf %2180, %2183 : vector<16x36xf32>
    %c5_220 = arith.constant 5 : index
    %2185 = memref.load %arg6[%c5_220] : memref<54xf32, #tpu.memory_space<smem>>
    %2186 = vector.broadcast %2185 : f32 to vector<16x36xf32>
    %2187 = arith.mulf %2186, %2161 : vector<16x36xf32>
    %2188 = arith.addf %2184, %2187 : vector<16x36xf32>
    %c6_221 = arith.constant 6 : index
    %2189 = memref.load %arg6[%c6_221] : memref<54xf32, #tpu.memory_space<smem>>
    %2190 = vector.broadcast %2189 : f32 to vector<16x36xf32>
    %2191 = arith.mulf %2190, %2162 : vector<16x36xf32>
    %2192 = arith.addf %2188, %2191 : vector<16x36xf32>
    %c7_222 = arith.constant 7 : index
    %2193 = memref.load %arg6[%c7_222] : memref<54xf32, #tpu.memory_space<smem>>
    %2194 = vector.broadcast %2193 : f32 to vector<16x36xf32>
    %2195 = arith.mulf %2194, %2163 : vector<16x36xf32>
    %2196 = arith.addf %2192, %2195 : vector<16x36xf32>
    %c8_223 = arith.constant 8 : index
    %2197 = memref.load %arg6[%c8_223] : memref<54xf32, #tpu.memory_space<smem>>
    %2198 = vector.broadcast %2197 : f32 to vector<16x36xf32>
    %2199 = arith.mulf %2198, %2164 : vector<16x36xf32>
    %2200 = arith.addf %2196, %2199 : vector<16x36xf32>
    %2201 = vector.extract_strided_slice %2134 {offsets = [0, 0], sizes = [18, 36], strides = [1, 1]} : vector<18x38xf32> to vector<18x36xf32>
    %2202 = vector.extract_strided_slice %2134 {offsets = [0, 1], sizes = [18, 36], strides = [1, 1]} : vector<18x38xf32> to vector<18x36xf32>
    %2203 = vector.extract_strided_slice %2134 {offsets = [0, 2], sizes = [18, 36], strides = [1, 1]} : vector<18x38xf32> to vector<18x36xf32>
    %2204 = vector.extract_strided_slice %2201 {offsets = [0, 0], sizes = [16, 36], strides = [1, 1]} : vector<18x36xf32> to vector<16x36xf32>
    %2205 = vector.extract_strided_slice %2202 {offsets = [0, 0], sizes = [16, 36], strides = [1, 1]} : vector<18x36xf32> to vector<16x36xf32>
    %2206 = vector.extract_strided_slice %2203 {offsets = [0, 0], sizes = [16, 36], strides = [1, 1]} : vector<18x36xf32> to vector<16x36xf32>
    %2207 = vector.extract_strided_slice %2201 {offsets = [1, 0], sizes = [16, 36], strides = [1, 1]} : vector<18x36xf32> to vector<16x36xf32>
    %2208 = vector.extract_strided_slice %2202 {offsets = [1, 0], sizes = [16, 36], strides = [1, 1]} : vector<18x36xf32> to vector<16x36xf32>
    %2209 = vector.extract_strided_slice %2203 {offsets = [1, 0], sizes = [16, 36], strides = [1, 1]} : vector<18x36xf32> to vector<16x36xf32>
    %2210 = vector.extract_strided_slice %2201 {offsets = [2, 0], sizes = [16, 36], strides = [1, 1]} : vector<18x36xf32> to vector<16x36xf32>
    %2211 = vector.extract_strided_slice %2202 {offsets = [2, 0], sizes = [16, 36], strides = [1, 1]} : vector<18x36xf32> to vector<16x36xf32>
    %2212 = vector.extract_strided_slice %2203 {offsets = [2, 0], sizes = [16, 36], strides = [1, 1]} : vector<18x36xf32> to vector<16x36xf32>
    %c9_224 = arith.constant 9 : index
    %2213 = memref.load %arg6[%c9_224] : memref<54xf32, #tpu.memory_space<smem>>
    %2214 = vector.broadcast %2213 : f32 to vector<16x36xf32>
    %2215 = arith.mulf %2214, %2204 : vector<16x36xf32>
    %2216 = arith.addf %2200, %2215 : vector<16x36xf32>
    %c10_225 = arith.constant 10 : index
    %2217 = memref.load %arg6[%c10_225] : memref<54xf32, #tpu.memory_space<smem>>
    %2218 = vector.broadcast %2217 : f32 to vector<16x36xf32>
    %2219 = arith.mulf %2218, %2205 : vector<16x36xf32>
    %2220 = arith.addf %2216, %2219 : vector<16x36xf32>
    %c11_226 = arith.constant 11 : index
    %2221 = memref.load %arg6[%c11_226] : memref<54xf32, #tpu.memory_space<smem>>
    %2222 = vector.broadcast %2221 : f32 to vector<16x36xf32>
    %2223 = arith.mulf %2222, %2206 : vector<16x36xf32>
    %2224 = arith.addf %2220, %2223 : vector<16x36xf32>
    %c12_227 = arith.constant 12 : index
    %2225 = memref.load %arg6[%c12_227] : memref<54xf32, #tpu.memory_space<smem>>
    %2226 = vector.broadcast %2225 : f32 to vector<16x36xf32>
    %2227 = arith.mulf %2226, %2207 : vector<16x36xf32>
    %2228 = arith.addf %2224, %2227 : vector<16x36xf32>
    %c13_228 = arith.constant 13 : index
    %2229 = memref.load %arg6[%c13_228] : memref<54xf32, #tpu.memory_space<smem>>
    %2230 = vector.broadcast %2229 : f32 to vector<16x36xf32>
    %2231 = arith.mulf %2230, %2208 : vector<16x36xf32>
    %2232 = arith.addf %2228, %2231 : vector<16x36xf32>
    %c14_229 = arith.constant 14 : index
    %2233 = memref.load %arg6[%c14_229] : memref<54xf32, #tpu.memory_space<smem>>
    %2234 = vector.broadcast %2233 : f32 to vector<16x36xf32>
    %2235 = arith.mulf %2234, %2209 : vector<16x36xf32>
    %2236 = arith.addf %2232, %2235 : vector<16x36xf32>
    %c15_230 = arith.constant 15 : index
    %2237 = memref.load %arg6[%c15_230] : memref<54xf32, #tpu.memory_space<smem>>
    %2238 = vector.broadcast %2237 : f32 to vector<16x36xf32>
    %2239 = arith.mulf %2238, %2210 : vector<16x36xf32>
    %2240 = arith.addf %2236, %2239 : vector<16x36xf32>
    %c16_231 = arith.constant 16 : index
    %2241 = memref.load %arg6[%c16_231] : memref<54xf32, #tpu.memory_space<smem>>
    %2242 = vector.broadcast %2241 : f32 to vector<16x36xf32>
    %2243 = arith.mulf %2242, %2211 : vector<16x36xf32>
    %2244 = arith.addf %2240, %2243 : vector<16x36xf32>
    %c17_232 = arith.constant 17 : index
    %2245 = memref.load %arg6[%c17_232] : memref<54xf32, #tpu.memory_space<smem>>
    %2246 = vector.broadcast %2245 : f32 to vector<16x36xf32>
    %2247 = arith.mulf %2246, %2212 : vector<16x36xf32>
    %2248 = arith.addf %2244, %2247 : vector<16x36xf32>
    %2249 = vector.extract_strided_slice %2138 {offsets = [0, 0], sizes = [18, 36], strides = [1, 1]} : vector<18x38xf32> to vector<18x36xf32>
    %2250 = vector.extract_strided_slice %2138 {offsets = [0, 1], sizes = [18, 36], strides = [1, 1]} : vector<18x38xf32> to vector<18x36xf32>
    %2251 = vector.extract_strided_slice %2138 {offsets = [0, 2], sizes = [18, 36], strides = [1, 1]} : vector<18x38xf32> to vector<18x36xf32>
    %2252 = vector.extract_strided_slice %2249 {offsets = [0, 0], sizes = [16, 36], strides = [1, 1]} : vector<18x36xf32> to vector<16x36xf32>
    %2253 = vector.extract_strided_slice %2250 {offsets = [0, 0], sizes = [16, 36], strides = [1, 1]} : vector<18x36xf32> to vector<16x36xf32>
    %2254 = vector.extract_strided_slice %2251 {offsets = [0, 0], sizes = [16, 36], strides = [1, 1]} : vector<18x36xf32> to vector<16x36xf32>
    %2255 = vector.extract_strided_slice %2249 {offsets = [1, 0], sizes = [16, 36], strides = [1, 1]} : vector<18x36xf32> to vector<16x36xf32>
    %2256 = vector.extract_strided_slice %2250 {offsets = [1, 0], sizes = [16, 36], strides = [1, 1]} : vector<18x36xf32> to vector<16x36xf32>
    %2257 = vector.extract_strided_slice %2251 {offsets = [1, 0], sizes = [16, 36], strides = [1, 1]} : vector<18x36xf32> to vector<16x36xf32>
    %2258 = vector.extract_strided_slice %2249 {offsets = [2, 0], sizes = [16, 36], strides = [1, 1]} : vector<18x36xf32> to vector<16x36xf32>
    %2259 = vector.extract_strided_slice %2250 {offsets = [2, 0], sizes = [16, 36], strides = [1, 1]} : vector<18x36xf32> to vector<16x36xf32>
    %2260 = vector.extract_strided_slice %2251 {offsets = [2, 0], sizes = [16, 36], strides = [1, 1]} : vector<18x36xf32> to vector<16x36xf32>
    %c18_233 = arith.constant 18 : index
    %2261 = memref.load %arg6[%c18_233] : memref<54xf32, #tpu.memory_space<smem>>
    %2262 = vector.broadcast %2261 : f32 to vector<16x36xf32>
    %2263 = arith.mulf %2262, %2252 : vector<16x36xf32>
    %2264 = arith.addf %2248, %2263 : vector<16x36xf32>
    %c19_234 = arith.constant 19 : index
    %2265 = memref.load %arg6[%c19_234] : memref<54xf32, #tpu.memory_space<smem>>
    %2266 = vector.broadcast %2265 : f32 to vector<16x36xf32>
    %2267 = arith.mulf %2266, %2253 : vector<16x36xf32>
    %2268 = arith.addf %2264, %2267 : vector<16x36xf32>
    %c20_235 = arith.constant 20 : index
    %2269 = memref.load %arg6[%c20_235] : memref<54xf32, #tpu.memory_space<smem>>
    %2270 = vector.broadcast %2269 : f32 to vector<16x36xf32>
    %2271 = arith.mulf %2270, %2254 : vector<16x36xf32>
    %2272 = arith.addf %2268, %2271 : vector<16x36xf32>
    %c21_236 = arith.constant 21 : index
    %2273 = memref.load %arg6[%c21_236] : memref<54xf32, #tpu.memory_space<smem>>
    %2274 = vector.broadcast %2273 : f32 to vector<16x36xf32>
    %2275 = arith.mulf %2274, %2255 : vector<16x36xf32>
    %2276 = arith.addf %2272, %2275 : vector<16x36xf32>
    %c22_237 = arith.constant 22 : index
    %2277 = memref.load %arg6[%c22_237] : memref<54xf32, #tpu.memory_space<smem>>
    %2278 = vector.broadcast %2277 : f32 to vector<16x36xf32>
    %2279 = arith.mulf %2278, %2256 : vector<16x36xf32>
    %2280 = arith.addf %2276, %2279 : vector<16x36xf32>
    %c23_238 = arith.constant 23 : index
    %2281 = memref.load %arg6[%c23_238] : memref<54xf32, #tpu.memory_space<smem>>
    %2282 = vector.broadcast %2281 : f32 to vector<16x36xf32>
    %2283 = arith.mulf %2282, %2257 : vector<16x36xf32>
    %2284 = arith.addf %2280, %2283 : vector<16x36xf32>
    %c24_239 = arith.constant 24 : index
    %2285 = memref.load %arg6[%c24_239] : memref<54xf32, #tpu.memory_space<smem>>
    %2286 = vector.broadcast %2285 : f32 to vector<16x36xf32>
    %2287 = arith.mulf %2286, %2258 : vector<16x36xf32>
    %2288 = arith.addf %2284, %2287 : vector<16x36xf32>
    %c25_240 = arith.constant 25 : index
    %2289 = memref.load %arg6[%c25_240] : memref<54xf32, #tpu.memory_space<smem>>
    %2290 = vector.broadcast %2289 : f32 to vector<16x36xf32>
    %2291 = arith.mulf %2290, %2259 : vector<16x36xf32>
    %2292 = arith.addf %2288, %2291 : vector<16x36xf32>
    %c26_241 = arith.constant 26 : index
    %2293 = memref.load %arg6[%c26_241] : memref<54xf32, #tpu.memory_space<smem>>
    %2294 = vector.broadcast %2293 : f32 to vector<16x36xf32>
    %2295 = arith.mulf %2294, %2260 : vector<16x36xf32>
    %2296 = arith.addf %2292, %2295 : vector<16x36xf32>
    %2297 = vector.extract_strided_slice %2142 {offsets = [0, 0], sizes = [18, 36], strides = [1, 1]} : vector<18x38xf32> to vector<18x36xf32>
    %2298 = vector.extract_strided_slice %2142 {offsets = [0, 1], sizes = [18, 36], strides = [1, 1]} : vector<18x38xf32> to vector<18x36xf32>
    %2299 = vector.extract_strided_slice %2142 {offsets = [0, 2], sizes = [18, 36], strides = [1, 1]} : vector<18x38xf32> to vector<18x36xf32>
    %2300 = vector.extract_strided_slice %2297 {offsets = [0, 0], sizes = [16, 36], strides = [1, 1]} : vector<18x36xf32> to vector<16x36xf32>
    %2301 = vector.extract_strided_slice %2298 {offsets = [0, 0], sizes = [16, 36], strides = [1, 1]} : vector<18x36xf32> to vector<16x36xf32>
    %2302 = vector.extract_strided_slice %2299 {offsets = [0, 0], sizes = [16, 36], strides = [1, 1]} : vector<18x36xf32> to vector<16x36xf32>
    %2303 = vector.extract_strided_slice %2297 {offsets = [1, 0], sizes = [16, 36], strides = [1, 1]} : vector<18x36xf32> to vector<16x36xf32>
    %2304 = vector.extract_strided_slice %2298 {offsets = [1, 0], sizes = [16, 36], strides = [1, 1]} : vector<18x36xf32> to vector<16x36xf32>
    %2305 = vector.extract_strided_slice %2299 {offsets = [1, 0], sizes = [16, 36], strides = [1, 1]} : vector<18x36xf32> to vector<16x36xf32>
    %2306 = vector.extract_strided_slice %2297 {offsets = [2, 0], sizes = [16, 36], strides = [1, 1]} : vector<18x36xf32> to vector<16x36xf32>
    %2307 = vector.extract_strided_slice %2298 {offsets = [2, 0], sizes = [16, 36], strides = [1, 1]} : vector<18x36xf32> to vector<16x36xf32>
    %2308 = vector.extract_strided_slice %2299 {offsets = [2, 0], sizes = [16, 36], strides = [1, 1]} : vector<18x36xf32> to vector<16x36xf32>
    %c27_242 = arith.constant 27 : index
    %2309 = memref.load %arg6[%c27_242] : memref<54xf32, #tpu.memory_space<smem>>
    %2310 = vector.broadcast %2309 : f32 to vector<16x36xf32>
    %2311 = arith.mulf %2310, %2300 : vector<16x36xf32>
    %2312 = arith.addf %2296, %2311 : vector<16x36xf32>
    %c28_243 = arith.constant 28 : index
    %2313 = memref.load %arg6[%c28_243] : memref<54xf32, #tpu.memory_space<smem>>
    %2314 = vector.broadcast %2313 : f32 to vector<16x36xf32>
    %2315 = arith.mulf %2314, %2301 : vector<16x36xf32>
    %2316 = arith.addf %2312, %2315 : vector<16x36xf32>
    %c29_244 = arith.constant 29 : index
    %2317 = memref.load %arg6[%c29_244] : memref<54xf32, #tpu.memory_space<smem>>
    %2318 = vector.broadcast %2317 : f32 to vector<16x36xf32>
    %2319 = arith.mulf %2318, %2302 : vector<16x36xf32>
    %2320 = arith.addf %2316, %2319 : vector<16x36xf32>
    %c30_245 = arith.constant 30 : index
    %2321 = memref.load %arg6[%c30_245] : memref<54xf32, #tpu.memory_space<smem>>
    %2322 = vector.broadcast %2321 : f32 to vector<16x36xf32>
    %2323 = arith.mulf %2322, %2303 : vector<16x36xf32>
    %2324 = arith.addf %2320, %2323 : vector<16x36xf32>
    %c31_246 = arith.constant 31 : index
    %2325 = memref.load %arg6[%c31_246] : memref<54xf32, #tpu.memory_space<smem>>
    %2326 = vector.broadcast %2325 : f32 to vector<16x36xf32>
    %2327 = arith.mulf %2326, %2304 : vector<16x36xf32>
    %2328 = arith.addf %2324, %2327 : vector<16x36xf32>
    %c32_247 = arith.constant 32 : index
    %2329 = memref.load %arg6[%c32_247] : memref<54xf32, #tpu.memory_space<smem>>
    %2330 = vector.broadcast %2329 : f32 to vector<16x36xf32>
    %2331 = arith.mulf %2330, %2305 : vector<16x36xf32>
    %2332 = arith.addf %2328, %2331 : vector<16x36xf32>
    %c33_248 = arith.constant 33 : index
    %2333 = memref.load %arg6[%c33_248] : memref<54xf32, #tpu.memory_space<smem>>
    %2334 = vector.broadcast %2333 : f32 to vector<16x36xf32>
    %2335 = arith.mulf %2334, %2306 : vector<16x36xf32>
    %2336 = arith.addf %2332, %2335 : vector<16x36xf32>
    %c34_249 = arith.constant 34 : index
    %2337 = memref.load %arg6[%c34_249] : memref<54xf32, #tpu.memory_space<smem>>
    %2338 = vector.broadcast %2337 : f32 to vector<16x36xf32>
    %2339 = arith.mulf %2338, %2307 : vector<16x36xf32>
    %2340 = arith.addf %2336, %2339 : vector<16x36xf32>
    %c35_250 = arith.constant 35 : index
    %2341 = memref.load %arg6[%c35_250] : memref<54xf32, #tpu.memory_space<smem>>
    %2342 = vector.broadcast %2341 : f32 to vector<16x36xf32>
    %2343 = arith.mulf %2342, %2308 : vector<16x36xf32>
    %2344 = arith.addf %2340, %2343 : vector<16x36xf32>
    %2345 = vector.extract_strided_slice %2146 {offsets = [0, 0], sizes = [18, 36], strides = [1, 1]} : vector<18x38xf32> to vector<18x36xf32>
    %2346 = vector.extract_strided_slice %2146 {offsets = [0, 1], sizes = [18, 36], strides = [1, 1]} : vector<18x38xf32> to vector<18x36xf32>
    %2347 = vector.extract_strided_slice %2146 {offsets = [0, 2], sizes = [18, 36], strides = [1, 1]} : vector<18x38xf32> to vector<18x36xf32>
    %2348 = vector.extract_strided_slice %2345 {offsets = [0, 0], sizes = [16, 36], strides = [1, 1]} : vector<18x36xf32> to vector<16x36xf32>
    %2349 = vector.extract_strided_slice %2346 {offsets = [0, 0], sizes = [16, 36], strides = [1, 1]} : vector<18x36xf32> to vector<16x36xf32>
    %2350 = vector.extract_strided_slice %2347 {offsets = [0, 0], sizes = [16, 36], strides = [1, 1]} : vector<18x36xf32> to vector<16x36xf32>
    %2351 = vector.extract_strided_slice %2345 {offsets = [1, 0], sizes = [16, 36], strides = [1, 1]} : vector<18x36xf32> to vector<16x36xf32>
    %2352 = vector.extract_strided_slice %2346 {offsets = [1, 0], sizes = [16, 36], strides = [1, 1]} : vector<18x36xf32> to vector<16x36xf32>
    %2353 = vector.extract_strided_slice %2347 {offsets = [1, 0], sizes = [16, 36], strides = [1, 1]} : vector<18x36xf32> to vector<16x36xf32>
    %2354 = vector.extract_strided_slice %2345 {offsets = [2, 0], sizes = [16, 36], strides = [1, 1]} : vector<18x36xf32> to vector<16x36xf32>
    %2355 = vector.extract_strided_slice %2346 {offsets = [2, 0], sizes = [16, 36], strides = [1, 1]} : vector<18x36xf32> to vector<16x36xf32>
    %2356 = vector.extract_strided_slice %2347 {offsets = [2, 0], sizes = [16, 36], strides = [1, 1]} : vector<18x36xf32> to vector<16x36xf32>
    %c36_251 = arith.constant 36 : index
    %2357 = memref.load %arg6[%c36_251] : memref<54xf32, #tpu.memory_space<smem>>
    %2358 = vector.broadcast %2357 : f32 to vector<16x36xf32>
    %2359 = arith.mulf %2358, %2348 : vector<16x36xf32>
    %2360 = arith.addf %2344, %2359 : vector<16x36xf32>
    %c37_252 = arith.constant 37 : index
    %2361 = memref.load %arg6[%c37_252] : memref<54xf32, #tpu.memory_space<smem>>
    %2362 = vector.broadcast %2361 : f32 to vector<16x36xf32>
    %2363 = arith.mulf %2362, %2349 : vector<16x36xf32>
    %2364 = arith.addf %2360, %2363 : vector<16x36xf32>
    %c38_253 = arith.constant 38 : index
    %2365 = memref.load %arg6[%c38_253] : memref<54xf32, #tpu.memory_space<smem>>
    %2366 = vector.broadcast %2365 : f32 to vector<16x36xf32>
    %2367 = arith.mulf %2366, %2350 : vector<16x36xf32>
    %2368 = arith.addf %2364, %2367 : vector<16x36xf32>
    %c39_254 = arith.constant 39 : index
    %2369 = memref.load %arg6[%c39_254] : memref<54xf32, #tpu.memory_space<smem>>
    %2370 = vector.broadcast %2369 : f32 to vector<16x36xf32>
    %2371 = arith.mulf %2370, %2351 : vector<16x36xf32>
    %2372 = arith.addf %2368, %2371 : vector<16x36xf32>
    %c40_255 = arith.constant 40 : index
    %2373 = memref.load %arg6[%c40_255] : memref<54xf32, #tpu.memory_space<smem>>
    %2374 = vector.broadcast %2373 : f32 to vector<16x36xf32>
    %2375 = arith.mulf %2374, %2352 : vector<16x36xf32>
    %2376 = arith.addf %2372, %2375 : vector<16x36xf32>
    %c41_256 = arith.constant 41 : index
    %2377 = memref.load %arg6[%c41_256] : memref<54xf32, #tpu.memory_space<smem>>
    %2378 = vector.broadcast %2377 : f32 to vector<16x36xf32>
    %2379 = arith.mulf %2378, %2353 : vector<16x36xf32>
    %2380 = arith.addf %2376, %2379 : vector<16x36xf32>
    %c42_257 = arith.constant 42 : index
    %2381 = memref.load %arg6[%c42_257] : memref<54xf32, #tpu.memory_space<smem>>
    %2382 = vector.broadcast %2381 : f32 to vector<16x36xf32>
    %2383 = arith.mulf %2382, %2354 : vector<16x36xf32>
    %2384 = arith.addf %2380, %2383 : vector<16x36xf32>
    %c43_258 = arith.constant 43 : index
    %2385 = memref.load %arg6[%c43_258] : memref<54xf32, #tpu.memory_space<smem>>
    %2386 = vector.broadcast %2385 : f32 to vector<16x36xf32>
    %2387 = arith.mulf %2386, %2355 : vector<16x36xf32>
    %2388 = arith.addf %2384, %2387 : vector<16x36xf32>
    %c44_259 = arith.constant 44 : index
    %2389 = memref.load %arg6[%c44_259] : memref<54xf32, #tpu.memory_space<smem>>
    %2390 = vector.broadcast %2389 : f32 to vector<16x36xf32>
    %2391 = arith.mulf %2390, %2356 : vector<16x36xf32>
    %2392 = arith.addf %2388, %2391 : vector<16x36xf32>
    %2393 = vector.extract_strided_slice %2150 {offsets = [0, 0], sizes = [18, 36], strides = [1, 1]} : vector<18x38xf32> to vector<18x36xf32>
    %2394 = vector.extract_strided_slice %2150 {offsets = [0, 1], sizes = [18, 36], strides = [1, 1]} : vector<18x38xf32> to vector<18x36xf32>
    %2395 = vector.extract_strided_slice %2150 {offsets = [0, 2], sizes = [18, 36], strides = [1, 1]} : vector<18x38xf32> to vector<18x36xf32>
    %2396 = vector.extract_strided_slice %2393 {offsets = [0, 0], sizes = [16, 36], strides = [1, 1]} : vector<18x36xf32> to vector<16x36xf32>
    %2397 = vector.extract_strided_slice %2394 {offsets = [0, 0], sizes = [16, 36], strides = [1, 1]} : vector<18x36xf32> to vector<16x36xf32>
    %2398 = vector.extract_strided_slice %2395 {offsets = [0, 0], sizes = [16, 36], strides = [1, 1]} : vector<18x36xf32> to vector<16x36xf32>
    %2399 = vector.extract_strided_slice %2393 {offsets = [1, 0], sizes = [16, 36], strides = [1, 1]} : vector<18x36xf32> to vector<16x36xf32>
    %2400 = vector.extract_strided_slice %2394 {offsets = [1, 0], sizes = [16, 36], strides = [1, 1]} : vector<18x36xf32> to vector<16x36xf32>
    %2401 = vector.extract_strided_slice %2395 {offsets = [1, 0], sizes = [16, 36], strides = [1, 1]} : vector<18x36xf32> to vector<16x36xf32>
    %2402 = vector.extract_strided_slice %2393 {offsets = [2, 0], sizes = [16, 36], strides = [1, 1]} : vector<18x36xf32> to vector<16x36xf32>
    %2403 = vector.extract_strided_slice %2394 {offsets = [2, 0], sizes = [16, 36], strides = [1, 1]} : vector<18x36xf32> to vector<16x36xf32>
    %2404 = vector.extract_strided_slice %2395 {offsets = [2, 0], sizes = [16, 36], strides = [1, 1]} : vector<18x36xf32> to vector<16x36xf32>
    %c45_260 = arith.constant 45 : index
    %2405 = memref.load %arg6[%c45_260] : memref<54xf32, #tpu.memory_space<smem>>
    %2406 = vector.broadcast %2405 : f32 to vector<16x36xf32>
    %2407 = arith.mulf %2406, %2396 : vector<16x36xf32>
    %2408 = arith.addf %2392, %2407 : vector<16x36xf32>
    %c46_261 = arith.constant 46 : index
    %2409 = memref.load %arg6[%c46_261] : memref<54xf32, #tpu.memory_space<smem>>
    %2410 = vector.broadcast %2409 : f32 to vector<16x36xf32>
    %2411 = arith.mulf %2410, %2397 : vector<16x36xf32>
    %2412 = arith.addf %2408, %2411 : vector<16x36xf32>
    %c47_262 = arith.constant 47 : index
    %2413 = memref.load %arg6[%c47_262] : memref<54xf32, #tpu.memory_space<smem>>
    %2414 = vector.broadcast %2413 : f32 to vector<16x36xf32>
    %2415 = arith.mulf %2414, %2398 : vector<16x36xf32>
    %2416 = arith.addf %2412, %2415 : vector<16x36xf32>
    %c48_263 = arith.constant 48 : index
    %2417 = memref.load %arg6[%c48_263] : memref<54xf32, #tpu.memory_space<smem>>
    %2418 = vector.broadcast %2417 : f32 to vector<16x36xf32>
    %2419 = arith.mulf %2418, %2399 : vector<16x36xf32>
    %2420 = arith.addf %2416, %2419 : vector<16x36xf32>
    %c49_264 = arith.constant 49 : index
    %2421 = memref.load %arg6[%c49_264] : memref<54xf32, #tpu.memory_space<smem>>
    %2422 = vector.broadcast %2421 : f32 to vector<16x36xf32>
    %2423 = arith.mulf %2422, %2400 : vector<16x36xf32>
    %2424 = arith.addf %2420, %2423 : vector<16x36xf32>
    %c50_265 = arith.constant 50 : index
    %2425 = memref.load %arg6[%c50_265] : memref<54xf32, #tpu.memory_space<smem>>
    %2426 = vector.broadcast %2425 : f32 to vector<16x36xf32>
    %2427 = arith.mulf %2426, %2401 : vector<16x36xf32>
    %2428 = arith.addf %2424, %2427 : vector<16x36xf32>
    %c51_266 = arith.constant 51 : index
    %2429 = memref.load %arg6[%c51_266] : memref<54xf32, #tpu.memory_space<smem>>
    %2430 = vector.broadcast %2429 : f32 to vector<16x36xf32>
    %2431 = arith.mulf %2430, %2402 : vector<16x36xf32>
    %2432 = arith.addf %2428, %2431 : vector<16x36xf32>
    %c52_267 = arith.constant 52 : index
    %2433 = memref.load %arg6[%c52_267] : memref<54xf32, #tpu.memory_space<smem>>
    %2434 = vector.broadcast %2433 : f32 to vector<16x36xf32>
    %2435 = arith.mulf %2434, %2403 : vector<16x36xf32>
    %2436 = arith.addf %2432, %2435 : vector<16x36xf32>
    %c53_268 = arith.constant 53 : index
    %2437 = memref.load %arg6[%c53_268] : memref<54xf32, #tpu.memory_space<smem>>
    %2438 = vector.broadcast %2437 : f32 to vector<16x36xf32>
    %2439 = arith.mulf %2438, %2404 : vector<16x36xf32>
    %2440 = arith.addf %2436, %2439 : vector<16x36xf32>
    %c0_269 = arith.constant 0 : index
    %c0_270 = arith.constant 0 : index
    %c0_271 = arith.constant 0 : index
    %2441 = vector.load %arg8[%c0_269, %c0_270, %c0_271] : memref<1x16x36xf32, #tpu.memory_space<vmem>>, vector<1x16x36xf32>
    %2442 = vector.shape_cast %2441 : vector<1x16x36xf32> to vector<16x36xf32>
    %2443 = vector.shape_cast %2440 : vector<16x36xf32> to vector<1x16x36xf32>
    tpu.vector_store %arg8[%c0_269, %c0_270, %c0_271], %2443 {strides = array<i32>} : memref<1x16x36xf32, #tpu.memory_space<vmem>>, vector<1x16x36xf32>,
    return
  }
  func.func @transform_0(%arg0: i32) -> (i32, i32, i32, i32) {
    %c0_i32 = arith.constant 0 : i32
    %c0_i32_0 = arith.constant 0 : i32
    %c0_i32_1 = arith.constant 0 : i32
    %c0_i32_2 = arith.constant 0 : i32
    return %arg0, %c0_i32, %c0_i32_0, %c0_i32_1 : i32, i32, i32, i32
  }
  func.func @transform_1(%arg0: i32) -> i32 {
    %c0_i32 = arith.constant 0 : i32
    %c0_i32_0 = arith.constant 0 : i32
    return %c0_i32 : i32
  }
  func.func @transform_2(%arg0: i32) -> i32 {
    %c0_i32 = arith.constant 0 : i32
    %c0_i32_0 = arith.constant 0 : i32
    return %c0_i32 : i32
  }
  func.func @transform_3(%arg0: i32) -> i32 {
    %c0_i32 = arith.constant 0 : i32
    %c0_i32_0 = arith.constant 0 : i32
    return %c0_i32 : i32
  }
  func.func @transform_4(%arg0: i32) -> i32 {
    %c0_i32 = arith.constant 0 : i32
    %c0_i32_0 = arith.constant 0 : i32
    return %c0_i32 : i32
  }
  func.func @transform_5(%arg0: i32) -> i32 {
    %c0_i32 = arith.constant 0 : i32
    %c0_i32_0 = arith.constant 0 : i32
    return %c0_i32 : i32
  }
  func.func @transform_6(%arg0: i32) -> i32 {
    %c0_i32 = arith.constant 0 : i32
    %c0_i32_0 = arith.constant 0 : i32
    return %c0_i32 : i32
  }
  func.func @transform_7(%arg0: i32) -> (i32, i32, i32) {
    %c0_i32 = arith.constant 0 : i32
    %c0_i32_0 = arith.constant 0 : i32
    %c0_i32_1 = arith.constant 0 : i32
    return %arg0, %c0_i32, %c0_i32_0 : i32, i32, i32
  }
}

</mosaic_0001>

<llo_original>
// kernel: alinet_forward.1
$region0: #{alinet_forward.1}
  #allocation0 [shape = 'u32[]', space=smem, size = 0x4, offset = 0x4, fixed_abs, tag = 'smem constant byte address 0x4 - core index']
  #allocation1 [shape = 'u32[144,128]{1,0:T(1,128)}', space=vmem, size = 0x12000, scoped, tag = 'internal scratch']
  #allocation2 [shape = 'f32[1]{0:T(128)S(6)}', space=smem, size = 0x200, scoped, tag = 'scoped memory for alinet_forward.1']
  %s0 = inlined_call_operand.vmem [shape: f32[2,3,16,16], index: 0, kind: input, shape index: {}]
  %s1 = inlined_call_operand.vmem [shape: f32[162], index: 1, kind: input, shape index: {}]
  %s2 = inlined_call_operand.vmem [shape: f32[6], index: 2, kind: input, shape index: {}]
  %s3 = inlined_call_operand.vmem [shape: f32[324], index: 3, kind: input, shape index: {}]
  %s4 = inlined_call_operand.vmem [shape: f32[6], index: 4, kind: input, shape index: {}]
  %s5 = inlined_call_operand.vmem [shape: f32[54], index: 5, kind: input, shape index: {}]
  %s6 = inlined_call_operand.<no memory space> [shape: f32[1], index: 6, kind: input, shape index: {}]
  %s7 = inlined_call_operand.vmem [shape: f32[1,16,36], index: 7, kind: output, shape index: {}]
  %s8 = sld [smem:[#allocation0]]
  $region58: #{alinet_forward.1} parent=0
    _
  %s10 = ssub.s32 1, %s8
  %s11 = scalar_select 0, %s10, %s8
  %12 = sst [smem:[#allocation2]] %s6
  $region1: #{alinet_forward.1} parent=0
    #allocation3 [shape = 'u8[1024]{0}', space=smem, size = 0x400, scoped, tag = 'input window, operand 1, single buffered']
    #allocation4 [shape = 's32[1]{0}', space=sflag, size = 0x4, scoped, tag = 'scoped memory for alinet_forward.1']
    #allocation5 [shape = 'u8[512]{0}', space=smem, size = 0x200, scoped, tag = 'input window, operand 2, single buffered']
    #allocation6 [shape = 's32[1]{0}', space=sflag, size = 0x4, scoped, tag = 'scoped memory for alinet_forward.1']
    #allocation7 [shape = 'u8[1536]{0}', space=smem, size = 0x600, scoped, tag = 'input window, operand 3, single buffered']
    #allocation8 [shape = 'u8[512]{0}', space=smem, size = 0x200, scoped, tag = 'input window, operand 4, single buffered']
    #allocation9 [shape = 's32[1]{0}', space=sflag, size = 0x4, scoped, tag = 'scoped memory for alinet_forward.1']
    #allocation10 [shape = 'u8[512]{0}', space=smem, size = 0x200, scoped, tag = 'input window, operand 5, single buffered']
    %13 = vsyncpa [#allocation4], 0
    %14 = vsyncpa [#allocation6], 0
    %15 = vsyncpa [#allocation9], 0
    // Predicated region
    $region2: #{alinet_forward.1} parent=1 // pred_check
      _
    $region3: #{alinet_forward.1} parent=1 // pred_check_branch
      %17 = sbr.rel (0) target = $region5
    $region4: #{alinet_forward.1} parent=1 // pred_region
      _
    $region5: #{alinet_forward.1} parent=1 // pred_fallthru
      _
    // Predicated region
    $region6: #{alinet_forward.1} parent=1 // pred_check
      _
    $region7: #{alinet_forward.1} parent=1 // pred_check_branch
      %19 = sbr.rel (0) target = $region9
    $region8: #{alinet_forward.1} parent=1 // pred_region
      %s21 = ssub.s32 32, 32
      %22 = vsyncadd [#allocation4], %s21
      %s24 = sshll.u32 %s1, 4
      %s25 = int_to_ptr.vmem [resolvable:$true] %s24
      %27 = dma.vmem_to_smem %s25, 32, [#allocation3], [#allocation4]
    $region9: #{alinet_forward.1} parent=1 // pred_fallthru
      _
    // Predicated region
    $region10: #{alinet_forward.1} parent=1 // pred_check
      _
    $region11: #{alinet_forward.1} parent=1 // pred_check_branch
      %29 = sbr.rel (0) target = $region13
    $region12: #{alinet_forward.1} parent=1 // pred_region
      %s31 = ssub.s32 16, 16
      %32 = vsyncadd [#allocation6], %s31
      %s34 = sshll.u32 %s2, 4
      %s35 = int_to_ptr.vmem [resolvable:$true] %s34
      %37 = dma.vmem_to_smem %s35, 16, [#allocation5], [#allocation6]
    $region13: #{alinet_forward.1} parent=1 // pred_fallthru
      _
    // Predicated region
    $region14: #{alinet_forward.1} parent=1 // pred_check
      _
    $region15: #{alinet_forward.1} parent=1 // pred_check_branch
      %39 = sbr.rel (0) target = $region17
    $region16: #{alinet_forward.1} parent=1 // pred_region
      %s41 = ssub.s32 48, 48
      %42 = vsyncadd [#allocation6], %s41
      %s44 = sshll.u32 %s3, 4
      %s45 = int_to_ptr.vmem [resolvable:$true] %s44
      %47 = dma.vmem_to_smem %s45, 48, [#allocation7], [#allocation6]
    $region17: #{alinet_forward.1} parent=1 // pred_fallthru
      _
    // Predicated region
    $region18: #{alinet_forward.1} parent=1 // pred_check
      _
    $region19: #{alinet_forward.1} parent=1 // pred_check_branch
      %49 = sbr.rel (0) target = $region21
    $region20: #{alinet_forward.1} parent=1 // pred_region
      %s51 = ssub.s32 16, 16
      %52 = vsyncadd [#allocation9], %s51
      %s54 = sshll.u32 %s4, 4
      %s55 = int_to_ptr.vmem [resolvable:$true] %s54
      %57 = dma.vmem_to_smem %s55, 16, [#allocation8], [#allocation9]
    $region21: #{alinet_forward.1} parent=1 // pred_fallthru
      _
    // Predicated region
    $region22: #{alinet_forward.1} parent=1 // pred_check
      _
    $region23: #{alinet_forward.1} parent=1 // pred_check_branch
      %59 = sbr.rel (0) target = $region25
    $region24: #{alinet_forward.1} parent=1 // pred_region
      %s61 = ssub.s32 16, 16
      %62 = vsyncadd [#allocation9], %s61
      %s64 = sshll.u32 %s5, 4
      %s65 = int_to_ptr.vmem [resolvable:$true] %s64
      %67 = dma.vmem_to_smem %s65, 16, [#allocation10], [#allocation9]
    $region25: #{alinet_forward.1} parent=1 // pred_fallthru
      _
    // Predicated region
    $region26: #{alinet_forward.1} parent=1 // pred_check
      _
    $region27: #{alinet_forward.1} parent=1 // pred_check_branch
      %69 = sbr.rel (0) target = $region29
    $region28: #{alinet_forward.1} parent=1 // pred_region
      _
    $region29: #{alinet_forward.1} parent=1 // pred_fallthru
      _
    // Predicated region
    $region30: #{alinet_forward.1} parent=1 // pred_check
      _
    $region31: #{alinet_forward.1} parent=1 // pred_check_branch
      %71 = sbr.rel (0) target = $region33
    $region32: #{alinet_forward.1} parent=1 // pred_region
      %72 = dma.done [#allocation4], 32
    $region33: #{alinet_forward.1} parent=1 // pred_fallthru
      _
    // Predicated region
    $region34: #{alinet_forward.1} parent=1 // pred_check
      _
    $region35: #{alinet_forward.1} parent=1 // pred_check_branch
      %74 = sbr.rel (0) target = $region37
    $region36: #{alinet_forward.1} parent=1 // pred_region
      %75 = dma.done [#allocation6], 16
    $region37: #{alinet_forward.1} parent=1 // pred_fallthru
      _
    // Predicated region
    $region38: #{alinet_forward.1} parent=1 // pred_check
      _
    $region39: #{alinet_forward.1} parent=1 // pred_check_branch
      %77 = sbr.rel (0) target = $region41
    $region40: #{alinet_forward.1} parent=1 // pred_region
      %78 = dma.done [#allocation6], 48
    $region41: #{alinet_forward.1} parent=1 // pred_fallthru
      _
    // Predicated region
    $region42: #{alinet_forward.1} parent=1 // pred_check
      _
    $region43: #{alinet_forward.1} parent=1 // pred_check_branch
      %80 = sbr.rel (0) target = $region45
    $region44: #{alinet_forward.1} parent=1 // pred_region
      %81 = dma.done [#allocation9], 16
    $region45: #{alinet_forward.1} parent=1 // pred_fallthru
      _
    // Predicated region
    $region46: #{alinet_forward.1} parent=1 // pred_check
      _
    $region47: #{alinet_forward.1} parent=1 // pred_check_branch
      %83 = sbr.rel (0) target = $region49
    $region48: #{alinet_forward.1} parent=1 // pred_region
      %84 = dma.done [#allocation9], 16
    $region49: #{alinet_forward.1} parent=1 // pred_fallthru
      _
    %85 = sfence
    %vm86 = vcmask 7168
    %v87 = vsel %vm86, 0.0, 1.0
    %vm88 = vcmask 138240
    %v89 = vsel %vm88, %v87, 0.0
    %vm90 = vcmask 146432
    %v91 = vsel %vm90, %v89, 0.0
    %vm92 = vcmask 154624
    %v93 = vsel %vm92, %v91, 1.0
    %vm94 = vcmask 285696
    %v95 = vsel %vm94, %v93, 0.0
    %v96 = vld [vmem:[%s0] sm:$0xff]
    %v97 = vld [vmem:[%s0 + $0x8] sm:$0xff]
    %s98 = scalar_lea.vmem %s0, 48
    %v99 = vld [vmem:[%s98] sm:$0xff]
    %v100 = vld [vmem:[%s98 + $0x8] sm:$0xff]
    %103 = vrot.lane.b32.xlu0 %v96, 1
    %v104 = vpop.permute.xlu0 %103
    %105 = vrot.lane.b32.xlu0 %v97, 1
    %v106 = vpop.permute.xlu0 %105
    %111 = vrot.lane.b32.xlu0 %v99, 19
    %v112 = vpop.permute.xlu0 %111
    %113 = vrot.lane.b32.xlu0 %v100, 19
    %v114 = vpop.permute.xlu0 %113
    %v117 = vsel %vm86, 0.0, %v104
    %v118 = vsel %vm86, 0.0, %v106
    %v119 = vsel %vm88, %v117, 0.0
    %v120 = vsel %vm88, %v118, 0.0
    %v121 = vsel %vm90, %v119, 0.0
    %v122 = vsel %vm90, %v120, 0.0
    %v123 = vsel %vm92, %v121, %v112
    %v124 = vsel %vm92, %v122, %v114
    %v125 = vsel %vm94, %v123, 0.0
    %v126 = vsel %vm94, %v124, 0.0
    %129 = vrot.lane.b32.xlu0 %v125, 1
    %v130 = vpop.permute.xlu0 %129
    %131 = vrot.lane.b32.xlu0 %v126, 1
    %v132 = vpop.permute.xlu0 %131
    %v135 = vsel %vm86, 0.0, %v130
    %v136 = vsel %vm86, 0.0, %v132
    %vm137 = vcmask 302080
    %v138 = vsel %vm137, %v135, 0.0
    %v139 = vsel %vm137, %v136, 0.0
    %vm142 = vcmask 1040384
    %v143 = vrot.slane %v138, 7
    %v144 = vrot.slane %v139, 7
    %v145 = vsel %vm142, %v143, %v144
    %v149 = vsel %vm142, 0.0, %v143
    %v150 = vsel %vm142, %v144, 0.0
    %s151 = scalar_lea.vmem %s0, 16
    %v152 = vld [vmem:[%s151] sm:$0xff]
    %v153 = vld [vmem:[%s151 + $0x8] sm:$0xff]
    %s154 = scalar_lea.vmem %s0, 64
    %v155 = vld [vmem:[%s154] sm:$0xff]
    %v156 = vld [vmem:[%s154 + $0x8] sm:$0xff]
    %159 = vrot.lane.b32.xlu0 %v152, 1
    %v160 = vpop.permute.xlu0 %159
    %161 = vrot.lane.b32.xlu0 %v153, 1
    %v162 = vpop.permute.xlu0 %161
    %167 = vrot.lane.b32.xlu0 %v155, 19
    %v168 = vpop.permute.xlu0 %167
    %169 = vrot.lane.b32.xlu0 %v156, 19
    %v170 = vpop.permute.xlu0 %169
    %v173 = vsel %vm86, 0.0, %v160
    %v174 = vsel %vm86, 0.0, %v162
    %v175 = vsel %vm88, %v173, 0.0
    %v176 = vsel %vm88, %v174, 0.0
    %v177 = vsel %vm90, %v175, 0.0
    %v178 = vsel %vm90, %v176, 0.0
    %v179 = vsel %vm92, %v177, %v168
    %v180 = vsel %vm92, %v178, %v170
    %v181 = vsel %vm94, %v179, 0.0
    %v182 = vsel %vm94, %v180, 0.0
    %185 = vrot.lane.b32.xlu0 %v181, 1
    %v186 = vpop.permute.xlu0 %185
    %187 = vrot.lane.b32.xlu0 %v182, 1
    %v188 = vpop.permute.xlu0 %187
    %v191 = vsel %vm86, 0.0, %v186
    %v192 = vsel %vm86, 0.0, %v188
    %v193 = vsel %vm137, %v191, 0.0
    %v194 = vsel %vm137, %v192, 0.0
    %v197 = vrot.slane %v193, 7
    %v198 = vrot.slane %v194, 7
    %v199 = vsel %vm142, %v197, %v198
    %v203 = vsel %vm142, 0.0, %v197
    %v204 = vsel %vm142, %v198, 0.0
    %s205 = scalar_lea.vmem %s0, 32
    %v206 = vld [vmem:[%s205] sm:$0xff]
    %v207 = vld [vmem:[%s205 + $0x8] sm:$0xff]
    %s208 = scalar_lea.vmem %s0, 80
    %v209 = vld [vmem:[%s208] sm:$0xff]
    %v210 = vld [vmem:[%s208 + $0x8] sm:$0xff]
    %213 = vrot.lane.b32.xlu0 %v206, 1
    %v214 = vpop.permute.xlu0 %213
    %215 = vrot.lane.b32.xlu0 %v207, 1
    %v216 = vpop.permute.xlu0 %215
    %221 = vrot.lane.b32.xlu0 %v209, 19
    %v222 = vpop.permute.xlu0 %221
    %223 = vrot.lane.b32.xlu0 %v210, 19
    %v224 = vpop.permute.xlu0 %223
    %v227 = vsel %vm86, 0.0, %v214
    %v228 = vsel %vm86, 0.0, %v216
    %v229 = vsel %vm88, %v227, 0.0
    %v230 = vsel %vm88, %v228, 0.0
    %v231 = vsel %vm90, %v229, 0.0
    %v232 = vsel %vm90, %v230, 0.0
    %v233 = vsel %vm92, %v231, %v222
    %v234 = vsel %vm92, %v232, %v224
    %v235 = vsel %vm94, %v233, 0.0
    %v236 = vsel %vm94, %v234, 0.0
    %239 = vrot.lane.b32.xlu0 %v235, 1
    %v240 = vpop.permute.xlu0 %239
    %241 = vrot.lane.b32.xlu0 %v236, 1
    %v242 = vpop.permute.xlu0 %241
    %v245 = vsel %vm86, 0.0, %v240
    %v246 = vsel %vm86, 0.0, %v242
    %v247 = vsel %vm137, %v245, 0.0
    %v248 = vsel %vm137, %v246, 0.0
    %v251 = vrot.slane %v247, 7
    %v252 = vrot.slane %v248, 7
    %v253 = vsel %vm142, %v251, %v252
    %v257 = vsel %vm142, 0.0, %v251
    %v258 = vsel %vm142, %v252, 0.0
    %s259 = sld [smem:[#allocation5]]
    %v260 = vstv %s259
    %s261 = sld [smem:[#allocation5 + $0x1]]
    %v262 = vstv %s261
    %s263 = sld [smem:[#allocation5 + $0x2]]
    %v264 = vstv %s263
    %s265 = sld [smem:[#allocation5 + $0x3]]
    %v266 = vstv %s265
    %s267 = sld [smem:[#allocation5 + $0x4]]
    %v268 = vstv %s267
    %s269 = sld [smem:[#allocation5 + $0x5]]
    %v270 = vstv %s269
    %s271 = sld [smem:[#allocation3]]
    %v272 = vstv %s271
    %v273 = vmul.f32 %v272, %v149
    %v274 = vmul.f32 %v272, %v145
    %v275 = vadd.f32 %v260, %v273
    %v276 = vadd.f32 %v260, %v274
    %s277 = sld [smem:[#allocation3 + $0x1]]
    %v278 = vstv %s277
    %v279 = vmul.f32 %v278, %v149
    %v280 = vmul.f32 %v278, %v145
    %283 = vrot.lane.b32.xlu0 %v279, 127
    %v284 = vpop.permute.xlu0 %283
    %285 = vrot.lane.b32.xlu0 %v280, 127
    %v286 = vpop.permute.xlu0 %285
    %v289 = vadd.f32 %v275, %v284
    %v290 = vadd.f32 %v276, %v286
    %s291 = sld [smem:[#allocation3 + $0x2]]
    %v292 = vstv %s291
    %v293 = vmul.f32 %v292, %v149
    %v294 = vmul.f32 %v292, %v145
    %297 = vrot.lane.b32.xlu0 %v293, 126
    %v298 = vpop.permute.xlu0 %297
    %299 = vrot.lane.b32.xlu0 %v294, 126
    %v300 = vpop.permute.xlu0 %299
    %v303 = vadd.f32 %v289, %v298
    %v304 = vadd.f32 %v290, %v300
    %s305 = sld [smem:[#allocation3 + $0x3]]
    %v306 = vstv %s305
    %v307 = vmul.f32 %v306, %v149
    %v308 = vmul.f32 %v306, %v145
    %v309 = vmul.f32 %v306, %v150
    %vm313 = vcmask 1046528
    %v314 = vrot.slane %v307, 1
    %v315 = vrot.slane %v308, 1
    %v316 = vsel %vm313, %v314, %v315
    %v317 = vrot.slane %v309, 1
    %v318 = vsel %vm313, %v315, %v317
    %v321 = vadd.f32 %v303, %v316
    %v322 = vadd.f32 %v304, %v318
    %s323 = sld [smem:[#allocation3 + $0x4]]
    %v324 = vstv %s323
    %v325 = vmul.f32 %v324, %v149
    %v326 = vmul.f32 %v324, %v145
    %v327 = vmul.f32 %v324, %v150
    %v331 = vrot.slane %v325, 1
    %v332 = vrot.slane %v326, 1
    %v333 = vsel %vm313, %v331, %v332
    %v334 = vrot.slane %v327, 1
    %v335 = vsel %vm313, %v332, %v334
    %336 = vrot.lane.b32.xlu0 %v333, 127
    %v337 = vpop.permute.xlu0 %336
    %338 = vrot.lane.b32.xlu0 %v335, 127
    %v339 = vpop.permute.xlu0 %338
    %v342 = vadd.f32 %v321, %v337
    %v343 = vadd.f32 %v322, %v339
    %s344 = sld [smem:[#allocation3 + $0x5]]
    %v345 = vstv %s344
    %v346 = vmul.f32 %v345, %v149
    %v347 = vmul.f32 %v345, %v145
    %v348 = vmul.f32 %v345, %v150
    %v352 = vrot.slane %v346, 1
    %v353 = vrot.slane %v347, 1
    %v354 = vsel %vm313, %v352, %v353
    %v355 = vrot.slane %v348, 1
    %v356 = vsel %vm313, %v353, %v355
    %357 = vrot.lane.b32.xlu0 %v354, 126
    %v358 = vpop.permute.xlu0 %357
    %359 = vrot.lane.b32.xlu0 %v356, 126
    %v360 = vpop.permute.xlu0 %359
    %v363 = vadd.f32 %v342, %v358
    %v364 = vadd.f32 %v343, %v360
    %s365 = sld [smem:[#allocation3 + $0x6]]
    %v366 = vstv %s365
    %v367 = vmul.f32 %v366, %v149
    %v368 = vmul.f32 %v366, %v145
    %v369 = vmul.f32 %v366, %v150
    %vm373 = vcmask 1045504
    %v374 = vrot.slane %v367, 2
    %v375 = vrot.slane %v368, 2
    %v376 = vsel %vm373, %v374, %v375
    %v377 = vrot.slane %v369, 2
    %v378 = vsel %vm373, %v375, %v377
    %v381 = vadd.f32 %v363, %v376
    %v382 = vadd.f32 %v364, %v378
    %s383 = sld [smem:[#allocation3 + $0x7]]
    %v384 = vstv %s383
    %v385 = vmul.f32 %v384, %v149
    %v386 = vmul.f32 %v384, %v145
    %v387 = vmul.f32 %v384, %v150
    %v391 = vrot.slane %v385, 2
    %v392 = vrot.slane %v386, 2
    %v393 = vsel %vm373, %v391, %v392
    %v394 = vrot.slane %v387, 2
    %v395 = vsel %vm373, %v392, %v394
    %396 = vrot.lane.b32.xlu0 %v393, 127
    %v397 = vpop.permute.xlu0 %396
    %398 = vrot.lane.b32.xlu0 %v395, 127
    %v399 = vpop.permute.xlu0 %398
    %v402 = vadd.f32 %v381, %v397
    %v403 = vadd.f32 %v382, %v399
    %s404 = sld [smem:[#allocation3 + $0x8]]
    %v405 = vstv %s404
    %v406 = vmul.f32 %v405, %v149
    %v407 = vmul.f32 %v405, %v145
    %v408 = vmul.f32 %v405, %v150
    %v412 = vrot.slane %v406, 2
    %v413 = vrot.slane %v407, 2
    %v414 = vsel %vm373, %v412, %v413
    %v415 = vrot.slane %v408, 2
    %v416 = vsel %vm373, %v413, %v415
    %417 = vrot.lane.b32.xlu0 %v414, 126
    %v418 = vpop.permute.xlu0 %417
    %419 = vrot.lane.b32.xlu0 %v416, 126
    %v420 = vpop.permute.xlu0 %419
    %v423 = vadd.f32 %v402, %v418
    %v424 = vadd.f32 %v403, %v420
    %s425 = sld [smem:[#allocation3 + $0x1b]]
    %v426 = vstv %s425
    %v427 = vmul.f32 %v426, %v149
    %v428 = vmul.f32 %v426, %v145
    %v429 = vadd.f32 %v262, %v427
    %v430 = vadd.f32 %v262, %v428
    %s431 = sld [smem:[#allocation3 + $0x1c]]
    %v432 = vstv %s431
    %v433 = vmul.f32 %v432, %v149
    %v434 = vmul.f32 %v432, %v145
    %437 = vrot.lane.b32.xlu0 %v433, 127
    %v438 = vpop.permute.xlu0 %437
    %439 = vrot.lane.b32.xlu0 %v434, 127
    %v440 = vpop.permute.xlu0 %439
    %v443 = vadd.f32 %v429, %v438
    %v444 = vadd.f32 %v430, %v440
    %s445 = sld [smem:[#allocation3 + $0x1d]]
    %v446 = vstv %s445
    %v447 = vmul.f32 %v446, %v149
    %v448 = vmul.f32 %v446, %v145
    %451 = vrot.lane.b32.xlu0 %v447, 126
    %v452 = vpop.permute.xlu0 %451
    %453 = vrot.lane.b32.xlu0 %v448, 126
    %v454 = vpop.permute.xlu0 %453
    %v457 = vadd.f32 %v443, %v452
    %v458 = vadd.f32 %v444, %v454
    %s459 = sld [smem:[#allocation3 + $0x1e]]
    %v460 = vstv %s459
    %v461 = vmul.f32 %v460, %v149
    %v462 = vmul.f32 %v460, %v145
    %v463 = vmul.f32 %v460, %v150
    %v467 = vrot.slane %v461, 1
    %v468 = vrot.slane %v462, 1
    %v469 = vsel %vm313, %v467, %v468
    %v470 = vrot.slane %v463, 1
    %v471 = vsel %vm313, %v468, %v470
    %v474 = vadd.f32 %v457, %v469
    %v475 = vadd.f32 %v458, %v471
    %s476 = sld [smem:[#allocation3 + $0x1f]]
    %v477 = vstv %s476
    %v478 = vmul.f32 %v477, %v149
    %v479 = vmul.f32 %v477, %v145
    %v480 = vmul.f32 %v477, %v150
    %v484 = vrot.slane %v478, 1
    %v485 = vrot.slane %v479, 1
    %v486 = vsel %vm313, %v484, %v485
    %v487 = vrot.slane %v480, 1
    %v488 = vsel %vm313, %v485, %v487
    %489 = vrot.lane.b32.xlu0 %v486, 127
    %v490 = vpop.permute.xlu0 %489
    %491 = vrot.lane.b32.xlu0 %v488, 127
    %v492 = vpop.permute.xlu0 %491
    %v495 = vadd.f32 %v474, %v490
    %v496 = vadd.f32 %v475, %v492
    %s497 = sld [smem:[#allocation3 + $0x20]]
    %v498 = vstv %s497
    %v499 = vmul.f32 %v498, %v149
    %v500 = vmul.f32 %v498, %v145
    %v501 = vmul.f32 %v498, %v150
    %v505 = vrot.slane %v499, 1
    %v506 = vrot.slane %v500, 1
    %v507 = vsel %vm313, %v505, %v506
    %v508 = vrot.slane %v501, 1
    %v509 = vsel %vm313, %v506, %v508
    %510 = vrot.lane.b32.xlu0 %v507, 126
    %v511 = vpop.permute.xlu0 %510
    %512 = vrot.lane.b32.xlu0 %v509, 126
    %v513 = vpop.permute.xlu0 %512
    %v516 = vadd.f32 %v495, %v511
    %v517 = vadd.f32 %v496, %v513
    %s518 = sld [smem:[#allocation3 + $0x21]]
    %v519 = vstv %s518
    %v520 = vmul.f32 %v519, %v149
    %v521 = vmul.f32 %v519, %v145
    %v522 = vmul.f32 %v519, %v150
    %v526 = vrot.slane %v520, 2
    %v527 = vrot.slane %v521, 2
    %v528 = vsel %vm373, %v526, %v527
    %v529 = vrot.slane %v522, 2
    %v530 = vsel %vm373, %v527, %v529
    %v533 = vadd.f32 %v516, %v528
    %v534 = vadd.f32 %v517, %v530
    %s535 = sld [smem:[#allocation3 + $0x22]]
    %v536 = vstv %s535
    %v537 = vmul.f32 %v536, %v149
    %v538 = vmul.f32 %v536, %v145
    %v539 = vmul.f32 %v536, %v150
    %v543 = vrot.slane %v537, 2
    %v544 = vrot.slane %v538, 2
    %v545 = vsel %vm373, %v543, %v544
    %v546 = vrot.slane %v539, 2
    %v547 = vsel %vm373, %v544, %v546
    %548 = vrot.lane.b32.xlu0 %v545, 127
    %v549 = vpop.permute.xlu0 %548
    %550 = vrot.lane.b32.xlu0 %v547, 127
    %v551 = vpop.permute.xlu0 %550
    %v554 = vadd.f32 %v533, %v549
    %v555 = vadd.f32 %v534, %v551
    %s556 = sld [smem:[#allocation3 + $0x23]]
    %v557 = vstv %s556
    %v558 = vmul.f32 %v557, %v149
    %v559 = vmul.f32 %v557, %v145
    %v560 = vmul.f32 %v557, %v150
    %v564 = vrot.slane %v558, 2
    %v565 = vrot.slane %v559, 2
    %v566 = vsel %vm373, %v564, %v565
    %v567 = vrot.slane %v560, 2
    %v568 = vsel %vm373, %v565, %v567
    %569 = vrot.lane.b32.xlu0 %v566, 126
    %v570 = vpop.permute.xlu0 %569
    %571 = vrot.lane.b32.xlu0 %v568, 126
    %v572 = vpop.permute.xlu0 %571
    %v575 = vadd.f32 %v554, %v570
    %v576 = vadd.f32 %v555, %v572
    %s577 = sld [smem:[#allocation3 + $0x36]]
    %v578 = vstv %s577
    %v579 = vmul.f32 %v578, %v149
    %v580 = vmul.f32 %v578, %v145
    %v581 = vadd.f32 %v264, %v579
    %v582 = vadd.f32 %v264, %v580
    %s583 = sld [smem:[#allocation3 + $0x37]]
    %v584 = vstv %s583
    %v585 = vmul.f32 %v584, %v149
    %v586 = vmul.f32 %v584, %v145
    %589 = vrot.lane.b32.xlu0 %v585, 127
    %v590 = vpop.permute.xlu0 %589
    %591 = vrot.lane.b32.xlu0 %v586, 127
    %v592 = vpop.permute.xlu0 %591
    %v595 = vadd.f32 %v581, %v590
    %v596 = vadd.f32 %v582, %v592
    %s597 = sld [smem:[#allocation3 + $0x38]]
    %v598 = vstv %s597
    %v599 = vmul.f32 %v598, %v149
    %v600 = vmul.f32 %v598, %v145
    %603 = vrot.lane.b32.xlu0 %v599, 126
    %v604 = vpop.permute.xlu0 %603
    %605 = vrot.lane.b32.xlu0 %v600, 126
    %v606 = vpop.permute.xlu0 %605
    %v609 = vadd.f32 %v595, %v604
    %v610 = vadd.f32 %v596, %v606
    %s611 = sld [smem:[#allocation3 + $0x39]]
    %v612 = vstv %s611
    %v613 = vmul.f32 %v612, %v149
    %v614 = vmul.f32 %v612, %v145
    %v615 = vmul.f32 %v612, %v150
    %v619 = vrot.slane %v613, 1
    %v620 = vrot.slane %v614, 1
    %v621 = vsel %vm313, %v619, %v620
    %v622 = vrot.slane %v615, 1
    %v623 = vsel %vm313, %v620, %v622
    %v626 = vadd.f32 %v609, %v621
    %v627 = vadd.f32 %v610, %v623
    %s628 = sld [smem:[#allocation3 + $0x3a]]
    %v629 = vstv %s628
    %v630 = vmul.f32 %v629, %v149
    %v631 = vmul.f32 %v629, %v145
    %v632 = vmul.f32 %v629, %v150
    %v636 = vrot.slane %v630, 1
    %v637 = vrot.slane %v631, 1
    %v638 = vsel %vm313, %v636, %v637
    %v639 = vrot.slane %v632, 1
    %v640 = vsel %vm313, %v637, %v639
    %641 = vrot.lane.b32.xlu0 %v638, 127
    %v642 = vpop.permute.xlu0 %641
    %643 = vrot.lane.b32.xlu0 %v640, 127
    %v644 = vpop.permute.xlu0 %643
    %v647 = vadd.f32 %v626, %v642
    %v648 = vadd.f32 %v627, %v644
    %s649 = sld [smem:[#allocation3 + $0x3b]]
    %v650 = vstv %s649
    %v651 = vmul.f32 %v650, %v149
    %v652 = vmul.f32 %v650, %v145
    %v653 = vmul.f32 %v650, %v150
    %v657 = vrot.slane %v651, 1
    %v658 = vrot.slane %v652, 1
    %v659 = vsel %vm313, %v657, %v658
    %v660 = vrot.slane %v653, 1
    %v661 = vsel %vm313, %v658, %v660
    %662 = vrot.lane.b32.xlu0 %v659, 126
    %v663 = vpop.permute.xlu0 %662
    %664 = vrot.lane.b32.xlu0 %v661, 126
    %v665 = vpop.permute.xlu0 %664
    %v668 = vadd.f32 %v647, %v663
    %v669 = vadd.f32 %v648, %v665
    %s670 = sld [smem:[#allocation3 + $0x3c]]
    %v671 = vstv %s670
    %v672 = vmul.f32 %v671, %v149
    %v673 = vmul.f32 %v671, %v145
    %v674 = vmul.f32 %v671, %v150
    %v678 = vrot.slane %v672, 2
    %v679 = vrot.slane %v673, 2
    %v680 = vsel %vm373, %v678, %v679
    %v681 = vrot.slane %v674, 2
    %v682 = vsel %vm373, %v679, %v681
    %v685 = vadd.f32 %v668, %v680
    %v686 = vadd.f32 %v669, %v682
    %s687 = sld [smem:[#allocation3 + $0x3d]]
    %v688 = vstv %s687
    %v689 = vmul.f32 %v688, %v149
    %v690 = vmul.f32 %v688, %v145
    %v691 = vmul.f32 %v688, %v150
    %v695 = vrot.slane %v689, 2
    %v696 = vrot.slane %v690, 2
    %v697 = vsel %vm373, %v695, %v696
    %v698 = vrot.slane %v691, 2
    %v699 = vsel %vm373, %v696, %v698
    %700 = vrot.lane.b32.xlu0 %v697, 127
    %v701 = vpop.permute.xlu0 %700
    %702 = vrot.lane.b32.xlu0 %v699, 127
    %v703 = vpop.permute.xlu0 %702
    %v706 = vadd.f32 %v685, %v701
    %v707 = vadd.f32 %v686, %v703
    %s708 = sld [smem:[#allocation3 + $0x3e]]
    %v709 = vstv %s708
    %v710 = vmul.f32 %v709, %v149
    %v711 = vmul.f32 %v709, %v145
    %v712 = vmul.f32 %v709, %v150
    %v716 = vrot.slane %v710, 2
    %v717 = vrot.slane %v711, 2
    %v718 = vsel %vm373, %v716, %v717
    %v719 = vrot.slane %v712, 2
    %v720 = vsel %vm373, %v717, %v719
    %721 = vrot.lane.b32.xlu0 %v718, 126
    %v722 = vpop.permute.xlu0 %721
    %723 = vrot.lane.b32.xlu0 %v720, 126
    %v724 = vpop.permute.xlu0 %723
    %v727 = vadd.f32 %v706, %v722
    %v728 = vadd.f32 %v707, %v724
    %s729 = sld [smem:[#allocation3 + $0x51]]
    %v730 = vstv %s729
    %v731 = vmul.f32 %v730, %v149
    %v732 = vmul.f32 %v730, %v145
    %v733 = vadd.f32 %v266, %v731
    %v734 = vadd.f32 %v266, %v732
    %s735 = sld [smem:[#allocation3 + $0x52]]
    %v736 = vstv %s735
    %v737 = vmul.f32 %v736, %v149
    %v738 = vmul.f32 %v736, %v145
    %741 = vrot.lane.b32.xlu0 %v737, 127
    %v742 = vpop.permute.xlu0 %741
    %743 = vrot.lane.b32.xlu0 %v738, 127
    %v744 = vpop.permute.xlu0 %743
    %v747 = vadd.f32 %v733, %v742
    %v748 = vadd.f32 %v734, %v744
    %s749 = sld [smem:[#allocation3 + $0x53]]
    %v750 = vstv %s749
    %v751 = vmul.f32 %v750, %v149
    %v752 = vmul.f32 %v750, %v145
    %755 = vrot.lane.b32.xlu0 %v751, 126
    %v756 = vpop.permute.xlu0 %755
    %757 = vrot.lane.b32.xlu0 %v752, 126
    %v758 = vpop.permute.xlu0 %757
    %v761 = vadd.f32 %v747, %v756
    %v762 = vadd.f32 %v748, %v758
    %s763 = sld [smem:[#allocation3 + $0x54]]
    %v764 = vstv %s763
    %v765 = vmul.f32 %v764, %v149
    %v766 = vmul.f32 %v764, %v145
    %v767 = vmul.f32 %v764, %v150
    %v771 = vrot.slane %v765, 1
    %v772 = vrot.slane %v766, 1
    %v773 = vsel %vm313, %v771, %v772
    %v774 = vrot.slane %v767, 1
    %v775 = vsel %vm313, %v772, %v774
    %v778 = vadd.f32 %v761, %v773
    %v779 = vadd.f32 %v762, %v775
    %s780 = sld [smem:[#allocation3 + $0x55]]
    %v781 = vstv %s780
    %v782 = vmul.f32 %v781, %v149
    %v783 = vmul.f32 %v781, %v145
    %v784 = vmul.f32 %v781, %v150
    %v788 = vrot.slane %v782, 1
    %v789 = vrot.slane %v783, 1
    %v790 = vsel %vm313, %v788, %v789
    %v791 = vrot.slane %v784, 1
    %v792 = vsel %vm313, %v789, %v791
    %793 = vrot.lane.b32.xlu0 %v790, 127
    %v794 = vpop.permute.xlu0 %793
    %795 = vrot.lane.b32.xlu0 %v792, 127
    %v796 = vpop.permute.xlu0 %795
    %v799 = vadd.f32 %v778, %v794
    %v800 = vadd.f32 %v779, %v796
    %s801 = sld [smem:[#allocation3 + $0x56]]
    %v802 = vstv %s801
    %v803 = vmul.f32 %v802, %v149
    %v804 = vmul.f32 %v802, %v145
    %v805 = vmul.f32 %v802, %v150
    %v809 = vrot.slane %v803, 1
    %v810 = vrot.slane %v804, 1
    %v811 = vsel %vm313, %v809, %v810
    %v812 = vrot.slane %v805, 1
    %v813 = vsel %vm313, %v810, %v812
    %814 = vrot.lane.b32.xlu0 %v811, 126
    %v815 = vpop.permute.xlu0 %814
    %816 = vrot.lane.b32.xlu0 %v813, 126
    %v817 = vpop.permute.xlu0 %816
    %v820 = vadd.f32 %v799, %v815
    %v821 = vadd.f32 %v800, %v817
    %s822 = sld [smem:[#allocation3 + $0x57]]
    %v823 = vstv %s822
    %v824 = vmul.f32 %v823, %v149
    %v825 = vmul.f32 %v823, %v145
    %v826 = vmul.f32 %v823, %v150
    %v830 = vrot.slane %v824, 2
    %v831 = vrot.slane %v825, 2
    %v832 = vsel %vm373, %v830, %v831
    %v833 = vrot.slane %v826, 2
    %v834 = vsel %vm373, %v831, %v833
    %v837 = vadd.f32 %v820, %v832
    %v838 = vadd.f32 %v821, %v834
    %s839 = sld [smem:[#allocation3 + $0x58]]
    %v840 = vstv %s839
    %v841 = vmul.f32 %v840, %v149
    %v842 = vmul.f32 %v840, %v145
    %v843 = vmul.f32 %v840, %v150
    %v847 = vrot.slane %v841, 2
    %v848 = vrot.slane %v842, 2
    %v849 = vsel %vm373, %v847, %v848
    %v850 = vrot.slane %v843, 2
    %v851 = vsel %vm373, %v848, %v850
    %852 = vrot.lane.b32.xlu0 %v849, 127
    %v853 = vpop.permute.xlu0 %852
    %854 = vrot.lane.b32.xlu0 %v851, 127
    %v855 = vpop.permute.xlu0 %854
    %v858 = vadd.f32 %v837, %v853
    %v859 = vadd.f32 %v838, %v855
    %s860 = sld [smem:[#allocation3 + $0x59]]
    %v861 = vstv %s860
    %v862 = vmul.f32 %v861, %v149
    %v863 = vmul.f32 %v861, %v145
    %v864 = vmul.f32 %v861, %v150
    %v868 = vrot.slane %v862, 2
    %v869 = vrot.slane %v863, 2
    %v870 = vsel %vm373, %v868, %v869
    %v871 = vrot.slane %v864, 2
    %v872 = vsel %vm373, %v869, %v871
    %873 = vrot.lane.b32.xlu0 %v870, 126
    %v874 = vpop.permute.xlu0 %873
    %875 = vrot.lane.b32.xlu0 %v872, 126
    %v876 = vpop.permute.xlu0 %875
    %v879 = vadd.f32 %v858, %v874
    %v880 = vadd.f32 %v859, %v876
    %s881 = sld [smem:[#allocation3 + $0x6c]]
    %v882 = vstv %s881
    %v883 = vmul.f32 %v882, %v149
    %v884 = vmul.f32 %v882, %v145
    %v885 = vadd.f32 %v268, %v883
    %v886 = vadd.f32 %v268, %v884
    %s887 = sld [smem:[#allocation3 + $0x6d]]
    %v888 = vstv %s887
    %v889 = vmul.f32 %v888, %v149
    %v890 = vmul.f32 %v888, %v145
    %893 = vrot.lane.b32.xlu0 %v889, 127
    %v894 = vpop.permute.xlu0 %893
    %895 = vrot.lane.b32.xlu0 %v890, 127
    %v896 = vpop.permute.xlu0 %895
    %v899 = vadd.f32 %v885, %v894
    %v900 = vadd.f32 %v886, %v896
    %s901 = sld [smem:[#allocation3 + $0x6e]]
    %v902 = vstv %s901
    %v903 = vmul.f32 %v902, %v149
    %v904 = vmul.f32 %v902, %v145
    %907 = vrot.lane.b32.xlu0 %v903, 126
    %v908 = vpop.permute.xlu0 %907
    %909 = vrot.lane.b32.xlu0 %v904, 126
    %v910 = vpop.permute.xlu0 %909
    %v913 = vadd.f32 %v899, %v908
    %v914 = vadd.f32 %v900, %v910
    %s915 = sld [smem:[#allocation3 + $0x6f]]
    %v916 = vstv %s915
    %v917 = vmul.f32 %v916, %v149
    %v918 = vmul.f32 %v916, %v145
    %v919 = vmul.f32 %v916, %v150
    %v923 = vrot.slane %v917, 1
    %v924 = vrot.slane %v918, 1
    %v925 = vsel %vm313, %v923, %v924
    %v926 = vrot.slane %v919, 1
    %v927 = vsel %vm313, %v924, %v926
    %v930 = vadd.f32 %v913, %v925
    %v931 = vadd.f32 %v914, %v927
    %s932 = sld [smem:[#allocation3 + $0x70]]
    %v933 = vstv %s932
    %v934 = vmul.f32 %v933, %v149
    %v935 = vmul.f32 %v933, %v145
    %v936 = vmul.f32 %v933, %v150
    %v940 = vrot.slane %v934, 1
    %v941 = vrot.slane %v935, 1
    %v942 = vsel %vm313, %v940, %v941
    %v943 = vrot.slane %v936, 1
    %v944 = vsel %vm313, %v941, %v943
    %945 = vrot.lane.b32.xlu0 %v942, 127
    %v946 = vpop.permute.xlu0 %945
    %947 = vrot.lane.b32.xlu0 %v944, 127
    %v948 = vpop.permute.xlu0 %947
    %v951 = vadd.f32 %v930, %v946
    %v952 = vadd.f32 %v931, %v948
    %s953 = sld [smem:[#allocation3 + $0x71]]
    %v954 = vstv %s953
    %v955 = vmul.f32 %v954, %v149
    %v956 = vmul.f32 %v954, %v145
    %v957 = vmul.f32 %v954, %v150
    %v961 = vrot.slane %v955, 1
    %v962 = vrot.slane %v956, 1
    %v963 = vsel %vm313, %v961, %v962
    %v964 = vrot.slane %v957, 1
    %v965 = vsel %vm313, %v962, %v964
    %966 = vrot.lane.b32.xlu0 %v963, 126
    %v967 = vpop.permute.xlu0 %966
    %968 = vrot.lane.b32.xlu0 %v965, 126
    %v969 = vpop.permute.xlu0 %968
    %v972 = vadd.f32 %v951, %v967
    %v973 = vadd.f32 %v952, %v969
    %s974 = sld [smem:[#allocation3 + $0x72]]
    %v975 = vstv %s974
    %v976 = vmul.f32 %v975, %v149
    %v977 = vmul.f32 %v975, %v145
    %v978 = vmul.f32 %v975, %v150
    %v982 = vrot.slane %v976, 2
    %v983 = vrot.slane %v977, 2
    %v984 = vsel %vm373, %v982, %v983
    %v985 = vrot.slane %v978, 2
    %v986 = vsel %vm373, %v983, %v985
    %v989 = vadd.f32 %v972, %v984
    %v990 = vadd.f32 %v973, %v986
    %s991 = sld [smem:[#allocation3 + $0x73]]
    %v992 = vstv %s991
    %v993 = vmul.f32 %v992, %v149
    %v994 = vmul.f32 %v992, %v145
    %v995 = vmul.f32 %v992, %v150
    %v999 = vrot.slane %v993, 2
    %v1000 = vrot.slane %v994, 2
    %v1001 = vsel %vm373, %v999, %v1000
    %v1002 = vrot.slane %v995, 2
    %v1003 = vsel %vm373, %v1000, %v1002
    %1004 = vrot.lane.b32.xlu0 %v1001, 127
    %v1005 = vpop.permute.xlu0 %1004
    %1006 = vrot.lane.b32.xlu0 %v1003, 127
    %v1007 = vpop.permute.xlu0 %1006
    %v1010 = vadd.f32 %v989, %v1005
    %v1011 = vadd.f32 %v990, %v1007
    %s1012 = sld [smem:[#allocation3 + $0x74]]
    %v1013 = vstv %s1012
    %v1014 = vmul.f32 %v1013, %v149
    %v1015 = vmul.f32 %v1013, %v145
    %v1016 = vmul.f32 %v1013, %v150
    %v1020 = vrot.slane %v1014, 2
    %v1021 = vrot.slane %v1015, 2
    %v1022 = vsel %vm373, %v1020, %v1021
    %v1023 = vrot.slane %v1016, 2
    %v1024 = vsel %vm373, %v1021, %v1023
    %1025 = vrot.lane.b32.xlu0 %v1022, 126
    %v1026 = vpop.permute.xlu0 %1025
    %1027 = vrot.lane.b32.xlu0 %v1024, 126
    %v1028 = vpop.permute.xlu0 %1027
    %v1031 = vadd.f32 %v1010, %v1026
    %v1032 = vadd.f32 %v1011, %v1028
    %s1033 = sld [smem:[#allocation3 + $0x87]]
    %v1034 = vstv %s1033
    %v1035 = vmul.f32 %v1034, %v149
    %v1036 = vmul.f32 %v1034, %v145
    %v1037 = vadd.f32 %v270, %v1035
    %v1038 = vadd.f32 %v270, %v1036
    %s1039 = sld [smem:[#allocation3 + $0x88]]
    %v1040 = vstv %s1039
    %v1041 = vmul.f32 %v1040, %v149
    %v1042 = vmul.f32 %v1040, %v145
    %1045 = vrot.lane.b32.xlu0 %v1041, 127
    %v1046 = vpop.permute.xlu0 %1045
    %1047 = vrot.lane.b32.xlu0 %v1042, 127
    %v1048 = vpop.permute.xlu0 %1047
    %v1051 = vadd.f32 %v1037, %v1046
    %v1052 = vadd.f32 %v1038, %v1048
    %s1053 = sld [smem:[#allocation3 + $0x89]]
    %v1054 = vstv %s1053
    %v1055 = vmul.f32 %v1054, %v149
    %v1056 = vmul.f32 %v1054, %v145
    %1059 = vrot.lane.b32.xlu0 %v1055, 126
    %v1060 = vpop.permute.xlu0 %1059
    %1061 = vrot.lane.b32.xlu0 %v1056, 126
    %v1062 = vpop.permute.xlu0 %1061
    %v1065 = vadd.f32 %v1051, %v1060
    %v1066 = vadd.f32 %v1052, %v1062
    %s1067 = sld [smem:[#allocation3 + $0x8a]]
    %v1068 = vstv %s1067
    %v1069 = vmul.f32 %v1068, %v149
    %v1070 = vmul.f32 %v1068, %v145
    %v1071 = vmul.f32 %v1068, %v150
    %v1075 = vrot.slane %v1069, 1
    %v1076 = vrot.slane %v1070, 1
    %v1077 = vsel %vm313, %v1075, %v1076
    %v1078 = vrot.slane %v1071, 1
    %v1079 = vsel %vm313, %v1076, %v1078
    %v1082 = vadd.f32 %v1065, %v1077
    %v1083 = vadd.f32 %v1066, %v1079
    %s1084 = sld [smem:[#allocation3 + $0x8b]]
    %v1085 = vstv %s1084
    %v1086 = vmul.f32 %v1085, %v149
    %v1087 = vmul.f32 %v1085, %v145
    %v1088 = vmul.f32 %v1085, %v150
    %v1092 = vrot.slane %v1086, 1
    %v1093 = vrot.slane %v1087, 1
    %v1094 = vsel %vm313, %v1092, %v1093
    %v1095 = vrot.slane %v1088, 1
    %v1096 = vsel %vm313, %v1093, %v1095
    %1097 = vrot.lane.b32.xlu0 %v1094, 127
    %v1098 = vpop.permute.xlu0 %1097
    %1099 = vrot.lane.b32.xlu0 %v1096, 127
    %v1100 = vpop.permute.xlu0 %1099
    %v1103 = vadd.f32 %v1082, %v1098
    %v1104 = vadd.f32 %v1083, %v1100
    %s1105 = sld [smem:[#allocation3 + $0x8c]]
    %v1106 = vstv %s1105
    %v1107 = vmul.f32 %v1106, %v149
    %v1108 = vmul.f32 %v1106, %v145
    %v1109 = vmul.f32 %v1106, %v150
    %v1113 = vrot.slane %v1107, 1
    %v1114 = vrot.slane %v1108, 1
    %v1115 = vsel %vm313, %v1113, %v1114
    %v1116 = vrot.slane %v1109, 1
    %v1117 = vsel %vm313, %v1114, %v1116
    %1118 = vrot.lane.b32.xlu0 %v1115, 126
    %v1119 = vpop.permute.xlu0 %1118
    %1120 = vrot.lane.b32.xlu0 %v1117, 126
    %v1121 = vpop.permute.xlu0 %1120
    %v1124 = vadd.f32 %v1103, %v1119
    %v1125 = vadd.f32 %v1104, %v1121
    %s1126 = sld [smem:[#allocation3 + $0x8d]]
    %v1127 = vstv %s1126
    %v1128 = vmul.f32 %v1127, %v149
    %v1129 = vmul.f32 %v1127, %v145
    %v1130 = vmul.f32 %v1127, %v150
    %v1134 = vrot.slane %v1128, 2
    %v1135 = vrot.slane %v1129, 2
    %v1136 = vsel %vm373, %v1134, %v1135
    %v1137 = vrot.slane %v1130, 2
    %v1138 = vsel %vm373, %v1135, %v1137
    %v1141 = vadd.f32 %v1124, %v1136
    %v1142 = vadd.f32 %v1125, %v1138
    %s1143 = sld [smem:[#allocation3 + $0x8e]]
    %v1144 = vstv %s1143
    %v1145 = vmul.f32 %v1144, %v149
    %v1146 = vmul.f32 %v1144, %v145
    %v1147 = vmul.f32 %v1144, %v150
    %v1151 = vrot.slane %v1145, 2
    %v1152 = vrot.slane %v1146, 2
    %v1153 = vsel %vm373, %v1151, %v1152
    %v1154 = vrot.slane %v1147, 2
    %v1155 = vsel %vm373, %v1152, %v1154
    %1156 = vrot.lane.b32.xlu0 %v1153, 127
    %v1157 = vpop.permute.xlu0 %1156
    %1158 = vrot.lane.b32.xlu0 %v1155, 127
    %v1159 = vpop.permute.xlu0 %1158
    %v1162 = vadd.f32 %v1141, %v1157
    %v1163 = vadd.f32 %v1142, %v1159
    %s1164 = sld [smem:[#allocation3 + $0x8f]]
    %v1165 = vstv %s1164
    %v1166 = vmul.f32 %v1165, %v149
    %v1167 = vmul.f32 %v1165, %v145
    %v1168 = vmul.f32 %v1165, %v150
    %v1172 = vrot.slane %v1166, 2
    %v1173 = vrot.slane %v1167, 2
    %v1174 = vsel %vm373, %v1172, %v1173
    %v1175 = vrot.slane %v1168, 2
    %v1176 = vsel %vm373, %v1173, %v1175
    %1177 = vrot.lane.b32.xlu0 %v1174, 126
    %v1178 = vpop.permute.xlu0 %1177
    %1179 = vrot.lane.b32.xlu0 %v1176, 126
    %v1180 = vpop.permute.xlu0 %1179
    %v1183 = vadd.f32 %v1162, %v1178
    %v1184 = vadd.f32 %v1163, %v1180
    %s1185 = sld [smem:[#allocation3 + $0x9]]
    %v1186 = vstv %s1185
    %v1187 = vmul.f32 %v1186, %v203
    %v1188 = vmul.f32 %v1186, %v199
    %v1189 = vadd.f32 %v423, %v1187
    %v1190 = vadd.f32 %v424, %v1188
    %s1191 = sld [smem:[#allocation3 + $0xa]]
    %v1192 = vstv %s1191
    %v1193 = vmul.f32 %v1192, %v203
    %v1194 = vmul.f32 %v1192, %v199
    %1197 = vrot.lane.b32.xlu0 %v1193, 127
    %v1198 = vpop.permute.xlu0 %1197
    %1199 = vrot.lane.b32.xlu0 %v1194, 127
    %v1200 = vpop.permute.xlu0 %1199
    %v1203 = vadd.f32 %v1189, %v1198
    %v1204 = vadd.f32 %v1190, %v1200
    %s1205 = sld [smem:[#allocation3 + $0xb]]
    %v1206 = vstv %s1205
    %v1207 = vmul.f32 %v1206, %v203
    %v1208 = vmul.f32 %v1206, %v199
    %1211 = vrot.lane.b32.xlu0 %v1207, 126
    %v1212 = vpop.permute.xlu0 %1211
    %1213 = vrot.lane.b32.xlu0 %v1208, 126
    %v1214 = vpop.permute.xlu0 %1213
    %v1217 = vadd.f32 %v1203, %v1212
    %v1218 = vadd.f32 %v1204, %v1214
    %s1219 = sld [smem:[#allocation3 + $0xc]]
    %v1220 = vstv %s1219
    %v1221 = vmul.f32 %v1220, %v203
    %v1222 = vmul.f32 %v1220, %v199
    %v1223 = vmul.f32 %v1220, %v204
    %v1227 = vrot.slane %v1221, 1
    %v1228 = vrot.slane %v1222, 1
    %v1229 = vsel %vm313, %v1227, %v1228
    %v1230 = vrot.slane %v1223, 1
    %v1231 = vsel %vm313, %v1228, %v1230
    %v1234 = vadd.f32 %v1217, %v1229
    %v1235 = vadd.f32 %v1218, %v1231
    %s1236 = sld [smem:[#allocation3 + $0xd]]
    %v1237 = vstv %s1236
    %v1238 = vmul.f32 %v1237, %v203
    %v1239 = vmul.f32 %v1237, %v199
    %v1240 = vmul.f32 %v1237, %v204
    %v1244 = vrot.slane %v1238, 1
    %v1245 = vrot.slane %v1239, 1
    %v1246 = vsel %vm313, %v1244, %v1245
    %v1247 = vrot.slane %v1240, 1
    %v1248 = vsel %vm313, %v1245, %v1247
    %1249 = vrot.lane.b32.xlu0 %v1246, 127
    %v1250 = vpop.permute.xlu0 %1249
    %1251 = vrot.lane.b32.xlu0 %v1248, 127
    %v1252 = vpop.permute.xlu0 %1251
    %v1255 = vadd.f32 %v1234, %v1250
    %v1256 = vadd.f32 %v1235, %v1252
    %s1257 = sld [smem:[#allocation3 + $0xe]]
    %v1258 = vstv %s1257
    %v1259 = vmul.f32 %v1258, %v203
    %v1260 = vmul.f32 %v1258, %v199
    %v1261 = vmul.f32 %v1258, %v204
    %v1265 = vrot.slane %v1259, 1
    %v1266 = vrot.slane %v1260, 1
    %v1267 = vsel %vm313, %v1265, %v1266
    %v1268 = vrot.slane %v1261, 1
    %v1269 = vsel %vm313, %v1266, %v1268
    %1270 = vrot.lane.b32.xlu0 %v1267, 126
    %v1271 = vpop.permute.xlu0 %1270
    %1272 = vrot.lane.b32.xlu0 %v1269, 126
    %v1273 = vpop.permute.xlu0 %1272
    %v1276 = vadd.f32 %v1255, %v1271
    %v1277 = vadd.f32 %v1256, %v1273
    %s1278 = sld [smem:[#allocation3 + $0xf]]
    %v1279 = vstv %s1278
    %v1280 = vmul.f32 %v1279, %v203
    %v1281 = vmul.f32 %v1279, %v199
    %v1282 = vmul.f32 %v1279, %v204
    %v1286 = vrot.slane %v1280, 2
    %v1287 = vrot.slane %v1281, 2
    %v1288 = vsel %vm373, %v1286, %v1287
    %v1289 = vrot.slane %v1282, 2
    %v1290 = vsel %vm373, %v1287, %v1289
    %v1293 = vadd.f32 %v1276, %v1288
    %v1294 = vadd.f32 %v1277, %v1290
    %s1295 = sld [smem:[#allocation3 + $0x10]]
    %v1296 = vstv %s1295
    %v1297 = vmul.f32 %v1296, %v203
    %v1298 = vmul.f32 %v1296, %v199
    %v1299 = vmul.f32 %v1296, %v204
    %v1303 = vrot.slane %v1297, 2
    %v1304 = vrot.slane %v1298, 2
    %v1305 = vsel %vm373, %v1303, %v1304
    %v1306 = vrot.slane %v1299, 2
    %v1307 = vsel %vm373, %v1304, %v1306
    %1308 = vrot.lane.b32.xlu0 %v1305, 127
    %v1309 = vpop.permute.xlu0 %1308
    %1310 = vrot.lane.b32.xlu0 %v1307, 127
    %v1311 = vpop.permute.xlu0 %1310
    %v1314 = vadd.f32 %v1293, %v1309
    %v1315 = vadd.f32 %v1294, %v1311
    %s1316 = sld [smem:[#allocation3 + $0x11]]
    %v1317 = vstv %s1316
    %v1318 = vmul.f32 %v1317, %v203
    %v1319 = vmul.f32 %v1317, %v199
    %v1320 = vmul.f32 %v1317, %v204
    %v1324 = vrot.slane %v1318, 2
    %v1325 = vrot.slane %v1319, 2
    %v1326 = vsel %vm373, %v1324, %v1325
    %v1327 = vrot.slane %v1320, 2
    %v1328 = vsel %vm373, %v1325, %v1327
    %1329 = vrot.lane.b32.xlu0 %v1326, 126
    %v1330 = vpop.permute.xlu0 %1329
    %1331 = vrot.lane.b32.xlu0 %v1328, 126
    %v1332 = vpop.permute.xlu0 %1331
    %v1335 = vadd.f32 %v1314, %v1330
    %v1336 = vadd.f32 %v1315, %v1332
    %s1337 = sld [smem:[#allocation3 + $0x24]]
    %v1338 = vstv %s1337
    %v1339 = vmul.f32 %v1338, %v203
    %v1340 = vmul.f32 %v1338, %v199
    %v1341 = vadd.f32 %v575, %v1339
    %v1342 = vadd.f32 %v576, %v1340
    %s1343 = sld [smem:[#allocation3 + $0x25]]
    %v1344 = vstv %s1343
    %v1345 = vmul.f32 %v1344, %v203
    %v1346 = vmul.f32 %v1344, %v199
    %1349 = vrot.lane.b32.xlu0 %v1345, 127
    %v1350 = vpop.permute.xlu0 %1349
    %1351 = vrot.lane.b32.xlu0 %v1346, 127
    %v1352 = vpop.permute.xlu0 %1351
    %v1355 = vadd.f32 %v1341, %v1350
    %v1356 = vadd.f32 %v1342, %v1352
    %s1357 = sld [smem:[#allocation3 + $0x26]]
    %v1358 = vstv %s1357
    %v1359 = vmul.f32 %v1358, %v203
    %v1360 = vmul.f32 %v1358, %v199
    %1363 = vrot.lane.b32.xlu0 %v1359, 126
    %v1364 = vpop.permute.xlu0 %1363
    %1365 = vrot.lane.b32.xlu0 %v1360, 126
    %v1366 = vpop.permute.xlu0 %1365
    %v1369 = vadd.f32 %v1355, %v1364
    %v1370 = vadd.f32 %v1356, %v1366
    %s1371 = sld [smem:[#allocation3 + $0x27]]
    %v1372 = vstv %s1371
    %v1373 = vmul.f32 %v1372, %v203
    %v1374 = vmul.f32 %v1372, %v199
    %v1375 = vmul.f32 %v1372, %v204
    %v1379 = vrot.slane %v1373, 1
    %v1380 = vrot.slane %v1374, 1
    %v1381 = vsel %vm313, %v1379, %v1380
    %v1382 = vrot.slane %v1375, 1
    %v1383 = vsel %vm313, %v1380, %v1382
    %v1386 = vadd.f32 %v1369, %v1381
    %v1387 = vadd.f32 %v1370, %v1383
    %s1388 = sld [smem:[#allocation3 + $0x28]]
    %v1389 = vstv %s1388
    %v1390 = vmul.f32 %v1389, %v203
    %v1391 = vmul.f32 %v1389, %v199
    %v1392 = vmul.f32 %v1389, %v204
    %v1396 = vrot.slane %v1390, 1
    %v1397 = vrot.slane %v1391, 1
    %v1398 = vsel %vm313, %v1396, %v1397
    %v1399 = vrot.slane %v1392, 1
    %v1400 = vsel %vm313, %v1397, %v1399
    %1401 = vrot.lane.b32.xlu0 %v1398, 127
    %v1402 = vpop.permute.xlu0 %1401
    %1403 = vrot.lane.b32.xlu0 %v1400, 127
    %v1404 = vpop.permute.xlu0 %1403
    %v1407 = vadd.f32 %v1386, %v1402
    %v1408 = vadd.f32 %v1387, %v1404
    %s1409 = sld [smem:[#allocation3 + $0x29]]
    %v1410 = vstv %s1409
    %v1411 = vmul.f32 %v1410, %v203
    %v1412 = vmul.f32 %v1410, %v199
    %v1413 = vmul.f32 %v1410, %v204
    %v1417 = vrot.slane %v1411, 1
    %v1418 = vrot.slane %v1412, 1
    %v1419 = vsel %vm313, %v1417, %v1418
    %v1420 = vrot.slane %v1413, 1
    %v1421 = vsel %vm313, %v1418, %v1420
    %1422 = vrot.lane.b32.xlu0 %v1419, 126
    %v1423 = vpop.permute.xlu0 %1422
    %1424 = vrot.lane.b32.xlu0 %v1421, 126
    %v1425 = vpop.permute.xlu0 %1424
    %v1428 = vadd.f32 %v1407, %v1423
    %v1429 = vadd.f32 %v1408, %v1425
    %s1430 = sld [smem:[#allocation3 + $0x2a]]
    %v1431 = vstv %s1430
    %v1432 = vmul.f32 %v1431, %v203
    %v1433 = vmul.f32 %v1431, %v199
    %v1434 = vmul.f32 %v1431, %v204
    %v1438 = vrot.slane %v1432, 2
    %v1439 = vrot.slane %v1433, 2
    %v1440 = vsel %vm373, %v1438, %v1439
    %v1441 = vrot.slane %v1434, 2
    %v1442 = vsel %vm373, %v1439, %v1441
    %v1445 = vadd.f32 %v1428, %v1440
    %v1446 = vadd.f32 %v1429, %v1442
    %s1447 = sld [smem:[#allocation3 + $0x2b]]
    %v1448 = vstv %s1447
    %v1449 = vmul.f32 %v1448, %v203
    %v1450 = vmul.f32 %v1448, %v199
    %v1451 = vmul.f32 %v1448, %v204
    %v1455 = vrot.slane %v1449, 2
    %v1456 = vrot.slane %v1450, 2
    %v1457 = vsel %vm373, %v1455, %v1456
    %v1458 = vrot.slane %v1451, 2
    %v1459 = vsel %vm373, %v1456, %v1458
    %1460 = vrot.lane.b32.xlu0 %v1457, 127
    %v1461 = vpop.permute.xlu0 %1460
    %1462 = vrot.lane.b32.xlu0 %v1459, 127
    %v1463 = vpop.permute.xlu0 %1462
    %v1466 = vadd.f32 %v1445, %v1461
    %v1467 = vadd.f32 %v1446, %v1463
    %s1468 = sld [smem:[#allocation3 + $0x2c]]
    %v1469 = vstv %s1468
    %v1470 = vmul.f32 %v1469, %v203
    %v1471 = vmul.f32 %v1469, %v199
    %v1472 = vmul.f32 %v1469, %v204
    %v1476 = vrot.slane %v1470, 2
    %v1477 = vrot.slane %v1471, 2
    %v1478 = vsel %vm373, %v1476, %v1477
    %v1479 = vrot.slane %v1472, 2
    %v1480 = vsel %vm373, %v1477, %v1479
    %1481 = vrot.lane.b32.xlu0 %v1478, 126
    %v1482 = vpop.permute.xlu0 %1481
    %1483 = vrot.lane.b32.xlu0 %v1480, 126
    %v1484 = vpop.permute.xlu0 %1483
    %v1487 = vadd.f32 %v1466, %v1482
    %v1488 = vadd.f32 %v1467, %v1484
    %s1489 = sld [smem:[#allocation3 + $0x3f]]
    %v1490 = vstv %s1489
    %v1491 = vmul.f32 %v1490, %v203
    %v1492 = vmul.f32 %v1490, %v199
    %v1493 = vadd.f32 %v727, %v1491
    %v1494 = vadd.f32 %v728, %v1492
    %s1495 = sld [smem:[#allocation3 + $0x40]]
    %v1496 = vstv %s1495
    %v1497 = vmul.f32 %v1496, %v203
    %v1498 = vmul.f32 %v1496, %v199
    %1501 = vrot.lane.b32.xlu0 %v1497, 127
    %v1502 = vpop.permute.xlu0 %1501
    %1503 = vrot.lane.b32.xlu0 %v1498, 127
    %v1504 = vpop.permute.xlu0 %1503
    %v1507 = vadd.f32 %v1493, %v1502
    %v1508 = vadd.f32 %v1494, %v1504
    %s1509 = sld [smem:[#allocation3 + $0x41]]
    %v1510 = vstv %s1509
    %v1511 = vmul.f32 %v1510, %v203
    %v1512 = vmul.f32 %v1510, %v199
    %1515 = vrot.lane.b32.xlu0 %v1511, 126
    %v1516 = vpop.permute.xlu0 %1515
    %1517 = vrot.lane.b32.xlu0 %v1512, 126
    %v1518 = vpop.permute.xlu0 %1517
    %v1521 = vadd.f32 %v1507, %v1516
    %v1522 = vadd.f32 %v1508, %v1518
    %s1523 = sld [smem:[#allocation3 + $0x42]]
    %v1524 = vstv %s1523
    %v1525 = vmul.f32 %v1524, %v203
    %v1526 = vmul.f32 %v1524, %v199
    %v1527 = vmul.f32 %v1524, %v204
    %v1531 = vrot.slane %v1525, 1
    %v1532 = vrot.slane %v1526, 1
    %v1533 = vsel %vm313, %v1531, %v1532
    %v1534 = vrot.slane %v1527, 1
    %v1535 = vsel %vm313, %v1532, %v1534
    %v1538 = vadd.f32 %v1521, %v1533
    %v1539 = vadd.f32 %v1522, %v1535
    %s1540 = sld [smem:[#allocation3 + $0x43]]
    %v1541 = vstv %s1540
    %v1542 = vmul.f32 %v1541, %v203
    %v1543 = vmul.f32 %v1541, %v199
    %v1544 = vmul.f32 %v1541, %v204
    %v1548 = vrot.slane %v1542, 1
    %v1549 = vrot.slane %v1543, 1
    %v1550 = vsel %vm313, %v1548, %v1549
    %v1551 = vrot.slane %v1544, 1
    %v1552 = vsel %vm313, %v1549, %v1551
    %1553 = vrot.lane.b32.xlu0 %v1550, 127
    %v1554 = vpop.permute.xlu0 %1553
    %1555 = vrot.lane.b32.xlu0 %v1552, 127
    %v1556 = vpop.permute.xlu0 %1555
    %v1559 = vadd.f32 %v1538, %v1554
    %v1560 = vadd.f32 %v1539, %v1556
    %s1561 = sld [smem:[#allocation3 + $0x44]]
    %v1562 = vstv %s1561
    %v1563 = vmul.f32 %v1562, %v203
    %v1564 = vmul.f32 %v1562, %v199
    %v1565 = vmul.f32 %v1562, %v204
    %v1569 = vrot.slane %v1563, 1
    %v1570 = vrot.slane %v1564, 1
    %v1571 = vsel %vm313, %v1569, %v1570
    %v1572 = vrot.slane %v1565, 1
    %v1573 = vsel %vm313, %v1570, %v1572
    %1574 = vrot.lane.b32.xlu0 %v1571, 126
    %v1575 = vpop.permute.xlu0 %1574
    %1576 = vrot.lane.b32.xlu0 %v1573, 126
    %v1577 = vpop.permute.xlu0 %1576
    %v1580 = vadd.f32 %v1559, %v1575
    %v1581 = vadd.f32 %v1560, %v1577
    %s1582 = sld [smem:[#allocation3 + $0x45]]
    %v1583 = vstv %s1582
    %v1584 = vmul.f32 %v1583, %v203
    %v1585 = vmul.f32 %v1583, %v199
    %v1586 = vmul.f32 %v1583, %v204
    %v1590 = vrot.slane %v1584, 2
    %v1591 = vrot.slane %v1585, 2
    %v1592 = vsel %vm373, %v1590, %v1591
    %v1593 = vrot.slane %v1586, 2
    %v1594 = vsel %vm373, %v1591, %v1593
    %v1597 = vadd.f32 %v1580, %v1592
    %v1598 = vadd.f32 %v1581, %v1594
    %s1599 = sld [smem:[#allocation3 + $0x46]]
    %v1600 = vstv %s1599
    %v1601 = vmul.f32 %v1600, %v203
    %v1602 = vmul.f32 %v1600, %v199
    %v1603 = vmul.f32 %v1600, %v204
    %v1607 = vrot.slane %v1601, 2
    %v1608 = vrot.slane %v1602, 2
    %v1609 = vsel %vm373, %v1607, %v1608
    %v1610 = vrot.slane %v1603, 2
    %v1611 = vsel %vm373, %v1608, %v1610
    %1612 = vrot.lane.b32.xlu0 %v1609, 127
    %v1613 = vpop.permute.xlu0 %1612
    %1614 = vrot.lane.b32.xlu0 %v1611, 127
    %v1615 = vpop.permute.xlu0 %1614
    %v1618 = vadd.f32 %v1597, %v1613
    %v1619 = vadd.f32 %v1598, %v1615
    %s1620 = sld [smem:[#allocation3 + $0x47]]
    %v1621 = vstv %s1620
    %v1622 = vmul.f32 %v1621, %v203
    %v1623 = vmul.f32 %v1621, %v199
    %v1624 = vmul.f32 %v1621, %v204
    %v1628 = vrot.slane %v1622, 2
    %v1629 = vrot.slane %v1623, 2
    %v1630 = vsel %vm373, %v1628, %v1629
    %v1631 = vrot.slane %v1624, 2
    %v1632 = vsel %vm373, %v1629, %v1631
    %1633 = vrot.lane.b32.xlu0 %v1630, 126
    %v1634 = vpop.permute.xlu0 %1633
    %1635 = vrot.lane.b32.xlu0 %v1632, 126
    %v1636 = vpop.permute.xlu0 %1635
    %v1639 = vadd.f32 %v1618, %v1634
    %v1640 = vadd.f32 %v1619, %v1636
    %s1641 = sld [smem:[#allocation3 + $0x5a]]
    %v1642 = vstv %s1641
    %v1643 = vmul.f32 %v1642, %v203
    %v1644 = vmul.f32 %v1642, %v199
    %v1645 = vadd.f32 %v879, %v1643
    %v1646 = vadd.f32 %v880, %v1644
    %s1647 = sld [smem:[#allocation3 + $0x5b]]
    %v1648 = vstv %s1647
    %v1649 = vmul.f32 %v1648, %v203
    %v1650 = vmul.f32 %v1648, %v199
    %1653 = vrot.lane.b32.xlu0 %v1649, 127
    %v1654 = vpop.permute.xlu0 %1653
    %1655 = vrot.lane.b32.xlu0 %v1650, 127
    %v1656 = vpop.permute.xlu0 %1655
    %v1659 = vadd.f32 %v1645, %v1654
    %v1660 = vadd.f32 %v1646, %v1656
    %s1661 = sld [smem:[#allocation3 + $0x5c]]
    %v1662 = vstv %s1661
    %v1663 = vmul.f32 %v1662, %v203
    %v1664 = vmul.f32 %v1662, %v199
    %1667 = vrot.lane.b32.xlu0 %v1663, 126
    %v1668 = vpop.permute.xlu0 %1667
    %1669 = vrot.lane.b32.xlu0 %v1664, 126
    %v1670 = vpop.permute.xlu0 %1669
    %v1673 = vadd.f32 %v1659, %v1668
    %v1674 = vadd.f32 %v1660, %v1670
    %s1675 = sld [smem:[#allocation3 + $0x5d]]
    %v1676 = vstv %s1675
    %v1677 = vmul.f32 %v1676, %v203
    %v1678 = vmul.f32 %v1676, %v199
    %v1679 = vmul.f32 %v1676, %v204
    %v1683 = vrot.slane %v1677, 1
    %v1684 = vrot.slane %v1678, 1
    %v1685 = vsel %vm313, %v1683, %v1684
    %v1686 = vrot.slane %v1679, 1
    %v1687 = vsel %vm313, %v1684, %v1686
    %v1690 = vadd.f32 %v1673, %v1685
    %v1691 = vadd.f32 %v1674, %v1687
    %s1692 = sld [smem:[#allocation3 + $0x5e]]
    %v1693 = vstv %s1692
    %v1694 = vmul.f32 %v1693, %v203
    %v1695 = vmul.f32 %v1693, %v199
    %v1696 = vmul.f32 %v1693, %v204
    %v1700 = vrot.slane %v1694, 1
    %v1701 = vrot.slane %v1695, 1
    %v1702 = vsel %vm313, %v1700, %v1701
    %v1703 = vrot.slane %v1696, 1
    %v1704 = vsel %vm313, %v1701, %v1703
    %1705 = vrot.lane.b32.xlu0 %v1702, 127
    %v1706 = vpop.permute.xlu0 %1705
    %1707 = vrot.lane.b32.xlu0 %v1704, 127
    %v1708 = vpop.permute.xlu0 %1707
    %v1711 = vadd.f32 %v1690, %v1706
    %v1712 = vadd.f32 %v1691, %v1708
    %s1713 = sld [smem:[#allocation3 + $0x5f]]
    %v1714 = vstv %s1713
    %v1715 = vmul.f32 %v1714, %v203
    %v1716 = vmul.f32 %v1714, %v199
    %v1717 = vmul.f32 %v1714, %v204
    %v1721 = vrot.slane %v1715, 1
    %v1722 = vrot.slane %v1716, 1
    %v1723 = vsel %vm313, %v1721, %v1722
    %v1724 = vrot.slane %v1717, 1
    %v1725 = vsel %vm313, %v1722, %v1724
    %1726 = vrot.lane.b32.xlu0 %v1723, 126
    %v1727 = vpop.permute.xlu0 %1726
    %1728 = vrot.lane.b32.xlu0 %v1725, 126
    %v1729 = vpop.permute.xlu0 %1728
    %v1732 = vadd.f32 %v1711, %v1727
    %v1733 = vadd.f32 %v1712, %v1729
    %s1734 = sld [smem:[#allocation3 + $0x60]]
    %v1735 = vstv %s1734
    %v1736 = vmul.f32 %v1735, %v203
    %v1737 = vmul.f32 %v1735, %v199
    %v1738 = vmul.f32 %v1735, %v204
    %v1742 = vrot.slane %v1736, 2
    %v1743 = vrot.slane %v1737, 2
    %v1744 = vsel %vm373, %v1742, %v1743
    %v1745 = vrot.slane %v1738, 2
    %v1746 = vsel %vm373, %v1743, %v1745
    %v1749 = vadd.f32 %v1732, %v1744
    %v1750 = vadd.f32 %v1733, %v1746
    %s1751 = sld [smem:[#allocation3 + $0x61]]
    %v1752 = vstv %s1751
    %v1753 = vmul.f32 %v1752, %v203
    %v1754 = vmul.f32 %v1752, %v199
    %v1755 = vmul.f32 %v1752, %v204
    %v1759 = vrot.slane %v1753, 2
    %v1760 = vrot.slane %v1754, 2
    %v1761 = vsel %vm373, %v1759, %v1760
    %v1762 = vrot.slane %v1755, 2
    %v1763 = vsel %vm373, %v1760, %v1762
    %1764 = vrot.lane.b32.xlu0 %v1761, 127
    %v1765 = vpop.permute.xlu0 %1764
    %1766 = vrot.lane.b32.xlu0 %v1763, 127
    %v1767 = vpop.permute.xlu0 %1766
    %v1770 = vadd.f32 %v1749, %v1765
    %v1771 = vadd.f32 %v1750, %v1767
    %s1772 = sld [smem:[#allocation3 + $0x62]]
    %v1773 = vstv %s1772
    %v1774 = vmul.f32 %v1773, %v203
    %v1775 = vmul.f32 %v1773, %v199
    %v1776 = vmul.f32 %v1773, %v204
    %v1780 = vrot.slane %v1774, 2
    %v1781 = vrot.slane %v1775, 2
    %v1782 = vsel %vm373, %v1780, %v1781
    %v1783 = vrot.slane %v1776, 2
    %v1784 = vsel %vm373, %v1781, %v1783
    %1785 = vrot.lane.b32.xlu0 %v1782, 126
    %v1786 = vpop.permute.xlu0 %1785
    %1787 = vrot.lane.b32.xlu0 %v1784, 126
    %v1788 = vpop.permute.xlu0 %1787
    %v1791 = vadd.f32 %v1770, %v1786
    %v1792 = vadd.f32 %v1771, %v1788
    %s1793 = sld [smem:[#allocation3 + $0x75]]
    %v1794 = vstv %s1793
    %v1795 = vmul.f32 %v1794, %v203
    %v1796 = vmul.f32 %v1794, %v199
    %v1797 = vadd.f32 %v1031, %v1795
    %v1798 = vadd.f32 %v1032, %v1796
    %s1799 = sld [smem:[#allocation3 + $0x76]]
    %v1800 = vstv %s1799
    %v1801 = vmul.f32 %v1800, %v203
    %v1802 = vmul.f32 %v1800, %v199
    %1805 = vrot.lane.b32.xlu0 %v1801, 127
    %v1806 = vpop.permute.xlu0 %1805
    %1807 = vrot.lane.b32.xlu0 %v1802, 127
    %v1808 = vpop.permute.xlu0 %1807
    %v1811 = vadd.f32 %v1797, %v1806
    %v1812 = vadd.f32 %v1798, %v1808
    %s1813 = sld [smem:[#allocation3 + $0x77]]
    %v1814 = vstv %s1813
    %v1815 = vmul.f32 %v1814, %v203
    %v1816 = vmul.f32 %v1814, %v199
    %1819 = vrot.lane.b32.xlu0 %v1815, 126
    %v1820 = vpop.permute.xlu0 %1819
    %1821 = vrot.lane.b32.xlu0 %v1816, 126
    %v1822 = vpop.permute.xlu0 %1821
    %v1825 = vadd.f32 %v1811, %v1820
    %v1826 = vadd.f32 %v1812, %v1822
    %s1827 = sld [smem:[#allocation3 + $0x78]]
    %v1828 = vstv %s1827
    %v1829 = vmul.f32 %v1828, %v203
    %v1830 = vmul.f32 %v1828, %v199
    %v1831 = vmul.f32 %v1828, %v204
    %v1835 = vrot.slane %v1829, 1
    %v1836 = vrot.slane %v1830, 1
    %v1837 = vsel %vm313, %v1835, %v1836
    %v1838 = vrot.slane %v1831, 1
    %v1839 = vsel %vm313, %v1836, %v1838
    %v1842 = vadd.f32 %v1825, %v1837
    %v1843 = vadd.f32 %v1826, %v1839
    %s1844 = sld [smem:[#allocation3 + $0x79]]
    %v1845 = vstv %s1844
    %v1846 = vmul.f32 %v1845, %v203
    %v1847 = vmul.f32 %v1845, %v199
    %v1848 = vmul.f32 %v1845, %v204
    %v1852 = vrot.slane %v1846, 1
    %v1853 = vrot.slane %v1847, 1
    %v1854 = vsel %vm313, %v1852, %v1853
    %v1855 = vrot.slane %v1848, 1
    %v1856 = vsel %vm313, %v1853, %v1855
    %1857 = vrot.lane.b32.xlu0 %v1854, 127
    %v1858 = vpop.permute.xlu0 %1857
    %1859 = vrot.lane.b32.xlu0 %v1856, 127
    %v1860 = vpop.permute.xlu0 %1859
    %v1863 = vadd.f32 %v1842, %v1858
    %v1864 = vadd.f32 %v1843, %v1860
    %s1865 = sld [smem:[#allocation3 + $0x7a]]
    %v1866 = vstv %s1865
    %v1867 = vmul.f32 %v1866, %v203
    %v1868 = vmul.f32 %v1866, %v199
    %v1869 = vmul.f32 %v1866, %v204
    %v1873 = vrot.slane %v1867, 1
    %v1874 = vrot.slane %v1868, 1
    %v1875 = vsel %vm313, %v1873, %v1874
    %v1876 = vrot.slane %v1869, 1
    %v1877 = vsel %vm313, %v1874, %v1876
    %1878 = vrot.lane.b32.xlu0 %v1875, 126
    %v1879 = vpop.permute.xlu0 %1878
    %1880 = vrot.lane.b32.xlu0 %v1877, 126
    %v1881 = vpop.permute.xlu0 %1880
    %v1884 = vadd.f32 %v1863, %v1879
    %v1885 = vadd.f32 %v1864, %v1881
    %s1886 = sld [smem:[#allocation3 + $0x7b]]
    %v1887 = vstv %s1886
    %v1888 = vmul.f32 %v1887, %v203
    %v1889 = vmul.f32 %v1887, %v199
    %v1890 = vmul.f32 %v1887, %v204
    %v1894 = vrot.slane %v1888, 2
    %v1895 = vrot.slane %v1889, 2
    %v1896 = vsel %vm373, %v1894, %v1895
    %v1897 = vrot.slane %v1890, 2
    %v1898 = vsel %vm373, %v1895, %v1897
    %v1901 = vadd.f32 %v1884, %v1896
    %v1902 = vadd.f32 %v1885, %v1898
    %s1903 = sld [smem:[#allocation3 + $0x7c]]
    %v1904 = vstv %s1903
    %v1905 = vmul.f32 %v1904, %v203
    %v1906 = vmul.f32 %v1904, %v199
    %v1907 = vmul.f32 %v1904, %v204
    %v1911 = vrot.slane %v1905, 2
    %v1912 = vrot.slane %v1906, 2
    %v1913 = vsel %vm373, %v1911, %v1912
    %v1914 = vrot.slane %v1907, 2
    %v1915 = vsel %vm373, %v1912, %v1914
    %1916 = vrot.lane.b32.xlu0 %v1913, 127
    %v1917 = vpop.permute.xlu0 %1916
    %1918 = vrot.lane.b32.xlu0 %v1915, 127
    %v1919 = vpop.permute.xlu0 %1918
    %v1922 = vadd.f32 %v1901, %v1917
    %v1923 = vadd.f32 %v1902, %v1919
    %s1924 = sld [smem:[#allocation3 + $0x7d]]
    %v1925 = vstv %s1924
    %v1926 = vmul.f32 %v1925, %v203
    %v1927 = vmul.f32 %v1925, %v199
    %v1928 = vmul.f32 %v1925, %v204
    %v1932 = vrot.slane %v1926, 2
    %v1933 = vrot.slane %v1927, 2
    %v1934 = vsel %vm373, %v1932, %v1933
    %v1935 = vrot.slane %v1928, 2
    %v1936 = vsel %vm373, %v1933, %v1935
    %1937 = vrot.lane.b32.xlu0 %v1934, 126
    %v1938 = vpop.permute.xlu0 %1937
    %1939 = vrot.lane.b32.xlu0 %v1936, 126
    %v1940 = vpop.permute.xlu0 %1939
    %v1943 = vadd.f32 %v1922, %v1938
    %v1944 = vadd.f32 %v1923, %v1940
    %s1945 = sld [smem:[#allocation3 + $0x90]]
    %v1946 = vstv %s1945
    %v1947 = vmul.f32 %v1946, %v203
    %v1948 = vmul.f32 %v1946, %v199
    %v1949 = vadd.f32 %v1183, %v1947
    %v1950 = vadd.f32 %v1184, %v1948
    %s1951 = sld [smem:[#allocation3 + $0x91]]
    %v1952 = vstv %s1951
    %v1953 = vmul.f32 %v1952, %v203
    %v1954 = vmul.f32 %v1952, %v199
    %1957 = vrot.lane.b32.xlu0 %v1953, 127
    %v1958 = vpop.permute.xlu0 %1957
    %1959 = vrot.lane.b32.xlu0 %v1954, 127
    %v1960 = vpop.permute.xlu0 %1959
    %v1963 = vadd.f32 %v1949, %v1958
    %v1964 = vadd.f32 %v1950, %v1960
    %s1965 = sld [smem:[#allocation3 + $0x92]]
    %v1966 = vstv %s1965
    %v1967 = vmul.f32 %v1966, %v203
    %v1968 = vmul.f32 %v1966, %v199
    %1971 = vrot.lane.b32.xlu0 %v1967, 126
    %v1972 = vpop.permute.xlu0 %1971
    %1973 = vrot.lane.b32.xlu0 %v1968, 126
    %v1974 = vpop.permute.xlu0 %1973
    %v1977 = vadd.f32 %v1963, %v1972
    %v1978 = vadd.f32 %v1964, %v1974
    %s1979 = sld [smem:[#allocation3 + $0x93]]
    %v1980 = vstv %s1979
    %v1981 = vmul.f32 %v1980, %v203
    %v1982 = vmul.f32 %v1980, %v199
    %v1983 = vmul.f32 %v1980, %v204
    %v1987 = vrot.slane %v1981, 1
    %v1988 = vrot.slane %v1982, 1
    %v1989 = vsel %vm313, %v1987, %v1988
    %v1990 = vrot.slane %v1983, 1
    %v1991 = vsel %vm313, %v1988, %v1990
    %v1994 = vadd.f32 %v1977, %v1989
    %v1995 = vadd.f32 %v1978, %v1991
    %s1996 = sld [smem:[#allocation3 + $0x94]]
    %v1997 = vstv %s1996
    %v1998 = vmul.f32 %v1997, %v203
    %v1999 = vmul.f32 %v1997, %v199
    %v2000 = vmul.f32 %v1997, %v204
    %v2004 = vrot.slane %v1998, 1
    %v2005 = vrot.slane %v1999, 1
    %v2006 = vsel %vm313, %v2004, %v2005
    %v2007 = vrot.slane %v2000, 1
    %v2008 = vsel %vm313, %v2005, %v2007
    %2009 = vrot.lane.b32.xlu0 %v2006, 127
    %v2010 = vpop.permute.xlu0 %2009
    %2011 = vrot.lane.b32.xlu0 %v2008, 127
    %v2012 = vpop.permute.xlu0 %2011
    %v2015 = vadd.f32 %v1994, %v2010
    %v2016 = vadd.f32 %v1995, %v2012
    %s2017 = sld [smem:[#allocation3 + $0x95]]
    %v2018 = vstv %s2017
    %v2019 = vmul.f32 %v2018, %v203
    %v2020 = vmul.f32 %v2018, %v199
    %v2021 = vmul.f32 %v2018, %v204
    %v2025 = vrot.slane %v2019, 1
    %v2026 = vrot.slane %v2020, 1
    %v2027 = vsel %vm313, %v2025, %v2026
    %v2028 = vrot.slane %v2021, 1
    %v2029 = vsel %vm313, %v2026, %v2028
    %2030 = vrot.lane.b32.xlu0 %v2027, 126
    %v2031 = vpop.permute.xlu0 %2030
    %2032 = vrot.lane.b32.xlu0 %v2029, 126
    %v2033 = vpop.permute.xlu0 %2032
    %v2036 = vadd.f32 %v2015, %v2031
    %v2037 = vadd.f32 %v2016, %v2033
    %s2038 = sld [smem:[#allocation3 + $0x96]]
    %v2039 = vstv %s2038
    %v2040 = vmul.f32 %v2039, %v203
    %v2041 = vmul.f32 %v2039, %v199
    %v2042 = vmul.f32 %v2039, %v204
    %v2046 = vrot.slane %v2040, 2
    %v2047 = vrot.slane %v2041, 2
    %v2048 = vsel %vm373, %v2046, %v2047
    %v2049 = vrot.slane %v2042, 2
    %v2050 = vsel %vm373, %v2047, %v2049
    %v2053 = vadd.f32 %v2036, %v2048
    %v2054 = vadd.f32 %v2037, %v2050
    %s2055 = sld [smem:[#allocation3 + $0x97]]
    %v2056 = vstv %s2055
    %v2057 = vmul.f32 %v2056, %v203
    %v2058 = vmul.f32 %v2056, %v199
    %v2059 = vmul.f32 %v2056, %v204
    %v2063 = vrot.slane %v2057, 2
    %v2064 = vrot.slane %v2058, 2
    %v2065 = vsel %vm373, %v2063, %v2064
    %v2066 = vrot.slane %v2059, 2
    %v2067 = vsel %vm373, %v2064, %v2066
    %2068 = vrot.lane.b32.xlu0 %v2065, 127
    %v2069 = vpop.permute.xlu0 %2068
    %2070 = vrot.lane.b32.xlu0 %v2067, 127
    %v2071 = vpop.permute.xlu0 %2070
    %v2074 = vadd.f32 %v2053, %v2069
    %v2075 = vadd.f32 %v2054, %v2071
    %s2076 = sld [smem:[#allocation3 + $0x98]]
    %v2077 = vstv %s2076
    %v2078 = vmul.f32 %v2077, %v203
    %v2079 = vmul.f32 %v2077, %v199
    %v2080 = vmul.f32 %v2077, %v204
    %v2084 = vrot.slane %v2078, 2
    %v2085 = vrot.slane %v2079, 2
    %v2086 = vsel %vm373, %v2084, %v2085
    %v2087 = vrot.slane %v2080, 2
    %v2088 = vsel %vm373, %v2085, %v2087
    %2089 = vrot.lane.b32.xlu0 %v2086, 126
    %v2090 = vpop.permute.xlu0 %2089
    %2091 = vrot.lane.b32.xlu0 %v2088, 126
    %v2092 = vpop.permute.xlu0 %2091
    %v2095 = vadd.f32 %v2074, %v2090
    %v2096 = vadd.f32 %v2075, %v2092
    %s2097 = sld [smem:[#allocation3 + $0x12]]
    %v2098 = vstv %s2097
    %v2099 = vmul.f32 %v2098, %v257
    %v2100 = vmul.f32 %v2098, %v253
    %v2101 = vadd.f32 %v1335, %v2099
    %v2102 = vadd.f32 %v1336, %v2100
    %s2103 = sld [smem:[#allocation3 + $0x13]]
    %v2104 = vstv %s2103
    %v2105 = vmul.f32 %v2104, %v257
    %v2106 = vmul.f32 %v2104, %v253
    %2109 = vrot.lane.b32.xlu0 %v2105, 127
    %v2110 = vpop.permute.xlu0 %2109
    %2111 = vrot.lane.b32.xlu0 %v2106, 127
    %v2112 = vpop.permute.xlu0 %2111
    %v2115 = vadd.f32 %v2101, %v2110
    %v2116 = vadd.f32 %v2102, %v2112
    %s2117 = sld [smem:[#allocation3 + $0x14]]
    %v2118 = vstv %s2117
    %v2119 = vmul.f32 %v2118, %v257
    %v2120 = vmul.f32 %v2118, %v253
    %2123 = vrot.lane.b32.xlu0 %v2119, 126
    %v2124 = vpop.permute.xlu0 %2123
    %2125 = vrot.lane.b32.xlu0 %v2120, 126
    %v2126 = vpop.permute.xlu0 %2125
    %v2129 = vadd.f32 %v2115, %v2124
    %v2130 = vadd.f32 %v2116, %v2126
    %s2131 = sld [smem:[#allocation3 + $0x15]]
    %v2132 = vstv %s2131
    %v2133 = vmul.f32 %v2132, %v257
    %v2134 = vmul.f32 %v2132, %v253
    %v2135 = vmul.f32 %v2132, %v258
    %v2139 = vrot.slane %v2133, 1
    %v2140 = vrot.slane %v2134, 1
    %v2141 = vsel %vm313, %v2139, %v2140
    %v2142 = vrot.slane %v2135, 1
    %v2143 = vsel %vm313, %v2140, %v2142
    %v2146 = vadd.f32 %v2129, %v2141
    %v2147 = vadd.f32 %v2130, %v2143
    %s2148 = sld [smem:[#allocation3 + $0x16]]
    %v2149 = vstv %s2148
    %v2150 = vmul.f32 %v2149, %v257
    %v2151 = vmul.f32 %v2149, %v253
    %v2152 = vmul.f32 %v2149, %v258
    %v2156 = vrot.slane %v2150, 1
    %v2157 = vrot.slane %v2151, 1
    %v2158 = vsel %vm313, %v2156, %v2157
    %v2159 = vrot.slane %v2152, 1
    %v2160 = vsel %vm313, %v2157, %v2159
    %2161 = vrot.lane.b32.xlu0 %v2158, 127
    %v2162 = vpop.permute.xlu0 %2161
    %2163 = vrot.lane.b32.xlu0 %v2160, 127
    %v2164 = vpop.permute.xlu0 %2163
    %v2167 = vadd.f32 %v2146, %v2162
    %v2168 = vadd.f32 %v2147, %v2164
    %s2169 = sld [smem:[#allocation3 + $0x17]]
    %v2170 = vstv %s2169
    %v2171 = vmul.f32 %v2170, %v257
    %v2172 = vmul.f32 %v2170, %v253
    %v2173 = vmul.f32 %v2170, %v258
    %v2177 = vrot.slane %v2171, 1
    %v2178 = vrot.slane %v2172, 1
    %v2179 = vsel %vm313, %v2177, %v2178
    %v2180 = vrot.slane %v2173, 1
    %v2181 = vsel %vm313, %v2178, %v2180
    %2182 = vrot.lane.b32.xlu0 %v2179, 126
    %v2183 = vpop.permute.xlu0 %2182
    %2184 = vrot.lane.b32.xlu0 %v2181, 126
    %v2185 = vpop.permute.xlu0 %2184
    %v2188 = vadd.f32 %v2167, %v2183
    %v2189 = vadd.f32 %v2168, %v2185
    %s2190 = sld [smem:[#allocation3 + $0x18]]
    %v2191 = vstv %s2190
    %v2192 = vmul.f32 %v2191, %v257
    %v2193 = vmul.f32 %v2191, %v253
    %v2194 = vmul.f32 %v2191, %v258
    %v2198 = vrot.slane %v2192, 2
    %v2199 = vrot.slane %v2193, 2
    %v2200 = vsel %vm373, %v2198, %v2199
    %v2201 = vrot.slane %v2194, 2
    %v2202 = vsel %vm373, %v2199, %v2201
    %v2205 = vadd.f32 %v2188, %v2200
    %v2206 = vadd.f32 %v2189, %v2202
    %s2207 = sld [smem:[#allocation3 + $0x19]]
    %v2208 = vstv %s2207
    %v2209 = vmul.f32 %v2208, %v257
    %v2210 = vmul.f32 %v2208, %v253
    %v2211 = vmul.f32 %v2208, %v258
    %v2215 = vrot.slane %v2209, 2
    %v2216 = vrot.slane %v2210, 2
    %v2217 = vsel %vm373, %v2215, %v2216
    %v2218 = vrot.slane %v2211, 2
    %v2219 = vsel %vm373, %v2216, %v2218
    %2220 = vrot.lane.b32.xlu0 %v2217, 127
    %v2221 = vpop.permute.xlu0 %2220
    %2222 = vrot.lane.b32.xlu0 %v2219, 127
    %v2223 = vpop.permute.xlu0 %2222
    %v2226 = vadd.f32 %v2205, %v2221
    %v2227 = vadd.f32 %v2206, %v2223
    %s2228 = sld [smem:[#allocation3 + $0x1a]]
    %v2229 = vstv %s2228
    %v2230 = vmul.f32 %v2229, %v257
    %v2231 = vmul.f32 %v2229, %v253
    %v2232 = vmul.f32 %v2229, %v258
    %v2236 = vrot.slane %v2230, 2
    %v2237 = vrot.slane %v2231, 2
    %v2238 = vsel %vm373, %v2236, %v2237
    %v2239 = vrot.slane %v2232, 2
    %v2240 = vsel %vm373, %v2237, %v2239
    %2241 = vrot.lane.b32.xlu0 %v2238, 126
    %v2242 = vpop.permute.xlu0 %2241
    %2243 = vrot.lane.b32.xlu0 %v2240, 126
    %v2244 = vpop.permute.xlu0 %2243
    %v2247 = vadd.f32 %v2226, %v2242
    %v2248 = vadd.f32 %v2227, %v2244
    %s2249 = sld [smem:[#allocation3 + $0x2d]]
    %v2250 = vstv %s2249
    %v2251 = vmul.f32 %v2250, %v257
    %v2252 = vmul.f32 %v2250, %v253
    %v2253 = vadd.f32 %v1487, %v2251
    %v2254 = vadd.f32 %v1488, %v2252
    %s2255 = sld [smem:[#allocation3 + $0x2e]]
    %v2256 = vstv %s2255
    %v2257 = vmul.f32 %v2256, %v257
    %v2258 = vmul.f32 %v2256, %v253
    %2261 = vrot.lane.b32.xlu0 %v2257, 127
    %v2262 = vpop.permute.xlu0 %2261
    %2263 = vrot.lane.b32.xlu0 %v2258, 127
    %v2264 = vpop.permute.xlu0 %2263
    %v2267 = vadd.f32 %v2253, %v2262
    %v2268 = vadd.f32 %v2254, %v2264
    %s2269 = sld [smem:[#allocation3 + $0x2f]]
    %v2270 = vstv %s2269
    %v2271 = vmul.f32 %v2270, %v257
    %v2272 = vmul.f32 %v2270, %v253
    %2275 = vrot.lane.b32.xlu0 %v2271, 126
    %v2276 = vpop.permute.xlu0 %2275
    %2277 = vrot.lane.b32.xlu0 %v2272, 126
    %v2278 = vpop.permute.xlu0 %2277
    %v2281 = vadd.f32 %v2267, %v2276
    %v2282 = vadd.f32 %v2268, %v2278
    %s2283 = sld [smem:[#allocation3 + $0x30]]
    %v2284 = vstv %s2283
    %v2285 = vmul.f32 %v2284, %v257
    %v2286 = vmul.f32 %v2284, %v253
    %v2287 = vmul.f32 %v2284, %v258
    %v2291 = vrot.slane %v2285, 1
    %v2292 = vrot.slane %v2286, 1
    %v2293 = vsel %vm313, %v2291, %v2292
    %v2294 = vrot.slane %v2287, 1
    %v2295 = vsel %vm313, %v2292, %v2294
    %v2298 = vadd.f32 %v2281, %v2293
    %v2299 = vadd.f32 %v2282, %v2295
    %s2300 = sld [smem:[#allocation3 + $0x31]]
    %v2301 = vstv %s2300
    %v2302 = vmul.f32 %v2301, %v257
    %v2303 = vmul.f32 %v2301, %v253
    %v2304 = vmul.f32 %v2301, %v258
    %v2308 = vrot.slane %v2302, 1
    %v2309 = vrot.slane %v2303, 1
    %v2310 = vsel %vm313, %v2308, %v2309
    %v2311 = vrot.slane %v2304, 1
    %v2312 = vsel %vm313, %v2309, %v2311
    %2313 = vrot.lane.b32.xlu0 %v2310, 127
    %v2314 = vpop.permute.xlu0 %2313
    %2315 = vrot.lane.b32.xlu0 %v2312, 127
    %v2316 = vpop.permute.xlu0 %2315
    %v2319 = vadd.f32 %v2298, %v2314
    %v2320 = vadd.f32 %v2299, %v2316
    %s2321 = sld [smem:[#allocation3 + $0x32]]
    %v2322 = vstv %s2321
    %v2323 = vmul.f32 %v2322, %v257
    %v2324 = vmul.f32 %v2322, %v253
    %v2325 = vmul.f32 %v2322, %v258
    %v2329 = vrot.slane %v2323, 1
    %v2330 = vrot.slane %v2324, 1
    %v2331 = vsel %vm313, %v2329, %v2330
    %v2332 = vrot.slane %v2325, 1
    %v2333 = vsel %vm313, %v2330, %v2332
    %2334 = vrot.lane.b32.xlu0 %v2331, 126
    %v2335 = vpop.permute.xlu0 %2334
    %2336 = vrot.lane.b32.xlu0 %v2333, 126
    %v2337 = vpop.permute.xlu0 %2336
    %v2340 = vadd.f32 %v2319, %v2335
    %v2341 = vadd.f32 %v2320, %v2337
    %s2342 = sld [smem:[#allocation3 + $0x33]]
    %v2343 = vstv %s2342
    %v2344 = vmul.f32 %v2343, %v257
    %v2345 = vmul.f32 %v2343, %v253
    %v2346 = vmul.f32 %v2343, %v258
    %v2350 = vrot.slane %v2344, 2
    %v2351 = vrot.slane %v2345, 2
    %v2352 = vsel %vm373, %v2350, %v2351
    %v2353 = vrot.slane %v2346, 2
    %v2354 = vsel %vm373, %v2351, %v2353
    %v2357 = vadd.f32 %v2340, %v2352
    %v2358 = vadd.f32 %v2341, %v2354
    %s2359 = sld [smem:[#allocation3 + $0x34]]
    %v2360 = vstv %s2359
    %v2361 = vmul.f32 %v2360, %v257
    %v2362 = vmul.f32 %v2360, %v253
    %v2363 = vmul.f32 %v2360, %v258
    %v2367 = vrot.slane %v2361, 2
    %v2368 = vrot.slane %v2362, 2
    %v2369 = vsel %vm373, %v2367, %v2368
    %v2370 = vrot.slane %v2363, 2
    %v2371 = vsel %vm373, %v2368, %v2370
    %2372 = vrot.lane.b32.xlu0 %v2369, 127
    %v2373 = vpop.permute.xlu0 %2372
    %2374 = vrot.lane.b32.xlu0 %v2371, 127
    %v2375 = vpop.permute.xlu0 %2374
    %v2378 = vadd.f32 %v2357, %v2373
    %v2379 = vadd.f32 %v2358, %v2375
    %s2380 = sld [smem:[#allocation3 + $0x35]]
    %v2381 = vstv %s2380
    %v2382 = vmul.f32 %v2381, %v257
    %v2383 = vmul.f32 %v2381, %v253
    %v2384 = vmul.f32 %v2381, %v258
    %v2388 = vrot.slane %v2382, 2
    %v2389 = vrot.slane %v2383, 2
    %v2390 = vsel %vm373, %v2388, %v2389
    %v2391 = vrot.slane %v2384, 2
    %v2392 = vsel %vm373, %v2389, %v2391
    %2393 = vrot.lane.b32.xlu0 %v2390, 126
    %v2394 = vpop.permute.xlu0 %2393
    %2395 = vrot.lane.b32.xlu0 %v2392, 126
    %v2396 = vpop.permute.xlu0 %2395
    %v2399 = vadd.f32 %v2378, %v2394
    %v2400 = vadd.f32 %v2379, %v2396
    %s2401 = sld [smem:[#allocation3 + $0x48]]
    %v2402 = vstv %s2401
    %v2403 = vmul.f32 %v2402, %v257
    %v2404 = vmul.f32 %v2402, %v253
    %v2405 = vadd.f32 %v1639, %v2403
    %v2406 = vadd.f32 %v1640, %v2404
    %s2407 = sld [smem:[#allocation3 + $0x49]]
    %v2408 = vstv %s2407
    %v2409 = vmul.f32 %v2408, %v257
    %v2410 = vmul.f32 %v2408, %v253
    %2413 = vrot.lane.b32.xlu0 %v2409, 127
    %v2414 = vpop.permute.xlu0 %2413
    %2415 = vrot.lane.b32.xlu0 %v2410, 127
    %v2416 = vpop.permute.xlu0 %2415
    %v2419 = vadd.f32 %v2405, %v2414
    %v2420 = vadd.f32 %v2406, %v2416
    %s2421 = sld [smem:[#allocation3 + $0x4a]]
    %v2422 = vstv %s2421
    %v2423 = vmul.f32 %v2422, %v257
    %v2424 = vmul.f32 %v2422, %v253
    %2427 = vrot.lane.b32.xlu0 %v2423, 126
    %v2428 = vpop.permute.xlu0 %2427
    %2429 = vrot.lane.b32.xlu0 %v2424, 126
    %v2430 = vpop.permute.xlu0 %2429
    %v2433 = vadd.f32 %v2419, %v2428
    %v2434 = vadd.f32 %v2420, %v2430
    %s2435 = sld [smem:[#allocation3 + $0x4b]]
    %v2436 = vstv %s2435
    %v2437 = vmul.f32 %v2436, %v257
    %v2438 = vmul.f32 %v2436, %v253
    %v2439 = vmul.f32 %v2436, %v258
    %v2443 = vrot.slane %v2437, 1
    %v2444 = vrot.slane %v2438, 1
    %v2445 = vsel %vm313, %v2443, %v2444
    %v2446 = vrot.slane %v2439, 1
    %v2447 = vsel %vm313, %v2444, %v2446
    %v2450 = vadd.f32 %v2433, %v2445
    %v2451 = vadd.f32 %v2434, %v2447
    %s2452 = sld [smem:[#allocation3 + $0x4c]]
    %v2453 = vstv %s2452
    %v2454 = vmul.f32 %v2453, %v257
    %v2455 = vmul.f32 %v2453, %v253
    %v2456 = vmul.f32 %v2453, %v258
    %v2460 = vrot.slane %v2454, 1
    %v2461 = vrot.slane %v2455, 1
    %v2462 = vsel %vm313, %v2460, %v2461
    %v2463 = vrot.slane %v2456, 1
    %v2464 = vsel %vm313, %v2461, %v2463
    %2465 = vrot.lane.b32.xlu0 %v2462, 127
    %v2466 = vpop.permute.xlu0 %2465
    %2467 = vrot.lane.b32.xlu0 %v2464, 127
    %v2468 = vpop.permute.xlu0 %2467
    %v2471 = vadd.f32 %v2450, %v2466
    %v2472 = vadd.f32 %v2451, %v2468
    %s2473 = sld [smem:[#allocation3 + $0x4d]]
    %v2474 = vstv %s2473
    %v2475 = vmul.f32 %v2474, %v257
    %v2476 = vmul.f32 %v2474, %v253
    %v2477 = vmul.f32 %v2474, %v258
    %v2481 = vrot.slane %v2475, 1
    %v2482 = vrot.slane %v2476, 1
    %v2483 = vsel %vm313, %v2481, %v2482
    %v2484 = vrot.slane %v2477, 1
    %v2485 = vsel %vm313, %v2482, %v2484
    %2486 = vrot.lane.b32.xlu0 %v2483, 126
    %v2487 = vpop.permute.xlu0 %2486
    %2488 = vrot.lane.b32.xlu0 %v2485, 126
    %v2489 = vpop.permute.xlu0 %2488
    %v2492 = vadd.f32 %v2471, %v2487
    %v2493 = vadd.f32 %v2472, %v2489
    %s2494 = sld [smem:[#allocation3 + $0x4e]]
    %v2495 = vstv %s2494
    %v2496 = vmul.f32 %v2495, %v257
    %v2497 = vmul.f32 %v2495, %v253
    %v2498 = vmul.f32 %v2495, %v258
    %v2502 = vrot.slane %v2496, 2
    %v2503 = vrot.slane %v2497, 2
    %v2504 = vsel %vm373, %v2502, %v2503
    %v2505 = vrot.slane %v2498, 2
    %v2506 = vsel %vm373, %v2503, %v2505
    %v2509 = vadd.f32 %v2492, %v2504
    %v2510 = vadd.f32 %v2493, %v2506
    %s2511 = sld [smem:[#allocation3 + $0x4f]]
    %v2512 = vstv %s2511
    %v2513 = vmul.f32 %v2512, %v257
    %v2514 = vmul.f32 %v2512, %v253
    %v2515 = vmul.f32 %v2512, %v258
    %v2519 = vrot.slane %v2513, 2
    %v2520 = vrot.slane %v2514, 2
    %v2521 = vsel %vm373, %v2519, %v2520
    %v2522 = vrot.slane %v2515, 2
    %v2523 = vsel %vm373, %v2520, %v2522
    %2524 = vrot.lane.b32.xlu0 %v2521, 127
    %v2525 = vpop.permute.xlu0 %2524
    %2526 = vrot.lane.b32.xlu0 %v2523, 127
    %v2527 = vpop.permute.xlu0 %2526
    %v2530 = vadd.f32 %v2509, %v2525
    %v2531 = vadd.f32 %v2510, %v2527
    %s2532 = sld [smem:[#allocation3 + $0x50]]
    %v2533 = vstv %s2532
    %v2534 = vmul.f32 %v2533, %v257
    %v2535 = vmul.f32 %v2533, %v253
    %v2536 = vmul.f32 %v2533, %v258
    %v2540 = vrot.slane %v2534, 2
    %v2541 = vrot.slane %v2535, 2
    %v2542 = vsel %vm373, %v2540, %v2541
    %v2543 = vrot.slane %v2536, 2
    %v2544 = vsel %vm373, %v2541, %v2543
    %2545 = vrot.lane.b32.xlu0 %v2542, 126
    %v2546 = vpop.permute.xlu0 %2545
    %2547 = vrot.lane.b32.xlu0 %v2544, 126
    %v2548 = vpop.permute.xlu0 %2547
    %v2551 = vadd.f32 %v2530, %v2546
    %v2552 = vadd.f32 %v2531, %v2548
    %s2553 = sld [smem:[#allocation3 + $0x63]]
    %v2554 = vstv %s2553
    %v2555 = vmul.f32 %v2554, %v257
    %v2556 = vmul.f32 %v2554, %v253
    %v2557 = vadd.f32 %v1791, %v2555
    %v2558 = vadd.f32 %v1792, %v2556
    %s2559 = sld [smem:[#allocation3 + $0x64]]
    %v2560 = vstv %s2559
    %v2561 = vmul.f32 %v2560, %v257
    %v2562 = vmul.f32 %v2560, %v253
    %2565 = vrot.lane.b32.xlu0 %v2561, 127
    %v2566 = vpop.permute.xlu0 %2565
    %2567 = vrot.lane.b32.xlu0 %v2562, 127
    %v2568 = vpop.permute.xlu0 %2567
    %v2571 = vadd.f32 %v2557, %v2566
    %v2572 = vadd.f32 %v2558, %v2568
    %s2573 = sld [smem:[#allocation3 + $0x65]]
    %v2574 = vstv %s2573
    %v2575 = vmul.f32 %v2574, %v257
    %v2576 = vmul.f32 %v2574, %v253
    %2579 = vrot.lane.b32.xlu0 %v2575, 126
    %v2580 = vpop.permute.xlu0 %2579
    %2581 = vrot.lane.b32.xlu0 %v2576, 126
    %v2582 = vpop.permute.xlu0 %2581
    %v2585 = vadd.f32 %v2571, %v2580
    %v2586 = vadd.f32 %v2572, %v2582
    %s2587 = sld [smem:[#allocation3 + $0x66]]
    %v2588 = vstv %s2587
    %v2589 = vmul.f32 %v2588, %v257
    %v2590 = vmul.f32 %v2588, %v253
    %v2591 = vmul.f32 %v2588, %v258
    %v2595 = vrot.slane %v2589, 1
    %v2596 = vrot.slane %v2590, 1
    %v2597 = vsel %vm313, %v2595, %v2596
    %v2598 = vrot.slane %v2591, 1
    %v2599 = vsel %vm313, %v2596, %v2598
    %v2602 = vadd.f32 %v2585, %v2597
    %v2603 = vadd.f32 %v2586, %v2599
    %s2604 = sld [smem:[#allocation3 + $0x67]]
    %v2605 = vstv %s2604
    %v2606 = vmul.f32 %v2605, %v257
    %v2607 = vmul.f32 %v2605, %v253
    %v2608 = vmul.f32 %v2605, %v258
    %v2612 = vrot.slane %v2606, 1
    %v2613 = vrot.slane %v2607, 1
    %v2614 = vsel %vm313, %v2612, %v2613
    %v2615 = vrot.slane %v2608, 1
    %v2616 = vsel %vm313, %v2613, %v2615
    %2617 = vrot.lane.b32.xlu0 %v2614, 127
    %v2618 = vpop.permute.xlu0 %2617
    %2619 = vrot.lane.b32.xlu0 %v2616, 127
    %v2620 = vpop.permute.xlu0 %2619
    %v2623 = vadd.f32 %v2602, %v2618
    %v2624 = vadd.f32 %v2603, %v2620
    %s2625 = sld [smem:[#allocation3 + $0x68]]
    %v2626 = vstv %s2625
    %v2627 = vmul.f32 %v2626, %v257
    %v2628 = vmul.f32 %v2626, %v253
    %v2629 = vmul.f32 %v2626, %v258
    %v2633 = vrot.slane %v2627, 1
    %v2634 = vrot.slane %v2628, 1
    %v2635 = vsel %vm313, %v2633, %v2634
    %v2636 = vrot.slane %v2629, 1
    %v2637 = vsel %vm313, %v2634, %v2636
    %2638 = vrot.lane.b32.xlu0 %v2635, 126
    %v2639 = vpop.permute.xlu0 %2638
    %2640 = vrot.lane.b32.xlu0 %v2637, 126
    %v2641 = vpop.permute.xlu0 %2640
    %v2644 = vadd.f32 %v2623, %v2639
    %v2645 = vadd.f32 %v2624, %v2641
    %s2646 = sld [smem:[#allocation3 + $0x69]]
    %v2647 = vstv %s2646
    %v2648 = vmul.f32 %v2647, %v257
    %v2649 = vmul.f32 %v2647, %v253
    %v2650 = vmul.f32 %v2647, %v258
    %v2654 = vrot.slane %v2648, 2
    %v2655 = vrot.slane %v2649, 2
    %v2656 = vsel %vm373, %v2654, %v2655
    %v2657 = vrot.slane %v2650, 2
    %v2658 = vsel %vm373, %v2655, %v2657
    %v2661 = vadd.f32 %v2644, %v2656
    %v2662 = vadd.f32 %v2645, %v2658
    %s2663 = sld [smem:[#allocation3 + $0x6a]]
    %v2664 = vstv %s2663
    %v2665 = vmul.f32 %v2664, %v257
    %v2666 = vmul.f32 %v2664, %v253
    %v2667 = vmul.f32 %v2664, %v258
    %v2671 = vrot.slane %v2665, 2
    %v2672 = vrot.slane %v2666, 2
    %v2673 = vsel %vm373, %v2671, %v2672
    %v2674 = vrot.slane %v2667, 2
    %v2675 = vsel %vm373, %v2672, %v2674
    %2676 = vrot.lane.b32.xlu0 %v2673, 127
    %v2677 = vpop.permute.xlu0 %2676
    %2678 = vrot.lane.b32.xlu0 %v2675, 127
    %v2679 = vpop.permute.xlu0 %2678
    %v2682 = vadd.f32 %v2661, %v2677
    %v2683 = vadd.f32 %v2662, %v2679
    %s2684 = sld [smem:[#allocation3 + $0x6b]]
    %v2685 = vstv %s2684
    %v2686 = vmul.f32 %v2685, %v257
    %v2687 = vmul.f32 %v2685, %v253
    %v2688 = vmul.f32 %v2685, %v258
    %v2692 = vrot.slane %v2686, 2
    %v2693 = vrot.slane %v2687, 2
    %v2694 = vsel %vm373, %v2692, %v2693
    %v2695 = vrot.slane %v2688, 2
    %v2696 = vsel %vm373, %v2693, %v2695
    %2697 = vrot.lane.b32.xlu0 %v2694, 126
    %v2698 = vpop.permute.xlu0 %2697
    %2699 = vrot.lane.b32.xlu0 %v2696, 126
    %v2700 = vpop.permute.xlu0 %2699
    %v2703 = vadd.f32 %v2682, %v2698
    %v2704 = vadd.f32 %v2683, %v2700
    %s2705 = sld [smem:[#allocation3 + $0x7e]]
    %v2706 = vstv %s2705
    %v2707 = vmul.f32 %v2706, %v257
    %v2708 = vmul.f32 %v2706, %v253
    %v2709 = vadd.f32 %v1943, %v2707
    %v2710 = vadd.f32 %v1944, %v2708
    %s2711 = sld [smem:[#allocation3 + $0x7f]]
    %v2712 = vstv %s2711
    %v2713 = vmul.f32 %v2712, %v257
    %v2714 = vmul.f32 %v2712, %v253
    %2717 = vrot.lane.b32.xlu0 %v2713, 127
    %v2718 = vpop.permute.xlu0 %2717
    %2719 = vrot.lane.b32.xlu0 %v2714, 127
    %v2720 = vpop.permute.xlu0 %2719
    %v2723 = vadd.f32 %v2709, %v2718
    %v2724 = vadd.f32 %v2710, %v2720
    %s2725 = sld [smem:[#allocation3 + $0x80]]
    %v2726 = vstv %s2725
    %v2727 = vmul.f32 %v2726, %v257
    %v2728 = vmul.f32 %v2726, %v253
    %2731 = vrot.lane.b32.xlu0 %v2727, 126
    %v2732 = vpop.permute.xlu0 %2731
    %2733 = vrot.lane.b32.xlu0 %v2728, 126
    %v2734 = vpop.permute.xlu0 %2733
    %v2737 = vadd.f32 %v2723, %v2732
    %v2738 = vadd.f32 %v2724, %v2734
    %s2739 = sld [smem:[#allocation3 + $0x81]]
    %v2740 = vstv %s2739
    %v2741 = vmul.f32 %v2740, %v257
    %v2742 = vmul.f32 %v2740, %v253
    %v2743 = vmul.f32 %v2740, %v258
    %v2747 = vrot.slane %v2741, 1
    %v2748 = vrot.slane %v2742, 1
    %v2749 = vsel %vm313, %v2747, %v2748
    %v2750 = vrot.slane %v2743, 1
    %v2751 = vsel %vm313, %v2748, %v2750
    %v2754 = vadd.f32 %v2737, %v2749
    %v2755 = vadd.f32 %v2738, %v2751
    %s2756 = sld [smem:[#allocation3 + $0x82]]
    %v2757 = vstv %s2756
    %v2758 = vmul.f32 %v2757, %v257
    %v2759 = vmul.f32 %v2757, %v253
    %v2760 = vmul.f32 %v2757, %v258
    %v2764 = vrot.slane %v2758, 1
    %v2765 = vrot.slane %v2759, 1
    %v2766 = vsel %vm313, %v2764, %v2765
    %v2767 = vrot.slane %v2760, 1
    %v2768 = vsel %vm313, %v2765, %v2767
    %2769 = vrot.lane.b32.xlu0 %v2766, 127
    %v2770 = vpop.permute.xlu0 %2769
    %2771 = vrot.lane.b32.xlu0 %v2768, 127
    %v2772 = vpop.permute.xlu0 %2771
    %v2775 = vadd.f32 %v2754, %v2770
    %v2776 = vadd.f32 %v2755, %v2772
    %s2777 = sld [smem:[#allocation3 + $0x83]]
    %v2778 = vstv %s2777
    %v2779 = vmul.f32 %v2778, %v257
    %v2780 = vmul.f32 %v2778, %v253
    %v2781 = vmul.f32 %v2778, %v258
    %v2785 = vrot.slane %v2779, 1
    %v2786 = vrot.slane %v2780, 1
    %v2787 = vsel %vm313, %v2785, %v2786
    %v2788 = vrot.slane %v2781, 1
    %v2789 = vsel %vm313, %v2786, %v2788
    %2790 = vrot.lane.b32.xlu0 %v2787, 126
    %v2791 = vpop.permute.xlu0 %2790
    %2792 = vrot.lane.b32.xlu0 %v2789, 126
    %v2793 = vpop.permute.xlu0 %2792
    %v2796 = vadd.f32 %v2775, %v2791
    %v2797 = vadd.f32 %v2776, %v2793
    %s2798 = sld [smem:[#allocation3 + $0x84]]
    %v2799 = vstv %s2798
    %v2800 = vmul.f32 %v2799, %v257
    %v2801 = vmul.f32 %v2799, %v253
    %v2802 = vmul.f32 %v2799, %v258
    %v2806 = vrot.slane %v2800, 2
    %v2807 = vrot.slane %v2801, 2
    %v2808 = vsel %vm373, %v2806, %v2807
    %v2809 = vrot.slane %v2802, 2
    %v2810 = vsel %vm373, %v2807, %v2809
    %v2813 = vadd.f32 %v2796, %v2808
    %v2814 = vadd.f32 %v2797, %v2810
    %s2815 = sld [smem:[#allocation3 + $0x85]]
    %v2816 = vstv %s2815
    %v2817 = vmul.f32 %v2816, %v257
    %v2818 = vmul.f32 %v2816, %v253
    %v2819 = vmul.f32 %v2816, %v258
    %v2823 = vrot.slane %v2817, 2
    %v2824 = vrot.slane %v2818, 2
    %v2825 = vsel %vm373, %v2823, %v2824
    %v2826 = vrot.slane %v2819, 2
    %v2827 = vsel %vm373, %v2824, %v2826
    %2828 = vrot.lane.b32.xlu0 %v2825, 127
    %v2829 = vpop.permute.xlu0 %2828
    %2830 = vrot.lane.b32.xlu0 %v2827, 127
    %v2831 = vpop.permute.xlu0 %2830
    %v2834 = vadd.f32 %v2813, %v2829
    %v2835 = vadd.f32 %v2814, %v2831
    %s2836 = sld [smem:[#allocation3 + $0x86]]
    %v2837 = vstv %s2836
    %v2838 = vmul.f32 %v2837, %v257
    %v2839 = vmul.f32 %v2837, %v253
    %v2840 = vmul.f32 %v2837, %v258
    %v2844 = vrot.slane %v2838, 2
    %v2845 = vrot.slane %v2839, 2
    %v2846 = vsel %vm373, %v2844, %v2845
    %v2847 = vrot.slane %v2840, 2
    %v2848 = vsel %vm373, %v2845, %v2847
    %2849 = vrot.lane.b32.xlu0 %v2846, 126
    %v2850 = vpop.permute.xlu0 %2849
    %2851 = vrot.lane.b32.xlu0 %v2848, 126
    %v2852 = vpop.permute.xlu0 %2851
    %v2855 = vadd.f32 %v2834, %v2850
    %v2856 = vadd.f32 %v2835, %v2852
    %s2857 = sld [smem:[#allocation3 + $0x99]]
    %v2858 = vstv %s2857
    %v2859 = vmul.f32 %v2858, %v257
    %v2860 = vmul.f32 %v2858, %v253
    %v2861 = vadd.f32 %v2095, %v2859
    %v2862 = vadd.f32 %v2096, %v2860
    %s2863 = sld [smem:[#allocation3 + $0x9a]]
    %v2864 = vstv %s2863
    %v2865 = vmul.f32 %v2864, %v257
    %v2866 = vmul.f32 %v2864, %v253
    %2869 = vrot.lane.b32.xlu0 %v2865, 127
    %v2870 = vpop.permute.xlu0 %2869
    %2871 = vrot.lane.b32.xlu0 %v2866, 127
    %v2872 = vpop.permute.xlu0 %2871
    %v2875 = vadd.f32 %v2861, %v2870
    %v2876 = vadd.f32 %v2862, %v2872
    %s2877 = sld [smem:[#allocation3 + $0x9b]]
    %v2878 = vstv %s2877
    %v2879 = vmul.f32 %v2878, %v257
    %v2880 = vmul.f32 %v2878, %v253
    %2883 = vrot.lane.b32.xlu0 %v2879, 126
    %v2884 = vpop.permute.xlu0 %2883
    %2885 = vrot.lane.b32.xlu0 %v2880, 126
    %v2886 = vpop.permute.xlu0 %2885
    %v2889 = vadd.f32 %v2875, %v2884
    %v2890 = vadd.f32 %v2876, %v2886
    %s2891 = sld [smem:[#allocation3 + $0x9c]]
    %v2892 = vstv %s2891
    %v2893 = vmul.f32 %v2892, %v257
    %v2894 = vmul.f32 %v2892, %v253
    %v2895 = vmul.f32 %v2892, %v258
    %v2899 = vrot.slane %v2893, 1
    %v2900 = vrot.slane %v2894, 1
    %v2901 = vsel %vm313, %v2899, %v2900
    %v2902 = vrot.slane %v2895, 1
    %v2903 = vsel %vm313, %v2900, %v2902
    %v2906 = vadd.f32 %v2889, %v2901
    %v2907 = vadd.f32 %v2890, %v2903
    %s2908 = sld [smem:[#allocation3 + $0x9d]]
    %v2909 = vstv %s2908
    %v2910 = vmul.f32 %v2909, %v257
    %v2911 = vmul.f32 %v2909, %v253
    %v2912 = vmul.f32 %v2909, %v258
    %v2916 = vrot.slane %v2910, 1
    %v2917 = vrot.slane %v2911, 1
    %v2918 = vsel %vm313, %v2916, %v2917
    %v2919 = vrot.slane %v2912, 1
    %v2920 = vsel %vm313, %v2917, %v2919
    %2921 = vrot.lane.b32.xlu0 %v2918, 127
    %v2922 = vpop.permute.xlu0 %2921
    %2923 = vrot.lane.b32.xlu0 %v2920, 127
    %v2924 = vpop.permute.xlu0 %2923
    %v2927 = vadd.f32 %v2906, %v2922
    %v2928 = vadd.f32 %v2907, %v2924
    %s2929 = sld [smem:[#allocation3 + $0x9e]]
    %v2930 = vstv %s2929
    %v2931 = vmul.f32 %v2930, %v257
    %v2932 = vmul.f32 %v2930, %v253
    %v2933 = vmul.f32 %v2930, %v258
    %v2937 = vrot.slane %v2931, 1
    %v2938 = vrot.slane %v2932, 1
    %v2939 = vsel %vm313, %v2937, %v2938
    %v2940 = vrot.slane %v2933, 1
    %v2941 = vsel %vm313, %v2938, %v2940
    %2942 = vrot.lane.b32.xlu0 %v2939, 126
    %v2943 = vpop.permute.xlu0 %2942
    %2944 = vrot.lane.b32.xlu0 %v2941, 126
    %v2945 = vpop.permute.xlu0 %2944
    %v2948 = vadd.f32 %v2927, %v2943
    %v2949 = vadd.f32 %v2928, %v2945
    %s2950 = sld [smem:[#allocation3 + $0x9f]]
    %v2951 = vstv %s2950
    %v2952 = vmul.f32 %v2951, %v257
    %v2953 = vmul.f32 %v2951, %v253
    %v2954 = vmul.f32 %v2951, %v258
    %v2958 = vrot.slane %v2952, 2
    %v2959 = vrot.slane %v2953, 2
    %v2960 = vsel %vm373, %v2958, %v2959
    %v2961 = vrot.slane %v2954, 2
    %v2962 = vsel %vm373, %v2959, %v2961
    %v2965 = vadd.f32 %v2948, %v2960
    %v2966 = vadd.f32 %v2949, %v2962
    %s2967 = sld [smem:[#allocation3 + $0xa0]]
    %v2968 = vstv %s2967
    %v2969 = vmul.f32 %v2968, %v257
    %v2970 = vmul.f32 %v2968, %v253
    %v2971 = vmul.f32 %v2968, %v258
    %v2975 = vrot.slane %v2969, 2
    %v2976 = vrot.slane %v2970, 2
    %v2977 = vsel %vm373, %v2975, %v2976
    %v2978 = vrot.slane %v2971, 2
    %v2979 = vsel %vm373, %v2976, %v2978
    %2980 = vrot.lane.b32.xlu0 %v2977, 127
    %v2981 = vpop.permute.xlu0 %2980
    %2982 = vrot.lane.b32.xlu0 %v2979, 127
    %v2983 = vpop.permute.xlu0 %2982
    %v2986 = vadd.f32 %v2965, %v2981
    %v2987 = vadd.f32 %v2966, %v2983
    %s2988 = sld [smem:[#allocation3 + $0xa1]]
    %v2989 = vstv %s2988
    %v2990 = vmul.f32 %v2989, %v257
    %v2991 = vmul.f32 %v2989, %v253
    %v2992 = vmul.f32 %v2989, %v258
    %v2996 = vrot.slane %v2990, 2
    %v2997 = vrot.slane %v2991, 2
    %v2998 = vsel %vm373, %v2996, %v2997
    %v2999 = vrot.slane %v2992, 2
    %v3000 = vsel %vm373, %v2997, %v2999
    %3001 = vrot.lane.b32.xlu0 %v2998, 126
    %v3002 = vpop.permute.xlu0 %3001
    %3003 = vrot.lane.b32.xlu0 %v3000, 126
    %v3004 = vpop.permute.xlu0 %3003
    %v3007 = vadd.f32 %v2986, %v3002
    %v3008 = vadd.f32 %v2987, %v3004
    %v3009 = vmul.f32 %v2247, %v95
    %v3010 = vmul.f32 %v2248, %v95
    %3013 = vrot.lane.b32.xlu0 %v3009, 1
    %v3014 = vpop.permute.xlu0 %3013
    %3015 = vrot.lane.b32.xlu0 %v3010, 1
    %v3016 = vpop.permute.xlu0 %3015
    %v3019 = vsel %vm86, 0.0, %v3014
    %v3020 = vsel %vm86, 0.0, %v3016
    %v3021 = vsel %vm137, %v3019, 0.0
    %v3022 = vsel %vm137, %v3020, 0.0
    %v3025 = vrot.slane %v3021, 7
    %v3026 = vrot.slane %v3022, 7
    %v3027 = vsel %vm142, %v3025, %v3026
    %v3031 = vsel %vm142, 0.0, %v3025
    %v3032 = vsel %vm142, %v3026, 0.0
    %v3033 = vmul.f32 %v2399, %v95
    %v3034 = vmul.f32 %v2400, %v95
    %3037 = vrot.lane.b32.xlu0 %v3033, 1
    %v3038 = vpop.permute.xlu0 %3037
    %3039 = vrot.lane.b32.xlu0 %v3034, 1
    %v3040 = vpop.permute.xlu0 %3039
    %v3043 = vsel %vm86, 0.0, %v3038
    %v3044 = vsel %vm86, 0.0, %v3040
    %v3045 = vsel %vm137, %v3043, 0.0
    %v3046 = vsel %vm137, %v3044, 0.0
    %v3049 = vrot.slane %v3045, 7
    %v3050 = vrot.slane %v3046, 7
    %v3051 = vsel %vm142, %v3049, %v3050
    %v3055 = vsel %vm142, 0.0, %v3049
    %v3056 = vsel %vm142, %v3050, 0.0
    %v3057 = vmul.f32 %v2551, %v95
    %v3058 = vmul.f32 %v2552, %v95
    %3061 = vrot.lane.b32.xlu0 %v3057, 1
    %v3062 = vpop.permute.xlu0 %3061
    %3063 = vrot.lane.b32.xlu0 %v3058, 1
    %v3064 = vpop.permute.xlu0 %3063
    %v3067 = vsel %vm86, 0.0, %v3062
    %v3068 = vsel %vm86, 0.0, %v3064
    %v3069 = vsel %vm137, %v3067, 0.0
    %v3070 = vsel %vm137, %v3068, 0.0
    %v3073 = vrot.slane %v3069, 7
    %v3074 = vrot.slane %v3070, 7
    %v3075 = vsel %vm142, %v3073, %v3074
    %v3079 = vsel %vm142, 0.0, %v3073
    %v3080 = vsel %vm142, %v3074, 0.0
    %v3081 = vmul.f32 %v2703, %v95
    %v3082 = vmul.f32 %v2704, %v95
    %3085 = vrot.lane.b32.xlu0 %v3081, 1
    %v3086 = vpop.permute.xlu0 %3085
    %3087 = vrot.lane.b32.xlu0 %v3082, 1
    %v3088 = vpop.permute.xlu0 %3087
    %v3091 = vsel %vm86, 0.0, %v3086
    %v3092 = vsel %vm86, 0.0, %v3088
    %v3093 = vsel %vm137, %v3091, 0.0
    %v3094 = vsel %vm137, %v3092, 0.0
    %v3097 = vrot.slane %v3093, 7
    %v3098 = vrot.slane %v3094, 7
    %v3099 = vsel %vm142, %v3097, %v3098
    %v3103 = vsel %vm142, 0.0, %v3097
    %v3104 = vsel %vm142, %v3098, 0.0
    %v3105 = vmul.f32 %v2855, %v95
    %v3106 = vmul.f32 %v2856, %v95
    %3109 = vrot.lane.b32.xlu0 %v3105, 1
    %v3110 = vpop.permute.xlu0 %3109
    %3111 = vrot.lane.b32.xlu0 %v3106, 1
    %v3112 = vpop.permute.xlu0 %3111
    %v3115 = vsel %vm86, 0.0, %v3110
    %v3116 = vsel %vm86, 0.0, %v3112
    %v3117 = vsel %vm137, %v3115, 0.0
    %v3118 = vsel %vm137, %v3116, 0.0
    %v3121 = vrot.slane %v3117, 7
    %v3122 = vrot.slane %v3118, 7
    %v3123 = vsel %vm142, %v3121, %v3122
    %v3127 = vsel %vm142, 0.0, %v3121
    %v3128 = vsel %vm142, %v3122, 0.0
    %v3129 = vmul.f32 %v3007, %v95
    %v3130 = vmul.f32 %v3008, %v95
    %3133 = vrot.lane.b32.xlu0 %v3129, 1
    %v3134 = vpop.permute.xlu0 %3133
    %3135 = vrot.lane.b32.xlu0 %v3130, 1
    %v3136 = vpop.permute.xlu0 %3135
    %v3139 = vsel %vm86, 0.0, %v3134
    %v3140 = vsel %vm86, 0.0, %v3136
    %v3141 = vsel %vm137, %v3139, 0.0
    %v3142 = vsel %vm137, %v3140, 0.0
    %v3145 = vrot.slane %v3141, 7
    %v3146 = vrot.slane %v3142, 7
    %v3147 = vsel %vm142, %v3145, %v3146
    %v3151 = vsel %vm142, 0.0, %v3145
    %v3152 = vsel %vm142, %v3146, 0.0
    %s3153 = sld [smem:[#allocation8]]
    %v3154 = vstv %s3153
    %s3155 = sld [smem:[#allocation8 + $0x1]]
    %v3156 = vstv %s3155
    %s3157 = sld [smem:[#allocation8 + $0x2]]
    %v3158 = vstv %s3157
    %s3159 = sld [smem:[#allocation8 + $0x3]]
    %v3160 = vstv %s3159
    %s3161 = sld [smem:[#allocation8 + $0x4]]
    %v3162 = vstv %s3161
    %s3163 = sld [smem:[#allocation8 + $0x5]]
    %v3164 = vstv %s3163
    %s3165 = sld [smem:[#allocation7]]
    %v3166 = vstv %s3165
    %v3167 = vmul.f32 %v3166, %v3031
    %v3168 = vmul.f32 %v3166, %v3027
    %v3169 = vadd.f32 %v3154, %v3167
    %v3170 = vadd.f32 %v3154, %v3168
    %s3171 = sld [smem:[#allocation7 + $0x1]]
    %v3172 = vstv %s3171
    %v3173 = vmul.f32 %v3172, %v3031
    %v3174 = vmul.f32 %v3172, %v3027
    %3177 = vrot.lane.b32.xlu0 %v3173, 127
    %v3178 = vpop.permute.xlu0 %3177
    %3179 = vrot.lane.b32.xlu0 %v3174, 127
    %v3180 = vpop.permute.xlu0 %3179
    %v3183 = vadd.f32 %v3169, %v3178
    %v3184 = vadd.f32 %v3170, %v3180
    %s3185 = sld [smem:[#allocation7 + $0x2]]
    %v3186 = vstv %s3185
    %v3187 = vmul.f32 %v3186, %v3031
    %v3188 = vmul.f32 %v3186, %v3027
    %3191 = vrot.lane.b32.xlu0 %v3187, 126
    %v3192 = vpop.permute.xlu0 %3191
    %3193 = vrot.lane.b32.xlu0 %v3188, 126
    %v3194 = vpop.permute.xlu0 %3193
    %v3197 = vadd.f32 %v3183, %v3192
    %v3198 = vadd.f32 %v3184, %v3194
    %s3199 = sld [smem:[#allocation7 + $0x3]]
    %v3200 = vstv %s3199
    %v3201 = vmul.f32 %v3200, %v3031
    %v3202 = vmul.f32 %v3200, %v3027
    %v3203 = vmul.f32 %v3200, %v3032
    %v3207 = vrot.slane %v3201, 1
    %v3208 = vrot.slane %v3202, 1
    %v3209 = vsel %vm313, %v3207, %v3208
    %v3210 = vrot.slane %v3203, 1
    %v3211 = vsel %vm313, %v3208, %v3210
    %v3214 = vadd.f32 %v3197, %v3209
    %v3215 = vadd.f32 %v3198, %v3211
    %s3216 = sld [smem:[#allocation7 + $0x4]]
    %v3217 = vstv %s3216
    %v3218 = vmul.f32 %v3217, %v3031
    %v3219 = vmul.f32 %v3217, %v3027
    %v3220 = vmul.f32 %v3217, %v3032
    %v3224 = vrot.slane %v3218, 1
    %v3225 = vrot.slane %v3219, 1
    %v3226 = vsel %vm313, %v3224, %v3225
    %v3227 = vrot.slane %v3220, 1
    %v3228 = vsel %vm313, %v3225, %v3227
    %3229 = vrot.lane.b32.xlu0 %v3226, 127
    %v3230 = vpop.permute.xlu0 %3229
    %3231 = vrot.lane.b32.xlu0 %v3228, 127
    %v3232 = vpop.permute.xlu0 %3231
    %v3235 = vadd.f32 %v3214, %v3230
    %v3236 = vadd.f32 %v3215, %v3232
    %s3237 = sld [smem:[#allocation7 + $0x5]]
    %v3238 = vstv %s3237
    %v3239 = vmul.f32 %v3238, %v3031
    %v3240 = vmul.f32 %v3238, %v3027
    %v3241 = vmul.f32 %v3238, %v3032
    %v3245 = vrot.slane %v3239, 1
    %v3246 = vrot.slane %v3240, 1
    %v3247 = vsel %vm313, %v3245, %v3246
    %v3248 = vrot.slane %v3241, 1
    %v3249 = vsel %vm313, %v3246, %v3248
    %3250 = vrot.lane.b32.xlu0 %v3247, 126
    %v3251 = vpop.permute.xlu0 %3250
    %3252 = vrot.lane.b32.xlu0 %v3249, 126
    %v3253 = vpop.permute.xlu0 %3252
    %v3256 = vadd.f32 %v3235, %v3251
    %v3257 = vadd.f32 %v3236, %v3253
    %s3258 = sld [smem:[#allocation7 + $0x6]]
    %v3259 = vstv %s3258
    %v3260 = vmul.f32 %v3259, %v3031
    %v3261 = vmul.f32 %v3259, %v3027
    %v3262 = vmul.f32 %v3259, %v3032
    %v3266 = vrot.slane %v3260, 2
    %v3267 = vrot.slane %v3261, 2
    %v3268 = vsel %vm373, %v3266, %v3267
    %v3269 = vrot.slane %v3262, 2
    %v3270 = vsel %vm373, %v3267, %v3269
    %v3273 = vadd.f32 %v3256, %v3268
    %v3274 = vadd.f32 %v3257, %v3270
    %s3275 = sld [smem:[#allocation7 + $0x7]]
    %v3276 = vstv %s3275
    %v3277 = vmul.f32 %v3276, %v3031
    %v3278 = vmul.f32 %v3276, %v3027
    %v3279 = vmul.f32 %v3276, %v3032
    %v3283 = vrot.slane %v3277, 2
    %v3284 = vrot.slane %v3278, 2
    %v3285 = vsel %vm373, %v3283, %v3284
    %v3286 = vrot.slane %v3279, 2
    %v3287 = vsel %vm373, %v3284, %v3286
    %3288 = vrot.lane.b32.xlu0 %v3285, 127
    %v3289 = vpop.permute.xlu0 %3288
    %3290 = vrot.lane.b32.xlu0 %v3287, 127
    %v3291 = vpop.permute.xlu0 %3290
    %v3294 = vadd.f32 %v3273, %v3289
    %v3295 = vadd.f32 %v3274, %v3291
    %s3296 = sld [smem:[#allocation7 + $0x8]]
    %v3297 = vstv %s3296
    %v3298 = vmul.f32 %v3297, %v3031
    %v3299 = vmul.f32 %v3297, %v3027
    %v3300 = vmul.f32 %v3297, %v3032
    %v3304 = vrot.slane %v3298, 2
    %v3305 = vrot.slane %v3299, 2
    %v3306 = vsel %vm373, %v3304, %v3305
    %v3307 = vrot.slane %v3300, 2
    %v3308 = vsel %vm373, %v3305, %v3307
    %3309 = vrot.lane.b32.xlu0 %v3306, 126
    %v3310 = vpop.permute.xlu0 %3309
    %3311 = vrot.lane.b32.xlu0 %v3308, 126
    %v3312 = vpop.permute.xlu0 %3311
    %v3315 = vadd.f32 %v3294, %v3310
    %v3316 = vadd.f32 %v3295, %v3312
    %s3317 = sld [smem:[#allocation7 + $0x36]]
    %v3318 = vstv %s3317
    %v3319 = vmul.f32 %v3318, %v3031
    %v3320 = vmul.f32 %v3318, %v3027
    %v3321 = vadd.f32 %v3156, %v3319
    %v3322 = vadd.f32 %v3156, %v3320
    %s3323 = sld [smem:[#allocation7 + $0x37]]
    %v3324 = vstv %s3323
    %v3325 = vmul.f32 %v3324, %v3031
    %v3326 = vmul.f32 %v3324, %v3027
    %3329 = vrot.lane.b32.xlu0 %v3325, 127
    %v3330 = vpop.permute.xlu0 %3329
    %3331 = vrot.lane.b32.xlu0 %v3326, 127
    %v3332 = vpop.permute.xlu0 %3331
    %v3335 = vadd.f32 %v3321, %v3330
    %v3336 = vadd.f32 %v3322, %v3332
    %s3337 = sld [smem:[#allocation7 + $0x38]]
    %v3338 = vstv %s3337
    %v3339 = vmul.f32 %v3338, %v3031
    %v3340 = vmul.f32 %v3338, %v3027
    %3343 = vrot.lane.b32.xlu0 %v3339, 126
    %v3344 = vpop.permute.xlu0 %3343
    %3345 = vrot.lane.b32.xlu0 %v3340, 126
    %v3346 = vpop.permute.xlu0 %3345
    %v3349 = vadd.f32 %v3335, %v3344
    %v3350 = vadd.f32 %v3336, %v3346
    %s3351 = sld [smem:[#allocation7 + $0x39]]
    %v3352 = vstv %s3351
    %v3353 = vmul.f32 %v3352, %v3031
    %v3354 = vmul.f32 %v3352, %v3027
    %v3355 = vmul.f32 %v3352, %v3032
    %v3359 = vrot.slane %v3353, 1
    %v3360 = vrot.slane %v3354, 1
    %v3361 = vsel %vm313, %v3359, %v3360
    %v3362 = vrot.slane %v3355, 1
    %v3363 = vsel %vm313, %v3360, %v3362
    %v3366 = vadd.f32 %v3349, %v3361
    %v3367 = vadd.f32 %v3350, %v3363
    %s3368 = sld [smem:[#allocation7 + $0x3a]]
    %v3369 = vstv %s3368
    %v3370 = vmul.f32 %v3369, %v3031
    %v3371 = vmul.f32 %v3369, %v3027
    %v3372 = vmul.f32 %v3369, %v3032
    %v3376 = vrot.slane %v3370, 1
    %v3377 = vrot.slane %v3371, 1
    %v3378 = vsel %vm313, %v3376, %v3377
    %v3379 = vrot.slane %v3372, 1
    %v3380 = vsel %vm313, %v3377, %v3379
    %3381 = vrot.lane.b32.xlu0 %v3378, 127
    %v3382 = vpop.permute.xlu0 %3381
    %3383 = vrot.lane.b32.xlu0 %v3380, 127
    %v3384 = vpop.permute.xlu0 %3383
    %v3387 = vadd.f32 %v3366, %v3382
    %v3388 = vadd.f32 %v3367, %v3384
    %s3389 = sld [smem:[#allocation7 + $0x3b]]
    %v3390 = vstv %s3389
    %v3391 = vmul.f32 %v3390, %v3031
    %v3392 = vmul.f32 %v3390, %v3027
    %v3393 = vmul.f32 %v3390, %v3032
    %v3397 = vrot.slane %v3391, 1
    %v3398 = vrot.slane %v3392, 1
    %v3399 = vsel %vm313, %v3397, %v3398
    %v3400 = vrot.slane %v3393, 1
    %v3401 = vsel %vm313, %v3398, %v3400
    %3402 = vrot.lane.b32.xlu0 %v3399, 126
    %v3403 = vpop.permute.xlu0 %3402
    %3404 = vrot.lane.b32.xlu0 %v3401, 126
    %v3405 = vpop.permute.xlu0 %3404
    %v3408 = vadd.f32 %v3387, %v3403
    %v3409 = vadd.f32 %v3388, %v3405
    %s3410 = sld [smem:[#allocation7 + $0x3c]]
    %v3411 = vstv %s3410
    %v3412 = vmul.f32 %v3411, %v3031
    %v3413 = vmul.f32 %v3411, %v3027
    %v3414 = vmul.f32 %v3411, %v3032
    %v3418 = vrot.slane %v3412, 2
    %v3419 = vrot.slane %v3413, 2
    %v3420 = vsel %vm373, %v3418, %v3419
    %v3421 = vrot.slane %v3414, 2
    %v3422 = vsel %vm373, %v3419, %v3421
    %v3425 = vadd.f32 %v3408, %v3420
    %v3426 = vadd.f32 %v3409, %v3422
    %s3427 = sld [smem:[#allocation7 + $0x3d]]
    %v3428 = vstv %s3427
    %v3429 = vmul.f32 %v3428, %v3031
    %v3430 = vmul.f32 %v3428, %v3027
    %v3431 = vmul.f32 %v3428, %v3032
    %v3435 = vrot.slane %v3429, 2
    %v3436 = vrot.slane %v3430, 2
    %v3437 = vsel %vm373, %v3435, %v3436
    %v3438 = vrot.slane %v3431, 2
    %v3439 = vsel %vm373, %v3436, %v3438
    %3440 = vrot.lane.b32.xlu0 %v3437, 127
    %v3441 = vpop.permute.xlu0 %3440
    %3442 = vrot.lane.b32.xlu0 %v3439, 127
    %v3443 = vpop.permute.xlu0 %3442
    %v3446 = vadd.f32 %v3425, %v3441
    %v3447 = vadd.f32 %v3426, %v3443
    %s3448 = sld [smem:[#allocation7 + $0x3e]]
    %v3449 = vstv %s3448
    %v3450 = vmul.f32 %v3449, %v3031
    %v3451 = vmul.f32 %v3449, %v3027
    %v3452 = vmul.f32 %v3449, %v3032
    %v3456 = vrot.slane %v3450, 2
    %v3457 = vrot.slane %v3451, 2
    %v3458 = vsel %vm373, %v3456, %v3457
    %v3459 = vrot.slane %v3452, 2
    %v3460 = vsel %vm373, %v3457, %v3459
    %3461 = vrot.lane.b32.xlu0 %v3458, 126
    %v3462 = vpop.permute.xlu0 %3461
    %3463 = vrot.lane.b32.xlu0 %v3460, 126
    %v3464 = vpop.permute.xlu0 %3463
    %v3467 = vadd.f32 %v3446, %v3462
    %v3468 = vadd.f32 %v3447, %v3464
    %s3469 = sld [smem:[#allocation7 + $0x6c]]
    %v3470 = vstv %s3469
    %v3471 = vmul.f32 %v3470, %v3031
    %v3472 = vmul.f32 %v3470, %v3027
    %v3473 = vadd.f32 %v3158, %v3471
    %v3474 = vadd.f32 %v3158, %v3472
    %s3475 = sld [smem:[#allocation7 + $0x6d]]
    %v3476 = vstv %s3475
    %v3477 = vmul.f32 %v3476, %v3031
    %v3478 = vmul.f32 %v3476, %v3027
    %3481 = vrot.lane.b32.xlu0 %v3477, 127
    %v3482 = vpop.permute.xlu0 %3481
    %3483 = vrot.lane.b32.xlu0 %v3478, 127
    %v3484 = vpop.permute.xlu0 %3483
    %v3487 = vadd.f32 %v3473, %v3482
    %v3488 = vadd.f32 %v3474, %v3484
    %s3489 = sld [smem:[#allocation7 + $0x6e]]
    %v3490 = vstv %s3489
    %v3491 = vmul.f32 %v3490, %v3031
    %v3492 = vmul.f32 %v3490, %v3027
    %3495 = vrot.lane.b32.xlu0 %v3491, 126
    %v3496 = vpop.permute.xlu0 %3495
    %3497 = vrot.lane.b32.xlu0 %v3492, 126
    %v3498 = vpop.permute.xlu0 %3497
    %v3501 = vadd.f32 %v3487, %v3496
    %v3502 = vadd.f32 %v3488, %v3498
    %s3503 = sld [smem:[#allocation7 + $0x6f]]
    %v3504 = vstv %s3503
    %v3505 = vmul.f32 %v3504, %v3031
    %v3506 = vmul.f32 %v3504, %v3027
    %v3507 = vmul.f32 %v3504, %v3032
    %v3511 = vrot.slane %v3505, 1
    %v3512 = vrot.slane %v3506, 1
    %v3513 = vsel %vm313, %v3511, %v3512
    %v3514 = vrot.slane %v3507, 1
    %v3515 = vsel %vm313, %v3512, %v3514
    %v3518 = vadd.f32 %v3501, %v3513
    %v3519 = vadd.f32 %v3502, %v3515
    %s3520 = sld [smem:[#allocation7 + $0x70]]
    %v3521 = vstv %s3520
    %v3522 = vmul.f32 %v3521, %v3031
    %v3523 = vmul.f32 %v3521, %v3027
    %v3524 = vmul.f32 %v3521, %v3032
    %v3528 = vrot.slane %v3522, 1
    %v3529 = vrot.slane %v3523, 1
    %v3530 = vsel %vm313, %v3528, %v3529
    %v3531 = vrot.slane %v3524, 1
    %v3532 = vsel %vm313, %v3529, %v3531
    %3533 = vrot.lane.b32.xlu0 %v3530, 127
    %v3534 = vpop.permute.xlu0 %3533
    %3535 = vrot.lane.b32.xlu0 %v3532, 127
    %v3536 = vpop.permute.xlu0 %3535
    %v3539 = vadd.f32 %v3518, %v3534
    %v3540 = vadd.f32 %v3519, %v3536
    %s3541 = sld [smem:[#allocation7 + $0x71]]
    %v3542 = vstv %s3541
    %v3543 = vmul.f32 %v3542, %v3031
    %v3544 = vmul.f32 %v3542, %v3027
    %v3545 = vmul.f32 %v3542, %v3032
    %v3549 = vrot.slane %v3543, 1
    %v3550 = vrot.slane %v3544, 1
    %v3551 = vsel %vm313, %v3549, %v3550
    %v3552 = vrot.slane %v3545, 1
    %v3553 = vsel %vm313, %v3550, %v3552
    %3554 = vrot.lane.b32.xlu0 %v3551, 126
    %v3555 = vpop.permute.xlu0 %3554
    %3556 = vrot.lane.b32.xlu0 %v3553, 126
    %v3557 = vpop.permute.xlu0 %3556
    %v3560 = vadd.f32 %v3539, %v3555
    %v3561 = vadd.f32 %v3540, %v3557
    %s3562 = sld [smem:[#allocation7 + $0x72]]
    %v3563 = vstv %s3562
    %v3564 = vmul.f32 %v3563, %v3031
    %v3565 = vmul.f32 %v3563, %v3027
    %v3566 = vmul.f32 %v3563, %v3032
    %v3570 = vrot.slane %v3564, 2
    %v3571 = vrot.slane %v3565, 2
    %v3572 = vsel %vm373, %v3570, %v3571
    %v3573 = vrot.slane %v3566, 2
    %v3574 = vsel %vm373, %v3571, %v3573
    %v3577 = vadd.f32 %v3560, %v3572
    %v3578 = vadd.f32 %v3561, %v3574
    %s3579 = sld [smem:[#allocation7 + $0x73]]
    %v3580 = vstv %s3579
    %v3581 = vmul.f32 %v3580, %v3031
    %v3582 = vmul.f32 %v3580, %v3027
    %v3583 = vmul.f32 %v3580, %v3032
    %v3587 = vrot.slane %v3581, 2
    %v3588 = vrot.slane %v3582, 2
    %v3589 = vsel %vm373, %v3587, %v3588
    %v3590 = vrot.slane %v3583, 2
    %v3591 = vsel %vm373, %v3588, %v3590
    %3592 = vrot.lane.b32.xlu0 %v3589, 127
    %v3593 = vpop.permute.xlu0 %3592
    %3594 = vrot.lane.b32.xlu0 %v3591, 127
    %v3595 = vpop.permute.xlu0 %3594
    %v3598 = vadd.f32 %v3577, %v3593
    %v3599 = vadd.f32 %v3578, %v3595
    %s3600 = sld [smem:[#allocation7 + $0x74]]
    %v3601 = vstv %s3600
    %v3602 = vmul.f32 %v3601, %v3031
    %v3603 = vmul.f32 %v3601, %v3027
    %v3604 = vmul.f32 %v3601, %v3032
    %v3608 = vrot.slane %v3602, 2
    %v3609 = vrot.slane %v3603, 2
    %v3610 = vsel %vm373, %v3608, %v3609
    %v3611 = vrot.slane %v3604, 2
    %v3612 = vsel %vm373, %v3609, %v3611
    %3613 = vrot.lane.b32.xlu0 %v3610, 126
    %v3614 = vpop.permute.xlu0 %3613
    %3615 = vrot.lane.b32.xlu0 %v3612, 126
    %v3616 = vpop.permute.xlu0 %3615
    %v3619 = vadd.f32 %v3598, %v3614
    %v3620 = vadd.f32 %v3599, %v3616
    %s3621 = sld [smem:[#allocation7 + $0xa2]]
    %v3622 = vstv %s3621
    %v3623 = vmul.f32 %v3622, %v3031
    %v3624 = vmul.f32 %v3622, %v3027
    %v3625 = vadd.f32 %v3160, %v3623
    %v3626 = vadd.f32 %v3160, %v3624
    %s3627 = sld [smem:[#allocation7 + $0xa3]]
    %v3628 = vstv %s3627
    %v3629 = vmul.f32 %v3628, %v3031
    %v3630 = vmul.f32 %v3628, %v3027
    %3633 = vrot.lane.b32.xlu0 %v3629, 127
    %v3634 = vpop.permute.xlu0 %3633
    %3635 = vrot.lane.b32.xlu0 %v3630, 127
    %v3636 = vpop.permute.xlu0 %3635
    %v3639 = vadd.f32 %v3625, %v3634
    %v3640 = vadd.f32 %v3626, %v3636
    %s3641 = sld [smem:[#allocation7 + $0xa4]]
    %v3642 = vstv %s3641
    %v3643 = vmul.f32 %v3642, %v3031
    %v3644 = vmul.f32 %v3642, %v3027
    %3647 = vrot.lane.b32.xlu0 %v3643, 126
    %v3648 = vpop.permute.xlu0 %3647
    %3649 = vrot.lane.b32.xlu0 %v3644, 126
    %v3650 = vpop.permute.xlu0 %3649
    %v3653 = vadd.f32 %v3639, %v3648
    %v3654 = vadd.f32 %v3640, %v3650
    %s3655 = sld [smem:[#allocation7 + $0xa5]]
    %v3656 = vstv %s3655
    %v3657 = vmul.f32 %v3656, %v3031
    %v3658 = vmul.f32 %v3656, %v3027
    %v3659 = vmul.f32 %v3656, %v3032
    %v3663 = vrot.slane %v3657, 1
    %v3664 = vrot.slane %v3658, 1
    %v3665 = vsel %vm313, %v3663, %v3664
    %v3666 = vrot.slane %v3659, 1
    %v3667 = vsel %vm313, %v3664, %v3666
    %v3670 = vadd.f32 %v3653, %v3665
    %v3671 = vadd.f32 %v3654, %v3667
    %s3672 = sld [smem:[#allocation7 + $0xa6]]
    %v3673 = vstv %s3672
    %v3674 = vmul.f32 %v3673, %v3031
    %v3675 = vmul.f32 %v3673, %v3027
    %v3676 = vmul.f32 %v3673, %v3032
    %v3680 = vrot.slane %v3674, 1
    %v3681 = vrot.slane %v3675, 1
    %v3682 = vsel %vm313, %v3680, %v3681
    %v3683 = vrot.slane %v3676, 1
    %v3684 = vsel %vm313, %v3681, %v3683
    %3685 = vrot.lane.b32.xlu0 %v3682, 127
    %v3686 = vpop.permute.xlu0 %3685
    %3687 = vrot.lane.b32.xlu0 %v3684, 127
    %v3688 = vpop.permute.xlu0 %3687
    %v3691 = vadd.f32 %v3670, %v3686
    %v3692 = vadd.f32 %v3671, %v3688
    %s3693 = sld [smem:[#allocation7 + $0xa7]]
    %v3694 = vstv %s3693
    %v3695 = vmul.f32 %v3694, %v3031
    %v3696 = vmul.f32 %v3694, %v3027
    %v3697 = vmul.f32 %v3694, %v3032
    %v3701 = vrot.slane %v3695, 1
    %v3702 = vrot.slane %v3696, 1
    %v3703 = vsel %vm313, %v3701, %v3702
    %v3704 = vrot.slane %v3697, 1
    %v3705 = vsel %vm313, %v3702, %v3704
    %3706 = vrot.lane.b32.xlu0 %v3703, 126
    %v3707 = vpop.permute.xlu0 %3706
    %3708 = vrot.lane.b32.xlu0 %v3705, 126
    %v3709 = vpop.permute.xlu0 %3708
    %v3712 = vadd.f32 %v3691, %v3707
    %v3713 = vadd.f32 %v3692, %v3709
    %s3714 = sld [smem:[#allocation7 + $0xa8]]
    %v3715 = vstv %s3714
    %v3716 = vmul.f32 %v3715, %v3031
    %v3717 = vmul.f32 %v3715, %v3027
    %v3718 = vmul.f32 %v3715, %v3032
    %v3722 = vrot.slane %v3716, 2
    %v3723 = vrot.slane %v3717, 2
    %v3724 = vsel %vm373, %v3722, %v3723
    %v3725 = vrot.slane %v3718, 2
    %v3726 = vsel %vm373, %v3723, %v3725
    %v3729 = vadd.f32 %v3712, %v3724
    %v3730 = vadd.f32 %v3713, %v3726
    %s3731 = sld [smem:[#allocation7 + $0xa9]]
    %v3732 = vstv %s3731
    %v3733 = vmul.f32 %v3732, %v3031
    %v3734 = vmul.f32 %v3732, %v3027
    %v3735 = vmul.f32 %v3732, %v3032
    %v3739 = vrot.slane %v3733, 2
    %v3740 = vrot.slane %v3734, 2
    %v3741 = vsel %vm373, %v3739, %v3740
    %v3742 = vrot.slane %v3735, 2
    %v3743 = vsel %vm373, %v3740, %v3742
    %3744 = vrot.lane.b32.xlu0 %v3741, 127
    %v3745 = vpop.permute.xlu0 %3744
    %3746 = vrot.lane.b32.xlu0 %v3743, 127
    %v3747 = vpop.permute.xlu0 %3746
    %v3750 = vadd.f32 %v3729, %v3745
    %v3751 = vadd.f32 %v3730, %v3747
    %s3752 = sld [smem:[#allocation7 + $0xaa]]
    %v3753 = vstv %s3752
    %v3754 = vmul.f32 %v3753, %v3031
    %v3755 = vmul.f32 %v3753, %v3027
    %v3756 = vmul.f32 %v3753, %v3032
    %v3760 = vrot.slane %v3754, 2
    %v3761 = vrot.slane %v3755, 2
    %v3762 = vsel %vm373, %v3760, %v3761
    %v3763 = vrot.slane %v3756, 2
    %v3764 = vsel %vm373, %v3761, %v3763
    %3765 = vrot.lane.b32.xlu0 %v3762, 126
    %v3766 = vpop.permute.xlu0 %3765
    %3767 = vrot.lane.b32.xlu0 %v3764, 126
    %v3768 = vpop.permute.xlu0 %3767
    %v3771 = vadd.f32 %v3750, %v3766
    %v3772 = vadd.f32 %v3751, %v3768
    %s3773 = sld [smem:[#allocation7 + $0xd8]]
    %v3774 = vstv %s3773
    %v3775 = vmul.f32 %v3774, %v3031
    %v3776 = vmul.f32 %v3774, %v3027
    %v3777 = vadd.f32 %v3162, %v3775
    %v3778 = vadd.f32 %v3162, %v3776
    %s3779 = sld [smem:[#allocation7 + $0xd9]]
    %v3780 = vstv %s3779
    %v3781 = vmul.f32 %v3780, %v3031
    %v3782 = vmul.f32 %v3780, %v3027
    %3785 = vrot.lane.b32.xlu0 %v3781, 127
    %v3786 = vpop.permute.xlu0 %3785
    %3787 = vrot.lane.b32.xlu0 %v3782, 127
    %v3788 = vpop.permute.xlu0 %3787
    %v3791 = vadd.f32 %v3777, %v3786
    %v3792 = vadd.f32 %v3778, %v3788
    %s3793 = sld [smem:[#allocation7 + $0xda]]
    %v3794 = vstv %s3793
    %v3795 = vmul.f32 %v3794, %v3031
    %v3796 = vmul.f32 %v3794, %v3027
    %3799 = vrot.lane.b32.xlu0 %v3795, 126
    %v3800 = vpop.permute.xlu0 %3799
    %3801 = vrot.lane.b32.xlu0 %v3796, 126
    %v3802 = vpop.permute.xlu0 %3801
    %v3805 = vadd.f32 %v3791, %v3800
    %v3806 = vadd.f32 %v3792, %v3802
    %s3807 = sld [smem:[#allocation7 + $0xdb]]
    %v3808 = vstv %s3807
    %v3809 = vmul.f32 %v3808, %v3031
    %v3810 = vmul.f32 %v3808, %v3027
    %v3811 = vmul.f32 %v3808, %v3032
    %v3815 = vrot.slane %v3809, 1
    %v3816 = vrot.slane %v3810, 1
    %v3817 = vsel %vm313, %v3815, %v3816
    %v3818 = vrot.slane %v3811, 1
    %v3819 = vsel %vm313, %v3816, %v3818
    %v3822 = vadd.f32 %v3805, %v3817
    %v3823 = vadd.f32 %v3806, %v3819
    %s3824 = sld [smem:[#allocation7 + $0xdc]]
    %v3825 = vstv %s3824
    %v3826 = vmul.f32 %v3825, %v3031
    %v3827 = vmul.f32 %v3825, %v3027
    %v3828 = vmul.f32 %v3825, %v3032
    %v3832 = vrot.slane %v3826, 1
    %v3833 = vrot.slane %v3827, 1
    %v3834 = vsel %vm313, %v3832, %v3833
    %v3835 = vrot.slane %v3828, 1
    %v3836 = vsel %vm313, %v3833, %v3835
    %3837 = vrot.lane.b32.xlu0 %v3834, 127
    %v3838 = vpop.permute.xlu0 %3837
    %3839 = vrot.lane.b32.xlu0 %v3836, 127
    %v3840 = vpop.permute.xlu0 %3839
    %v3843 = vadd.f32 %v3822, %v3838
    %v3844 = vadd.f32 %v3823, %v3840
    %s3845 = sld [smem:[#allocation7 + $0xdd]]
    %v3846 = vstv %s3845
    %v3847 = vmul.f32 %v3846, %v3031
    %v3848 = vmul.f32 %v3846, %v3027
    %v3849 = vmul.f32 %v3846, %v3032
    %v3853 = vrot.slane %v3847, 1
    %v3854 = vrot.slane %v3848, 1
    %v3855 = vsel %vm313, %v3853, %v3854
    %v3856 = vrot.slane %v3849, 1
    %v3857 = vsel %vm313, %v3854, %v3856
    %3858 = vrot.lane.b32.xlu0 %v3855, 126
    %v3859 = vpop.permute.xlu0 %3858
    %3860 = vrot.lane.b32.xlu0 %v3857, 126
    %v3861 = vpop.permute.xlu0 %3860
    %v3864 = vadd.f32 %v3843, %v3859
    %v3865 = vadd.f32 %v3844, %v3861
    %s3866 = sld [smem:[#allocation7 + $0xde]]
    %v3867 = vstv %s3866
    %v3868 = vmul.f32 %v3867, %v3031
    %v3869 = vmul.f32 %v3867, %v3027
    %v3870 = vmul.f32 %v3867, %v3032
    %v3874 = vrot.slane %v3868, 2
    %v3875 = vrot.slane %v3869, 2
    %v3876 = vsel %vm373, %v3874, %v3875
    %v3877 = vrot.slane %v3870, 2
    %v3878 = vsel %vm373, %v3875, %v3877
    %v3881 = vadd.f32 %v3864, %v3876
    %v3882 = vadd.f32 %v3865, %v3878
    %s3883 = sld [smem:[#allocation7 + $0xdf]]
    %v3884 = vstv %s3883
    %v3885 = vmul.f32 %v3884, %v3031
    %v3886 = vmul.f32 %v3884, %v3027
    %v3887 = vmul.f32 %v3884, %v3032
    %v3891 = vrot.slane %v3885, 2
    %v3892 = vrot.slane %v3886, 2
    %v3893 = vsel %vm373, %v3891, %v3892
    %v3894 = vrot.slane %v3887, 2
    %v3895 = vsel %vm373, %v3892, %v3894
    %3896 = vrot.lane.b32.xlu0 %v3893, 127
    %v3897 = vpop.permute.xlu0 %3896
    %3898 = vrot.lane.b32.xlu0 %v3895, 127
    %v3899 = vpop.permute.xlu0 %3898
    %v3902 = vadd.f32 %v3881, %v3897
    %v3903 = vadd.f32 %v3882, %v3899
    %s3904 = sld [smem:[#allocation7 + $0xe0]]
    %v3905 = vstv %s3904
    %v3906 = vmul.f32 %v3905, %v3031
    %v3907 = vmul.f32 %v3905, %v3027
    %v3908 = vmul.f32 %v3905, %v3032
    %v3912 = vrot.slane %v3906, 2
    %v3913 = vrot.slane %v3907, 2
    %v3914 = vsel %vm373, %v3912, %v3913
    %v3915 = vrot.slane %v3908, 2
    %v3916 = vsel %vm373, %v3913, %v3915
    %3917 = vrot.lane.b32.xlu0 %v3914, 126
    %v3918 = vpop.permute.xlu0 %3917
    %3919 = vrot.lane.b32.xlu0 %v3916, 126
    %v3920 = vpop.permute.xlu0 %3919
    %v3923 = vadd.f32 %v3902, %v3918
    %v3924 = vadd.f32 %v3903, %v3920
    %s3925 = sld [smem:[#allocation7 + $0x10e]]
    %v3926 = vstv %s3925
    %v3927 = vmul.f32 %v3926, %v3031
    %v3928 = vmul.f32 %v3926, %v3027
    %v3929 = vadd.f32 %v3164, %v3927
    %v3930 = vadd.f32 %v3164, %v3928
    %s3931 = sld [smem:[#allocation7 + $0x10f]]
    %v3932 = vstv %s3931
    %v3933 = vmul.f32 %v3932, %v3031
    %v3934 = vmul.f32 %v3932, %v3027
    %3937 = vrot.lane.b32.xlu0 %v3933, 127
    %v3938 = vpop.permute.xlu0 %3937
    %3939 = vrot.lane.b32.xlu0 %v3934, 127
    %v3940 = vpop.permute.xlu0 %3939
    %v3943 = vadd.f32 %v3929, %v3938
    %v3944 = vadd.f32 %v3930, %v3940
    %s3945 = sld [smem:[#allocation7 + $0x110]]
    %v3946 = vstv %s3945
    %v3947 = vmul.f32 %v3946, %v3031
    %v3948 = vmul.f32 %v3946, %v3027
    %3951 = vrot.lane.b32.xlu0 %v3947, 126
    %v3952 = vpop.permute.xlu0 %3951
    %3953 = vrot.lane.b32.xlu0 %v3948, 126
    %v3954 = vpop.permute.xlu0 %3953
    %v3957 = vadd.f32 %v3943, %v3952
    %v3958 = vadd.f32 %v3944, %v3954
    %s3959 = sld [smem:[#allocation7 + $0x111]]
    %v3960 = vstv %s3959
    %v3961 = vmul.f32 %v3960, %v3031
    %v3962 = vmul.f32 %v3960, %v3027
    %v3963 = vmul.f32 %v3960, %v3032
    %v3967 = vrot.slane %v3961, 1
    %v3968 = vrot.slane %v3962, 1
    %v3969 = vsel %vm313, %v3967, %v3968
    %v3970 = vrot.slane %v3963, 1
    %v3971 = vsel %vm313, %v3968, %v3970
    %v3974 = vadd.f32 %v3957, %v3969
    %v3975 = vadd.f32 %v3958, %v3971
    %s3976 = sld [smem:[#allocation7 + $0x112]]
    %v3977 = vstv %s3976
    %v3978 = vmul.f32 %v3977, %v3031
    %v3979 = vmul.f32 %v3977, %v3027
    %v3980 = vmul.f32 %v3977, %v3032
    %v3984 = vrot.slane %v3978, 1
    %v3985 = vrot.slane %v3979, 1
    %v3986 = vsel %vm313, %v3984, %v3985
    %v3987 = vrot.slane %v3980, 1
    %v3988 = vsel %vm313, %v3985, %v3987
    %3989 = vrot.lane.b32.xlu0 %v3986, 127
    %v3990 = vpop.permute.xlu0 %3989
    %3991 = vrot.lane.b32.xlu0 %v3988, 127
    %v3992 = vpop.permute.xlu0 %3991
    %v3995 = vadd.f32 %v3974, %v3990
    %v3996 = vadd.f32 %v3975, %v3992
    %s3997 = sld [smem:[#allocation7 + $0x113]]
    %v3998 = vstv %s3997
    %v3999 = vmul.f32 %v3998, %v3031
    %v4000 = vmul.f32 %v3998, %v3027
    %v4001 = vmul.f32 %v3998, %v3032
    %v4005 = vrot.slane %v3999, 1
    %v4006 = vrot.slane %v4000, 1
    %v4007 = vsel %vm313, %v4005, %v4006
    %v4008 = vrot.slane %v4001, 1
    %v4009 = vsel %vm313, %v4006, %v4008
    %4010 = vrot.lane.b32.xlu0 %v4007, 126
    %v4011 = vpop.permute.xlu0 %4010
    %4012 = vrot.lane.b32.xlu0 %v4009, 126
    %v4013 = vpop.permute.xlu0 %4012
    %v4016 = vadd.f32 %v3995, %v4011
    %v4017 = vadd.f32 %v3996, %v4013
    %s4018 = sld [smem:[#allocation7 + $0x114]]
    %v4019 = vstv %s4018
    %v4020 = vmul.f32 %v4019, %v3031
    %v4021 = vmul.f32 %v4019, %v3027
    %v4022 = vmul.f32 %v4019, %v3032
    %v4026 = vrot.slane %v4020, 2
    %v4027 = vrot.slane %v4021, 2
    %v4028 = vsel %vm373, %v4026, %v4027
    %v4029 = vrot.slane %v4022, 2
    %v4030 = vsel %vm373, %v4027, %v4029
    %v4033 = vadd.f32 %v4016, %v4028
    %v4034 = vadd.f32 %v4017, %v4030
    %s4035 = sld [smem:[#allocation7 + $0x115]]
    %v4036 = vstv %s4035
    %v4037 = vmul.f32 %v4036, %v3031
    %v4038 = vmul.f32 %v4036, %v3027
    %v4039 = vmul.f32 %v4036, %v3032
    %v4043 = vrot.slane %v4037, 2
    %v4044 = vrot.slane %v4038, 2
    %v4045 = vsel %vm373, %v4043, %v4044
    %v4046 = vrot.slane %v4039, 2
    %v4047 = vsel %vm373, %v4044, %v4046
    %4048 = vrot.lane.b32.xlu0 %v4045, 127
    %v4049 = vpop.permute.xlu0 %4048
    %4050 = vrot.lane.b32.xlu0 %v4047, 127
    %v4051 = vpop.permute.xlu0 %4050
    %v4054 = vadd.f32 %v4033, %v4049
    %v4055 = vadd.f32 %v4034, %v4051
    %s4056 = sld [smem:[#allocation7 + $0x116]]
    %v4057 = vstv %s4056
    %v4058 = vmul.f32 %v4057, %v3031
    %v4059 = vmul.f32 %v4057, %v3027
    %v4060 = vmul.f32 %v4057, %v3032
    %v4064 = vrot.slane %v4058, 2
    %v4065 = vrot.slane %v4059, 2
    %v4066 = vsel %vm373, %v4064, %v4065
    %v4067 = vrot.slane %v4060, 2
    %v4068 = vsel %vm373, %v4065, %v4067
    %4069 = vrot.lane.b32.xlu0 %v4066, 126
    %v4070 = vpop.permute.xlu0 %4069
    %4071 = vrot.lane.b32.xlu0 %v4068, 126
    %v4072 = vpop.permute.xlu0 %4071
    %v4075 = vadd.f32 %v4054, %v4070
    %v4076 = vadd.f32 %v4055, %v4072
    %s4077 = sld [smem:[#allocation7 + $0x9]]
    %v4078 = vstv %s4077
    %v4079 = vmul.f32 %v4078, %v3055
    %v4080 = vmul.f32 %v4078, %v3051
    %v4081 = vadd.f32 %v3315, %v4079
    %v4082 = vadd.f32 %v3316, %v4080
    %s4083 = sld [smem:[#allocation7 + $0xa]]
    %v4084 = vstv %s4083
    %v4085 = vmul.f32 %v4084, %v3055
    %v4086 = vmul.f32 %v4084, %v3051
    %4089 = vrot.lane.b32.xlu0 %v4085, 127
    %v4090 = vpop.permute.xlu0 %4089
    %4091 = vrot.lane.b32.xlu0 %v4086, 127
    %v4092 = vpop.permute.xlu0 %4091
    %v4095 = vadd.f32 %v4081, %v4090
    %v4096 = vadd.f32 %v4082, %v4092
    %s4097 = sld [smem:[#allocation7 + $0xb]]
    %v4098 = vstv %s4097
    %v4099 = vmul.f32 %v4098, %v3055
    %v4100 = vmul.f32 %v4098, %v3051
    %4103 = vrot.lane.b32.xlu0 %v4099, 126
    %v4104 = vpop.permute.xlu0 %4103
    %4105 = vrot.lane.b32.xlu0 %v4100, 126
    %v4106 = vpop.permute.xlu0 %4105
    %v4109 = vadd.f32 %v4095, %v4104
    %v4110 = vadd.f32 %v4096, %v4106
    %s4111 = sld [smem:[#allocation7 + $0xc]]
    %v4112 = vstv %s4111
    %v4113 = vmul.f32 %v4112, %v3055
    %v4114 = vmul.f32 %v4112, %v3051
    %v4115 = vmul.f32 %v4112, %v3056
    %v4119 = vrot.slane %v4113, 1
    %v4120 = vrot.slane %v4114, 1
    %v4121 = vsel %vm313, %v4119, %v4120
    %v4122 = vrot.slane %v4115, 1
    %v4123 = vsel %vm313, %v4120, %v4122
    %v4126 = vadd.f32 %v4109, %v4121
    %v4127 = vadd.f32 %v4110, %v4123
    %s4128 = sld [smem:[#allocation7 + $0xd]]
    %v4129 = vstv %s4128
    %v4130 = vmul.f32 %v4129, %v3055
    %v4131 = vmul.f32 %v4129, %v3051
    %v4132 = vmul.f32 %v4129, %v3056
    %v4136 = vrot.slane %v4130, 1
    %v4137 = vrot.slane %v4131, 1
    %v4138 = vsel %vm313, %v4136, %v4137
    %v4139 = vrot.slane %v4132, 1
    %v4140 = vsel %vm313, %v4137, %v4139
    %4141 = vrot.lane.b32.xlu0 %v4138, 127
    %v4142 = vpop.permute.xlu0 %4141
    %4143 = vrot.lane.b32.xlu0 %v4140, 127
    %v4144 = vpop.permute.xlu0 %4143
    %v4147 = vadd.f32 %v4126, %v4142
    %v4148 = vadd.f32 %v4127, %v4144
    %s4149 = sld [smem:[#allocation7 + $0xe]]
    %v4150 = vstv %s4149
    %v4151 = vmul.f32 %v4150, %v3055
    %v4152 = vmul.f32 %v4150, %v3051
    %v4153 = vmul.f32 %v4150, %v3056
    %v4157 = vrot.slane %v4151, 1
    %v4158 = vrot.slane %v4152, 1
    %v4159 = vsel %vm313, %v4157, %v4158
    %v4160 = vrot.slane %v4153, 1
    %v4161 = vsel %vm313, %v4158, %v4160
    %4162 = vrot.lane.b32.xlu0 %v4159, 126
    %v4163 = vpop.permute.xlu0 %4162
    %4164 = vrot.lane.b32.xlu0 %v4161, 126
    %v4165 = vpop.permute.xlu0 %4164
    %v4168 = vadd.f32 %v4147, %v4163
    %v4169 = vadd.f32 %v4148, %v4165
    %s4170 = sld [smem:[#allocation7 + $0xf]]
    %v4171 = vstv %s4170
    %v4172 = vmul.f32 %v4171, %v3055
    %v4173 = vmul.f32 %v4171, %v3051
    %v4174 = vmul.f32 %v4171, %v3056
    %v4178 = vrot.slane %v4172, 2
    %v4179 = vrot.slane %v4173, 2
    %v4180 = vsel %vm373, %v4178, %v4179
    %v4181 = vrot.slane %v4174, 2
    %v4182 = vsel %vm373, %v4179, %v4181
    %v4185 = vadd.f32 %v4168, %v4180
    %v4186 = vadd.f32 %v4169, %v4182
    %s4187 = sld [smem:[#allocation7 + $0x10]]
    %v4188 = vstv %s4187
    %v4189 = vmul.f32 %v4188, %v3055
    %v4190 = vmul.f32 %v4188, %v3051
    %v4191 = vmul.f32 %v4188, %v3056
    %v4195 = vrot.slane %v4189, 2
    %v4196 = vrot.slane %v4190, 2
    %v4197 = vsel %vm373, %v4195, %v4196
    %v4198 = vrot.slane %v4191, 2
    %v4199 = vsel %vm373, %v4196, %v4198
    %4200 = vrot.lane.b32.xlu0 %v4197, 127
    %v4201 = vpop.permute.xlu0 %4200
    %4202 = vrot.lane.b32.xlu0 %v4199, 127
    %v4203 = vpop.permute.xlu0 %4202
    %v4206 = vadd.f32 %v4185, %v4201
    %v4207 = vadd.f32 %v4186, %v4203
    %s4208 = sld [smem:[#allocation7 + $0x11]]
    %v4209 = vstv %s4208
    %v4210 = vmul.f32 %v4209, %v3055
    %v4211 = vmul.f32 %v4209, %v3051
    %v4212 = vmul.f32 %v4209, %v3056
    %v4216 = vrot.slane %v4210, 2
    %v4217 = vrot.slane %v4211, 2
    %v4218 = vsel %vm373, %v4216, %v4217
    %v4219 = vrot.slane %v4212, 2
    %v4220 = vsel %vm373, %v4217, %v4219
    %4221 = vrot.lane.b32.xlu0 %v4218, 126
    %v4222 = vpop.permute.xlu0 %4221
    %4223 = vrot.lane.b32.xlu0 %v4220, 126
    %v4224 = vpop.permute.xlu0 %4223
    %v4227 = vadd.f32 %v4206, %v4222
    %v4228 = vadd.f32 %v4207, %v4224
    %s4229 = sld [smem:[#allocation7 + $0x3f]]
    %v4230 = vstv %s4229
    %v4231 = vmul.f32 %v4230, %v3055
    %v4232 = vmul.f32 %v4230, %v3051
    %v4233 = vadd.f32 %v3467, %v4231
    %v4234 = vadd.f32 %v3468, %v4232
    %s4235 = sld [smem:[#allocation7 + $0x40]]
    %v4236 = vstv %s4235
    %v4237 = vmul.f32 %v4236, %v3055
    %v4238 = vmul.f32 %v4236, %v3051
    %4241 = vrot.lane.b32.xlu0 %v4237, 127
    %v4242 = vpop.permute.xlu0 %4241
    %4243 = vrot.lane.b32.xlu0 %v4238, 127
    %v4244 = vpop.permute.xlu0 %4243
    %v4247 = vadd.f32 %v4233, %v4242
    %v4248 = vadd.f32 %v4234, %v4244
    %s4249 = sld [smem:[#allocation7 + $0x41]]
    %v4250 = vstv %s4249
    %v4251 = vmul.f32 %v4250, %v3055
    %v4252 = vmul.f32 %v4250, %v3051
    %4255 = vrot.lane.b32.xlu0 %v4251, 126
    %v4256 = vpop.permute.xlu0 %4255
    %4257 = vrot.lane.b32.xlu0 %v4252, 126
    %v4258 = vpop.permute.xlu0 %4257
    %v4261 = vadd.f32 %v4247, %v4256
    %v4262 = vadd.f32 %v4248, %v4258
    %s4263 = sld [smem:[#allocation7 + $0x42]]
    %v4264 = vstv %s4263
    %v4265 = vmul.f32 %v4264, %v3055
    %v4266 = vmul.f32 %v4264, %v3051
    %v4267 = vmul.f32 %v4264, %v3056
    %v4271 = vrot.slane %v4265, 1
    %v4272 = vrot.slane %v4266, 1
    %v4273 = vsel %vm313, %v4271, %v4272
    %v4274 = vrot.slane %v4267, 1
    %v4275 = vsel %vm313, %v4272, %v4274
    %v4278 = vadd.f32 %v4261, %v4273
    %v4279 = vadd.f32 %v4262, %v4275
    %s4280 = sld [smem:[#allocation7 + $0x43]]
    %v4281 = vstv %s4280
    %v4282 = vmul.f32 %v4281, %v3055
    %v4283 = vmul.f32 %v4281, %v3051
    %v4284 = vmul.f32 %v4281, %v3056
    %v4288 = vrot.slane %v4282, 1
    %v4289 = vrot.slane %v4283, 1
    %v4290 = vsel %vm313, %v4288, %v4289
    %v4291 = vrot.slane %v4284, 1
    %v4292 = vsel %vm313, %v4289, %v4291
    %4293 = vrot.lane.b32.xlu0 %v4290, 127
    %v4294 = vpop.permute.xlu0 %4293
    %4295 = vrot.lane.b32.xlu0 %v4292, 127
    %v4296 = vpop.permute.xlu0 %4295
    %v4299 = vadd.f32 %v4278, %v4294
    %v4300 = vadd.f32 %v4279, %v4296
    %s4301 = sld [smem:[#allocation7 + $0x44]]
    %v4302 = vstv %s4301
    %v4303 = vmul.f32 %v4302, %v3055
    %v4304 = vmul.f32 %v4302, %v3051
    %v4305 = vmul.f32 %v4302, %v3056
    %v4309 = vrot.slane %v4303, 1
    %v4310 = vrot.slane %v4304, 1
    %v4311 = vsel %vm313, %v4309, %v4310
    %v4312 = vrot.slane %v4305, 1
    %v4313 = vsel %vm313, %v4310, %v4312
    %4314 = vrot.lane.b32.xlu0 %v4311, 126
    %v4315 = vpop.permute.xlu0 %4314
    %4316 = vrot.lane.b32.xlu0 %v4313, 126
    %v4317 = vpop.permute.xlu0 %4316
    %v4320 = vadd.f32 %v4299, %v4315
    %v4321 = vadd.f32 %v4300, %v4317
    %s4322 = sld [smem:[#allocation7 + $0x45]]
    %v4323 = vstv %s4322
    %v4324 = vmul.f32 %v4323, %v3055
    %v4325 = vmul.f32 %v4323, %v3051
    %v4326 = vmul.f32 %v4323, %v3056
    %v4330 = vrot.slane %v4324, 2
    %v4331 = vrot.slane %v4325, 2
    %v4332 = vsel %vm373, %v4330, %v4331
    %v4333 = vrot.slane %v4326, 2
    %v4334 = vsel %vm373, %v4331, %v4333
    %v4337 = vadd.f32 %v4320, %v4332
    %v4338 = vadd.f32 %v4321, %v4334
    %s4339 = sld [smem:[#allocation7 + $0x46]]
    %v4340 = vstv %s4339
    %v4341 = vmul.f32 %v4340, %v3055
    %v4342 = vmul.f32 %v4340, %v3051
    %v4343 = vmul.f32 %v4340, %v3056
    %v4347 = vrot.slane %v4341, 2
    %v4348 = vrot.slane %v4342, 2
    %v4349 = vsel %vm373, %v4347, %v4348
    %v4350 = vrot.slane %v4343, 2
    %v4351 = vsel %vm373, %v4348, %v4350
    %4352 = vrot.lane.b32.xlu0 %v4349, 127
    %v4353 = vpop.permute.xlu0 %4352
    %4354 = vrot.lane.b32.xlu0 %v4351, 127
    %v4355 = vpop.permute.xlu0 %4354
    %v4358 = vadd.f32 %v4337, %v4353
    %v4359 = vadd.f32 %v4338, %v4355
    %s4360 = sld [smem:[#allocation7 + $0x47]]
    %v4361 = vstv %s4360
    %v4362 = vmul.f32 %v4361, %v3055
    %v4363 = vmul.f32 %v4361, %v3051
    %v4364 = vmul.f32 %v4361, %v3056
    %v4368 = vrot.slane %v4362, 2
    %v4369 = vrot.slane %v4363, 2
    %v4370 = vsel %vm373, %v4368, %v4369
    %v4371 = vrot.slane %v4364, 2
    %v4372 = vsel %vm373, %v4369, %v4371
    %4373 = vrot.lane.b32.xlu0 %v4370, 126
    %v4374 = vpop.permute.xlu0 %4373
    %4375 = vrot.lane.b32.xlu0 %v4372, 126
    %v4376 = vpop.permute.xlu0 %4375
    %v4379 = vadd.f32 %v4358, %v4374
    %v4380 = vadd.f32 %v4359, %v4376
    %s4381 = sld [smem:[#allocation7 + $0x75]]
    %v4382 = vstv %s4381
    %v4383 = vmul.f32 %v4382, %v3055
    %v4384 = vmul.f32 %v4382, %v3051
    %v4385 = vadd.f32 %v3619, %v4383
    %v4386 = vadd.f32 %v3620, %v4384
    %s4387 = sld [smem:[#allocation7 + $0x76]]
    %v4388 = vstv %s4387
    %v4389 = vmul.f32 %v4388, %v3055
    %v4390 = vmul.f32 %v4388, %v3051
    %4393 = vrot.lane.b32.xlu0 %v4389, 127
    %v4394 = vpop.permute.xlu0 %4393
    %4395 = vrot.lane.b32.xlu0 %v4390, 127
    %v4396 = vpop.permute.xlu0 %4395
    %v4399 = vadd.f32 %v4385, %v4394
    %v4400 = vadd.f32 %v4386, %v4396
    %s4401 = sld [smem:[#allocation7 + $0x77]]
    %v4402 = vstv %s4401
    %v4403 = vmul.f32 %v4402, %v3055
    %v4404 = vmul.f32 %v4402, %v3051
    %4407 = vrot.lane.b32.xlu0 %v4403, 126
    %v4408 = vpop.permute.xlu0 %4407
    %4409 = vrot.lane.b32.xlu0 %v4404, 126
    %v4410 = vpop.permute.xlu0 %4409
    %v4413 = vadd.f32 %v4399, %v4408
    %v4414 = vadd.f32 %v4400, %v4410
    %s4415 = sld [smem:[#allocation7 + $0x78]]
    %v4416 = vstv %s4415
    %v4417 = vmul.f32 %v4416, %v3055
    %v4418 = vmul.f32 %v4416, %v3051
    %v4419 = vmul.f32 %v4416, %v3056
    %v4423 = vrot.slane %v4417, 1
    %v4424 = vrot.slane %v4418, 1
    %v4425 = vsel %vm313, %v4423, %v4424
    %v4426 = vrot.slane %v4419, 1
    %v4427 = vsel %vm313, %v4424, %v4426
    %v4430 = vadd.f32 %v4413, %v4425
    %v4431 = vadd.f32 %v4414, %v4427
    %s4432 = sld [smem:[#allocation7 + $0x79]]
    %v4433 = vstv %s4432
    %v4434 = vmul.f32 %v4433, %v3055
    %v4435 = vmul.f32 %v4433, %v3051
    %v4436 = vmul.f32 %v4433, %v3056
    %v4440 = vrot.slane %v4434, 1
    %v4441 = vrot.slane %v4435, 1
    %v4442 = vsel %vm313, %v4440, %v4441
    %v4443 = vrot.slane %v4436, 1
    %v4444 = vsel %vm313, %v4441, %v4443
    %4445 = vrot.lane.b32.xlu0 %v4442, 127
    %v4446 = vpop.permute.xlu0 %4445
    %4447 = vrot.lane.b32.xlu0 %v4444, 127
    %v4448 = vpop.permute.xlu0 %4447
    %v4451 = vadd.f32 %v4430, %v4446
    %v4452 = vadd.f32 %v4431, %v4448
    %s4453 = sld [smem:[#allocation7 + $0x7a]]
    %v4454 = vstv %s4453
    %v4455 = vmul.f32 %v4454, %v3055
    %v4456 = vmul.f32 %v4454, %v3051
    %v4457 = vmul.f32 %v4454, %v3056
    %v4461 = vrot.slane %v4455, 1
    %v4462 = vrot.slane %v4456, 1
    %v4463 = vsel %vm313, %v4461, %v4462
    %v4464 = vrot.slane %v4457, 1
    %v4465 = vsel %vm313, %v4462, %v4464
    %4466 = vrot.lane.b32.xlu0 %v4463, 126
    %v4467 = vpop.permute.xlu0 %4466
    %4468 = vrot.lane.b32.xlu0 %v4465, 126
    %v4469 = vpop.permute.xlu0 %4468
    %v4472 = vadd.f32 %v4451, %v4467
    %v4473 = vadd.f32 %v4452, %v4469
    %s4474 = sld [smem:[#allocation7 + $0x7b]]
    %v4475 = vstv %s4474
    %v4476 = vmul.f32 %v4475, %v3055
    %v4477 = vmul.f32 %v4475, %v3051
    %v4478 = vmul.f32 %v4475, %v3056
    %v4482 = vrot.slane %v4476, 2
    %v4483 = vrot.slane %v4477, 2
    %v4484 = vsel %vm373, %v4482, %v4483
    %v4485 = vrot.slane %v4478, 2
    %v4486 = vsel %vm373, %v4483, %v4485
    %v4489 = vadd.f32 %v4472, %v4484
    %v4490 = vadd.f32 %v4473, %v4486
    %s4491 = sld [smem:[#allocation7 + $0x7c]]
    %v4492 = vstv %s4491
    %v4493 = vmul.f32 %v4492, %v3055
    %v4494 = vmul.f32 %v4492, %v3051
    %v4495 = vmul.f32 %v4492, %v3056
    %v4499 = vrot.slane %v4493, 2
    %v4500 = vrot.slane %v4494, 2
    %v4501 = vsel %vm373, %v4499, %v4500
    %v4502 = vrot.slane %v4495, 2
    %v4503 = vsel %vm373, %v4500, %v4502
    %4504 = vrot.lane.b32.xlu0 %v4501, 127
    %v4505 = vpop.permute.xlu0 %4504
    %4506 = vrot.lane.b32.xlu0 %v4503, 127
    %v4507 = vpop.permute.xlu0 %4506
    %v4510 = vadd.f32 %v4489, %v4505
    %v4511 = vadd.f32 %v4490, %v4507
    %s4512 = sld [smem:[#allocation7 + $0x7d]]
    %v4513 = vstv %s4512
    %v4514 = vmul.f32 %v4513, %v3055
    %v4515 = vmul.f32 %v4513, %v3051
    %v4516 = vmul.f32 %v4513, %v3056
    %v4520 = vrot.slane %v4514, 2
    %v4521 = vrot.slane %v4515, 2
    %v4522 = vsel %vm373, %v4520, %v4521
    %v4523 = vrot.slane %v4516, 2
    %v4524 = vsel %vm373, %v4521, %v4523
    %4525 = vrot.lane.b32.xlu0 %v4522, 126
    %v4526 = vpop.permute.xlu0 %4525
    %4527 = vrot.lane.b32.xlu0 %v4524, 126
    %v4528 = vpop.permute.xlu0 %4527
    %v4531 = vadd.f32 %v4510, %v4526
    %v4532 = vadd.f32 %v4511, %v4528
    %s4533 = sld [smem:[#allocation7 + $0xab]]
    %v4534 = vstv %s4533
    %v4535 = vmul.f32 %v4534, %v3055
    %v4536 = vmul.f32 %v4534, %v3051
    %v4537 = vadd.f32 %v3771, %v4535
    %v4538 = vadd.f32 %v3772, %v4536
    %s4539 = sld [smem:[#allocation7 + $0xac]]
    %v4540 = vstv %s4539
    %v4541 = vmul.f32 %v4540, %v3055
    %v4542 = vmul.f32 %v4540, %v3051
    %4545 = vrot.lane.b32.xlu0 %v4541, 127
    %v4546 = vpop.permute.xlu0 %4545
    %4547 = vrot.lane.b32.xlu0 %v4542, 127
    %v4548 = vpop.permute.xlu0 %4547
    %v4551 = vadd.f32 %v4537, %v4546
    %v4552 = vadd.f32 %v4538, %v4548
    %s4553 = sld [smem:[#allocation7 + $0xad]]
    %v4554 = vstv %s4553
    %v4555 = vmul.f32 %v4554, %v3055
    %v4556 = vmul.f32 %v4554, %v3051
    %4559 = vrot.lane.b32.xlu0 %v4555, 126
    %v4560 = vpop.permute.xlu0 %4559
    %4561 = vrot.lane.b32.xlu0 %v4556, 126
    %v4562 = vpop.permute.xlu0 %4561
    %v4565 = vadd.f32 %v4551, %v4560
    %v4566 = vadd.f32 %v4552, %v4562
    %s4567 = sld [smem:[#allocation7 + $0xae]]
    %v4568 = vstv %s4567
    %v4569 = vmul.f32 %v4568, %v3055
    %v4570 = vmul.f32 %v4568, %v3051
    %v4571 = vmul.f32 %v4568, %v3056
    %v4575 = vrot.slane %v4569, 1
    %v4576 = vrot.slane %v4570, 1
    %v4577 = vsel %vm313, %v4575, %v4576
    %v4578 = vrot.slane %v4571, 1
    %v4579 = vsel %vm313, %v4576, %v4578
    %v4582 = vadd.f32 %v4565, %v4577
    %v4583 = vadd.f32 %v4566, %v4579
    %s4584 = sld [smem:[#allocation7 + $0xaf]]
    %v4585 = vstv %s4584
    %v4586 = vmul.f32 %v4585, %v3055
    %v4587 = vmul.f32 %v4585, %v3051
    %v4588 = vmul.f32 %v4585, %v3056
    %v4592 = vrot.slane %v4586, 1
    %v4593 = vrot.slane %v4587, 1
    %v4594 = vsel %vm313, %v4592, %v4593
    %v4595 = vrot.slane %v4588, 1
    %v4596 = vsel %vm313, %v4593, %v4595
    %4597 = vrot.lane.b32.xlu0 %v4594, 127
    %v4598 = vpop.permute.xlu0 %4597
    %4599 = vrot.lane.b32.xlu0 %v4596, 127
    %v4600 = vpop.permute.xlu0 %4599
    %v4603 = vadd.f32 %v4582, %v4598
    %v4604 = vadd.f32 %v4583, %v4600
    %s4605 = sld [smem:[#allocation7 + $0xb0]]
    %v4606 = vstv %s4605
    %v4607 = vmul.f32 %v4606, %v3055
    %v4608 = vmul.f32 %v4606, %v3051
    %v4609 = vmul.f32 %v4606, %v3056
    %v4613 = vrot.slane %v4607, 1
    %v4614 = vrot.slane %v4608, 1
    %v4615 = vsel %vm313, %v4613, %v4614
    %v4616 = vrot.slane %v4609, 1
    %v4617 = vsel %vm313, %v4614, %v4616
    %4618 = vrot.lane.b32.xlu0 %v4615, 126
    %v4619 = vpop.permute.xlu0 %4618
    %4620 = vrot.lane.b32.xlu0 %v4617, 126
    %v4621 = vpop.permute.xlu0 %4620
    %v4624 = vadd.f32 %v4603, %v4619
    %v4625 = vadd.f32 %v4604, %v4621
    %s4626 = sld [smem:[#allocation7 + $0xb1]]
    %v4627 = vstv %s4626
    %v4628 = vmul.f32 %v4627, %v3055
    %v4629 = vmul.f32 %v4627, %v3051
    %v4630 = vmul.f32 %v4627, %v3056
    %v4634 = vrot.slane %v4628, 2
    %v4635 = vrot.slane %v4629, 2
    %v4636 = vsel %vm373, %v4634, %v4635
    %v4637 = vrot.slane %v4630, 2
    %v4638 = vsel %vm373, %v4635, %v4637
    %v4641 = vadd.f32 %v4624, %v4636
    %v4642 = vadd.f32 %v4625, %v4638
    %s4643 = sld [smem:[#allocation7 + $0xb2]]
    %v4644 = vstv %s4643
    %v4645 = vmul.f32 %v4644, %v3055
    %v4646 = vmul.f32 %v4644, %v3051
    %v4647 = vmul.f32 %v4644, %v3056
    %v4651 = vrot.slane %v4645, 2
    %v4652 = vrot.slane %v4646, 2
    %v4653 = vsel %vm373, %v4651, %v4652
    %v4654 = vrot.slane %v4647, 2
    %v4655 = vsel %vm373, %v4652, %v4654
    %4656 = vrot.lane.b32.xlu0 %v4653, 127
    %v4657 = vpop.permute.xlu0 %4656
    %4658 = vrot.lane.b32.xlu0 %v4655, 127
    %v4659 = vpop.permute.xlu0 %4658
    %v4662 = vadd.f32 %v4641, %v4657
    %v4663 = vadd.f32 %v4642, %v4659
    %s4664 = sld [smem:[#allocation7 + $0xb3]]
    %v4665 = vstv %s4664
    %v4666 = vmul.f32 %v4665, %v3055
    %v4667 = vmul.f32 %v4665, %v3051
    %v4668 = vmul.f32 %v4665, %v3056
    %v4672 = vrot.slane %v4666, 2
    %v4673 = vrot.slane %v4667, 2
    %v4674 = vsel %vm373, %v4672, %v4673
    %v4675 = vrot.slane %v4668, 2
    %v4676 = vsel %vm373, %v4673, %v4675
    %4677 = vrot.lane.b32.xlu0 %v4674, 126
    %v4678 = vpop.permute.xlu0 %4677
    %4679 = vrot.lane.b32.xlu0 %v4676, 126
    %v4680 = vpop.permute.xlu0 %4679
    %v4683 = vadd.f32 %v4662, %v4678
    %v4684 = vadd.f32 %v4663, %v4680
    %s4685 = sld [smem:[#allocation7 + $0xe1]]
    %v4686 = vstv %s4685
    %v4687 = vmul.f32 %v4686, %v3055
    %v4688 = vmul.f32 %v4686, %v3051
    %v4689 = vadd.f32 %v3923, %v4687
    %v4690 = vadd.f32 %v3924, %v4688
    %s4691 = sld [smem:[#allocation7 + $0xe2]]
    %v4692 = vstv %s4691
    %v4693 = vmul.f32 %v4692, %v3055
    %v4694 = vmul.f32 %v4692, %v3051
    %4697 = vrot.lane.b32.xlu0 %v4693, 127
    %v4698 = vpop.permute.xlu0 %4697
    %4699 = vrot.lane.b32.xlu0 %v4694, 127
    %v4700 = vpop.permute.xlu0 %4699
    %v4703 = vadd.f32 %v4689, %v4698
    %v4704 = vadd.f32 %v4690, %v4700
    %s4705 = sld [smem:[#allocation7 + $0xe3]]
    %v4706 = vstv %s4705
    %v4707 = vmul.f32 %v4706, %v3055
    %v4708 = vmul.f32 %v4706, %v3051
    %4711 = vrot.lane.b32.xlu0 %v4707, 126
    %v4712 = vpop.permute.xlu0 %4711
    %4713 = vrot.lane.b32.xlu0 %v4708, 126
    %v4714 = vpop.permute.xlu0 %4713
    %v4717 = vadd.f32 %v4703, %v4712
    %v4718 = vadd.f32 %v4704, %v4714
    %s4719 = sld [smem:[#allocation7 + $0xe4]]
    %v4720 = vstv %s4719
    %v4721 = vmul.f32 %v4720, %v3055
    %v4722 = vmul.f32 %v4720, %v3051
    %v4723 = vmul.f32 %v4720, %v3056
    %v4727 = vrot.slane %v4721, 1
    %v4728 = vrot.slane %v4722, 1
    %v4729 = vsel %vm313, %v4727, %v4728
    %v4730 = vrot.slane %v4723, 1
    %v4731 = vsel %vm313, %v4728, %v4730
    %v4734 = vadd.f32 %v4717, %v4729
    %v4735 = vadd.f32 %v4718, %v4731
    %s4736 = sld [smem:[#allocation7 + $0xe5]]
    %v4737 = vstv %s4736
    %v4738 = vmul.f32 %v4737, %v3055
    %v4739 = vmul.f32 %v4737, %v3051
    %v4740 = vmul.f32 %v4737, %v3056
    %v4744 = vrot.slane %v4738, 1
    %v4745 = vrot.slane %v4739, 1
    %v4746 = vsel %vm313, %v4744, %v4745
    %v4747 = vrot.slane %v4740, 1
    %v4748 = vsel %vm313, %v4745, %v4747
    %4749 = vrot.lane.b32.xlu0 %v4746, 127
    %v4750 = vpop.permute.xlu0 %4749
    %4751 = vrot.lane.b32.xlu0 %v4748, 127
    %v4752 = vpop.permute.xlu0 %4751
    %v4755 = vadd.f32 %v4734, %v4750
    %v4756 = vadd.f32 %v4735, %v4752
    %s4757 = sld [smem:[#allocation7 + $0xe6]]
    %v4758 = vstv %s4757
    %v4759 = vmul.f32 %v4758, %v3055
    %v4760 = vmul.f32 %v4758, %v3051
    %v4761 = vmul.f32 %v4758, %v3056
    %v4765 = vrot.slane %v4759, 1
    %v4766 = vrot.slane %v4760, 1
    %v4767 = vsel %vm313, %v4765, %v4766
    %v4768 = vrot.slane %v4761, 1
    %v4769 = vsel %vm313, %v4766, %v4768
    %4770 = vrot.lane.b32.xlu0 %v4767, 126
    %v4771 = vpop.permute.xlu0 %4770
    %4772 = vrot.lane.b32.xlu0 %v4769, 126
    %v4773 = vpop.permute.xlu0 %4772
    %v4776 = vadd.f32 %v4755, %v4771
    %v4777 = vadd.f32 %v4756, %v4773
    %s4778 = sld [smem:[#allocation7 + $0xe7]]
    %v4779 = vstv %s4778
    %v4780 = vmul.f32 %v4779, %v3055
    %v4781 = vmul.f32 %v4779, %v3051
    %v4782 = vmul.f32 %v4779, %v3056
    %v4786 = vrot.slane %v4780, 2
    %v4787 = vrot.slane %v4781, 2
    %v4788 = vsel %vm373, %v4786, %v4787
    %v4789 = vrot.slane %v4782, 2
    %v4790 = vsel %vm373, %v4787, %v4789
    %v4793 = vadd.f32 %v4776, %v4788
    %v4794 = vadd.f32 %v4777, %v4790
    %s4795 = sld [smem:[#allocation7 + $0xe8]]
    %v4796 = vstv %s4795
    %v4797 = vmul.f32 %v4796, %v3055
    %v4798 = vmul.f32 %v4796, %v3051
    %v4799 = vmul.f32 %v4796, %v3056
    %v4803 = vrot.slane %v4797, 2
    %v4804 = vrot.slane %v4798, 2
    %v4805 = vsel %vm373, %v4803, %v4804
    %v4806 = vrot.slane %v4799, 2
    %v4807 = vsel %vm373, %v4804, %v4806
    %4808 = vrot.lane.b32.xlu0 %v4805, 127
    %v4809 = vpop.permute.xlu0 %4808
    %4810 = vrot.lane.b32.xlu0 %v4807, 127
    %v4811 = vpop.permute.xlu0 %4810
    %v4814 = vadd.f32 %v4793, %v4809
    %v4815 = vadd.f32 %v4794, %v4811
    %s4816 = sld [smem:[#allocation7 + $0xe9]]
    %v4817 = vstv %s4816
    %v4818 = vmul.f32 %v4817, %v3055
    %v4819 = vmul.f32 %v4817, %v3051
    %v4820 = vmul.f32 %v4817, %v3056
    %v4824 = vrot.slane %v4818, 2
    %v4825 = vrot.slane %v4819, 2
    %v4826 = vsel %vm373, %v4824, %v4825
    %v4827 = vrot.slane %v4820, 2
    %v4828 = vsel %vm373, %v4825, %v4827
    %4829 = vrot.lane.b32.xlu0 %v4826, 126
    %v4830 = vpop.permute.xlu0 %4829
    %4831 = vrot.lane.b32.xlu0 %v4828, 126
    %v4832 = vpop.permute.xlu0 %4831
    %v4835 = vadd.f32 %v4814, %v4830
    %v4836 = vadd.f32 %v4815, %v4832
    %s4837 = sld [smem:[#allocation7 + $0x117]]
    %v4838 = vstv %s4837
    %v4839 = vmul.f32 %v4838, %v3055
    %v4840 = vmul.f32 %v4838, %v3051
    %v4841 = vadd.f32 %v4075, %v4839
    %v4842 = vadd.f32 %v4076, %v4840
    %s4843 = sld [smem:[#allocation7 + $0x118]]
    %v4844 = vstv %s4843
    %v4845 = vmul.f32 %v4844, %v3055
    %v4846 = vmul.f32 %v4844, %v3051
    %4849 = vrot.lane.b32.xlu0 %v4845, 127
    %v4850 = vpop.permute.xlu0 %4849
    %4851 = vrot.lane.b32.xlu0 %v4846, 127
    %v4852 = vpop.permute.xlu0 %4851
    %v4855 = vadd.f32 %v4841, %v4850
    %v4856 = vadd.f32 %v4842, %v4852
    %s4857 = sld [smem:[#allocation7 + $0x119]]
    %v4858 = vstv %s4857
    %v4859 = vmul.f32 %v4858, %v3055
    %v4860 = vmul.f32 %v4858, %v3051
    %4863 = vrot.lane.b32.xlu0 %v4859, 126
    %v4864 = vpop.permute.xlu0 %4863
    %4865 = vrot.lane.b32.xlu0 %v4860, 126
    %v4866 = vpop.permute.xlu0 %4865
    %v4869 = vadd.f32 %v4855, %v4864
    %v4870 = vadd.f32 %v4856, %v4866
    %s4871 = sld [smem:[#allocation7 + $0x11a]]
    %v4872 = vstv %s4871
    %v4873 = vmul.f32 %v4872, %v3055
    %v4874 = vmul.f32 %v4872, %v3051
    %v4875 = vmul.f32 %v4872, %v3056
    %v4879 = vrot.slane %v4873, 1
    %v4880 = vrot.slane %v4874, 1
    %v4881 = vsel %vm313, %v4879, %v4880
    %v4882 = vrot.slane %v4875, 1
    %v4883 = vsel %vm313, %v4880, %v4882
    %v4886 = vadd.f32 %v4869, %v4881
    %v4887 = vadd.f32 %v4870, %v4883
    %s4888 = sld [smem:[#allocation7 + $0x11b]]
    %v4889 = vstv %s4888
    %v4890 = vmul.f32 %v4889, %v3055
    %v4891 = vmul.f32 %v4889, %v3051
    %v4892 = vmul.f32 %v4889, %v3056
    %v4896 = vrot.slane %v4890, 1
    %v4897 = vrot.slane %v4891, 1
    %v4898 = vsel %vm313, %v4896, %v4897
    %v4899 = vrot.slane %v4892, 1
    %v4900 = vsel %vm313, %v4897, %v4899
    %4901 = vrot.lane.b32.xlu0 %v4898, 127
    %v4902 = vpop.permute.xlu0 %4901
    %4903 = vrot.lane.b32.xlu0 %v4900, 127
    %v4904 = vpop.permute.xlu0 %4903
    %v4907 = vadd.f32 %v4886, %v4902
    %v4908 = vadd.f32 %v4887, %v4904
    %s4909 = sld [smem:[#allocation7 + $0x11c]]
    %v4910 = vstv %s4909
    %v4911 = vmul.f32 %v4910, %v3055
    %v4912 = vmul.f32 %v4910, %v3051
    %v4913 = vmul.f32 %v4910, %v3056
    %v4917 = vrot.slane %v4911, 1
    %v4918 = vrot.slane %v4912, 1
    %v4919 = vsel %vm313, %v4917, %v4918
    %v4920 = vrot.slane %v4913, 1
    %v4921 = vsel %vm313, %v4918, %v4920
    %4922 = vrot.lane.b32.xlu0 %v4919, 126
    %v4923 = vpop.permute.xlu0 %4922
    %4924 = vrot.lane.b32.xlu0 %v4921, 126
    %v4925 = vpop.permute.xlu0 %4924
    %v4928 = vadd.f32 %v4907, %v4923
    %v4929 = vadd.f32 %v4908, %v4925
    %s4930 = sld [smem:[#allocation7 + $0x11d]]
    %v4931 = vstv %s4930
    %v4932 = vmul.f32 %v4931, %v3055
    %v4933 = vmul.f32 %v4931, %v3051
    %v4934 = vmul.f32 %v4931, %v3056
    %v4938 = vrot.slane %v4932, 2
    %v4939 = vrot.slane %v4933, 2
    %v4940 = vsel %vm373, %v4938, %v4939
    %v4941 = vrot.slane %v4934, 2
    %v4942 = vsel %vm373, %v4939, %v4941
    %v4945 = vadd.f32 %v4928, %v4940
    %v4946 = vadd.f32 %v4929, %v4942
    %s4947 = sld [smem:[#allocation7 + $0x11e]]
    %v4948 = vstv %s4947
    %v4949 = vmul.f32 %v4948, %v3055
    %v4950 = vmul.f32 %v4948, %v3051
    %v4951 = vmul.f32 %v4948, %v3056
    %v4955 = vrot.slane %v4949, 2
    %v4956 = vrot.slane %v4950, 2
    %v4957 = vsel %vm373, %v4955, %v4956
    %v4958 = vrot.slane %v4951, 2
    %v4959 = vsel %vm373, %v4956, %v4958
    %4960 = vrot.lane.b32.xlu0 %v4957, 127
    %v4961 = vpop.permute.xlu0 %4960
    %4962 = vrot.lane.b32.xlu0 %v4959, 127
    %v4963 = vpop.permute.xlu0 %4962
    %v4966 = vadd.f32 %v4945, %v4961
    %v4967 = vadd.f32 %v4946, %v4963
    %s4968 = sld [smem:[#allocation7 + $0x11f]]
    %v4969 = vstv %s4968
    %v4970 = vmul.f32 %v4969, %v3055
    %v4971 = vmul.f32 %v4969, %v3051
    %v4972 = vmul.f32 %v4969, %v3056
    %v4976 = vrot.slane %v4970, 2
    %v4977 = vrot.slane %v4971, 2
    %v4978 = vsel %vm373, %v4976, %v4977
    %v4979 = vrot.slane %v4972, 2
    %v4980 = vsel %vm373, %v4977, %v4979
    %4981 = vrot.lane.b32.xlu0 %v4978, 126
    %v4982 = vpop.permute.xlu0 %4981
    %4983 = vrot.lane.b32.xlu0 %v4980, 126
    %v4984 = vpop.permute.xlu0 %4983
    %v4987 = vadd.f32 %v4966, %v4982
    %v4988 = vadd.f32 %v4967, %v4984
    %s4989 = sld [smem:[#allocation7 + $0x12]]
    %v4990 = vstv %s4989
    %v4991 = vmul.f32 %v4990, %v3079
    %v4992 = vmul.f32 %v4990, %v3075
    %v4993 = vadd.f32 %v4227, %v4991
    %v4994 = vadd.f32 %v4228, %v4992
    %s4995 = sld [smem:[#allocation7 + $0x13]]
    %v4996 = vstv %s4995
    %v4997 = vmul.f32 %v4996, %v3079
    %v4998 = vmul.f32 %v4996, %v3075
    %5001 = vrot.lane.b32.xlu0 %v4997, 127
    %v5002 = vpop.permute.xlu0 %5001
    %5003 = vrot.lane.b32.xlu0 %v4998, 127
    %v5004 = vpop.permute.xlu0 %5003
    %v5007 = vadd.f32 %v4993, %v5002
    %v5008 = vadd.f32 %v4994, %v5004
    %s5009 = sld [smem:[#allocation7 + $0x14]]
    %v5010 = vstv %s5009
    %v5011 = vmul.f32 %v5010, %v3079
    %v5012 = vmul.f32 %v5010, %v3075
    %5015 = vrot.lane.b32.xlu0 %v5011, 126
    %v5016 = vpop.permute.xlu0 %5015
    %5017 = vrot.lane.b32.xlu0 %v5012, 126
    %v5018 = vpop.permute.xlu0 %5017
    %v5021 = vadd.f32 %v5007, %v5016
    %v5022 = vadd.f32 %v5008, %v5018
    %s5023 = sld [smem:[#allocation7 + $0x15]]
    %v5024 = vstv %s5023
    %v5025 = vmul.f32 %v5024, %v3079
    %v5026 = vmul.f32 %v5024, %v3075
    %v5027 = vmul.f32 %v5024, %v3080
    %v5031 = vrot.slane %v5025, 1
    %v5032 = vrot.slane %v5026, 1
    %v5033 = vsel %vm313, %v5031, %v5032
    %v5034 = vrot.slane %v5027, 1
    %v5035 = vsel %vm313, %v5032, %v5034
    %v5038 = vadd.f32 %v5021, %v5033
    %v5039 = vadd.f32 %v5022, %v5035
    %s5040 = sld [smem:[#allocation7 + $0x16]]
    %v5041 = vstv %s5040
    %v5042 = vmul.f32 %v5041, %v3079
    %v5043 = vmul.f32 %v5041, %v3075
    %v5044 = vmul.f32 %v5041, %v3080
    %v5048 = vrot.slane %v5042, 1
    %v5049 = vrot.slane %v5043, 1
    %v5050 = vsel %vm313, %v5048, %v5049
    %v5051 = vrot.slane %v5044, 1
    %v5052 = vsel %vm313, %v5049, %v5051
    %5053 = vrot.lane.b32.xlu0 %v5050, 127
    %v5054 = vpop.permute.xlu0 %5053
    %5055 = vrot.lane.b32.xlu0 %v5052, 127
    %v5056 = vpop.permute.xlu0 %5055
    %v5059 = vadd.f32 %v5038, %v5054
    %v5060 = vadd.f32 %v5039, %v5056
    %s5061 = sld [smem:[#allocation7 + $0x17]]
    %v5062 = vstv %s5061
    %v5063 = vmul.f32 %v5062, %v3079
    %v5064 = vmul.f32 %v5062, %v3075
    %v5065 = vmul.f32 %v5062, %v3080
    %v5069 = vrot.slane %v5063, 1
    %v5070 = vrot.slane %v5064, 1
    %v5071 = vsel %vm313, %v5069, %v5070
    %v5072 = vrot.slane %v5065, 1
    %v5073 = vsel %vm313, %v5070, %v5072
    %5074 = vrot.lane.b32.xlu0 %v5071, 126
    %v5075 = vpop.permute.xlu0 %5074
    %5076 = vrot.lane.b32.xlu0 %v5073, 126
    %v5077 = vpop.permute.xlu0 %5076
    %v5080 = vadd.f32 %v5059, %v5075
    %v5081 = vadd.f32 %v5060, %v5077
    %s5082 = sld [smem:[#allocation7 + $0x18]]
    %v5083 = vstv %s5082
    %v5084 = vmul.f32 %v5083, %v3079
    %v5085 = vmul.f32 %v5083, %v3075
    %v5086 = vmul.f32 %v5083, %v3080
    %v5090 = vrot.slane %v5084, 2
    %v5091 = vrot.slane %v5085, 2
    %v5092 = vsel %vm373, %v5090, %v5091
    %v5093 = vrot.slane %v5086, 2
    %v5094 = vsel %vm373, %v5091, %v5093
    %v5097 = vadd.f32 %v5080, %v5092
    %v5098 = vadd.f32 %v5081, %v5094
    %s5099 = sld [smem:[#allocation7 + $0x19]]
    %v5100 = vstv %s5099
    %v5101 = vmul.f32 %v5100, %v3079
    %v5102 = vmul.f32 %v5100, %v3075
    %v5103 = vmul.f32 %v5100, %v3080
    %v5107 = vrot.slane %v5101, 2
    %v5108 = vrot.slane %v5102, 2
    %v5109 = vsel %vm373, %v5107, %v5108
    %v5110 = vrot.slane %v5103, 2
    %v5111 = vsel %vm373, %v5108, %v5110
    %5112 = vrot.lane.b32.xlu0 %v5109, 127
    %v5113 = vpop.permute.xlu0 %5112
    %5114 = vrot.lane.b32.xlu0 %v5111, 127
    %v5115 = vpop.permute.xlu0 %5114
    %v5118 = vadd.f32 %v5097, %v5113
    %v5119 = vadd.f32 %v5098, %v5115
    %s5120 = sld [smem:[#allocation7 + $0x1a]]
    %v5121 = vstv %s5120
    %v5122 = vmul.f32 %v5121, %v3079
    %v5123 = vmul.f32 %v5121, %v3075
    %v5124 = vmul.f32 %v5121, %v3080
    %v5128 = vrot.slane %v5122, 2
    %v5129 = vrot.slane %v5123, 2
    %v5130 = vsel %vm373, %v5128, %v5129
    %v5131 = vrot.slane %v5124, 2
    %v5132 = vsel %vm373, %v5129, %v5131
    %5133 = vrot.lane.b32.xlu0 %v5130, 126
    %v5134 = vpop.permute.xlu0 %5133
    %5135 = vrot.lane.b32.xlu0 %v5132, 126
    %v5136 = vpop.permute.xlu0 %5135
    %v5139 = vadd.f32 %v5118, %v5134
    %v5140 = vadd.f32 %v5119, %v5136
    %s5141 = sld [smem:[#allocation7 + $0x48]]
    %v5142 = vstv %s5141
    %v5143 = vmul.f32 %v5142, %v3079
    %v5144 = vmul.f32 %v5142, %v3075
    %v5145 = vadd.f32 %v4379, %v5143
    %v5146 = vadd.f32 %v4380, %v5144
    %s5147 = sld [smem:[#allocation7 + $0x49]]
    %v5148 = vstv %s5147
    %v5149 = vmul.f32 %v5148, %v3079
    %v5150 = vmul.f32 %v5148, %v3075
    %5153 = vrot.lane.b32.xlu0 %v5149, 127
    %v5154 = vpop.permute.xlu0 %5153
    %5155 = vrot.lane.b32.xlu0 %v5150, 127
    %v5156 = vpop.permute.xlu0 %5155
    %v5159 = vadd.f32 %v5145, %v5154
    %v5160 = vadd.f32 %v5146, %v5156
    %s5161 = sld [smem:[#allocation7 + $0x4a]]
    %v5162 = vstv %s5161
    %v5163 = vmul.f32 %v5162, %v3079
    %v5164 = vmul.f32 %v5162, %v3075
    %5167 = vrot.lane.b32.xlu0 %v5163, 126
    %v5168 = vpop.permute.xlu0 %5167
    %5169 = vrot.lane.b32.xlu0 %v5164, 126
    %v5170 = vpop.permute.xlu0 %5169
    %v5173 = vadd.f32 %v5159, %v5168
    %v5174 = vadd.f32 %v5160, %v5170
    %s5175 = sld [smem:[#allocation7 + $0x4b]]
    %v5176 = vstv %s5175
    %v5177 = vmul.f32 %v5176, %v3079
    %v5178 = vmul.f32 %v5176, %v3075
    %v5179 = vmul.f32 %v5176, %v3080
    %v5183 = vrot.slane %v5177, 1
    %v5184 = vrot.slane %v5178, 1
    %v5185 = vsel %vm313, %v5183, %v5184
    %v5186 = vrot.slane %v5179, 1
    %v5187 = vsel %vm313, %v5184, %v5186
    %v5190 = vadd.f32 %v5173, %v5185
    %v5191 = vadd.f32 %v5174, %v5187
    %s5192 = sld [smem:[#allocation7 + $0x4c]]
    %v5193 = vstv %s5192
    %v5194 = vmul.f32 %v5193, %v3079
    %v5195 = vmul.f32 %v5193, %v3075
    %v5196 = vmul.f32 %v5193, %v3080
    %v5200 = vrot.slane %v5194, 1
    %v5201 = vrot.slane %v5195, 1
    %v5202 = vsel %vm313, %v5200, %v5201
    %v5203 = vrot.slane %v5196, 1
    %v5204 = vsel %vm313, %v5201, %v5203
    %5205 = vrot.lane.b32.xlu0 %v5202, 127
    %v5206 = vpop.permute.xlu0 %5205
    %5207 = vrot.lane.b32.xlu0 %v5204, 127
    %v5208 = vpop.permute.xlu0 %5207
    %v5211 = vadd.f32 %v5190, %v5206
    %v5212 = vadd.f32 %v5191, %v5208
    %s5213 = sld [smem:[#allocation7 + $0x4d]]
    %v5214 = vstv %s5213
    %v5215 = vmul.f32 %v5214, %v3079
    %v5216 = vmul.f32 %v5214, %v3075
    %v5217 = vmul.f32 %v5214, %v3080
    %v5221 = vrot.slane %v5215, 1
    %v5222 = vrot.slane %v5216, 1
    %v5223 = vsel %vm313, %v5221, %v5222
    %v5224 = vrot.slane %v5217, 1
    %v5225 = vsel %vm313, %v5222, %v5224
    %5226 = vrot.lane.b32.xlu0 %v5223, 126
    %v5227 = vpop.permute.xlu0 %5226
    %5228 = vrot.lane.b32.xlu0 %v5225, 126
    %v5229 = vpop.permute.xlu0 %5228
    %v5232 = vadd.f32 %v5211, %v5227
    %v5233 = vadd.f32 %v5212, %v5229
    %s5234 = sld [smem:[#allocation7 + $0x4e]]
    %v5235 = vstv %s5234
    %v5236 = vmul.f32 %v5235, %v3079
    %v5237 = vmul.f32 %v5235, %v3075
    %v5238 = vmul.f32 %v5235, %v3080
    %v5242 = vrot.slane %v5236, 2
    %v5243 = vrot.slane %v5237, 2
    %v5244 = vsel %vm373, %v5242, %v5243
    %v5245 = vrot.slane %v5238, 2
    %v5246 = vsel %vm373, %v5243, %v5245
    %v5249 = vadd.f32 %v5232, %v5244
    %v5250 = vadd.f32 %v5233, %v5246
    %s5251 = sld [smem:[#allocation7 + $0x4f]]
    %v5252 = vstv %s5251
    %v5253 = vmul.f32 %v5252, %v3079
    %v5254 = vmul.f32 %v5252, %v3075
    %v5255 = vmul.f32 %v5252, %v3080
    %v5259 = vrot.slane %v5253, 2
    %v5260 = vrot.slane %v5254, 2
    %v5261 = vsel %vm373, %v5259, %v5260
    %v5262 = vrot.slane %v5255, 2
    %v5263 = vsel %vm373, %v5260, %v5262
    %5264 = vrot.lane.b32.xlu0 %v5261, 127
    %v5265 = vpop.permute.xlu0 %5264
    %5266 = vrot.lane.b32.xlu0 %v5263, 127
    %v5267 = vpop.permute.xlu0 %5266
    %v5270 = vadd.f32 %v5249, %v5265
    %v5271 = vadd.f32 %v5250, %v5267
    %s5272 = sld [smem:[#allocation7 + $0x50]]
    %v5273 = vstv %s5272
    %v5274 = vmul.f32 %v5273, %v3079
    %v5275 = vmul.f32 %v5273, %v3075
    %v5276 = vmul.f32 %v5273, %v3080
    %v5280 = vrot.slane %v5274, 2
    %v5281 = vrot.slane %v5275, 2
    %v5282 = vsel %vm373, %v5280, %v5281
    %v5283 = vrot.slane %v5276, 2
    %v5284 = vsel %vm373, %v5281, %v5283
    %5285 = vrot.lane.b32.xlu0 %v5282, 126
    %v5286 = vpop.permute.xlu0 %5285
    %5287 = vrot.lane.b32.xlu0 %v5284, 126
    %v5288 = vpop.permute.xlu0 %5287
    %v5291 = vadd.f32 %v5270, %v5286
    %v5292 = vadd.f32 %v5271, %v5288
    %s5293 = sld [smem:[#allocation7 + $0x7e]]
    %v5294 = vstv %s5293
    %v5295 = vmul.f32 %v5294, %v3079
    %v5296 = vmul.f32 %v5294, %v3075
    %v5297 = vadd.f32 %v4531, %v5295
    %v5298 = vadd.f32 %v4532, %v5296
    %s5299 = sld [smem:[#allocation7 + $0x7f]]
    %v5300 = vstv %s5299
    %v5301 = vmul.f32 %v5300, %v3079
    %v5302 = vmul.f32 %v5300, %v3075
    %5305 = vrot.lane.b32.xlu0 %v5301, 127
    %v5306 = vpop.permute.xlu0 %5305
    %5307 = vrot.lane.b32.xlu0 %v5302, 127
    %v5308 = vpop.permute.xlu0 %5307
    %v5311 = vadd.f32 %v5297, %v5306
    %v5312 = vadd.f32 %v5298, %v5308
    %s5313 = sld [smem:[#allocation7 + $0x80]]
    %v5314 = vstv %s5313
    %v5315 = vmul.f32 %v5314, %v3079
    %v5316 = vmul.f32 %v5314, %v3075
    %5319 = vrot.lane.b32.xlu0 %v5315, 126
    %v5320 = vpop.permute.xlu0 %5319
    %5321 = vrot.lane.b32.xlu0 %v5316, 126
    %v5322 = vpop.permute.xlu0 %5321
    %v5325 = vadd.f32 %v5311, %v5320
    %v5326 = vadd.f32 %v5312, %v5322
    %s5327 = sld [smem:[#allocation7 + $0x81]]
    %v5328 = vstv %s5327
    %v5329 = vmul.f32 %v5328, %v3079
    %v5330 = vmul.f32 %v5328, %v3075
    %v5331 = vmul.f32 %v5328, %v3080
    %v5335 = vrot.slane %v5329, 1
    %v5336 = vrot.slane %v5330, 1
    %v5337 = vsel %vm313, %v5335, %v5336
    %v5338 = vrot.slane %v5331, 1
    %v5339 = vsel %vm313, %v5336, %v5338
    %v5342 = vadd.f32 %v5325, %v5337
    %v5343 = vadd.f32 %v5326, %v5339
    %s5344 = sld [smem:[#allocation7 + $0x82]]
    %v5345 = vstv %s5344
    %v5346 = vmul.f32 %v5345, %v3079
    %v5347 = vmul.f32 %v5345, %v3075
    %v5348 = vmul.f32 %v5345, %v3080
    %v5352 = vrot.slane %v5346, 1
    %v5353 = vrot.slane %v5347, 1
    %v5354 = vsel %vm313, %v5352, %v5353
    %v5355 = vrot.slane %v5348, 1
    %v5356 = vsel %vm313, %v5353, %v5355
    %5357 = vrot.lane.b32.xlu0 %v5354, 127
    %v5358 = vpop.permute.xlu0 %5357
    %5359 = vrot.lane.b32.xlu0 %v5356, 127
    %v5360 = vpop.permute.xlu0 %5359
    %v5363 = vadd.f32 %v5342, %v5358
    %v5364 = vadd.f32 %v5343, %v5360
    %s5365 = sld [smem:[#allocation7 + $0x83]]
    %v5366 = vstv %s5365
    %v5367 = vmul.f32 %v5366, %v3079
    %v5368 = vmul.f32 %v5366, %v3075
    %v5369 = vmul.f32 %v5366, %v3080
    %v5373 = vrot.slane %v5367, 1
    %v5374 = vrot.slane %v5368, 1
    %v5375 = vsel %vm313, %v5373, %v5374
    %v5376 = vrot.slane %v5369, 1
    %v5377 = vsel %vm313, %v5374, %v5376
    %5378 = vrot.lane.b32.xlu0 %v5375, 126
    %v5379 = vpop.permute.xlu0 %5378
    %5380 = vrot.lane.b32.xlu0 %v5377, 126
    %v5381 = vpop.permute.xlu0 %5380
    %v5384 = vadd.f32 %v5363, %v5379
    %v5385 = vadd.f32 %v5364, %v5381
    %s5386 = sld [smem:[#allocation7 + $0x84]]
    %v5387 = vstv %s5386
    %v5388 = vmul.f32 %v5387, %v3079
    %v5389 = vmul.f32 %v5387, %v3075
    %v5390 = vmul.f32 %v5387, %v3080
    %v5394 = vrot.slane %v5388, 2
    %v5395 = vrot.slane %v5389, 2
    %v5396 = vsel %vm373, %v5394, %v5395
    %v5397 = vrot.slane %v5390, 2
    %v5398 = vsel %vm373, %v5395, %v5397
    %v5401 = vadd.f32 %v5384, %v5396
    %v5402 = vadd.f32 %v5385, %v5398
    %s5403 = sld [smem:[#allocation7 + $0x85]]
    %v5404 = vstv %s5403
    %v5405 = vmul.f32 %v5404, %v3079
    %v5406 = vmul.f32 %v5404, %v3075
    %v5407 = vmul.f32 %v5404, %v3080
    %v5411 = vrot.slane %v5405, 2
    %v5412 = vrot.slane %v5406, 2
    %v5413 = vsel %vm373, %v5411, %v5412
    %v5414 = vrot.slane %v5407, 2
    %v5415 = vsel %vm373, %v5412, %v5414
    %5416 = vrot.lane.b32.xlu0 %v5413, 127
    %v5417 = vpop.permute.xlu0 %5416
    %5418 = vrot.lane.b32.xlu0 %v5415, 127
    %v5419 = vpop.permute.xlu0 %5418
    %v5422 = vadd.f32 %v5401, %v5417
    %v5423 = vadd.f32 %v5402, %v5419
    %s5424 = sld [smem:[#allocation7 + $0x86]]
    %v5425 = vstv %s5424
    %v5426 = vmul.f32 %v5425, %v3079
    %v5427 = vmul.f32 %v5425, %v3075
    %v5428 = vmul.f32 %v5425, %v3080
    %v5432 = vrot.slane %v5426, 2
    %v5433 = vrot.slane %v5427, 2
    %v5434 = vsel %vm373, %v5432, %v5433
    %v5435 = vrot.slane %v5428, 2
    %v5436 = vsel %vm373, %v5433, %v5435
    %5437 = vrot.lane.b32.xlu0 %v5434, 126
    %v5438 = vpop.permute.xlu0 %5437
    %5439 = vrot.lane.b32.xlu0 %v5436, 126
    %v5440 = vpop.permute.xlu0 %5439
    %v5443 = vadd.f32 %v5422, %v5438
    %v5444 = vadd.f32 %v5423, %v5440
    %s5445 = sld [smem:[#allocation7 + $0xb4]]
    %v5446 = vstv %s5445
    %v5447 = vmul.f32 %v5446, %v3079
    %v5448 = vmul.f32 %v5446, %v3075
    %v5449 = vadd.f32 %v4683, %v5447
    %v5450 = vadd.f32 %v4684, %v5448
    %s5451 = sld [smem:[#allocation7 + $0xb5]]
    %v5452 = vstv %s5451
    %v5453 = vmul.f32 %v5452, %v3079
    %v5454 = vmul.f32 %v5452, %v3075
    %5457 = vrot.lane.b32.xlu0 %v5453, 127
    %v5458 = vpop.permute.xlu0 %5457
    %5459 = vrot.lane.b32.xlu0 %v5454, 127
    %v5460 = vpop.permute.xlu0 %5459
    %v5463 = vadd.f32 %v5449, %v5458
    %v5464 = vadd.f32 %v5450, %v5460
    %s5465 = sld [smem:[#allocation7 + $0xb6]]
    %v5466 = vstv %s5465
    %v5467 = vmul.f32 %v5466, %v3079
    %v5468 = vmul.f32 %v5466, %v3075
    %5471 = vrot.lane.b32.xlu0 %v5467, 126
    %v5472 = vpop.permute.xlu0 %5471
    %5473 = vrot.lane.b32.xlu0 %v5468, 126
    %v5474 = vpop.permute.xlu0 %5473
    %v5477 = vadd.f32 %v5463, %v5472
    %v5478 = vadd.f32 %v5464, %v5474
    %s5479 = sld [smem:[#allocation7 + $0xb7]]
    %v5480 = vstv %s5479
    %v5481 = vmul.f32 %v5480, %v3079
    %v5482 = vmul.f32 %v5480, %v3075
    %v5483 = vmul.f32 %v5480, %v3080
    %v5487 = vrot.slane %v5481, 1
    %v5488 = vrot.slane %v5482, 1
    %v5489 = vsel %vm313, %v5487, %v5488
    %v5490 = vrot.slane %v5483, 1
    %v5491 = vsel %vm313, %v5488, %v5490
    %v5494 = vadd.f32 %v5477, %v5489
    %v5495 = vadd.f32 %v5478, %v5491
    %s5496 = sld [smem:[#allocation7 + $0xb8]]
    %v5497 = vstv %s5496
    %v5498 = vmul.f32 %v5497, %v3079
    %v5499 = vmul.f32 %v5497, %v3075
    %v5500 = vmul.f32 %v5497, %v3080
    %v5504 = vrot.slane %v5498, 1
    %v5505 = vrot.slane %v5499, 1
    %v5506 = vsel %vm313, %v5504, %v5505
    %v5507 = vrot.slane %v5500, 1
    %v5508 = vsel %vm313, %v5505, %v5507
    %5509 = vrot.lane.b32.xlu0 %v5506, 127
    %v5510 = vpop.permute.xlu0 %5509
    %5511 = vrot.lane.b32.xlu0 %v5508, 127
    %v5512 = vpop.permute.xlu0 %5511
    %v5515 = vadd.f32 %v5494, %v5510
    %v5516 = vadd.f32 %v5495, %v5512
    %s5517 = sld [smem:[#allocation7 + $0xb9]]
    %v5518 = vstv %s5517
    %v5519 = vmul.f32 %v5518, %v3079
    %v5520 = vmul.f32 %v5518, %v3075
    %v5521 = vmul.f32 %v5518, %v3080
    %v5525 = vrot.slane %v5519, 1
    %v5526 = vrot.slane %v5520, 1
    %v5527 = vsel %vm313, %v5525, %v5526
    %v5528 = vrot.slane %v5521, 1
    %v5529 = vsel %vm313, %v5526, %v5528
    %5530 = vrot.lane.b32.xlu0 %v5527, 126
    %v5531 = vpop.permute.xlu0 %5530
    %5532 = vrot.lane.b32.xlu0 %v5529, 126
    %v5533 = vpop.permute.xlu0 %5532
    %v5536 = vadd.f32 %v5515, %v5531
    %v5537 = vadd.f32 %v5516, %v5533
    %s5538 = sld [smem:[#allocation7 + $0xba]]
    %v5539 = vstv %s5538
    %v5540 = vmul.f32 %v5539, %v3079
    %v5541 = vmul.f32 %v5539, %v3075
    %v5542 = vmul.f32 %v5539, %v3080
    %v5546 = vrot.slane %v5540, 2
    %v5547 = vrot.slane %v5541, 2
    %v5548 = vsel %vm373, %v5546, %v5547
    %v5549 = vrot.slane %v5542, 2
    %v5550 = vsel %vm373, %v5547, %v5549
    %v5553 = vadd.f32 %v5536, %v5548
    %v5554 = vadd.f32 %v5537, %v5550
    %s5555 = sld [smem:[#allocation7 + $0xbb]]
    %v5556 = vstv %s5555
    %v5557 = vmul.f32 %v5556, %v3079
    %v5558 = vmul.f32 %v5556, %v3075
    %v5559 = vmul.f32 %v5556, %v3080
    %v5563 = vrot.slane %v5557, 2
    %v5564 = vrot.slane %v5558, 2
    %v5565 = vsel %vm373, %v5563, %v5564
    %v5566 = vrot.slane %v5559, 2
    %v5567 = vsel %vm373, %v5564, %v5566
    %5568 = vrot.lane.b32.xlu0 %v5565, 127
    %v5569 = vpop.permute.xlu0 %5568
    %5570 = vrot.lane.b32.xlu0 %v5567, 127
    %v5571 = vpop.permute.xlu0 %5570
    %v5574 = vadd.f32 %v5553, %v5569
    %v5575 = vadd.f32 %v5554, %v5571
    %s5576 = sld [smem:[#allocation7 + $0xbc]]
    %v5577 = vstv %s5576
    %v5578 = vmul.f32 %v5577, %v3079
    %v5579 = vmul.f32 %v5577, %v3075
    %v5580 = vmul.f32 %v5577, %v3080
    %v5584 = vrot.slane %v5578, 2
    %v5585 = vrot.slane %v5579, 2
    %v5586 = vsel %vm373, %v5584, %v5585
    %v5587 = vrot.slane %v5580, 2
    %v5588 = vsel %vm373, %v5585, %v5587
    %5589 = vrot.lane.b32.xlu0 %v5586, 126
    %v5590 = vpop.permute.xlu0 %5589
    %5591 = vrot.lane.b32.xlu0 %v5588, 126
    %v5592 = vpop.permute.xlu0 %5591
    %v5595 = vadd.f32 %v5574, %v5590
    %v5596 = vadd.f32 %v5575, %v5592
    %s5597 = sld [smem:[#allocation7 + $0xea]]
    %v5598 = vstv %s5597
    %v5599 = vmul.f32 %v5598, %v3079
    %v5600 = vmul.f32 %v5598, %v3075
    %v5601 = vadd.f32 %v4835, %v5599
    %v5602 = vadd.f32 %v4836, %v5600
    %s5603 = sld [smem:[#allocation7 + $0xeb]]
    %v5604 = vstv %s5603
    %v5605 = vmul.f32 %v5604, %v3079
    %v5606 = vmul.f32 %v5604, %v3075
    %5609 = vrot.lane.b32.xlu0 %v5605, 127
    %v5610 = vpop.permute.xlu0 %5609
    %5611 = vrot.lane.b32.xlu0 %v5606, 127
    %v5612 = vpop.permute.xlu0 %5611
    %v5615 = vadd.f32 %v5601, %v5610
    %v5616 = vadd.f32 %v5602, %v5612
    %s5617 = sld [smem:[#allocation7 + $0xec]]
    %v5618 = vstv %s5617
    %v5619 = vmul.f32 %v5618, %v3079
    %v5620 = vmul.f32 %v5618, %v3075
    %5623 = vrot.lane.b32.xlu0 %v5619, 126
    %v5624 = vpop.permute.xlu0 %5623
    %5625 = vrot.lane.b32.xlu0 %v5620, 126
    %v5626 = vpop.permute.xlu0 %5625
    %v5629 = vadd.f32 %v5615, %v5624
    %v5630 = vadd.f32 %v5616, %v5626
    %s5631 = sld [smem:[#allocation7 + $0xed]]
    %v5632 = vstv %s5631
    %v5633 = vmul.f32 %v5632, %v3079
    %v5634 = vmul.f32 %v5632, %v3075
    %v5635 = vmul.f32 %v5632, %v3080
    %v5639 = vrot.slane %v5633, 1
    %v5640 = vrot.slane %v5634, 1
    %v5641 = vsel %vm313, %v5639, %v5640
    %v5642 = vrot.slane %v5635, 1
    %v5643 = vsel %vm313, %v5640, %v5642
    %v5646 = vadd.f32 %v5629, %v5641
    %v5647 = vadd.f32 %v5630, %v5643
    %s5648 = sld [smem:[#allocation7 + $0xee]]
    %v5649 = vstv %s5648
    %v5650 = vmul.f32 %v5649, %v3079
    %v5651 = vmul.f32 %v5649, %v3075
    %v5652 = vmul.f32 %v5649, %v3080
    %v5656 = vrot.slane %v5650, 1
    %v5657 = vrot.slane %v5651, 1
    %v5658 = vsel %vm313, %v5656, %v5657
    %v5659 = vrot.slane %v5652, 1
    %v5660 = vsel %vm313, %v5657, %v5659
    %5661 = vrot.lane.b32.xlu0 %v5658, 127
    %v5662 = vpop.permute.xlu0 %5661
    %5663 = vrot.lane.b32.xlu0 %v5660, 127
    %v5664 = vpop.permute.xlu0 %5663
    %v5667 = vadd.f32 %v5646, %v5662
    %v5668 = vadd.f32 %v5647, %v5664
    %s5669 = sld [smem:[#allocation7 + $0xef]]
    %v5670 = vstv %s5669
    %v5671 = vmul.f32 %v5670, %v3079
    %v5672 = vmul.f32 %v5670, %v3075
    %v5673 = vmul.f32 %v5670, %v3080
    %v5677 = vrot.slane %v5671, 1
    %v5678 = vrot.slane %v5672, 1
    %v5679 = vsel %vm313, %v5677, %v5678
    %v5680 = vrot.slane %v5673, 1
    %v5681 = vsel %vm313, %v5678, %v5680
    %5682 = vrot.lane.b32.xlu0 %v5679, 126
    %v5683 = vpop.permute.xlu0 %5682
    %5684 = vrot.lane.b32.xlu0 %v5681, 126
    %v5685 = vpop.permute.xlu0 %5684
    %v5688 = vadd.f32 %v5667, %v5683
    %v5689 = vadd.f32 %v5668, %v5685
    %s5690 = sld [smem:[#allocation7 + $0xf0]]
    %v5691 = vstv %s5690
    %v5692 = vmul.f32 %v5691, %v3079
    %v5693 = vmul.f32 %v5691, %v3075
    %v5694 = vmul.f32 %v5691, %v3080
    %v5698 = vrot.slane %v5692, 2
    %v5699 = vrot.slane %v5693, 2
    %v5700 = vsel %vm373, %v5698, %v5699
    %v5701 = vrot.slane %v5694, 2
    %v5702 = vsel %vm373, %v5699, %v5701
    %v5705 = vadd.f32 %v5688, %v5700
    %v5706 = vadd.f32 %v5689, %v5702
    %s5707 = sld [smem:[#allocation7 + $0xf1]]
    %v5708 = vstv %s5707
    %v5709 = vmul.f32 %v5708, %v3079
    %v5710 = vmul.f32 %v5708, %v3075
    %v5711 = vmul.f32 %v5708, %v3080
    %v5715 = vrot.slane %v5709, 2
    %v5716 = vrot.slane %v5710, 2
    %v5717 = vsel %vm373, %v5715, %v5716
    %v5718 = vrot.slane %v5711, 2
    %v5719 = vsel %vm373, %v5716, %v5718
    %5720 = vrot.lane.b32.xlu0 %v5717, 127
    %v5721 = vpop.permute.xlu0 %5720
    %5722 = vrot.lane.b32.xlu0 %v5719, 127
    %v5723 = vpop.permute.xlu0 %5722
    %v5726 = vadd.f32 %v5705, %v5721
    %v5727 = vadd.f32 %v5706, %v5723
    %s5728 = sld [smem:[#allocation7 + $0xf2]]
    %v5729 = vstv %s5728
    %v5730 = vmul.f32 %v5729, %v3079
    %v5731 = vmul.f32 %v5729, %v3075
    %v5732 = vmul.f32 %v5729, %v3080
    %v5736 = vrot.slane %v5730, 2
    %v5737 = vrot.slane %v5731, 2
    %v5738 = vsel %vm373, %v5736, %v5737
    %v5739 = vrot.slane %v5732, 2
    %v5740 = vsel %vm373, %v5737, %v5739
    %5741 = vrot.lane.b32.xlu0 %v5738, 126
    %v5742 = vpop.permute.xlu0 %5741
    %5743 = vrot.lane.b32.xlu0 %v5740, 126
    %v5744 = vpop.permute.xlu0 %5743
    %v5747 = vadd.f32 %v5726, %v5742
    %v5748 = vadd.f32 %v5727, %v5744
    %s5749 = sld [smem:[#allocation7 + $0x120]]
    %v5750 = vstv %s5749
    %v5751 = vmul.f32 %v5750, %v3079
    %v5752 = vmul.f32 %v5750, %v3075
    %v5753 = vadd.f32 %v4987, %v5751
    %v5754 = vadd.f32 %v4988, %v5752
    %s5755 = sld [smem:[#allocation7 + $0x121]]
    %v5756 = vstv %s5755
    %v5757 = vmul.f32 %v5756, %v3079
    %v5758 = vmul.f32 %v5756, %v3075
    %5761 = vrot.lane.b32.xlu0 %v5757, 127
    %v5762 = vpop.permute.xlu0 %5761
    %5763 = vrot.lane.b32.xlu0 %v5758, 127
    %v5764 = vpop.permute.xlu0 %5763
    %v5767 = vadd.f32 %v5753, %v5762
    %v5768 = vadd.f32 %v5754, %v5764
    %s5769 = sld [smem:[#allocation7 + $0x122]]
    %v5770 = vstv %s5769
    %v5771 = vmul.f32 %v5770, %v3079
    %v5772 = vmul.f32 %v5770, %v3075
    %5775 = vrot.lane.b32.xlu0 %v5771, 126
    %v5776 = vpop.permute.xlu0 %5775
    %5777 = vrot.lane.b32.xlu0 %v5772, 126
    %v5778 = vpop.permute.xlu0 %5777
    %v5781 = vadd.f32 %v5767, %v5776
    %v5782 = vadd.f32 %v5768, %v5778
    %s5783 = sld [smem:[#allocation7 + $0x123]]
    %v5784 = vstv %s5783
    %v5785 = vmul.f32 %v5784, %v3079
    %v5786 = vmul.f32 %v5784, %v3075
    %v5787 = vmul.f32 %v5784, %v3080
    %v5791 = vrot.slane %v5785, 1
    %v5792 = vrot.slane %v5786, 1
    %v5793 = vsel %vm313, %v5791, %v5792
    %v5794 = vrot.slane %v5787, 1
    %v5795 = vsel %vm313, %v5792, %v5794
    %v5798 = vadd.f32 %v5781, %v5793
    %v5799 = vadd.f32 %v5782, %v5795
    %s5800 = sld [smem:[#allocation7 + $0x124]]
    %v5801 = vstv %s5800
    %v5802 = vmul.f32 %v5801, %v3079
    %v5803 = vmul.f32 %v5801, %v3075
    %v5804 = vmul.f32 %v5801, %v3080
    %v5808 = vrot.slane %v5802, 1
    %v5809 = vrot.slane %v5803, 1
    %v5810 = vsel %vm313, %v5808, %v5809
    %v5811 = vrot.slane %v5804, 1
    %v5812 = vsel %vm313, %v5809, %v5811
    %5813 = vrot.lane.b32.xlu0 %v5810, 127
    %v5814 = vpop.permute.xlu0 %5813
    %5815 = vrot.lane.b32.xlu0 %v5812, 127
    %v5816 = vpop.permute.xlu0 %5815
    %v5819 = vadd.f32 %v5798, %v5814
    %v5820 = vadd.f32 %v5799, %v5816
    %s5821 = sld [smem:[#allocation7 + $0x125]]
    %v5822 = vstv %s5821
    %v5823 = vmul.f32 %v5822, %v3079
    %v5824 = vmul.f32 %v5822, %v3075
    %v5825 = vmul.f32 %v5822, %v3080
    %v5829 = vrot.slane %v5823, 1
    %v5830 = vrot.slane %v5824, 1
    %v5831 = vsel %vm313, %v5829, %v5830
    %v5832 = vrot.slane %v5825, 1
    %v5833 = vsel %vm313, %v5830, %v5832
    %5834 = vrot.lane.b32.xlu0 %v5831, 126
    %v5835 = vpop.permute.xlu0 %5834
    %5836 = vrot.lane.b32.xlu0 %v5833, 126
    %v5837 = vpop.permute.xlu0 %5836
    %v5840 = vadd.f32 %v5819, %v5835
    %v5841 = vadd.f32 %v5820, %v5837
    %s5842 = sld [smem:[#allocation7 + $0x126]]
    %v5843 = vstv %s5842
    %v5844 = vmul.f32 %v5843, %v3079
    %v5845 = vmul.f32 %v5843, %v3075
    %v5846 = vmul.f32 %v5843, %v3080
    %v5850 = vrot.slane %v5844, 2
    %v5851 = vrot.slane %v5845, 2
    %v5852 = vsel %vm373, %v5850, %v5851
    %v5853 = vrot.slane %v5846, 2
    %v5854 = vsel %vm373, %v5851, %v5853
    %v5857 = vadd.f32 %v5840, %v5852
    %v5858 = vadd.f32 %v5841, %v5854
    %s5859 = sld [smem:[#allocation7 + $0x127]]
    %v5860 = vstv %s5859
    %v5861 = vmul.f32 %v5860, %v3079
    %v5862 = vmul.f32 %v5860, %v3075
    %v5863 = vmul.f32 %v5860, %v3080
    %v5867 = vrot.slane %v5861, 2
    %v5868 = vrot.slane %v5862, 2
    %v5869 = vsel %vm373, %v5867, %v5868
    %v5870 = vrot.slane %v5863, 2
    %v5871 = vsel %vm373, %v5868, %v5870
    %5872 = vrot.lane.b32.xlu0 %v5869, 127
    %v5873 = vpop.permute.xlu0 %5872
    %5874 = vrot.lane.b32.xlu0 %v5871, 127
    %v5875 = vpop.permute.xlu0 %5874
    %v5878 = vadd.f32 %v5857, %v5873
    %v5879 = vadd.f32 %v5858, %v5875
    %s5880 = sld [smem:[#allocation7 + $0x128]]
    %v5881 = vstv %s5880
    %v5882 = vmul.f32 %v5881, %v3079
    %v5883 = vmul.f32 %v5881, %v3075
    %v5884 = vmul.f32 %v5881, %v3080
    %v5888 = vrot.slane %v5882, 2
    %v5889 = vrot.slane %v5883, 2
    %v5890 = vsel %vm373, %v5888, %v5889
    %v5891 = vrot.slane %v5884, 2
    %v5892 = vsel %vm373, %v5889, %v5891
    %5893 = vrot.lane.b32.xlu0 %v5890, 126
    %v5894 = vpop.permute.xlu0 %5893
    %5895 = vrot.lane.b32.xlu0 %v5892, 126
    %v5896 = vpop.permute.xlu0 %5895
    %v5899 = vadd.f32 %v5878, %v5894
    %v5900 = vadd.f32 %v5879, %v5896
    %s5901 = sld [smem:[#allocation7 + $0x1b]]
    %v5902 = vstv %s5901
    %v5903 = vmul.f32 %v5902, %v3103
    %v5904 = vmul.f32 %v5902, %v3099
    %v5905 = vadd.f32 %v5139, %v5903
    %v5906 = vadd.f32 %v5140, %v5904
    %s5907 = sld [smem:[#allocation7 + $0x1c]]
    %v5908 = vstv %s5907
    %v5909 = vmul.f32 %v5908, %v3103
    %v5910 = vmul.f32 %v5908, %v3099
    %5913 = vrot.lane.b32.xlu0 %v5909, 127
    %v5914 = vpop.permute.xlu0 %5913
    %5915 = vrot.lane.b32.xlu0 %v5910, 127
    %v5916 = vpop.permute.xlu0 %5915
    %v5919 = vadd.f32 %v5905, %v5914
    %v5920 = vadd.f32 %v5906, %v5916
    %s5921 = sld [smem:[#allocation7 + $0x1d]]
    %v5922 = vstv %s5921
    %v5923 = vmul.f32 %v5922, %v3103
    %v5924 = vmul.f32 %v5922, %v3099
    %5927 = vrot.lane.b32.xlu0 %v5923, 126
    %v5928 = vpop.permute.xlu0 %5927
    %5929 = vrot.lane.b32.xlu0 %v5924, 126
    %v5930 = vpop.permute.xlu0 %5929
    %v5933 = vadd.f32 %v5919, %v5928
    %v5934 = vadd.f32 %v5920, %v5930
    %s5935 = sld [smem:[#allocation7 + $0x1e]]
    %v5936 = vstv %s5935
    %v5937 = vmul.f32 %v5936, %v3103
    %v5938 = vmul.f32 %v5936, %v3099
    %v5939 = vmul.f32 %v5936, %v3104
    %v5943 = vrot.slane %v5937, 1
    %v5944 = vrot.slane %v5938, 1
    %v5945 = vsel %vm313, %v5943, %v5944
    %v5946 = vrot.slane %v5939, 1
    %v5947 = vsel %vm313, %v5944, %v5946
    %v5950 = vadd.f32 %v5933, %v5945
    %v5951 = vadd.f32 %v5934, %v5947
    %s5952 = sld [smem:[#allocation7 + $0x1f]]
    %v5953 = vstv %s5952
    %v5954 = vmul.f32 %v5953, %v3103
    %v5955 = vmul.f32 %v5953, %v3099
    %v5956 = vmul.f32 %v5953, %v3104
    %v5960 = vrot.slane %v5954, 1
    %v5961 = vrot.slane %v5955, 1
    %v5962 = vsel %vm313, %v5960, %v5961
    %v5963 = vrot.slane %v5956, 1
    %v5964 = vsel %vm313, %v5961, %v5963
    %5965 = vrot.lane.b32.xlu0 %v5962, 127
    %v5966 = vpop.permute.xlu0 %5965
    %5967 = vrot.lane.b32.xlu0 %v5964, 127
    %v5968 = vpop.permute.xlu0 %5967
    %v5971 = vadd.f32 %v5950, %v5966
    %v5972 = vadd.f32 %v5951, %v5968
    %s5973 = sld [smem:[#allocation7 + $0x20]]
    %v5974 = vstv %s5973
    %v5975 = vmul.f32 %v5974, %v3103
    %v5976 = vmul.f32 %v5974, %v3099
    %v5977 = vmul.f32 %v5974, %v3104
    %v5981 = vrot.slane %v5975, 1
    %v5982 = vrot.slane %v5976, 1
    %v5983 = vsel %vm313, %v5981, %v5982
    %v5984 = vrot.slane %v5977, 1
    %v5985 = vsel %vm313, %v5982, %v5984
    %5986 = vrot.lane.b32.xlu0 %v5983, 126
    %v5987 = vpop.permute.xlu0 %5986
    %5988 = vrot.lane.b32.xlu0 %v5985, 126
    %v5989 = vpop.permute.xlu0 %5988
    %v5992 = vadd.f32 %v5971, %v5987
    %v5993 = vadd.f32 %v5972, %v5989
    %s5994 = sld [smem:[#allocation7 + $0x21]]
    %v5995 = vstv %s5994
    %v5996 = vmul.f32 %v5995, %v3103
    %v5997 = vmul.f32 %v5995, %v3099
    %v5998 = vmul.f32 %v5995, %v3104
    %v6002 = vrot.slane %v5996, 2
    %v6003 = vrot.slane %v5997, 2
    %v6004 = vsel %vm373, %v6002, %v6003
    %v6005 = vrot.slane %v5998, 2
    %v6006 = vsel %vm373, %v6003, %v6005
    %v6009 = vadd.f32 %v5992, %v6004
    %v6010 = vadd.f32 %v5993, %v6006
    %s6011 = sld [smem:[#allocation7 + $0x22]]
    %v6012 = vstv %s6011
    %v6013 = vmul.f32 %v6012, %v3103
    %v6014 = vmul.f32 %v6012, %v3099
    %v6015 = vmul.f32 %v6012, %v3104
    %v6019 = vrot.slane %v6013, 2
    %v6020 = vrot.slane %v6014, 2
    %v6021 = vsel %vm373, %v6019, %v6020
    %v6022 = vrot.slane %v6015, 2
    %v6023 = vsel %vm373, %v6020, %v6022
    %6024 = vrot.lane.b32.xlu0 %v6021, 127
    %v6025 = vpop.permute.xlu0 %6024
    %6026 = vrot.lane.b32.xlu0 %v6023, 127
    %v6027 = vpop.permute.xlu0 %6026
    %v6030 = vadd.f32 %v6009, %v6025
    %v6031 = vadd.f32 %v6010, %v6027
    %s6032 = sld [smem:[#allocation7 + $0x23]]
    %v6033 = vstv %s6032
    %v6034 = vmul.f32 %v6033, %v3103
    %v6035 = vmul.f32 %v6033, %v3099
    %v6036 = vmul.f32 %v6033, %v3104
    %v6040 = vrot.slane %v6034, 2
    %v6041 = vrot.slane %v6035, 2
    %v6042 = vsel %vm373, %v6040, %v6041
    %v6043 = vrot.slane %v6036, 2
    %v6044 = vsel %vm373, %v6041, %v6043
    %6045 = vrot.lane.b32.xlu0 %v6042, 126
    %v6046 = vpop.permute.xlu0 %6045
    %6047 = vrot.lane.b32.xlu0 %v6044, 126
    %v6048 = vpop.permute.xlu0 %6047
    %v6051 = vadd.f32 %v6030, %v6046
    %v6052 = vadd.f32 %v6031, %v6048
    %s6053 = sld [smem:[#allocation7 + $0x51]]
    %v6054 = vstv %s6053
    %v6055 = vmul.f32 %v6054, %v3103
    %v6056 = vmul.f32 %v6054, %v3099
    %v6057 = vadd.f32 %v5291, %v6055
    %v6058 = vadd.f32 %v5292, %v6056
    %s6059 = sld [smem:[#allocation7 + $0x52]]
    %v6060 = vstv %s6059
    %v6061 = vmul.f32 %v6060, %v3103
    %v6062 = vmul.f32 %v6060, %v3099
    %6065 = vrot.lane.b32.xlu0 %v6061, 127
    %v6066 = vpop.permute.xlu0 %6065
    %6067 = vrot.lane.b32.xlu0 %v6062, 127
    %v6068 = vpop.permute.xlu0 %6067
    %v6071 = vadd.f32 %v6057, %v6066
    %v6072 = vadd.f32 %v6058, %v6068
    %s6073 = sld [smem:[#allocation7 + $0x53]]
    %v6074 = vstv %s6073
    %v6075 = vmul.f32 %v6074, %v3103
    %v6076 = vmul.f32 %v6074, %v3099
    %6079 = vrot.lane.b32.xlu0 %v6075, 126
    %v6080 = vpop.permute.xlu0 %6079
    %6081 = vrot.lane.b32.xlu0 %v6076, 126
    %v6082 = vpop.permute.xlu0 %6081
    %v6085 = vadd.f32 %v6071, %v6080
    %v6086 = vadd.f32 %v6072, %v6082
    %s6087 = sld [smem:[#allocation7 + $0x54]]
    %v6088 = vstv %s6087
    %v6089 = vmul.f32 %v6088, %v3103
    %v6090 = vmul.f32 %v6088, %v3099
    %v6091 = vmul.f32 %v6088, %v3104
    %v6095 = vrot.slane %v6089, 1
    %v6096 = vrot.slane %v6090, 1
    %v6097 = vsel %vm313, %v6095, %v6096
    %v6098 = vrot.slane %v6091, 1
    %v6099 = vsel %vm313, %v6096, %v6098
    %v6102 = vadd.f32 %v6085, %v6097
    %v6103 = vadd.f32 %v6086, %v6099
    %s6104 = sld [smem:[#allocation7 + $0x55]]
    %v6105 = vstv %s6104
    %v6106 = vmul.f32 %v6105, %v3103
    %v6107 = vmul.f32 %v6105, %v3099
    %v6108 = vmul.f32 %v6105, %v3104
    %v6112 = vrot.slane %v6106, 1
    %v6113 = vrot.slane %v6107, 1
    %v6114 = vsel %vm313, %v6112, %v6113
    %v6115 = vrot.slane %v6108, 1
    %v6116 = vsel %vm313, %v6113, %v6115
    %6117 = vrot.lane.b32.xlu0 %v6114, 127
    %v6118 = vpop.permute.xlu0 %6117
    %6119 = vrot.lane.b32.xlu0 %v6116, 127
    %v6120 = vpop.permute.xlu0 %6119
    %v6123 = vadd.f32 %v6102, %v6118
    %v6124 = vadd.f32 %v6103, %v6120
    %s6125 = sld [smem:[#allocation7 + $0x56]]
    %v6126 = vstv %s6125
    %v6127 = vmul.f32 %v6126, %v3103
    %v6128 = vmul.f32 %v6126, %v3099
    %v6129 = vmul.f32 %v6126, %v3104
    %v6133 = vrot.slane %v6127, 1
    %v6134 = vrot.slane %v6128, 1
    %v6135 = vsel %vm313, %v6133, %v6134
    %v6136 = vrot.slane %v6129, 1
    %v6137 = vsel %vm313, %v6134, %v6136
    %6138 = vrot.lane.b32.xlu0 %v6135, 126
    %v6139 = vpop.permute.xlu0 %6138
    %6140 = vrot.lane.b32.xlu0 %v6137, 126
    %v6141 = vpop.permute.xlu0 %6140
    %v6144 = vadd.f32 %v6123, %v6139
    %v6145 = vadd.f32 %v6124, %v6141
    %s6146 = sld [smem:[#allocation7 + $0x57]]
    %v6147 = vstv %s6146
    %v6148 = vmul.f32 %v6147, %v3103
    %v6149 = vmul.f32 %v6147, %v3099
    %v6150 = vmul.f32 %v6147, %v3104
    %v6154 = vrot.slane %v6148, 2
    %v6155 = vrot.slane %v6149, 2
    %v6156 = vsel %vm373, %v6154, %v6155
    %v6157 = vrot.slane %v6150, 2
    %v6158 = vsel %vm373, %v6155, %v6157
    %v6161 = vadd.f32 %v6144, %v6156
    %v6162 = vadd.f32 %v6145, %v6158
    %s6163 = sld [smem:[#allocation7 + $0x58]]
    %v6164 = vstv %s6163
    %v6165 = vmul.f32 %v6164, %v3103
    %v6166 = vmul.f32 %v6164, %v3099
    %v6167 = vmul.f32 %v6164, %v3104
    %v6171 = vrot.slane %v6165, 2
    %v6172 = vrot.slane %v6166, 2
    %v6173 = vsel %vm373, %v6171, %v6172
    %v6174 = vrot.slane %v6167, 2
    %v6175 = vsel %vm373, %v6172, %v6174
    %6176 = vrot.lane.b32.xlu0 %v6173, 127
    %v6177 = vpop.permute.xlu0 %6176
    %6178 = vrot.lane.b32.xlu0 %v6175, 127
    %v6179 = vpop.permute.xlu0 %6178
    %v6182 = vadd.f32 %v6161, %v6177
    %v6183 = vadd.f32 %v6162, %v6179
    %s6184 = sld [smem:[#allocation7 + $0x59]]
    %v6185 = vstv %s6184
    %v6186 = vmul.f32 %v6185, %v3103
    %v6187 = vmul.f32 %v6185, %v3099
    %v6188 = vmul.f32 %v6185, %v3104
    %v6192 = vrot.slane %v6186, 2
    %v6193 = vrot.slane %v6187, 2
    %v6194 = vsel %vm373, %v6192, %v6193
    %v6195 = vrot.slane %v6188, 2
    %v6196 = vsel %vm373, %v6193, %v6195
    %6197 = vrot.lane.b32.xlu0 %v6194, 126
    %v6198 = vpop.permute.xlu0 %6197
    %6199 = vrot.lane.b32.xlu0 %v6196, 126
    %v6200 = vpop.permute.xlu0 %6199
    %v6203 = vadd.f32 %v6182, %v6198
    %v6204 = vadd.f32 %v6183, %v6200
    %s6205 = sld [smem:[#allocation7 + $0x87]]
    %v6206 = vstv %s6205
    %v6207 = vmul.f32 %v6206, %v3103
    %v6208 = vmul.f32 %v6206, %v3099
    %v6209 = vadd.f32 %v5443, %v6207
    %v6210 = vadd.f32 %v5444, %v6208
    %s6211 = sld [smem:[#allocation7 + $0x88]]
    %v6212 = vstv %s6211
    %v6213 = vmul.f32 %v6212, %v3103
    %v6214 = vmul.f32 %v6212, %v3099
    %6217 = vrot.lane.b32.xlu0 %v6213, 127
    %v6218 = vpop.permute.xlu0 %6217
    %6219 = vrot.lane.b32.xlu0 %v6214, 127
    %v6220 = vpop.permute.xlu0 %6219
    %v6223 = vadd.f32 %v6209, %v6218
    %v6224 = vadd.f32 %v6210, %v6220
    %s6225 = sld [smem:[#allocation7 + $0x89]]
    %v6226 = vstv %s6225
    %v6227 = vmul.f32 %v6226, %v3103
    %v6228 = vmul.f32 %v6226, %v3099
    %6231 = vrot.lane.b32.xlu0 %v6227, 126
    %v6232 = vpop.permute.xlu0 %6231
    %6233 = vrot.lane.b32.xlu0 %v6228, 126
    %v6234 = vpop.permute.xlu0 %6233
    %v6237 = vadd.f32 %v6223, %v6232
    %v6238 = vadd.f32 %v6224, %v6234
    %s6239 = sld [smem:[#allocation7 + $0x8a]]
    %v6240 = vstv %s6239
    %v6241 = vmul.f32 %v6240, %v3103
    %v6242 = vmul.f32 %v6240, %v3099
    %v6243 = vmul.f32 %v6240, %v3104
    %v6247 = vrot.slane %v6241, 1
    %v6248 = vrot.slane %v6242, 1
    %v6249 = vsel %vm313, %v6247, %v6248
    %v6250 = vrot.slane %v6243, 1
    %v6251 = vsel %vm313, %v6248, %v6250
    %v6254 = vadd.f32 %v6237, %v6249
    %v6255 = vadd.f32 %v6238, %v6251
    %s6256 = sld [smem:[#allocation7 + $0x8b]]
    %v6257 = vstv %s6256
    %v6258 = vmul.f32 %v6257, %v3103
    %v6259 = vmul.f32 %v6257, %v3099
    %v6260 = vmul.f32 %v6257, %v3104
    %v6264 = vrot.slane %v6258, 1
    %v6265 = vrot.slane %v6259, 1
    %v6266 = vsel %vm313, %v6264, %v6265
    %v6267 = vrot.slane %v6260, 1
    %v6268 = vsel %vm313, %v6265, %v6267
    %6269 = vrot.lane.b32.xlu0 %v6266, 127
    %v6270 = vpop.permute.xlu0 %6269
    %6271 = vrot.lane.b32.xlu0 %v6268, 127
    %v6272 = vpop.permute.xlu0 %6271
    %v6275 = vadd.f32 %v6254, %v6270
    %v6276 = vadd.f32 %v6255, %v6272
    %s6277 = sld [smem:[#allocation7 + $0x8c]]
    %v6278 = vstv %s6277
    %v6279 = vmul.f32 %v6278, %v3103
    %v6280 = vmul.f32 %v6278, %v3099
    %v6281 = vmul.f32 %v6278, %v3104
    %v6285 = vrot.slane %v6279, 1
    %v6286 = vrot.slane %v6280, 1
    %v6287 = vsel %vm313, %v6285, %v6286
    %v6288 = vrot.slane %v6281, 1
    %v6289 = vsel %vm313, %v6286, %v6288
    %6290 = vrot.lane.b32.xlu0 %v6287, 126
    %v6291 = vpop.permute.xlu0 %6290
    %6292 = vrot.lane.b32.xlu0 %v6289, 126
    %v6293 = vpop.permute.xlu0 %6292
    %v6296 = vadd.f32 %v6275, %v6291
    %v6297 = vadd.f32 %v6276, %v6293
    %s6298 = sld [smem:[#allocation7 + $0x8d]]
    %v6299 = vstv %s6298
    %v6300 = vmul.f32 %v6299, %v3103
    %v6301 = vmul.f32 %v6299, %v3099
    %v6302 = vmul.f32 %v6299, %v3104
    %v6306 = vrot.slane %v6300, 2
    %v6307 = vrot.slane %v6301, 2
    %v6308 = vsel %vm373, %v6306, %v6307
    %v6309 = vrot.slane %v6302, 2
    %v6310 = vsel %vm373, %v6307, %v6309
    %v6313 = vadd.f32 %v6296, %v6308
    %v6314 = vadd.f32 %v6297, %v6310
    %s6315 = sld [smem:[#allocation7 + $0x8e]]
    %v6316 = vstv %s6315
    %v6317 = vmul.f32 %v6316, %v3103
    %v6318 = vmul.f32 %v6316, %v3099
    %v6319 = vmul.f32 %v6316, %v3104
    %v6323 = vrot.slane %v6317, 2
    %v6324 = vrot.slane %v6318, 2
    %v6325 = vsel %vm373, %v6323, %v6324
    %v6326 = vrot.slane %v6319, 2
    %v6327 = vsel %vm373, %v6324, %v6326
    %6328 = vrot.lane.b32.xlu0 %v6325, 127
    %v6329 = vpop.permute.xlu0 %6328
    %6330 = vrot.lane.b32.xlu0 %v6327, 127
    %v6331 = vpop.permute.xlu0 %6330
    %v6334 = vadd.f32 %v6313, %v6329
    %v6335 = vadd.f32 %v6314, %v6331
    %s6336 = sld [smem:[#allocation7 + $0x8f]]
    %v6337 = vstv %s6336
    %v6338 = vmul.f32 %v6337, %v3103
    %v6339 = vmul.f32 %v6337, %v3099
    %v6340 = vmul.f32 %v6337, %v3104
    %v6344 = vrot.slane %v6338, 2
    %v6345 = vrot.slane %v6339, 2
    %v6346 = vsel %vm373, %v6344, %v6345
    %v6347 = vrot.slane %v6340, 2
    %v6348 = vsel %vm373, %v6345, %v6347
    %6349 = vrot.lane.b32.xlu0 %v6346, 126
    %v6350 = vpop.permute.xlu0 %6349
    %6351 = vrot.lane.b32.xlu0 %v6348, 126
    %v6352 = vpop.permute.xlu0 %6351
    %v6355 = vadd.f32 %v6334, %v6350
    %v6356 = vadd.f32 %v6335, %v6352
    %s6357 = sld [smem:[#allocation7 + $0xbd]]
    %v6358 = vstv %s6357
    %v6359 = vmul.f32 %v6358, %v3103
    %v6360 = vmul.f32 %v6358, %v3099
    %v6361 = vadd.f32 %v5595, %v6359
    %v6362 = vadd.f32 %v5596, %v6360
    %s6363 = sld [smem:[#allocation7 + $0xbe]]
    %v6364 = vstv %s6363
    %v6365 = vmul.f32 %v6364, %v3103
    %v6366 = vmul.f32 %v6364, %v3099
    %6369 = vrot.lane.b32.xlu0 %v6365, 127
    %v6370 = vpop.permute.xlu0 %6369
    %6371 = vrot.lane.b32.xlu0 %v6366, 127
    %v6372 = vpop.permute.xlu0 %6371
    %v6375 = vadd.f32 %v6361, %v6370
    %v6376 = vadd.f32 %v6362, %v6372
    %s6377 = sld [smem:[#allocation7 + $0xbf]]
    %v6378 = vstv %s6377
    %v6379 = vmul.f32 %v6378, %v3103
    %v6380 = vmul.f32 %v6378, %v3099
    %6383 = vrot.lane.b32.xlu0 %v6379, 126
    %v6384 = vpop.permute.xlu0 %6383
    %6385 = vrot.lane.b32.xlu0 %v6380, 126
    %v6386 = vpop.permute.xlu0 %6385
    %v6389 = vadd.f32 %v6375, %v6384
    %v6390 = vadd.f32 %v6376, %v6386
    %s6391 = sld [smem:[#allocation7 + $0xc0]]
    %v6392 = vstv %s6391
    %v6393 = vmul.f32 %v6392, %v3103
    %v6394 = vmul.f32 %v6392, %v3099
    %v6395 = vmul.f32 %v6392, %v3104
    %v6399 = vrot.slane %v6393, 1
    %v6400 = vrot.slane %v6394, 1
    %v6401 = vsel %vm313, %v6399, %v6400
    %v6402 = vrot.slane %v6395, 1
    %v6403 = vsel %vm313, %v6400, %v6402
    %v6406 = vadd.f32 %v6389, %v6401
    %v6407 = vadd.f32 %v6390, %v6403
    %s6408 = sld [smem:[#allocation7 + $0xc1]]
    %v6409 = vstv %s6408
    %v6410 = vmul.f32 %v6409, %v3103
    %v6411 = vmul.f32 %v6409, %v3099
    %v6412 = vmul.f32 %v6409, %v3104
    %v6416 = vrot.slane %v6410, 1
    %v6417 = vrot.slane %v6411, 1
    %v6418 = vsel %vm313, %v6416, %v6417
    %v6419 = vrot.slane %v6412, 1
    %v6420 = vsel %vm313, %v6417, %v6419
    %6421 = vrot.lane.b32.xlu0 %v6418, 127
    %v6422 = vpop.permute.xlu0 %6421
    %6423 = vrot.lane.b32.xlu0 %v6420, 127
    %v6424 = vpop.permute.xlu0 %6423
    %v6427 = vadd.f32 %v6406, %v6422
    %v6428 = vadd.f32 %v6407, %v6424
    %s6429 = sld [smem:[#allocation7 + $0xc2]]
    %v6430 = vstv %s6429
    %v6431 = vmul.f32 %v6430, %v3103
    %v6432 = vmul.f32 %v6430, %v3099
    %v6433 = vmul.f32 %v6430, %v3104
    %v6437 = vrot.slane %v6431, 1
    %v6438 = vrot.slane %v6432, 1
    %v6439 = vsel %vm313, %v6437, %v6438
    %v6440 = vrot.slane %v6433, 1
    %v6441 = vsel %vm313, %v6438, %v6440
    %6442 = vrot.lane.b32.xlu0 %v6439, 126
    %v6443 = vpop.permute.xlu0 %6442
    %6444 = vrot.lane.b32.xlu0 %v6441, 126
    %v6445 = vpop.permute.xlu0 %6444
    %v6448 = vadd.f32 %v6427, %v6443
    %v6449 = vadd.f32 %v6428, %v6445
    %s6450 = sld [smem:[#allocation7 + $0xc3]]
    %v6451 = vstv %s6450
    %v6452 = vmul.f32 %v6451, %v3103
    %v6453 = vmul.f32 %v6451, %v3099
    %v6454 = vmul.f32 %v6451, %v3104
    %v6458 = vrot.slane %v6452, 2
    %v6459 = vrot.slane %v6453, 2
    %v6460 = vsel %vm373, %v6458, %v6459
    %v6461 = vrot.slane %v6454, 2
    %v6462 = vsel %vm373, %v6459, %v6461
    %v6465 = vadd.f32 %v6448, %v6460
    %v6466 = vadd.f32 %v6449, %v6462
    %s6467 = sld [smem:[#allocation7 + $0xc4]]
    %v6468 = vstv %s6467
    %v6469 = vmul.f32 %v6468, %v3103
    %v6470 = vmul.f32 %v6468, %v3099
    %v6471 = vmul.f32 %v6468, %v3104
    %v6475 = vrot.slane %v6469, 2
    %v6476 = vrot.slane %v6470, 2
    %v6477 = vsel %vm373, %v6475, %v6476
    %v6478 = vrot.slane %v6471, 2
    %v6479 = vsel %vm373, %v6476, %v6478
    %6480 = vrot.lane.b32.xlu0 %v6477, 127
    %v6481 = vpop.permute.xlu0 %6480
    %6482 = vrot.lane.b32.xlu0 %v6479, 127
    %v6483 = vpop.permute.xlu0 %6482
    %v6486 = vadd.f32 %v6465, %v6481
    %v6487 = vadd.f32 %v6466, %v6483
    %s6488 = sld [smem:[#allocation7 + $0xc5]]
    %v6489 = vstv %s6488
    %v6490 = vmul.f32 %v6489, %v3103
    %v6491 = vmul.f32 %v6489, %v3099
    %v6492 = vmul.f32 %v6489, %v3104
    %v6496 = vrot.slane %v6490, 2
    %v6497 = vrot.slane %v6491, 2
    %v6498 = vsel %vm373, %v6496, %v6497
    %v6499 = vrot.slane %v6492, 2
    %v6500 = vsel %vm373, %v6497, %v6499
    %6501 = vrot.lane.b32.xlu0 %v6498, 126
    %v6502 = vpop.permute.xlu0 %6501
    %6503 = vrot.lane.b32.xlu0 %v6500, 126
    %v6504 = vpop.permute.xlu0 %6503
    %v6507 = vadd.f32 %v6486, %v6502
    %v6508 = vadd.f32 %v6487, %v6504
    %s6509 = sld [smem:[#allocation7 + $0xf3]]
    %v6510 = vstv %s6509
    %v6511 = vmul.f32 %v6510, %v3103
    %v6512 = vmul.f32 %v6510, %v3099
    %v6513 = vadd.f32 %v5747, %v6511
    %v6514 = vadd.f32 %v5748, %v6512
    %s6515 = sld [smem:[#allocation7 + $0xf4]]
    %v6516 = vstv %s6515
    %v6517 = vmul.f32 %v6516, %v3103
    %v6518 = vmul.f32 %v6516, %v3099
    %6521 = vrot.lane.b32.xlu0 %v6517, 127
    %v6522 = vpop.permute.xlu0 %6521
    %6523 = vrot.lane.b32.xlu0 %v6518, 127
    %v6524 = vpop.permute.xlu0 %6523
    %v6527 = vadd.f32 %v6513, %v6522
    %v6528 = vadd.f32 %v6514, %v6524
    %s6529 = sld [smem:[#allocation7 + $0xf5]]
    %v6530 = vstv %s6529
    %v6531 = vmul.f32 %v6530, %v3103
    %v6532 = vmul.f32 %v6530, %v3099
    %6535 = vrot.lane.b32.xlu0 %v6531, 126
    %v6536 = vpop.permute.xlu0 %6535
    %6537 = vrot.lane.b32.xlu0 %v6532, 126
    %v6538 = vpop.permute.xlu0 %6537
    %v6541 = vadd.f32 %v6527, %v6536
    %v6542 = vadd.f32 %v6528, %v6538
    %s6543 = sld [smem:[#allocation7 + $0xf6]]
    %v6544 = vstv %s6543
    %v6545 = vmul.f32 %v6544, %v3103
    %v6546 = vmul.f32 %v6544, %v3099
    %v6547 = vmul.f32 %v6544, %v3104
    %v6551 = vrot.slane %v6545, 1
    %v6552 = vrot.slane %v6546, 1
    %v6553 = vsel %vm313, %v6551, %v6552
    %v6554 = vrot.slane %v6547, 1
    %v6555 = vsel %vm313, %v6552, %v6554
    %v6558 = vadd.f32 %v6541, %v6553
    %v6559 = vadd.f32 %v6542, %v6555
    %s6560 = sld [smem:[#allocation7 + $0xf7]]
    %v6561 = vstv %s6560
    %v6562 = vmul.f32 %v6561, %v3103
    %v6563 = vmul.f32 %v6561, %v3099
    %v6564 = vmul.f32 %v6561, %v3104
    %v6568 = vrot.slane %v6562, 1
    %v6569 = vrot.slane %v6563, 1
    %v6570 = vsel %vm313, %v6568, %v6569
    %v6571 = vrot.slane %v6564, 1
    %v6572 = vsel %vm313, %v6569, %v6571
    %6573 = vrot.lane.b32.xlu0 %v6570, 127
    %v6574 = vpop.permute.xlu0 %6573
    %6575 = vrot.lane.b32.xlu0 %v6572, 127
    %v6576 = vpop.permute.xlu0 %6575
    %v6579 = vadd.f32 %v6558, %v6574
    %v6580 = vadd.f32 %v6559, %v6576
    %s6581 = sld [smem:[#allocation7 + $0xf8]]
    %v6582 = vstv %s6581
    %v6583 = vmul.f32 %v6582, %v3103
    %v6584 = vmul.f32 %v6582, %v3099
    %v6585 = vmul.f32 %v6582, %v3104
    %v6589 = vrot.slane %v6583, 1
    %v6590 = vrot.slane %v6584, 1
    %v6591 = vsel %vm313, %v6589, %v6590
    %v6592 = vrot.slane %v6585, 1
    %v6593 = vsel %vm313, %v6590, %v6592
    %6594 = vrot.lane.b32.xlu0 %v6591, 126
    %v6595 = vpop.permute.xlu0 %6594
    %6596 = vrot.lane.b32.xlu0 %v6593, 126
    %v6597 = vpop.permute.xlu0 %6596
    %v6600 = vadd.f32 %v6579, %v6595
    %v6601 = vadd.f32 %v6580, %v6597
    %s6602 = sld [smem:[#allocation7 + $0xf9]]
    %v6603 = vstv %s6602
    %v6604 = vmul.f32 %v6603, %v3103
    %v6605 = vmul.f32 %v6603, %v3099
    %v6606 = vmul.f32 %v6603, %v3104
    %v6610 = vrot.slane %v6604, 2
    %v6611 = vrot.slane %v6605, 2
    %v6612 = vsel %vm373, %v6610, %v6611
    %v6613 = vrot.slane %v6606, 2
    %v6614 = vsel %vm373, %v6611, %v6613
    %v6617 = vadd.f32 %v6600, %v6612
    %v6618 = vadd.f32 %v6601, %v6614
    %s6619 = sld [smem:[#allocation7 + $0xfa]]
    %v6620 = vstv %s6619
    %v6621 = vmul.f32 %v6620, %v3103
    %v6622 = vmul.f32 %v6620, %v3099
    %v6623 = vmul.f32 %v6620, %v3104
    %v6627 = vrot.slane %v6621, 2
    %v6628 = vrot.slane %v6622, 2
    %v6629 = vsel %vm373, %v6627, %v6628
    %v6630 = vrot.slane %v6623, 2
    %v6631 = vsel %vm373, %v6628, %v6630
    %6632 = vrot.lane.b32.xlu0 %v6629, 127
    %v6633 = vpop.permute.xlu0 %6632
    %6634 = vrot.lane.b32.xlu0 %v6631, 127
    %v6635 = vpop.permute.xlu0 %6634
    %v6638 = vadd.f32 %v6617, %v6633
    %v6639 = vadd.f32 %v6618, %v6635
    %s6640 = sld [smem:[#allocation7 + $0xfb]]
    %v6641 = vstv %s6640
    %v6642 = vmul.f32 %v6641, %v3103
    %v6643 = vmul.f32 %v6641, %v3099
    %v6644 = vmul.f32 %v6641, %v3104
    %v6648 = vrot.slane %v6642, 2
    %v6649 = vrot.slane %v6643, 2
    %v6650 = vsel %vm373, %v6648, %v6649
    %v6651 = vrot.slane %v6644, 2
    %v6652 = vsel %vm373, %v6649, %v6651
    %6653 = vrot.lane.b32.xlu0 %v6650, 126
    %v6654 = vpop.permute.xlu0 %6653
    %6655 = vrot.lane.b32.xlu0 %v6652, 126
    %v6656 = vpop.permute.xlu0 %6655
    %v6659 = vadd.f32 %v6638, %v6654
    %v6660 = vadd.f32 %v6639, %v6656
    %s6661 = sld [smem:[#allocation7 + $0x129]]
    %v6662 = vstv %s6661
    %v6663 = vmul.f32 %v6662, %v3103
    %v6664 = vmul.f32 %v6662, %v3099
    %v6665 = vadd.f32 %v5899, %v6663
    %v6666 = vadd.f32 %v5900, %v6664
    %s6667 = sld [smem:[#allocation7 + $0x12a]]
    %v6668 = vstv %s6667
    %v6669 = vmul.f32 %v6668, %v3103
    %v6670 = vmul.f32 %v6668, %v3099
    %6673 = vrot.lane.b32.xlu0 %v6669, 127
    %v6674 = vpop.permute.xlu0 %6673
    %6675 = vrot.lane.b32.xlu0 %v6670, 127
    %v6676 = vpop.permute.xlu0 %6675
    %v6679 = vadd.f32 %v6665, %v6674
    %v6680 = vadd.f32 %v6666, %v6676
    %s6681 = sld [smem:[#allocation7 + $0x12b]]
    %v6682 = vstv %s6681
    %v6683 = vmul.f32 %v6682, %v3103
    %v6684 = vmul.f32 %v6682, %v3099
    %6687 = vrot.lane.b32.xlu0 %v6683, 126
    %v6688 = vpop.permute.xlu0 %6687
    %6689 = vrot.lane.b32.xlu0 %v6684, 126
    %v6690 = vpop.permute.xlu0 %6689
    %v6693 = vadd.f32 %v6679, %v6688
    %v6694 = vadd.f32 %v6680, %v6690
    %s6695 = sld [smem:[#allocation7 + $0x12c]]
    %v6696 = vstv %s6695
    %v6697 = vmul.f32 %v6696, %v3103
    %v6698 = vmul.f32 %v6696, %v3099
    %v6699 = vmul.f32 %v6696, %v3104
    %v6703 = vrot.slane %v6697, 1
    %v6704 = vrot.slane %v6698, 1
    %v6705 = vsel %vm313, %v6703, %v6704
    %v6706 = vrot.slane %v6699, 1
    %v6707 = vsel %vm313, %v6704, %v6706
    %v6710 = vadd.f32 %v6693, %v6705
    %v6711 = vadd.f32 %v6694, %v6707
    %s6712 = sld [smem:[#allocation7 + $0x12d]]
    %v6713 = vstv %s6712
    %v6714 = vmul.f32 %v6713, %v3103
    %v6715 = vmul.f32 %v6713, %v3099
    %v6716 = vmul.f32 %v6713, %v3104
    %v6720 = vrot.slane %v6714, 1
    %v6721 = vrot.slane %v6715, 1
    %v6722 = vsel %vm313, %v6720, %v6721
    %v6723 = vrot.slane %v6716, 1
    %v6724 = vsel %vm313, %v6721, %v6723
    %6725 = vrot.lane.b32.xlu0 %v6722, 127
    %v6726 = vpop.permute.xlu0 %6725
    %6727 = vrot.lane.b32.xlu0 %v6724, 127
    %v6728 = vpop.permute.xlu0 %6727
    %v6731 = vadd.f32 %v6710, %v6726
    %v6732 = vadd.f32 %v6711, %v6728
    %s6733 = sld [smem:[#allocation7 + $0x12e]]
    %v6734 = vstv %s6733
    %v6735 = vmul.f32 %v6734, %v3103
    %v6736 = vmul.f32 %v6734, %v3099
    %v6737 = vmul.f32 %v6734, %v3104
    %v6741 = vrot.slane %v6735, 1
    %v6742 = vrot.slane %v6736, 1
    %v6743 = vsel %vm313, %v6741, %v6742
    %v6744 = vrot.slane %v6737, 1
    %v6745 = vsel %vm313, %v6742, %v6744
    %6746 = vrot.lane.b32.xlu0 %v6743, 126
    %v6747 = vpop.permute.xlu0 %6746
    %6748 = vrot.lane.b32.xlu0 %v6745, 126
    %v6749 = vpop.permute.xlu0 %6748
    %v6752 = vadd.f32 %v6731, %v6747
    %v6753 = vadd.f32 %v6732, %v6749
    %s6754 = sld [smem:[#allocation7 + $0x12f]]
    %v6755 = vstv %s6754
    %v6756 = vmul.f32 %v6755, %v3103
    %v6757 = vmul.f32 %v6755, %v3099
    %v6758 = vmul.f32 %v6755, %v3104
    %v6762 = vrot.slane %v6756, 2
    %v6763 = vrot.slane %v6757, 2
    %v6764 = vsel %vm373, %v6762, %v6763
    %v6765 = vrot.slane %v6758, 2
    %v6766 = vsel %vm373, %v6763, %v6765
    %v6769 = vadd.f32 %v6752, %v6764
    %v6770 = vadd.f32 %v6753, %v6766
    %s6771 = sld [smem:[#allocation7 + $0x130]]
    %v6772 = vstv %s6771
    %v6773 = vmul.f32 %v6772, %v3103
    %v6774 = vmul.f32 %v6772, %v3099
    %v6775 = vmul.f32 %v6772, %v3104
    %v6779 = vrot.slane %v6773, 2
    %v6780 = vrot.slane %v6774, 2
    %v6781 = vsel %vm373, %v6779, %v6780
    %v6782 = vrot.slane %v6775, 2
    %v6783 = vsel %vm373, %v6780, %v6782
    %6784 = vrot.lane.b32.xlu0 %v6781, 127
    %v6785 = vpop.permute.xlu0 %6784
    %6786 = vrot.lane.b32.xlu0 %v6783, 127
    %v6787 = vpop.permute.xlu0 %6786
    %v6790 = vadd.f32 %v6769, %v6785
    %v6791 = vadd.f32 %v6770, %v6787
    %s6792 = sld [smem:[#allocation7 + $0x131]]
    %v6793 = vstv %s6792
    %v6794 = vmul.f32 %v6793, %v3103
    %v6795 = vmul.f32 %v6793, %v3099
    %v6796 = vmul.f32 %v6793, %v3104
    %v6800 = vrot.slane %v6794, 2
    %v6801 = vrot.slane %v6795, 2
    %v6802 = vsel %vm373, %v6800, %v6801
    %v6803 = vrot.slane %v6796, 2
    %v6804 = vsel %vm373, %v6801, %v6803
    %6805 = vrot.lane.b32.xlu0 %v6802, 126
    %v6806 = vpop.permute.xlu0 %6805
    %6807 = vrot.lane.b32.xlu0 %v6804, 126
    %v6808 = vpop.permute.xlu0 %6807
    %v6811 = vadd.f32 %v6790, %v6806
    %v6812 = vadd.f32 %v6791, %v6808
    %s6813 = sld [smem:[#allocation7 + $0x24]]
    %v6814 = vstv %s6813
    %v6815 = vmul.f32 %v6814, %v3127
    %v6816 = vmul.f32 %v6814, %v3123
    %v6817 = vadd.f32 %v6051, %v6815
    %v6818 = vadd.f32 %v6052, %v6816
    %s6819 = sld [smem:[#allocation7 + $0x25]]
    %v6820 = vstv %s6819
    %v6821 = vmul.f32 %v6820, %v3127
    %v6822 = vmul.f32 %v6820, %v3123
    %6825 = vrot.lane.b32.xlu0 %v6821, 127
    %v6826 = vpop.permute.xlu0 %6825
    %6827 = vrot.lane.b32.xlu0 %v6822, 127
    %v6828 = vpop.permute.xlu0 %6827
    %v6831 = vadd.f32 %v6817, %v6826
    %v6832 = vadd.f32 %v6818, %v6828
    %s6833 = sld [smem:[#allocation7 + $0x26]]
    %v6834 = vstv %s6833
    %v6835 = vmul.f32 %v6834, %v3127
    %v6836 = vmul.f32 %v6834, %v3123
    %6839 = vrot.lane.b32.xlu0 %v6835, 126
    %v6840 = vpop.permute.xlu0 %6839
    %6841 = vrot.lane.b32.xlu0 %v6836, 126
    %v6842 = vpop.permute.xlu0 %6841
    %v6845 = vadd.f32 %v6831, %v6840
    %v6846 = vadd.f32 %v6832, %v6842
    %s6847 = sld [smem:[#allocation7 + $0x27]]
    %v6848 = vstv %s6847
    %v6849 = vmul.f32 %v6848, %v3127
    %v6850 = vmul.f32 %v6848, %v3123
    %v6851 = vmul.f32 %v6848, %v3128
    %v6855 = vrot.slane %v6849, 1
    %v6856 = vrot.slane %v6850, 1
    %v6857 = vsel %vm313, %v6855, %v6856
    %v6858 = vrot.slane %v6851, 1
    %v6859 = vsel %vm313, %v6856, %v6858
    %v6862 = vadd.f32 %v6845, %v6857
    %v6863 = vadd.f32 %v6846, %v6859
    %s6864 = sld [smem:[#allocation7 + $0x28]]
    %v6865 = vstv %s6864
    %v6866 = vmul.f32 %v6865, %v3127
    %v6867 = vmul.f32 %v6865, %v3123
    %v6868 = vmul.f32 %v6865, %v3128
    %v6872 = vrot.slane %v6866, 1
    %v6873 = vrot.slane %v6867, 1
    %v6874 = vsel %vm313, %v6872, %v6873
    %v6875 = vrot.slane %v6868, 1
    %v6876 = vsel %vm313, %v6873, %v6875
    %6877 = vrot.lane.b32.xlu0 %v6874, 127
    %v6878 = vpop.permute.xlu0 %6877
    %6879 = vrot.lane.b32.xlu0 %v6876, 127
    %v6880 = vpop.permute.xlu0 %6879
    %v6883 = vadd.f32 %v6862, %v6878
    %v6884 = vadd.f32 %v6863, %v6880
    %s6885 = sld [smem:[#allocation7 + $0x29]]
    %v6886 = vstv %s6885
    %v6887 = vmul.f32 %v6886, %v3127
    %v6888 = vmul.f32 %v6886, %v3123
    %v6889 = vmul.f32 %v6886, %v3128
    %v6893 = vrot.slane %v6887, 1
    %v6894 = vrot.slane %v6888, 1
    %v6895 = vsel %vm313, %v6893, %v6894
    %v6896 = vrot.slane %v6889, 1
    %v6897 = vsel %vm313, %v6894, %v6896
    %6898 = vrot.lane.b32.xlu0 %v6895, 126
    %v6899 = vpop.permute.xlu0 %6898
    %6900 = vrot.lane.b32.xlu0 %v6897, 126
    %v6901 = vpop.permute.xlu0 %6900
    %v6904 = vadd.f32 %v6883, %v6899
    %v6905 = vadd.f32 %v6884, %v6901
    %s6906 = sld [smem:[#allocation7 + $0x2a]]
    %v6907 = vstv %s6906
    %v6908 = vmul.f32 %v6907, %v3127
    %v6909 = vmul.f32 %v6907, %v3123
    %v6910 = vmul.f32 %v6907, %v3128
    %v6914 = vrot.slane %v6908, 2
    %v6915 = vrot.slane %v6909, 2
    %v6916 = vsel %vm373, %v6914, %v6915
    %v6917 = vrot.slane %v6910, 2
    %v6918 = vsel %vm373, %v6915, %v6917
    %v6921 = vadd.f32 %v6904, %v6916
    %v6922 = vadd.f32 %v6905, %v6918
    %s6923 = sld [smem:[#allocation7 + $0x2b]]
    %v6924 = vstv %s6923
    %v6925 = vmul.f32 %v6924, %v3127
    %v6926 = vmul.f32 %v6924, %v3123
    %v6927 = vmul.f32 %v6924, %v3128
    %v6931 = vrot.slane %v6925, 2
    %v6932 = vrot.slane %v6926, 2
    %v6933 = vsel %vm373, %v6931, %v6932
    %v6934 = vrot.slane %v6927, 2
    %v6935 = vsel %vm373, %v6932, %v6934
    %6936 = vrot.lane.b32.xlu0 %v6933, 127
    %v6937 = vpop.permute.xlu0 %6936
    %6938 = vrot.lane.b32.xlu0 %v6935, 127
    %v6939 = vpop.permute.xlu0 %6938
    %v6942 = vadd.f32 %v6921, %v6937
    %v6943 = vadd.f32 %v6922, %v6939
    %s6944 = sld [smem:[#allocation7 + $0x2c]]
    %v6945 = vstv %s6944
    %v6946 = vmul.f32 %v6945, %v3127
    %v6947 = vmul.f32 %v6945, %v3123
    %v6948 = vmul.f32 %v6945, %v3128
    %v6952 = vrot.slane %v6946, 2
    %v6953 = vrot.slane %v6947, 2
    %v6954 = vsel %vm373, %v6952, %v6953
    %v6955 = vrot.slane %v6948, 2
    %v6956 = vsel %vm373, %v6953, %v6955
    %6957 = vrot.lane.b32.xlu0 %v6954, 126
    %v6958 = vpop.permute.xlu0 %6957
    %6959 = vrot.lane.b32.xlu0 %v6956, 126
    %v6960 = vpop.permute.xlu0 %6959
    %v6963 = vadd.f32 %v6942, %v6958
    %v6964 = vadd.f32 %v6943, %v6960
    %s6965 = sld [smem:[#allocation7 + $0x5a]]
    %v6966 = vstv %s6965
    %v6967 = vmul.f32 %v6966, %v3127
    %v6968 = vmul.f32 %v6966, %v3123
    %v6969 = vadd.f32 %v6203, %v6967
    %v6970 = vadd.f32 %v6204, %v6968
    %s6971 = sld [smem:[#allocation7 + $0x5b]]
    %v6972 = vstv %s6971
    %v6973 = vmul.f32 %v6972, %v3127
    %v6974 = vmul.f32 %v6972, %v3123
    %6977 = vrot.lane.b32.xlu0 %v6973, 127
    %v6978 = vpop.permute.xlu0 %6977
    %6979 = vrot.lane.b32.xlu0 %v6974, 127
    %v6980 = vpop.permute.xlu0 %6979
    %v6983 = vadd.f32 %v6969, %v6978
    %v6984 = vadd.f32 %v6970, %v6980
    %s6985 = sld [smem:[#allocation7 + $0x5c]]
    %v6986 = vstv %s6985
    %v6987 = vmul.f32 %v6986, %v3127
    %v6988 = vmul.f32 %v6986, %v3123
    %6991 = vrot.lane.b32.xlu0 %v6987, 126
    %v6992 = vpop.permute.xlu0 %6991
    %6993 = vrot.lane.b32.xlu0 %v6988, 126
    %v6994 = vpop.permute.xlu0 %6993
    %v6997 = vadd.f32 %v6983, %v6992
    %v6998 = vadd.f32 %v6984, %v6994
    %s6999 = sld [smem:[#allocation7 + $0x5d]]
    %v7000 = vstv %s6999
    %v7001 = vmul.f32 %v7000, %v3127
    %v7002 = vmul.f32 %v7000, %v3123
    %v7003 = vmul.f32 %v7000, %v3128
    %v7007 = vrot.slane %v7001, 1
    %v7008 = vrot.slane %v7002, 1
    %v7009 = vsel %vm313, %v7007, %v7008
    %v7010 = vrot.slane %v7003, 1
    %v7011 = vsel %vm313, %v7008, %v7010
    %v7014 = vadd.f32 %v6997, %v7009
    %v7015 = vadd.f32 %v6998, %v7011
    %s7016 = sld [smem:[#allocation7 + $0x5e]]
    %v7017 = vstv %s7016
    %v7018 = vmul.f32 %v7017, %v3127
    %v7019 = vmul.f32 %v7017, %v3123
    %v7020 = vmul.f32 %v7017, %v3128
    %v7024 = vrot.slane %v7018, 1
    %v7025 = vrot.slane %v7019, 1
    %v7026 = vsel %vm313, %v7024, %v7025
    %v7027 = vrot.slane %v7020, 1
    %v7028 = vsel %vm313, %v7025, %v7027
    %7029 = vrot.lane.b32.xlu0 %v7026, 127
    %v7030 = vpop.permute.xlu0 %7029
    %7031 = vrot.lane.b32.xlu0 %v7028, 127
    %v7032 = vpop.permute.xlu0 %7031
    %v7035 = vadd.f32 %v7014, %v7030
    %v7036 = vadd.f32 %v7015, %v7032
    %s7037 = sld [smem:[#allocation7 + $0x5f]]
    %v7038 = vstv %s7037
    %v7039 = vmul.f32 %v7038, %v3127
    %v7040 = vmul.f32 %v7038, %v3123
    %v7041 = vmul.f32 %v7038, %v3128
    %v7045 = vrot.slane %v7039, 1
    %v7046 = vrot.slane %v7040, 1
    %v7047 = vsel %vm313, %v7045, %v7046
    %v7048 = vrot.slane %v7041, 1
    %v7049 = vsel %vm313, %v7046, %v7048
    %7050 = vrot.lane.b32.xlu0 %v7047, 126
    %v7051 = vpop.permute.xlu0 %7050
    %7052 = vrot.lane.b32.xlu0 %v7049, 126
    %v7053 = vpop.permute.xlu0 %7052
    %v7056 = vadd.f32 %v7035, %v7051
    %v7057 = vadd.f32 %v7036, %v7053
    %s7058 = sld [smem:[#allocation7 + $0x60]]
    %v7059 = vstv %s7058
    %v7060 = vmul.f32 %v7059, %v3127
    %v7061 = vmul.f32 %v7059, %v3123
    %v7062 = vmul.f32 %v7059, %v3128
    %v7066 = vrot.slane %v7060, 2
    %v7067 = vrot.slane %v7061, 2
    %v7068 = vsel %vm373, %v7066, %v7067
    %v7069 = vrot.slane %v7062, 2
    %v7070 = vsel %vm373, %v7067, %v7069
    %v7073 = vadd.f32 %v7056, %v7068
    %v7074 = vadd.f32 %v7057, %v7070
    %s7075 = sld [smem:[#allocation7 + $0x61]]
    %v7076 = vstv %s7075
    %v7077 = vmul.f32 %v7076, %v3127
    %v7078 = vmul.f32 %v7076, %v3123
    %v7079 = vmul.f32 %v7076, %v3128
    %v7083 = vrot.slane %v7077, 2
    %v7084 = vrot.slane %v7078, 2
    %v7085 = vsel %vm373, %v7083, %v7084
    %v7086 = vrot.slane %v7079, 2
    %v7087 = vsel %vm373, %v7084, %v7086
    %7088 = vrot.lane.b32.xlu0 %v7085, 127
    %v7089 = vpop.permute.xlu0 %7088
    %7090 = vrot.lane.b32.xlu0 %v7087, 127
    %v7091 = vpop.permute.xlu0 %7090
    %v7094 = vadd.f32 %v7073, %v7089
    %v7095 = vadd.f32 %v7074, %v7091
    %s7096 = sld [smem:[#allocation7 + $0x62]]
    %v7097 = vstv %s7096
    %v7098 = vmul.f32 %v7097, %v3127
    %v7099 = vmul.f32 %v7097, %v3123
    %v7100 = vmul.f32 %v7097, %v3128
    %v7104 = vrot.slane %v7098, 2
    %v7105 = vrot.slane %v7099, 2
    %v7106 = vsel %vm373, %v7104, %v7105
    %v7107 = vrot.slane %v7100, 2
    %v7108 = vsel %vm373, %v7105, %v7107
    %7109 = vrot.lane.b32.xlu0 %v7106, 126
    %v7110 = vpop.permute.xlu0 %7109
    %7111 = vrot.lane.b32.xlu0 %v7108, 126
    %v7112 = vpop.permute.xlu0 %7111
    %v7115 = vadd.f32 %v7094, %v7110
    %v7116 = vadd.f32 %v7095, %v7112
    %s7117 = sld [smem:[#allocation7 + $0x90]]
    %v7118 = vstv %s7117
    %v7119 = vmul.f32 %v7118, %v3127
    %v7120 = vmul.f32 %v7118, %v3123
    %v7121 = vadd.f32 %v6355, %v7119
    %v7122 = vadd.f32 %v6356, %v7120
    %s7123 = sld [smem:[#allocation7 + $0x91]]
    %v7124 = vstv %s7123
    %v7125 = vmul.f32 %v7124, %v3127
    %v7126 = vmul.f32 %v7124, %v3123
    %7129 = vrot.lane.b32.xlu0 %v7125, 127
    %v7130 = vpop.permute.xlu0 %7129
    %7131 = vrot.lane.b32.xlu0 %v7126, 127
    %v7132 = vpop.permute.xlu0 %7131
    %v7135 = vadd.f32 %v7121, %v7130
    %v7136 = vadd.f32 %v7122, %v7132
    %s7137 = sld [smem:[#allocation7 + $0x92]]
    %v7138 = vstv %s7137
    %v7139 = vmul.f32 %v7138, %v3127
    %v7140 = vmul.f32 %v7138, %v3123
    %7143 = vrot.lane.b32.xlu0 %v7139, 126
    %v7144 = vpop.permute.xlu0 %7143
    %7145 = vrot.lane.b32.xlu0 %v7140, 126
    %v7146 = vpop.permute.xlu0 %7145
    %v7149 = vadd.f32 %v7135, %v7144
    %v7150 = vadd.f32 %v7136, %v7146
    %s7151 = sld [smem:[#allocation7 + $0x93]]
    %v7152 = vstv %s7151
    %v7153 = vmul.f32 %v7152, %v3127
    %v7154 = vmul.f32 %v7152, %v3123
    %v7155 = vmul.f32 %v7152, %v3128
    %v7159 = vrot.slane %v7153, 1
    %v7160 = vrot.slane %v7154, 1
    %v7161 = vsel %vm313, %v7159, %v7160
    %v7162 = vrot.slane %v7155, 1
    %v7163 = vsel %vm313, %v7160, %v7162
    %v7166 = vadd.f32 %v7149, %v7161
    %v7167 = vadd.f32 %v7150, %v7163
    %s7168 = sld [smem:[#allocation7 + $0x94]]
    %v7169 = vstv %s7168
    %v7170 = vmul.f32 %v7169, %v3127
    %v7171 = vmul.f32 %v7169, %v3123
    %v7172 = vmul.f32 %v7169, %v3128
    %v7176 = vrot.slane %v7170, 1
    %v7177 = vrot.slane %v7171, 1
    %v7178 = vsel %vm313, %v7176, %v7177
    %v7179 = vrot.slane %v7172, 1
    %v7180 = vsel %vm313, %v7177, %v7179
    %7181 = vrot.lane.b32.xlu0 %v7178, 127
    %v7182 = vpop.permute.xlu0 %7181
    %7183 = vrot.lane.b32.xlu0 %v7180, 127
    %v7184 = vpop.permute.xlu0 %7183
    %v7187 = vadd.f32 %v7166, %v7182
    %v7188 = vadd.f32 %v7167, %v7184
    %s7189 = sld [smem:[#allocation7 + $0x95]]
    %v7190 = vstv %s7189
    %v7191 = vmul.f32 %v7190, %v3127
    %v7192 = vmul.f32 %v7190, %v3123
    %v7193 = vmul.f32 %v7190, %v3128
    %v7197 = vrot.slane %v7191, 1
    %v7198 = vrot.slane %v7192, 1
    %v7199 = vsel %vm313, %v7197, %v7198
    %v7200 = vrot.slane %v7193, 1
    %v7201 = vsel %vm313, %v7198, %v7200
    %7202 = vrot.lane.b32.xlu0 %v7199, 126
    %v7203 = vpop.permute.xlu0 %7202
    %7204 = vrot.lane.b32.xlu0 %v7201, 126
    %v7205 = vpop.permute.xlu0 %7204
    %v7208 = vadd.f32 %v7187, %v7203
    %v7209 = vadd.f32 %v7188, %v7205
    %s7210 = sld [smem:[#allocation7 + $0x96]]
    %v7211 = vstv %s7210
    %v7212 = vmul.f32 %v7211, %v3127
    %v7213 = vmul.f32 %v7211, %v3123
    %v7214 = vmul.f32 %v7211, %v3128
    %v7218 = vrot.slane %v7212, 2
    %v7219 = vrot.slane %v7213, 2
    %v7220 = vsel %vm373, %v7218, %v7219
    %v7221 = vrot.slane %v7214, 2
    %v7222 = vsel %vm373, %v7219, %v7221
    %v7225 = vadd.f32 %v7208, %v7220
    %v7226 = vadd.f32 %v7209, %v7222
    %s7227 = sld [smem:[#allocation7 + $0x97]]
    %v7228 = vstv %s7227
    %v7229 = vmul.f32 %v7228, %v3127
    %v7230 = vmul.f32 %v7228, %v3123
    %v7231 = vmul.f32 %v7228, %v3128
    %v7235 = vrot.slane %v7229, 2
    %v7236 = vrot.slane %v7230, 2
    %v7237 = vsel %vm373, %v7235, %v7236
    %v7238 = vrot.slane %v7231, 2
    %v7239 = vsel %vm373, %v7236, %v7238
    %7240 = vrot.lane.b32.xlu0 %v7237, 127
    %v7241 = vpop.permute.xlu0 %7240
    %7242 = vrot.lane.b32.xlu0 %v7239, 127
    %v7243 = vpop.permute.xlu0 %7242
    %v7246 = vadd.f32 %v7225, %v7241
    %v7247 = vadd.f32 %v7226, %v7243
    %s7248 = sld [smem:[#allocation7 + $0x98]]
    %v7249 = vstv %s7248
    %v7250 = vmul.f32 %v7249, %v3127
    %v7251 = vmul.f32 %v7249, %v3123
    %v7252 = vmul.f32 %v7249, %v3128
    %v7256 = vrot.slane %v7250, 2
    %v7257 = vrot.slane %v7251, 2
    %v7258 = vsel %vm373, %v7256, %v7257
    %v7259 = vrot.slane %v7252, 2
    %v7260 = vsel %vm373, %v7257, %v7259
    %7261 = vrot.lane.b32.xlu0 %v7258, 126
    %v7262 = vpop.permute.xlu0 %7261
    %7263 = vrot.lane.b32.xlu0 %v7260, 126
    %v7264 = vpop.permute.xlu0 %7263
    %v7267 = vadd.f32 %v7246, %v7262
    %v7268 = vadd.f32 %v7247, %v7264
    %s7269 = sld [smem:[#allocation7 + $0xc6]]
    %v7270 = vstv %s7269
    %v7271 = vmul.f32 %v7270, %v3127
    %v7272 = vmul.f32 %v7270, %v3123
    %v7273 = vadd.f32 %v6507, %v7271
    %v7274 = vadd.f32 %v6508, %v7272
    %s7275 = sld [smem:[#allocation7 + $0xc7]]
    %v7276 = vstv %s7275
    %v7277 = vmul.f32 %v7276, %v3127
    %v7278 = vmul.f32 %v7276, %v3123
    %7281 = vrot.lane.b32.xlu0 %v7277, 127
    %v7282 = vpop.permute.xlu0 %7281
    %7283 = vrot.lane.b32.xlu0 %v7278, 127
    %v7284 = vpop.permute.xlu0 %7283
    %v7287 = vadd.f32 %v7273, %v7282
    %v7288 = vadd.f32 %v7274, %v7284
    %s7289 = sld [smem:[#allocation7 + $0xc8]]
    %v7290 = vstv %s7289
    %v7291 = vmul.f32 %v7290, %v3127
    %v7292 = vmul.f32 %v7290, %v3123
    %7295 = vrot.lane.b32.xlu0 %v7291, 126
    %v7296 = vpop.permute.xlu0 %7295
    %7297 = vrot.lane.b32.xlu0 %v7292, 126
    %v7298 = vpop.permute.xlu0 %7297
    %v7301 = vadd.f32 %v7287, %v7296
    %v7302 = vadd.f32 %v7288, %v7298
    %s7303 = sld [smem:[#allocation7 + $0xc9]]
    %v7304 = vstv %s7303
    %v7305 = vmul.f32 %v7304, %v3127
    %v7306 = vmul.f32 %v7304, %v3123
    %v7307 = vmul.f32 %v7304, %v3128
    %v7311 = vrot.slane %v7305, 1
    %v7312 = vrot.slane %v7306, 1
    %v7313 = vsel %vm313, %v7311, %v7312
    %v7314 = vrot.slane %v7307, 1
    %v7315 = vsel %vm313, %v7312, %v7314
    %v7318 = vadd.f32 %v7301, %v7313
    %v7319 = vadd.f32 %v7302, %v7315
    %s7320 = sld [smem:[#allocation7 + $0xca]]
    %v7321 = vstv %s7320
    %v7322 = vmul.f32 %v7321, %v3127
    %v7323 = vmul.f32 %v7321, %v3123
    %v7324 = vmul.f32 %v7321, %v3128
    %v7328 = vrot.slane %v7322, 1
    %v7329 = vrot.slane %v7323, 1
    %v7330 = vsel %vm313, %v7328, %v7329
    %v7331 = vrot.slane %v7324, 1
    %v7332 = vsel %vm313, %v7329, %v7331
    %7333 = vrot.lane.b32.xlu0 %v7330, 127
    %v7334 = vpop.permute.xlu0 %7333
    %7335 = vrot.lane.b32.xlu0 %v7332, 127
    %v7336 = vpop.permute.xlu0 %7335
    %v7339 = vadd.f32 %v7318, %v7334
    %v7340 = vadd.f32 %v7319, %v7336
    %s7341 = sld [smem:[#allocation7 + $0xcb]]
    %v7342 = vstv %s7341
    %v7343 = vmul.f32 %v7342, %v3127
    %v7344 = vmul.f32 %v7342, %v3123
    %v7345 = vmul.f32 %v7342, %v3128
    %v7349 = vrot.slane %v7343, 1
    %v7350 = vrot.slane %v7344, 1
    %v7351 = vsel %vm313, %v7349, %v7350
    %v7352 = vrot.slane %v7345, 1
    %v7353 = vsel %vm313, %v7350, %v7352
    %7354 = vrot.lane.b32.xlu0 %v7351, 126
    %v7355 = vpop.permute.xlu0 %7354
    %7356 = vrot.lane.b32.xlu0 %v7353, 126
    %v7357 = vpop.permute.xlu0 %7356
    %v7360 = vadd.f32 %v7339, %v7355
    %v7361 = vadd.f32 %v7340, %v7357
    %s7362 = sld [smem:[#allocation7 + $0xcc]]
    %v7363 = vstv %s7362
    %v7364 = vmul.f32 %v7363, %v3127
    %v7365 = vmul.f32 %v7363, %v3123
    %v7366 = vmul.f32 %v7363, %v3128
    %v7370 = vrot.slane %v7364, 2
    %v7371 = vrot.slane %v7365, 2
    %v7372 = vsel %vm373, %v7370, %v7371
    %v7373 = vrot.slane %v7366, 2
    %v7374 = vsel %vm373, %v7371, %v7373
    %v7377 = vadd.f32 %v7360, %v7372
    %v7378 = vadd.f32 %v7361, %v7374
    %s7379 = sld [smem:[#allocation7 + $0xcd]]
    %v7380 = vstv %s7379
    %v7381 = vmul.f32 %v7380, %v3127
    %v7382 = vmul.f32 %v7380, %v3123
    %v7383 = vmul.f32 %v7380, %v3128
    %v7387 = vrot.slane %v7381, 2
    %v7388 = vrot.slane %v7382, 2
    %v7389 = vsel %vm373, %v7387, %v7388
    %v7390 = vrot.slane %v7383, 2
    %v7391 = vsel %vm373, %v7388, %v7390
    %7392 = vrot.lane.b32.xlu0 %v7389, 127
    %v7393 = vpop.permute.xlu0 %7392
    %7394 = vrot.lane.b32.xlu0 %v7391, 127
    %v7395 = vpop.permute.xlu0 %7394
    %v7398 = vadd.f32 %v7377, %v7393
    %v7399 = vadd.f32 %v7378, %v7395
    %s7400 = sld [smem:[#allocation7 + $0xce]]
    %v7401 = vstv %s7400
    %v7402 = vmul.f32 %v7401, %v3127
    %v7403 = vmul.f32 %v7401, %v3123
    %v7404 = vmul.f32 %v7401, %v3128
    %v7408 = vrot.slane %v7402, 2
    %v7409 = vrot.slane %v7403, 2
    %v7410 = vsel %vm373, %v7408, %v7409
    %v7411 = vrot.slane %v7404, 2
    %v7412 = vsel %vm373, %v7409, %v7411
    %7413 = vrot.lane.b32.xlu0 %v7410, 126
    %v7414 = vpop.permute.xlu0 %7413
    %7415 = vrot.lane.b32.xlu0 %v7412, 126
    %v7416 = vpop.permute.xlu0 %7415
    %v7419 = vadd.f32 %v7398, %v7414
    %v7420 = vadd.f32 %v7399, %v7416
    %s7421 = sld [smem:[#allocation7 + $0xfc]]
    %v7422 = vstv %s7421
    %v7423 = vmul.f32 %v7422, %v3127
    %v7424 = vmul.f32 %v7422, %v3123
    %v7425 = vadd.f32 %v6659, %v7423
    %v7426 = vadd.f32 %v6660, %v7424
    %s7427 = sld [smem:[#allocation7 + $0xfd]]
    %v7428 = vstv %s7427
    %v7429 = vmul.f32 %v7428, %v3127
    %v7430 = vmul.f32 %v7428, %v3123
    %7433 = vrot.lane.b32.xlu0 %v7429, 127
    %v7434 = vpop.permute.xlu0 %7433
    %7435 = vrot.lane.b32.xlu0 %v7430, 127
    %v7436 = vpop.permute.xlu0 %7435
    %v7439 = vadd.f32 %v7425, %v7434
    %v7440 = vadd.f32 %v7426, %v7436
    %s7441 = sld [smem:[#allocation7 + $0xfe]]
    %v7442 = vstv %s7441
    %v7443 = vmul.f32 %v7442, %v3127
    %v7444 = vmul.f32 %v7442, %v3123
    %7447 = vrot.lane.b32.xlu0 %v7443, 126
    %v7448 = vpop.permute.xlu0 %7447
    %7449 = vrot.lane.b32.xlu0 %v7444, 126
    %v7450 = vpop.permute.xlu0 %7449
    %v7453 = vadd.f32 %v7439, %v7448
    %v7454 = vadd.f32 %v7440, %v7450
    %s7455 = sld [smem:[#allocation7 + $0xff]]
    %v7456 = vstv %s7455
    %v7457 = vmul.f32 %v7456, %v3127
    %v7458 = vmul.f32 %v7456, %v3123
    %v7459 = vmul.f32 %v7456, %v3128
    %v7463 = vrot.slane %v7457, 1
    %v7464 = vrot.slane %v7458, 1
    %v7465 = vsel %vm313, %v7463, %v7464
    %v7466 = vrot.slane %v7459, 1
    %v7467 = vsel %vm313, %v7464, %v7466
    %v7470 = vadd.f32 %v7453, %v7465
    %v7471 = vadd.f32 %v7454, %v7467
    %s7472 = sld [smem:[#allocation7 + $0x100]]
    %v7473 = vstv %s7472
    %v7474 = vmul.f32 %v7473, %v3127
    %v7475 = vmul.f32 %v7473, %v3123
    %v7476 = vmul.f32 %v7473, %v3128
    %v7480 = vrot.slane %v7474, 1
    %v7481 = vrot.slane %v7475, 1
    %v7482 = vsel %vm313, %v7480, %v7481
    %v7483 = vrot.slane %v7476, 1
    %v7484 = vsel %vm313, %v7481, %v7483
    %7485 = vrot.lane.b32.xlu0 %v7482, 127
    %v7486 = vpop.permute.xlu0 %7485
    %7487 = vrot.lane.b32.xlu0 %v7484, 127
    %v7488 = vpop.permute.xlu0 %7487
    %v7491 = vadd.f32 %v7470, %v7486
    %v7492 = vadd.f32 %v7471, %v7488
    %s7493 = sld [smem:[#allocation7 + $0x101]]
    %v7494 = vstv %s7493
    %v7495 = vmul.f32 %v7494, %v3127
    %v7496 = vmul.f32 %v7494, %v3123
    %v7497 = vmul.f32 %v7494, %v3128
    %v7501 = vrot.slane %v7495, 1
    %v7502 = vrot.slane %v7496, 1
    %v7503 = vsel %vm313, %v7501, %v7502
    %v7504 = vrot.slane %v7497, 1
    %v7505 = vsel %vm313, %v7502, %v7504
    %7506 = vrot.lane.b32.xlu0 %v7503, 126
    %v7507 = vpop.permute.xlu0 %7506
    %7508 = vrot.lane.b32.xlu0 %v7505, 126
    %v7509 = vpop.permute.xlu0 %7508
    %v7512 = vadd.f32 %v7491, %v7507
    %v7513 = vadd.f32 %v7492, %v7509
    %s7514 = sld [smem:[#allocation7 + $0x102]]
    %v7515 = vstv %s7514
    %v7516 = vmul.f32 %v7515, %v3127
    %v7517 = vmul.f32 %v7515, %v3123
    %v7518 = vmul.f32 %v7515, %v3128
    %v7522 = vrot.slane %v7516, 2
    %v7523 = vrot.slane %v7517, 2
    %v7524 = vsel %vm373, %v7522, %v7523
    %v7525 = vrot.slane %v7518, 2
    %v7526 = vsel %vm373, %v7523, %v7525
    %v7529 = vadd.f32 %v7512, %v7524
    %v7530 = vadd.f32 %v7513, %v7526
    %s7531 = sld [smem:[#allocation7 + $0x103]]
    %v7532 = vstv %s7531
    %v7533 = vmul.f32 %v7532, %v3127
    %v7534 = vmul.f32 %v7532, %v3123
    %v7535 = vmul.f32 %v7532, %v3128
    %v7539 = vrot.slane %v7533, 2
    %v7540 = vrot.slane %v7534, 2
    %v7541 = vsel %vm373, %v7539, %v7540
    %v7542 = vrot.slane %v7535, 2
    %v7543 = vsel %vm373, %v7540, %v7542
    %7544 = vrot.lane.b32.xlu0 %v7541, 127
    %v7545 = vpop.permute.xlu0 %7544
    %7546 = vrot.lane.b32.xlu0 %v7543, 127
    %v7547 = vpop.permute.xlu0 %7546
    %v7550 = vadd.f32 %v7529, %v7545
    %v7551 = vadd.f32 %v7530, %v7547
    %s7552 = sld [smem:[#allocation7 + $0x104]]
    %v7553 = vstv %s7552
    %v7554 = vmul.f32 %v7553, %v3127
    %v7555 = vmul.f32 %v7553, %v3123
    %v7556 = vmul.f32 %v7553, %v3128
    %v7560 = vrot.slane %v7554, 2
    %v7561 = vrot.slane %v7555, 2
    %v7562 = vsel %vm373, %v7560, %v7561
    %v7563 = vrot.slane %v7556, 2
    %v7564 = vsel %vm373, %v7561, %v7563
    %7565 = vrot.lane.b32.xlu0 %v7562, 126
    %v7566 = vpop.permute.xlu0 %7565
    %7567 = vrot.lane.b32.xlu0 %v7564, 126
    %v7568 = vpop.permute.xlu0 %7567
    %v7571 = vadd.f32 %v7550, %v7566
    %v7572 = vadd.f32 %v7551, %v7568
    %s7573 = sld [smem:[#allocation7 + $0x132]]
    %v7574 = vstv %s7573
    %v7575 = vmul.f32 %v7574, %v3127
    %v7576 = vmul.f32 %v7574, %v3123
    %v7577 = vadd.f32 %v6811, %v7575
    %v7578 = vadd.f32 %v6812, %v7576
    %s7579 = sld [smem:[#allocation7 + $0x133]]
    %v7580 = vstv %s7579
    %v7581 = vmul.f32 %v7580, %v3127
    %v7582 = vmul.f32 %v7580, %v3123
    %7585 = vrot.lane.b32.xlu0 %v7581, 127
    %v7586 = vpop.permute.xlu0 %7585
    %7587 = vrot.lane.b32.xlu0 %v7582, 127
    %v7588 = vpop.permute.xlu0 %7587
    %v7591 = vadd.f32 %v7577, %v7586
    %v7592 = vadd.f32 %v7578, %v7588
    %s7593 = sld [smem:[#allocation7 + $0x134]]
    %v7594 = vstv %s7593
    %v7595 = vmul.f32 %v7594, %v3127
    %v7596 = vmul.f32 %v7594, %v3123
    %7599 = vrot.lane.b32.xlu0 %v7595, 126
    %v7600 = vpop.permute.xlu0 %7599
    %7601 = vrot.lane.b32.xlu0 %v7596, 126
    %v7602 = vpop.permute.xlu0 %7601
    %v7605 = vadd.f32 %v7591, %v7600
    %v7606 = vadd.f32 %v7592, %v7602
    %s7607 = sld [smem:[#allocation7 + $0x135]]
    %v7608 = vstv %s7607
    %v7609 = vmul.f32 %v7608, %v3127
    %v7610 = vmul.f32 %v7608, %v3123
    %v7611 = vmul.f32 %v7608, %v3128
    %v7615 = vrot.slane %v7609, 1
    %v7616 = vrot.slane %v7610, 1
    %v7617 = vsel %vm313, %v7615, %v7616
    %v7618 = vrot.slane %v7611, 1
    %v7619 = vsel %vm313, %v7616, %v7618
    %v7622 = vadd.f32 %v7605, %v7617
    %v7623 = vadd.f32 %v7606, %v7619
    %s7624 = sld [smem:[#allocation7 + $0x136]]
    %v7625 = vstv %s7624
    %v7626 = vmul.f32 %v7625, %v3127
    %v7627 = vmul.f32 %v7625, %v3123
    %v7628 = vmul.f32 %v7625, %v3128
    %v7632 = vrot.slane %v7626, 1
    %v7633 = vrot.slane %v7627, 1
    %v7634 = vsel %vm313, %v7632, %v7633
    %v7635 = vrot.slane %v7628, 1
    %v7636 = vsel %vm313, %v7633, %v7635
    %7637 = vrot.lane.b32.xlu0 %v7634, 127
    %v7638 = vpop.permute.xlu0 %7637
    %7639 = vrot.lane.b32.xlu0 %v7636, 127
    %v7640 = vpop.permute.xlu0 %7639
    %v7643 = vadd.f32 %v7622, %v7638
    %v7644 = vadd.f32 %v7623, %v7640
    %s7645 = sld [smem:[#allocation7 + $0x137]]
    %v7646 = vstv %s7645
    %v7647 = vmul.f32 %v7646, %v3127
    %v7648 = vmul.f32 %v7646, %v3123
    %v7649 = vmul.f32 %v7646, %v3128
    %v7653 = vrot.slane %v7647, 1
    %v7654 = vrot.slane %v7648, 1
    %v7655 = vsel %vm313, %v7653, %v7654
    %v7656 = vrot.slane %v7649, 1
    %v7657 = vsel %vm313, %v7654, %v7656
    %7658 = vrot.lane.b32.xlu0 %v7655, 126
    %v7659 = vpop.permute.xlu0 %7658
    %7660 = vrot.lane.b32.xlu0 %v7657, 126
    %v7661 = vpop.permute.xlu0 %7660
    %v7664 = vadd.f32 %v7643, %v7659
    %v7665 = vadd.f32 %v7644, %v7661
    %s7666 = sld [smem:[#allocation7 + $0x138]]
    %v7667 = vstv %s7666
    %v7668 = vmul.f32 %v7667, %v3127
    %v7669 = vmul.f32 %v7667, %v3123
    %v7670 = vmul.f32 %v7667, %v3128
    %v7674 = vrot.slane %v7668, 2
    %v7675 = vrot.slane %v7669, 2
    %v7676 = vsel %vm373, %v7674, %v7675
    %v7677 = vrot.slane %v7670, 2
    %v7678 = vsel %vm373, %v7675, %v7677
    %v7681 = vadd.f32 %v7664, %v7676
    %v7682 = vadd.f32 %v7665, %v7678
    %s7683 = sld [smem:[#allocation7 + $0x139]]
    %v7684 = vstv %s7683
    %v7685 = vmul.f32 %v7684, %v3127
    %v7686 = vmul.f32 %v7684, %v3123
    %v7687 = vmul.f32 %v7684, %v3128
    %v7691 = vrot.slane %v7685, 2
    %v7692 = vrot.slane %v7686, 2
    %v7693 = vsel %vm373, %v7691, %v7692
    %v7694 = vrot.slane %v7687, 2
    %v7695 = vsel %vm373, %v7692, %v7694
    %7696 = vrot.lane.b32.xlu0 %v7693, 127
    %v7697 = vpop.permute.xlu0 %7696
    %7698 = vrot.lane.b32.xlu0 %v7695, 127
    %v7699 = vpop.permute.xlu0 %7698
    %v7702 = vadd.f32 %v7681, %v7697
    %v7703 = vadd.f32 %v7682, %v7699
    %s7704 = sld [smem:[#allocation7 + $0x13a]]
    %v7705 = vstv %s7704
    %v7706 = vmul.f32 %v7705, %v3127
    %v7707 = vmul.f32 %v7705, %v3123
    %v7708 = vmul.f32 %v7705, %v3128
    %v7712 = vrot.slane %v7706, 2
    %v7713 = vrot.slane %v7707, 2
    %v7714 = vsel %vm373, %v7712, %v7713
    %v7715 = vrot.slane %v7708, 2
    %v7716 = vsel %vm373, %v7713, %v7715
    %7717 = vrot.lane.b32.xlu0 %v7714, 126
    %v7718 = vpop.permute.xlu0 %7717
    %7719 = vrot.lane.b32.xlu0 %v7716, 126
    %v7720 = vpop.permute.xlu0 %7719
    %v7723 = vadd.f32 %v7702, %v7718
    %v7724 = vadd.f32 %v7703, %v7720
    %s7725 = sld [smem:[#allocation7 + $0x2d]]
    %v7726 = vstv %s7725
    %v7727 = vmul.f32 %v7726, %v3151
    %v7728 = vmul.f32 %v7726, %v3147
    %v7729 = vadd.f32 %v6963, %v7727
    %v7730 = vadd.f32 %v6964, %v7728
    %s7731 = sld [smem:[#allocation7 + $0x2e]]
    %v7732 = vstv %s7731
    %v7733 = vmul.f32 %v7732, %v3151
    %v7734 = vmul.f32 %v7732, %v3147
    %7737 = vrot.lane.b32.xlu0 %v7733, 127
    %v7738 = vpop.permute.xlu0 %7737
    %7739 = vrot.lane.b32.xlu0 %v7734, 127
    %v7740 = vpop.permute.xlu0 %7739
    %v7743 = vadd.f32 %v7729, %v7738
    %v7744 = vadd.f32 %v7730, %v7740
    %s7745 = sld [smem:[#allocation7 + $0x2f]]
    %v7746 = vstv %s7745
    %v7747 = vmul.f32 %v7746, %v3151
    %v7748 = vmul.f32 %v7746, %v3147
    %7751 = vrot.lane.b32.xlu0 %v7747, 126
    %v7752 = vpop.permute.xlu0 %7751
    %7753 = vrot.lane.b32.xlu0 %v7748, 126
    %v7754 = vpop.permute.xlu0 %7753
    %v7757 = vadd.f32 %v7743, %v7752
    %v7758 = vadd.f32 %v7744, %v7754
    %s7759 = sld [smem:[#allocation7 + $0x30]]
    %v7760 = vstv %s7759
    %v7761 = vmul.f32 %v7760, %v3151
    %v7762 = vmul.f32 %v7760, %v3147
    %v7763 = vmul.f32 %v7760, %v3152
    %v7767 = vrot.slane %v7761, 1
    %v7768 = vrot.slane %v7762, 1
    %v7769 = vsel %vm313, %v7767, %v7768
    %v7770 = vrot.slane %v7763, 1
    %v7771 = vsel %vm313, %v7768, %v7770
    %v7774 = vadd.f32 %v7757, %v7769
    %v7775 = vadd.f32 %v7758, %v7771
    %s7776 = sld [smem:[#allocation7 + $0x31]]
    %v7777 = vstv %s7776
    %v7778 = vmul.f32 %v7777, %v3151
    %v7779 = vmul.f32 %v7777, %v3147
    %v7780 = vmul.f32 %v7777, %v3152
    %v7784 = vrot.slane %v7778, 1
    %v7785 = vrot.slane %v7779, 1
    %v7786 = vsel %vm313, %v7784, %v7785
    %v7787 = vrot.slane %v7780, 1
    %v7788 = vsel %vm313, %v7785, %v7787
    %7789 = vrot.lane.b32.xlu0 %v7786, 127
    %v7790 = vpop.permute.xlu0 %7789
    %7791 = vrot.lane.b32.xlu0 %v7788, 127
    %v7792 = vpop.permute.xlu0 %7791
    %v7795 = vadd.f32 %v7774, %v7790
    %v7796 = vadd.f32 %v7775, %v7792
    %s7797 = sld [smem:[#allocation7 + $0x32]]
    %v7798 = vstv %s7797
    %v7799 = vmul.f32 %v7798, %v3151
    %v7800 = vmul.f32 %v7798, %v3147
    %v7801 = vmul.f32 %v7798, %v3152
    %v7805 = vrot.slane %v7799, 1
    %v7806 = vrot.slane %v7800, 1
    %v7807 = vsel %vm313, %v7805, %v7806
    %v7808 = vrot.slane %v7801, 1
    %v7809 = vsel %vm313, %v7806, %v7808
    %7810 = vrot.lane.b32.xlu0 %v7807, 126
    %v7811 = vpop.permute.xlu0 %7810
    %7812 = vrot.lane.b32.xlu0 %v7809, 126
    %v7813 = vpop.permute.xlu0 %7812
    %v7816 = vadd.f32 %v7795, %v7811
    %v7817 = vadd.f32 %v7796, %v7813
    %s7818 = sld [smem:[#allocation7 + $0x33]]
    %v7819 = vstv %s7818
    %v7820 = vmul.f32 %v7819, %v3151
    %v7821 = vmul.f32 %v7819, %v3147
    %v7822 = vmul.f32 %v7819, %v3152
    %v7826 = vrot.slane %v7820, 2
    %v7827 = vrot.slane %v7821, 2
    %v7828 = vsel %vm373, %v7826, %v7827
    %v7829 = vrot.slane %v7822, 2
    %v7830 = vsel %vm373, %v7827, %v7829
    %v7833 = vadd.f32 %v7816, %v7828
    %v7834 = vadd.f32 %v7817, %v7830
    %s7835 = sld [smem:[#allocation7 + $0x34]]
    %v7836 = vstv %s7835
    %v7837 = vmul.f32 %v7836, %v3151
    %v7838 = vmul.f32 %v7836, %v3147
    %v7839 = vmul.f32 %v7836, %v3152
    %v7843 = vrot.slane %v7837, 2
    %v7844 = vrot.slane %v7838, 2
    %v7845 = vsel %vm373, %v7843, %v7844
    %v7846 = vrot.slane %v7839, 2
    %v7847 = vsel %vm373, %v7844, %v7846
    %7848 = vrot.lane.b32.xlu0 %v7845, 127
    %v7849 = vpop.permute.xlu0 %7848
    %7850 = vrot.lane.b32.xlu0 %v7847, 127
    %v7851 = vpop.permute.xlu0 %7850
    %v7854 = vadd.f32 %v7833, %v7849
    %v7855 = vadd.f32 %v7834, %v7851
    %s7856 = sld [smem:[#allocation7 + $0x35]]
    %v7857 = vstv %s7856
    %v7858 = vmul.f32 %v7857, %v3151
    %v7859 = vmul.f32 %v7857, %v3147
    %v7860 = vmul.f32 %v7857, %v3152
    %v7864 = vrot.slane %v7858, 2
    %v7865 = vrot.slane %v7859, 2
    %v7866 = vsel %vm373, %v7864, %v7865
    %v7867 = vrot.slane %v7860, 2
    %v7868 = vsel %vm373, %v7865, %v7867
    %7869 = vrot.lane.b32.xlu0 %v7866, 126
    %v7870 = vpop.permute.xlu0 %7869
    %7871 = vrot.lane.b32.xlu0 %v7868, 126
    %v7872 = vpop.permute.xlu0 %7871
    %v7875 = vadd.f32 %v7854, %v7870
    %v7876 = vadd.f32 %v7855, %v7872
    %s7877 = sld [smem:[#allocation7 + $0x63]]
    %v7878 = vstv %s7877
    %v7879 = vmul.f32 %v7878, %v3151
    %v7880 = vmul.f32 %v7878, %v3147
    %v7881 = vadd.f32 %v7115, %v7879
    %v7882 = vadd.f32 %v7116, %v7880
    %s7883 = sld [smem:[#allocation7 + $0x64]]
    %v7884 = vstv %s7883
    %v7885 = vmul.f32 %v7884, %v3151
    %v7886 = vmul.f32 %v7884, %v3147
    %7889 = vrot.lane.b32.xlu0 %v7885, 127
    %v7890 = vpop.permute.xlu0 %7889
    %7891 = vrot.lane.b32.xlu0 %v7886, 127
    %v7892 = vpop.permute.xlu0 %7891
    %v7895 = vadd.f32 %v7881, %v7890
    %v7896 = vadd.f32 %v7882, %v7892
    %s7897 = sld [smem:[#allocation7 + $0x65]]
    %v7898 = vstv %s7897
    %v7899 = vmul.f32 %v7898, %v3151
    %v7900 = vmul.f32 %v7898, %v3147
    %7903 = vrot.lane.b32.xlu0 %v7899, 126
    %v7904 = vpop.permute.xlu0 %7903
    %7905 = vrot.lane.b32.xlu0 %v7900, 126
    %v7906 = vpop.permute.xlu0 %7905
    %v7909 = vadd.f32 %v7895, %v7904
    %v7910 = vadd.f32 %v7896, %v7906
    %s7911 = sld [smem:[#allocation7 + $0x66]]
    %v7912 = vstv %s7911
    %v7913 = vmul.f32 %v7912, %v3151
    %v7914 = vmul.f32 %v7912, %v3147
    %v7915 = vmul.f32 %v7912, %v3152
    %v7919 = vrot.slane %v7913, 1
    %v7920 = vrot.slane %v7914, 1
    %v7921 = vsel %vm313, %v7919, %v7920
    %v7922 = vrot.slane %v7915, 1
    %v7923 = vsel %vm313, %v7920, %v7922
    %v7926 = vadd.f32 %v7909, %v7921
    %v7927 = vadd.f32 %v7910, %v7923
    %s7928 = sld [smem:[#allocation7 + $0x67]]
    %v7929 = vstv %s7928
    %v7930 = vmul.f32 %v7929, %v3151
    %v7931 = vmul.f32 %v7929, %v3147
    %v7932 = vmul.f32 %v7929, %v3152
    %v7936 = vrot.slane %v7930, 1
    %v7937 = vrot.slane %v7931, 1
    %v7938 = vsel %vm313, %v7936, %v7937
    %v7939 = vrot.slane %v7932, 1
    %v7940 = vsel %vm313, %v7937, %v7939
    %7941 = vrot.lane.b32.xlu0 %v7938, 127
    %v7942 = vpop.permute.xlu0 %7941
    %7943 = vrot.lane.b32.xlu0 %v7940, 127
    %v7944 = vpop.permute.xlu0 %7943
    %v7947 = vadd.f32 %v7926, %v7942
    %v7948 = vadd.f32 %v7927, %v7944
    %s7949 = sld [smem:[#allocation7 + $0x68]]
    %v7950 = vstv %s7949
    %v7951 = vmul.f32 %v7950, %v3151
    %v7952 = vmul.f32 %v7950, %v3147
    %v7953 = vmul.f32 %v7950, %v3152
    %v7957 = vrot.slane %v7951, 1
    %v7958 = vrot.slane %v7952, 1
    %v7959 = vsel %vm313, %v7957, %v7958
    %v7960 = vrot.slane %v7953, 1
    %v7961 = vsel %vm313, %v7958, %v7960
    %7962 = vrot.lane.b32.xlu0 %v7959, 126
    %v7963 = vpop.permute.xlu0 %7962
    %7964 = vrot.lane.b32.xlu0 %v7961, 126
    %v7965 = vpop.permute.xlu0 %7964
    %v7968 = vadd.f32 %v7947, %v7963
    %v7969 = vadd.f32 %v7948, %v7965
    %s7970 = sld [smem:[#allocation7 + $0x69]]
    %v7971 = vstv %s7970
    %v7972 = vmul.f32 %v7971, %v3151
    %v7973 = vmul.f32 %v7971, %v3147
    %v7974 = vmul.f32 %v7971, %v3152
    %v7978 = vrot.slane %v7972, 2
    %v7979 = vrot.slane %v7973, 2
    %v7980 = vsel %vm373, %v7978, %v7979
    %v7981 = vrot.slane %v7974, 2
    %v7982 = vsel %vm373, %v7979, %v7981
    %v7985 = vadd.f32 %v7968, %v7980
    %v7986 = vadd.f32 %v7969, %v7982
    %s7987 = sld [smem:[#allocation7 + $0x6a]]
    %v7988 = vstv %s7987
    %v7989 = vmul.f32 %v7988, %v3151
    %v7990 = vmul.f32 %v7988, %v3147
    %v7991 = vmul.f32 %v7988, %v3152
    %v7995 = vrot.slane %v7989, 2
    %v7996 = vrot.slane %v7990, 2
    %v7997 = vsel %vm373, %v7995, %v7996
    %v7998 = vrot.slane %v7991, 2
    %v7999 = vsel %vm373, %v7996, %v7998
    %8000 = vrot.lane.b32.xlu0 %v7997, 127
    %v8001 = vpop.permute.xlu0 %8000
    %8002 = vrot.lane.b32.xlu0 %v7999, 127
    %v8003 = vpop.permute.xlu0 %8002
    %v8006 = vadd.f32 %v7985, %v8001
    %v8007 = vadd.f32 %v7986, %v8003
    %s8008 = sld [smem:[#allocation7 + $0x6b]]
    %v8009 = vstv %s8008
    %v8010 = vmul.f32 %v8009, %v3151
    %v8011 = vmul.f32 %v8009, %v3147
    %v8012 = vmul.f32 %v8009, %v3152
    %v8016 = vrot.slane %v8010, 2
    %v8017 = vrot.slane %v8011, 2
    %v8018 = vsel %vm373, %v8016, %v8017
    %v8019 = vrot.slane %v8012, 2
    %v8020 = vsel %vm373, %v8017, %v8019
    %8021 = vrot.lane.b32.xlu0 %v8018, 126
    %v8022 = vpop.permute.xlu0 %8021
    %8023 = vrot.lane.b32.xlu0 %v8020, 126
    %v8024 = vpop.permute.xlu0 %8023
    %v8027 = vadd.f32 %v8006, %v8022
    %v8028 = vadd.f32 %v8007, %v8024
    %s8029 = sld [smem:[#allocation7 + $0x99]]
    %v8030 = vstv %s8029
    %v8031 = vmul.f32 %v8030, %v3151
    %v8032 = vmul.f32 %v8030, %v3147
    %v8033 = vadd.f32 %v7267, %v8031
    %v8034 = vadd.f32 %v7268, %v8032
    %s8035 = sld [smem:[#allocation7 + $0x9a]]
    %v8036 = vstv %s8035
    %v8037 = vmul.f32 %v8036, %v3151
    %v8038 = vmul.f32 %v8036, %v3147
    %8041 = vrot.lane.b32.xlu0 %v8037, 127
    %v8042 = vpop.permute.xlu0 %8041
    %8043 = vrot.lane.b32.xlu0 %v8038, 127
    %v8044 = vpop.permute.xlu0 %8043
    %v8047 = vadd.f32 %v8033, %v8042
    %v8048 = vadd.f32 %v8034, %v8044
    %s8049 = sld [smem:[#allocation7 + $0x9b]]
    %v8050 = vstv %s8049
    %v8051 = vmul.f32 %v8050, %v3151
    %v8052 = vmul.f32 %v8050, %v3147
    %8055 = vrot.lane.b32.xlu0 %v8051, 126
    %v8056 = vpop.permute.xlu0 %8055
    %8057 = vrot.lane.b32.xlu0 %v8052, 126
    %v8058 = vpop.permute.xlu0 %8057
    %v8061 = vadd.f32 %v8047, %v8056
    %v8062 = vadd.f32 %v8048, %v8058
    %s8063 = sld [smem:[#allocation7 + $0x9c]]
    %v8064 = vstv %s8063
    %v8065 = vmul.f32 %v8064, %v3151
    %v8066 = vmul.f32 %v8064, %v3147
    %v8067 = vmul.f32 %v8064, %v3152
    %v8071 = vrot.slane %v8065, 1
    %v8072 = vrot.slane %v8066, 1
    %v8073 = vsel %vm313, %v8071, %v8072
    %v8074 = vrot.slane %v8067, 1
    %v8075 = vsel %vm313, %v8072, %v8074
    %v8078 = vadd.f32 %v8061, %v8073
    %v8079 = vadd.f32 %v8062, %v8075
    %s8080 = sld [smem:[#allocation7 + $0x9d]]
    %v8081 = vstv %s8080
    %v8082 = vmul.f32 %v8081, %v3151
    %v8083 = vmul.f32 %v8081, %v3147
    %v8084 = vmul.f32 %v8081, %v3152
    %v8088 = vrot.slane %v8082, 1
    %v8089 = vrot.slane %v8083, 1
    %v8090 = vsel %vm313, %v8088, %v8089
    %v8091 = vrot.slane %v8084, 1
    %v8092 = vsel %vm313, %v8089, %v8091
    %8093 = vrot.lane.b32.xlu0 %v8090, 127
    %v8094 = vpop.permute.xlu0 %8093
    %8095 = vrot.lane.b32.xlu0 %v8092, 127
    %v8096 = vpop.permute.xlu0 %8095
    %v8099 = vadd.f32 %v8078, %v8094
    %v8100 = vadd.f32 %v8079, %v8096
    %s8101 = sld [smem:[#allocation7 + $0x9e]]
    %v8102 = vstv %s8101
    %v8103 = vmul.f32 %v8102, %v3151
    %v8104 = vmul.f32 %v8102, %v3147
    %v8105 = vmul.f32 %v8102, %v3152
    %v8109 = vrot.slane %v8103, 1
    %v8110 = vrot.slane %v8104, 1
    %v8111 = vsel %vm313, %v8109, %v8110
    %v8112 = vrot.slane %v8105, 1
    %v8113 = vsel %vm313, %v8110, %v8112
    %8114 = vrot.lane.b32.xlu0 %v8111, 126
    %v8115 = vpop.permute.xlu0 %8114
    %8116 = vrot.lane.b32.xlu0 %v8113, 126
    %v8117 = vpop.permute.xlu0 %8116
    %v8120 = vadd.f32 %v8099, %v8115
    %v8121 = vadd.f32 %v8100, %v8117
    %s8122 = sld [smem:[#allocation7 + $0x9f]]
    %v8123 = vstv %s8122
    %v8124 = vmul.f32 %v8123, %v3151
    %v8125 = vmul.f32 %v8123, %v3147
    %v8126 = vmul.f32 %v8123, %v3152
    %v8130 = vrot.slane %v8124, 2
    %v8131 = vrot.slane %v8125, 2
    %v8132 = vsel %vm373, %v8130, %v8131
    %v8133 = vrot.slane %v8126, 2
    %v8134 = vsel %vm373, %v8131, %v8133
    %v8137 = vadd.f32 %v8120, %v8132
    %v8138 = vadd.f32 %v8121, %v8134
    %s8139 = sld [smem:[#allocation7 + $0xa0]]
    %v8140 = vstv %s8139
    %v8141 = vmul.f32 %v8140, %v3151
    %v8142 = vmul.f32 %v8140, %v3147
    %v8143 = vmul.f32 %v8140, %v3152
    %v8147 = vrot.slane %v8141, 2
    %v8148 = vrot.slane %v8142, 2
    %v8149 = vsel %vm373, %v8147, %v8148
    %v8150 = vrot.slane %v8143, 2
    %v8151 = vsel %vm373, %v8148, %v8150
    %8152 = vrot.lane.b32.xlu0 %v8149, 127
    %v8153 = vpop.permute.xlu0 %8152
    %8154 = vrot.lane.b32.xlu0 %v8151, 127
    %v8155 = vpop.permute.xlu0 %8154
    %v8158 = vadd.f32 %v8137, %v8153
    %v8159 = vadd.f32 %v8138, %v8155
    %s8160 = sld [smem:[#allocation7 + $0xa1]]
    %v8161 = vstv %s8160
    %v8162 = vmul.f32 %v8161, %v3151
    %v8163 = vmul.f32 %v8161, %v3147
    %v8164 = vmul.f32 %v8161, %v3152
    %v8168 = vrot.slane %v8162, 2
    %v8169 = vrot.slane %v8163, 2
    %v8170 = vsel %vm373, %v8168, %v8169
    %v8171 = vrot.slane %v8164, 2
    %v8172 = vsel %vm373, %v8169, %v8171
    %8173 = vrot.lane.b32.xlu0 %v8170, 126
    %v8174 = vpop.permute.xlu0 %8173
    %8175 = vrot.lane.b32.xlu0 %v8172, 126
    %v8176 = vpop.permute.xlu0 %8175
    %v8179 = vadd.f32 %v8158, %v8174
    %v8180 = vadd.f32 %v8159, %v8176
    %s8181 = sld [smem:[#allocation7 + $0xcf]]
    %v8182 = vstv %s8181
    %v8183 = vmul.f32 %v8182, %v3151
    %v8184 = vmul.f32 %v8182, %v3147
    %v8185 = vadd.f32 %v7419, %v8183
    %v8186 = vadd.f32 %v7420, %v8184
    %s8187 = sld [smem:[#allocation7 + $0xd0]]
    %v8188 = vstv %s8187
    %v8189 = vmul.f32 %v8188, %v3151
    %v8190 = vmul.f32 %v8188, %v3147
    %8193 = vrot.lane.b32.xlu0 %v8189, 127
    %v8194 = vpop.permute.xlu0 %8193
    %8195 = vrot.lane.b32.xlu0 %v8190, 127
    %v8196 = vpop.permute.xlu0 %8195
    %v8199 = vadd.f32 %v8185, %v8194
    %v8200 = vadd.f32 %v8186, %v8196
    %s8201 = sld [smem:[#allocation7 + $0xd1]]
    %v8202 = vstv %s8201
    %v8203 = vmul.f32 %v8202, %v3151
    %v8204 = vmul.f32 %v8202, %v3147
    %8207 = vrot.lane.b32.xlu0 %v8203, 126
    %v8208 = vpop.permute.xlu0 %8207
    %8209 = vrot.lane.b32.xlu0 %v8204, 126
    %v8210 = vpop.permute.xlu0 %8209
    %v8213 = vadd.f32 %v8199, %v8208
    %v8214 = vadd.f32 %v8200, %v8210
    %s8215 = sld [smem:[#allocation7 + $0xd2]]
    %v8216 = vstv %s8215
    %v8217 = vmul.f32 %v8216, %v3151
    %v8218 = vmul.f32 %v8216, %v3147
    %v8219 = vmul.f32 %v8216, %v3152
    %v8223 = vrot.slane %v8217, 1
    %v8224 = vrot.slane %v8218, 1
    %v8225 = vsel %vm313, %v8223, %v8224
    %v8226 = vrot.slane %v8219, 1
    %v8227 = vsel %vm313, %v8224, %v8226
    %v8230 = vadd.f32 %v8213, %v8225
    %v8231 = vadd.f32 %v8214, %v8227
    %s8232 = sld [smem:[#allocation7 + $0xd3]]
    %v8233 = vstv %s8232
    %v8234 = vmul.f32 %v8233, %v3151
    %v8235 = vmul.f32 %v8233, %v3147
    %v8236 = vmul.f32 %v8233, %v3152
    %v8240 = vrot.slane %v8234, 1
    %v8241 = vrot.slane %v8235, 1
    %v8242 = vsel %vm313, %v8240, %v8241
    %v8243 = vrot.slane %v8236, 1
    %v8244 = vsel %vm313, %v8241, %v8243
    %8245 = vrot.lane.b32.xlu0 %v8242, 127
    %v8246 = vpop.permute.xlu0 %8245
    %8247 = vrot.lane.b32.xlu0 %v8244, 127
    %v8248 = vpop.permute.xlu0 %8247
    %v8251 = vadd.f32 %v8230, %v8246
    %v8252 = vadd.f32 %v8231, %v8248
    %s8253 = sld [smem:[#allocation7 + $0xd4]]
    %v8254 = vstv %s8253
    %v8255 = vmul.f32 %v8254, %v3151
    %v8256 = vmul.f32 %v8254, %v3147
    %v8257 = vmul.f32 %v8254, %v3152
    %v8261 = vrot.slane %v8255, 1
    %v8262 = vrot.slane %v8256, 1
    %v8263 = vsel %vm313, %v8261, %v8262
    %v8264 = vrot.slane %v8257, 1
    %v8265 = vsel %vm313, %v8262, %v8264
    %8266 = vrot.lane.b32.xlu0 %v8263, 126
    %v8267 = vpop.permute.xlu0 %8266
    %8268 = vrot.lane.b32.xlu0 %v8265, 126
    %v8269 = vpop.permute.xlu0 %8268
    %v8272 = vadd.f32 %v8251, %v8267
    %v8273 = vadd.f32 %v8252, %v8269
    %s8274 = sld [smem:[#allocation7 + $0xd5]]
    %v8275 = vstv %s8274
    %v8276 = vmul.f32 %v8275, %v3151
    %v8277 = vmul.f32 %v8275, %v3147
    %v8278 = vmul.f32 %v8275, %v3152
    %v8282 = vrot.slane %v8276, 2
    %v8283 = vrot.slane %v8277, 2
    %v8284 = vsel %vm373, %v8282, %v8283
    %v8285 = vrot.slane %v8278, 2
    %v8286 = vsel %vm373, %v8283, %v8285
    %v8289 = vadd.f32 %v8272, %v8284
    %v8290 = vadd.f32 %v8273, %v8286
    %s8291 = sld [smem:[#allocation7 + $0xd6]]
    %v8292 = vstv %s8291
    %v8293 = vmul.f32 %v8292, %v3151
    %v8294 = vmul.f32 %v8292, %v3147
    %v8295 = vmul.f32 %v8292, %v3152
    %v8299 = vrot.slane %v8293, 2
    %v8300 = vrot.slane %v8294, 2
    %v8301 = vsel %vm373, %v8299, %v8300
    %v8302 = vrot.slane %v8295, 2
    %v8303 = vsel %vm373, %v8300, %v8302
    %8304 = vrot.lane.b32.xlu0 %v8301, 127
    %v8305 = vpop.permute.xlu0 %8304
    %8306 = vrot.lane.b32.xlu0 %v8303, 127
    %v8307 = vpop.permute.xlu0 %8306
    %v8310 = vadd.f32 %v8289, %v8305
    %v8311 = vadd.f32 %v8290, %v8307
    %s8312 = sld [smem:[#allocation7 + $0xd7]]
    %v8313 = vstv %s8312
    %v8314 = vmul.f32 %v8313, %v3151
    %v8315 = vmul.f32 %v8313, %v3147
    %v8316 = vmul.f32 %v8313, %v3152
    %v8320 = vrot.slane %v8314, 2
    %v8321 = vrot.slane %v8315, 2
    %v8322 = vsel %vm373, %v8320, %v8321
    %v8323 = vrot.slane %v8316, 2
    %v8324 = vsel %vm373, %v8321, %v8323
    %8325 = vrot.lane.b32.xlu0 %v8322, 126
    %v8326 = vpop.permute.xlu0 %8325
    %8327 = vrot.lane.b32.xlu0 %v8324, 126
    %v8328 = vpop.permute.xlu0 %8327
    %v8331 = vadd.f32 %v8310, %v8326
    %v8332 = vadd.f32 %v8311, %v8328
    %s8333 = sld [smem:[#allocation7 + $0x105]]
    %v8334 = vstv %s8333
    %v8335 = vmul.f32 %v8334, %v3151
    %v8336 = vmul.f32 %v8334, %v3147
    %v8337 = vadd.f32 %v7571, %v8335
    %v8338 = vadd.f32 %v7572, %v8336
    %s8339 = sld [smem:[#allocation7 + $0x106]]
    %v8340 = vstv %s8339
    %v8341 = vmul.f32 %v8340, %v3151
    %v8342 = vmul.f32 %v8340, %v3147
    %8345 = vrot.lane.b32.xlu0 %v8341, 127
    %v8346 = vpop.permute.xlu0 %8345
    %8347 = vrot.lane.b32.xlu0 %v8342, 127
    %v8348 = vpop.permute.xlu0 %8347
    %v8351 = vadd.f32 %v8337, %v8346
    %v8352 = vadd.f32 %v8338, %v8348
    %s8353 = sld [smem:[#allocation7 + $0x107]]
    %v8354 = vstv %s8353
    %v8355 = vmul.f32 %v8354, %v3151
    %v8356 = vmul.f32 %v8354, %v3147
    %8359 = vrot.lane.b32.xlu0 %v8355, 126
    %v8360 = vpop.permute.xlu0 %8359
    %8361 = vrot.lane.b32.xlu0 %v8356, 126
    %v8362 = vpop.permute.xlu0 %8361
    %v8365 = vadd.f32 %v8351, %v8360
    %v8366 = vadd.f32 %v8352, %v8362
    %s8367 = sld [smem:[#allocation7 + $0x108]]
    %v8368 = vstv %s8367
    %v8369 = vmul.f32 %v8368, %v3151
    %v8370 = vmul.f32 %v8368, %v3147
    %v8371 = vmul.f32 %v8368, %v3152
    %v8375 = vrot.slane %v8369, 1
    %v8376 = vrot.slane %v8370, 1
    %v8377 = vsel %vm313, %v8375, %v8376
    %v8378 = vrot.slane %v8371, 1
    %v8379 = vsel %vm313, %v8376, %v8378
    %v8382 = vadd.f32 %v8365, %v8377
    %v8383 = vadd.f32 %v8366, %v8379
    %s8384 = sld [smem:[#allocation7 + $0x109]]
    %v8385 = vstv %s8384
    %v8386 = vmul.f32 %v8385, %v3151
    %v8387 = vmul.f32 %v8385, %v3147
    %v8388 = vmul.f32 %v8385, %v3152
    %v8392 = vrot.slane %v8386, 1
    %v8393 = vrot.slane %v8387, 1
    %v8394 = vsel %vm313, %v8392, %v8393
    %v8395 = vrot.slane %v8388, 1
    %v8396 = vsel %vm313, %v8393, %v8395
    %8397 = vrot.lane.b32.xlu0 %v8394, 127
    %v8398 = vpop.permute.xlu0 %8397
    %8399 = vrot.lane.b32.xlu0 %v8396, 127
    %v8400 = vpop.permute.xlu0 %8399
    %v8403 = vadd.f32 %v8382, %v8398
    %v8404 = vadd.f32 %v8383, %v8400
    %s8405 = sld [smem:[#allocation7 + $0x10a]]
    %v8406 = vstv %s8405
    %v8407 = vmul.f32 %v8406, %v3151
    %v8408 = vmul.f32 %v8406, %v3147
    %v8409 = vmul.f32 %v8406, %v3152
    %v8413 = vrot.slane %v8407, 1
    %v8414 = vrot.slane %v8408, 1
    %v8415 = vsel %vm313, %v8413, %v8414
    %v8416 = vrot.slane %v8409, 1
    %v8417 = vsel %vm313, %v8414, %v8416
    %8418 = vrot.lane.b32.xlu0 %v8415, 126
    %v8419 = vpop.permute.xlu0 %8418
    %8420 = vrot.lane.b32.xlu0 %v8417, 126
    %v8421 = vpop.permute.xlu0 %8420
    %v8424 = vadd.f32 %v8403, %v8419
    %v8425 = vadd.f32 %v8404, %v8421
    %s8426 = sld [smem:[#allocation7 + $0x10b]]
    %v8427 = vstv %s8426
    %v8428 = vmul.f32 %v8427, %v3151
    %v8429 = vmul.f32 %v8427, %v3147
    %v8430 = vmul.f32 %v8427, %v3152
    %v8434 = vrot.slane %v8428, 2
    %v8435 = vrot.slane %v8429, 2
    %v8436 = vsel %vm373, %v8434, %v8435
    %v8437 = vrot.slane %v8430, 2
    %v8438 = vsel %vm373, %v8435, %v8437
    %v8441 = vadd.f32 %v8424, %v8436
    %v8442 = vadd.f32 %v8425, %v8438
    %s8443 = sld [smem:[#allocation7 + $0x10c]]
    %v8444 = vstv %s8443
    %v8445 = vmul.f32 %v8444, %v3151
    %v8446 = vmul.f32 %v8444, %v3147
    %v8447 = vmul.f32 %v8444, %v3152
    %v8451 = vrot.slane %v8445, 2
    %v8452 = vrot.slane %v8446, 2
    %v8453 = vsel %vm373, %v8451, %v8452
    %v8454 = vrot.slane %v8447, 2
    %v8455 = vsel %vm373, %v8452, %v8454
    %8456 = vrot.lane.b32.xlu0 %v8453, 127
    %v8457 = vpop.permute.xlu0 %8456
    %8458 = vrot.lane.b32.xlu0 %v8455, 127
    %v8459 = vpop.permute.xlu0 %8458
    %v8462 = vadd.f32 %v8441, %v8457
    %v8463 = vadd.f32 %v8442, %v8459
    %s8464 = sld [smem:[#allocation7 + $0x10d]]
    %v8465 = vstv %s8464
    %v8466 = vmul.f32 %v8465, %v3151
    %v8467 = vmul.f32 %v8465, %v3147
    %v8468 = vmul.f32 %v8465, %v3152
    %v8472 = vrot.slane %v8466, 2
    %v8473 = vrot.slane %v8467, 2
    %v8474 = vsel %vm373, %v8472, %v8473
    %v8475 = vrot.slane %v8468, 2
    %v8476 = vsel %vm373, %v8473, %v8475
    %8477 = vrot.lane.b32.xlu0 %v8474, 126
    %v8478 = vpop.permute.xlu0 %8477
    %8479 = vrot.lane.b32.xlu0 %v8476, 126
    %v8480 = vpop.permute.xlu0 %8479
    %v8483 = vadd.f32 %v8462, %v8478
    %v8484 = vadd.f32 %v8463, %v8480
    %s8485 = sld [smem:[#allocation7 + $0x13b]]
    %v8486 = vstv %s8485
    %v8487 = vmul.f32 %v8486, %v3151
    %v8488 = vmul.f32 %v8486, %v3147
    %v8489 = vadd.f32 %v7723, %v8487
    %v8490 = vadd.f32 %v7724, %v8488
    %s8491 = sld [smem:[#allocation7 + $0x13c]]
    %v8492 = vstv %s8491
    %v8493 = vmul.f32 %v8492, %v3151
    %v8494 = vmul.f32 %v8492, %v3147
    %8497 = vrot.lane.b32.xlu0 %v8493, 127
    %v8498 = vpop.permute.xlu0 %8497
    %8499 = vrot.lane.b32.xlu0 %v8494, 127
    %v8500 = vpop.permute.xlu0 %8499
    %v8503 = vadd.f32 %v8489, %v8498
    %v8504 = vadd.f32 %v8490, %v8500
    %s8505 = sld [smem:[#allocation7 + $0x13d]]
    %v8506 = vstv %s8505
    %v8507 = vmul.f32 %v8506, %v3151
    %v8508 = vmul.f32 %v8506, %v3147
    %8511 = vrot.lane.b32.xlu0 %v8507, 126
    %v8512 = vpop.permute.xlu0 %8511
    %8513 = vrot.lane.b32.xlu0 %v8508, 126
    %v8514 = vpop.permute.xlu0 %8513
    %v8517 = vadd.f32 %v8503, %v8512
    %v8518 = vadd.f32 %v8504, %v8514
    %s8519 = sld [smem:[#allocation7 + $0x13e]]
    %v8520 = vstv %s8519
    %v8521 = vmul.f32 %v8520, %v3151
    %v8522 = vmul.f32 %v8520, %v3147
    %v8523 = vmul.f32 %v8520, %v3152
    %v8527 = vrot.slane %v8521, 1
    %v8528 = vrot.slane %v8522, 1
    %v8529 = vsel %vm313, %v8527, %v8528
    %v8530 = vrot.slane %v8523, 1
    %v8531 = vsel %vm313, %v8528, %v8530
    %v8534 = vadd.f32 %v8517, %v8529
    %v8535 = vadd.f32 %v8518, %v8531
    %s8536 = sld [smem:[#allocation7 + $0x13f]]
    %v8537 = vstv %s8536
    %v8538 = vmul.f32 %v8537, %v3151
    %v8539 = vmul.f32 %v8537, %v3147
    %v8540 = vmul.f32 %v8537, %v3152
    %v8544 = vrot.slane %v8538, 1
    %v8545 = vrot.slane %v8539, 1
    %v8546 = vsel %vm313, %v8544, %v8545
    %v8547 = vrot.slane %v8540, 1
    %v8548 = vsel %vm313, %v8545, %v8547
    %8549 = vrot.lane.b32.xlu0 %v8546, 127
    %v8550 = vpop.permute.xlu0 %8549
    %8551 = vrot.lane.b32.xlu0 %v8548, 127
    %v8552 = vpop.permute.xlu0 %8551
    %v8555 = vadd.f32 %v8534, %v8550
    %v8556 = vadd.f32 %v8535, %v8552
    %s8557 = sld [smem:[#allocation7 + $0x140]]
    %v8558 = vstv %s8557
    %v8559 = vmul.f32 %v8558, %v3151
    %v8560 = vmul.f32 %v8558, %v3147
    %v8561 = vmul.f32 %v8558, %v3152
    %v8565 = vrot.slane %v8559, 1
    %v8566 = vrot.slane %v8560, 1
    %v8567 = vsel %vm313, %v8565, %v8566
    %v8568 = vrot.slane %v8561, 1
    %v8569 = vsel %vm313, %v8566, %v8568
    %8570 = vrot.lane.b32.xlu0 %v8567, 126
    %v8571 = vpop.permute.xlu0 %8570
    %8572 = vrot.lane.b32.xlu0 %v8569, 126
    %v8573 = vpop.permute.xlu0 %8572
    %v8576 = vadd.f32 %v8555, %v8571
    %v8577 = vadd.f32 %v8556, %v8573
    %s8578 = sld [smem:[#allocation7 + $0x141]]
    %v8579 = vstv %s8578
    %v8580 = vmul.f32 %v8579, %v3151
    %v8581 = vmul.f32 %v8579, %v3147
    %v8582 = vmul.f32 %v8579, %v3152
    %v8586 = vrot.slane %v8580, 2
    %v8587 = vrot.slane %v8581, 2
    %v8588 = vsel %vm373, %v8586, %v8587
    %v8589 = vrot.slane %v8582, 2
    %v8590 = vsel %vm373, %v8587, %v8589
    %v8593 = vadd.f32 %v8576, %v8588
    %v8594 = vadd.f32 %v8577, %v8590
    %s8595 = sld [smem:[#allocation7 + $0x142]]
    %v8596 = vstv %s8595
    %v8597 = vmul.f32 %v8596, %v3151
    %v8598 = vmul.f32 %v8596, %v3147
    %v8599 = vmul.f32 %v8596, %v3152
    %v8603 = vrot.slane %v8597, 2
    %v8604 = vrot.slane %v8598, 2
    %v8605 = vsel %vm373, %v8603, %v8604
    %v8606 = vrot.slane %v8599, 2
    %v8607 = vsel %vm373, %v8604, %v8606
    %8608 = vrot.lane.b32.xlu0 %v8605, 127
    %v8609 = vpop.permute.xlu0 %8608
    %8610 = vrot.lane.b32.xlu0 %v8607, 127
    %v8611 = vpop.permute.xlu0 %8610
    %v8614 = vadd.f32 %v8593, %v8609
    %v8615 = vadd.f32 %v8594, %v8611
    %s8616 = sld [smem:[#allocation7 + $0x143]]
    %v8617 = vstv %s8616
    %v8618 = vmul.f32 %v8617, %v3151
    %v8619 = vmul.f32 %v8617, %v3147
    %v8620 = vmul.f32 %v8617, %v3152
    %v8624 = vrot.slane %v8618, 2
    %v8625 = vrot.slane %v8619, 2
    %v8626 = vsel %vm373, %v8624, %v8625
    %v8627 = vrot.slane %v8620, 2
    %v8628 = vsel %vm373, %v8625, %v8627
    %8629 = vrot.lane.b32.xlu0 %v8626, 126
    %v8630 = vpop.permute.xlu0 %8629
    %8631 = vrot.lane.b32.xlu0 %v8628, 126
    %v8632 = vpop.permute.xlu0 %8631
    %v8635 = vadd.f32 %v8614, %v8630
    %v8636 = vadd.f32 %v8615, %v8632
    %v8637 = vmul.f32 %v7875, %v95
    %v8638 = vmul.f32 %v7876, %v95
    %8641 = vrot.lane.b32.xlu0 %v8637, 1
    %v8642 = vpop.permute.xlu0 %8641
    %8643 = vrot.lane.b32.xlu0 %v8638, 1
    %v8644 = vpop.permute.xlu0 %8643
    %v8647 = vsel %vm86, 0.0, %v8642
    %v8648 = vsel %vm86, 0.0, %v8644
    %v8649 = vsel %vm137, %v8647, 0.0
    %v8650 = vsel %vm137, %v8648, 0.0
    %v8653 = vrot.slane %v8649, 7
    %v8654 = vrot.slane %v8650, 7
    %v8655 = vsel %vm142, %v8653, %v8654
    %v8659 = vsel %vm142, 0.0, %v8653
    %v8660 = vsel %vm142, %v8654, 0.0
    %v8661 = vmul.f32 %v8027, %v95
    %v8662 = vmul.f32 %v8028, %v95
    %8665 = vrot.lane.b32.xlu0 %v8661, 1
    %v8666 = vpop.permute.xlu0 %8665
    %8667 = vrot.lane.b32.xlu0 %v8662, 1
    %v8668 = vpop.permute.xlu0 %8667
    %v8671 = vsel %vm86, 0.0, %v8666
    %v8672 = vsel %vm86, 0.0, %v8668
    %v8673 = vsel %vm137, %v8671, 0.0
    %v8674 = vsel %vm137, %v8672, 0.0
    %v8677 = vrot.slane %v8673, 7
    %v8678 = vrot.slane %v8674, 7
    %v8679 = vsel %vm142, %v8677, %v8678
    %v8683 = vsel %vm142, 0.0, %v8677
    %v8684 = vsel %vm142, %v8678, 0.0
    %v8685 = vmul.f32 %v8179, %v95
    %v8686 = vmul.f32 %v8180, %v95
    %8689 = vrot.lane.b32.xlu0 %v8685, 1
    %v8690 = vpop.permute.xlu0 %8689
    %8691 = vrot.lane.b32.xlu0 %v8686, 1
    %v8692 = vpop.permute.xlu0 %8691
    %v8695 = vsel %vm86, 0.0, %v8690
    %v8696 = vsel %vm86, 0.0, %v8692
    %v8697 = vsel %vm137, %v8695, 0.0
    %v8698 = vsel %vm137, %v8696, 0.0
    %v8701 = vrot.slane %v8697, 7
    %v8702 = vrot.slane %v8698, 7
    %v8703 = vsel %vm142, %v8701, %v8702
    %v8707 = vsel %vm142, 0.0, %v8701
    %v8708 = vsel %vm142, %v8702, 0.0
    %v8709 = vmul.f32 %v8331, %v95
    %v8710 = vmul.f32 %v8332, %v95
    %8713 = vrot.lane.b32.xlu0 %v8709, 1
    %v8714 = vpop.permute.xlu0 %8713
    %8715 = vrot.lane.b32.xlu0 %v8710, 1
    %v8716 = vpop.permute.xlu0 %8715
    %v8719 = vsel %vm86, 0.0, %v8714
    %v8720 = vsel %vm86, 0.0, %v8716
    %v8721 = vsel %vm137, %v8719, 0.0
    %v8722 = vsel %vm137, %v8720, 0.0
    %v8725 = vrot.slane %v8721, 7
    %v8726 = vrot.slane %v8722, 7
    %v8727 = vsel %vm142, %v8725, %v8726
    %v8731 = vsel %vm142, 0.0, %v8725
    %v8732 = vsel %vm142, %v8726, 0.0
    %v8733 = vmul.f32 %v8483, %v95
    %v8734 = vmul.f32 %v8484, %v95
    %8737 = vrot.lane.b32.xlu0 %v8733, 1
    %v8738 = vpop.permute.xlu0 %8737
    %8739 = vrot.lane.b32.xlu0 %v8734, 1
    %v8740 = vpop.permute.xlu0 %8739
    %v8743 = vsel %vm86, 0.0, %v8738
    %v8744 = vsel %vm86, 0.0, %v8740
    %v8745 = vsel %vm137, %v8743, 0.0
    %v8746 = vsel %vm137, %v8744, 0.0
    %v8749 = vrot.slane %v8745, 7
    %v8750 = vrot.slane %v8746, 7
    %v8751 = vsel %vm142, %v8749, %v8750
    %v8755 = vsel %vm142, 0.0, %v8749
    %v8756 = vsel %vm142, %v8750, 0.0
    %v8757 = vmul.f32 %v8635, %v95
    %v8758 = vmul.f32 %v8636, %v95
    %8761 = vrot.lane.b32.xlu0 %v8757, 1
    %v8762 = vpop.permute.xlu0 %8761
    %8763 = vrot.lane.b32.xlu0 %v8758, 1
    %v8764 = vpop.permute.xlu0 %8763
    %v8767 = vsel %vm86, 0.0, %v8762
    %v8768 = vsel %vm86, 0.0, %v8764
    %v8769 = vsel %vm137, %v8767, 0.0
    %v8770 = vsel %vm137, %v8768, 0.0
    %v8773 = vrot.slane %v8769, 7
    %v8774 = vrot.slane %v8770, 7
    %v8775 = vsel %vm142, %v8773, %v8774
    %v8779 = vsel %vm142, 0.0, %v8773
    %v8780 = vsel %vm142, %v8774, 0.0
    %s8781 = sld [smem:[#allocation2]]
    %v8782 = vstv %s8781
    %s8783 = sld [smem:[#allocation10]]
    %v8784 = vstv %s8783
    %v8785 = vmul.f32 %v8784, %v8659
    %v8786 = vmul.f32 %v8784, %v8655
    %v8787 = vadd.f32 %v8782, %v8785
    %v8788 = vadd.f32 %v8782, %v8786
    %s8789 = sld [smem:[#allocation10 + $0x1]]
    %v8790 = vstv %s8789
    %v8791 = vmul.f32 %v8790, %v8659
    %v8792 = vmul.f32 %v8790, %v8655
    %8795 = vrot.lane.b32.xlu0 %v8791, 127
    %v8796 = vpop.permute.xlu0 %8795
    %8797 = vrot.lane.b32.xlu0 %v8792, 127
    %v8798 = vpop.permute.xlu0 %8797
    %v8801 = vadd.f32 %v8787, %v8796
    %v8802 = vadd.f32 %v8788, %v8798
    %s8803 = sld [smem:[#allocation10 + $0x2]]
    %v8804 = vstv %s8803
    %v8805 = vmul.f32 %v8804, %v8659
    %v8806 = vmul.f32 %v8804, %v8655
    %8809 = vrot.lane.b32.xlu0 %v8805, 126
    %v8810 = vpop.permute.xlu0 %8809
    %8811 = vrot.lane.b32.xlu0 %v8806, 126
    %v8812 = vpop.permute.xlu0 %8811
    %v8815 = vadd.f32 %v8801, %v8810
    %v8816 = vadd.f32 %v8802, %v8812
    %s8817 = sld [smem:[#allocation10 + $0x3]]
    %v8818 = vstv %s8817
    %v8819 = vmul.f32 %v8818, %v8659
    %v8820 = vmul.f32 %v8818, %v8655
    %v8821 = vmul.f32 %v8818, %v8660
    %v8825 = vrot.slane %v8819, 1
    %v8826 = vrot.slane %v8820, 1
    %v8827 = vsel %vm313, %v8825, %v8826
    %v8828 = vrot.slane %v8821, 1
    %v8829 = vsel %vm313, %v8826, %v8828
    %v8832 = vadd.f32 %v8815, %v8827
    %v8833 = vadd.f32 %v8816, %v8829
    %s8834 = sld [smem:[#allocation10 + $0x4]]
    %v8835 = vstv %s8834
    %v8836 = vmul.f32 %v8835, %v8659
    %v8837 = vmul.f32 %v8835, %v8655
    %v8838 = vmul.f32 %v8835, %v8660
    %v8842 = vrot.slane %v8836, 1
    %v8843 = vrot.slane %v8837, 1
    %v8844 = vsel %vm313, %v8842, %v8843
    %v8845 = vrot.slane %v8838, 1
    %v8846 = vsel %vm313, %v8843, %v8845
    %8847 = vrot.lane.b32.xlu0 %v8844, 127
    %v8848 = vpop.permute.xlu0 %8847
    %8849 = vrot.lane.b32.xlu0 %v8846, 127
    %v8850 = vpop.permute.xlu0 %8849
    %v8853 = vadd.f32 %v8832, %v8848
    %v8854 = vadd.f32 %v8833, %v8850
    %s8855 = sld [smem:[#allocation10 + $0x5]]
    %v8856 = vstv %s8855
    %v8857 = vmul.f32 %v8856, %v8659
    %v8858 = vmul.f32 %v8856, %v8655
    %v8859 = vmul.f32 %v8856, %v8660
    %v8863 = vrot.slane %v8857, 1
    %v8864 = vrot.slane %v8858, 1
    %v8865 = vsel %vm313, %v8863, %v8864
    %v8866 = vrot.slane %v8859, 1
    %v8867 = vsel %vm313, %v8864, %v8866
    %8868 = vrot.lane.b32.xlu0 %v8865, 126
    %v8869 = vpop.permute.xlu0 %8868
    %8870 = vrot.lane.b32.xlu0 %v8867, 126
    %v8871 = vpop.permute.xlu0 %8870
    %v8874 = vadd.f32 %v8853, %v8869
    %v8875 = vadd.f32 %v8854, %v8871
    %s8876 = sld [smem:[#allocation10 + $0x6]]
    %v8877 = vstv %s8876
    %v8878 = vmul.f32 %v8877, %v8659
    %v8879 = vmul.f32 %v8877, %v8655
    %v8880 = vmul.f32 %v8877, %v8660
    %v8884 = vrot.slane %v8878, 2
    %v8885 = vrot.slane %v8879, 2
    %v8886 = vsel %vm373, %v8884, %v8885
    %v8887 = vrot.slane %v8880, 2
    %v8888 = vsel %vm373, %v8885, %v8887
    %v8891 = vadd.f32 %v8874, %v8886
    %v8892 = vadd.f32 %v8875, %v8888
    %s8893 = sld [smem:[#allocation10 + $0x7]]
    %v8894 = vstv %s8893
    %v8895 = vmul.f32 %v8894, %v8659
    %v8896 = vmul.f32 %v8894, %v8655
    %v8897 = vmul.f32 %v8894, %v8660
    %v8901 = vrot.slane %v8895, 2
    %v8902 = vrot.slane %v8896, 2
    %v8903 = vsel %vm373, %v8901, %v8902
    %v8904 = vrot.slane %v8897, 2
    %v8905 = vsel %vm373, %v8902, %v8904
    %8906 = vrot.lane.b32.xlu0 %v8903, 127
    %v8907 = vpop.permute.xlu0 %8906
    %8908 = vrot.lane.b32.xlu0 %v8905, 127
    %v8909 = vpop.permute.xlu0 %8908
    %v8912 = vadd.f32 %v8891, %v8907
    %v8913 = vadd.f32 %v8892, %v8909
    %s8914 = sld [smem:[#allocation10 + $0x8]]
    %v8915 = vstv %s8914
    %v8916 = vmul.f32 %v8915, %v8659
    %v8917 = vmul.f32 %v8915, %v8655
    %v8918 = vmul.f32 %v8915, %v8660
    %v8922 = vrot.slane %v8916, 2
    %v8923 = vrot.slane %v8917, 2
    %v8924 = vsel %vm373, %v8922, %v8923
    %v8925 = vrot.slane %v8918, 2
    %v8926 = vsel %vm373, %v8923, %v8925
    %8927 = vrot.lane.b32.xlu0 %v8924, 126
    %v8928 = vpop.permute.xlu0 %8927
    %8929 = vrot.lane.b32.xlu0 %v8926, 126
    %v8930 = vpop.permute.xlu0 %8929
    %v8933 = vadd.f32 %v8912, %v8928
    %v8934 = vadd.f32 %v8913, %v8930
    %s8935 = sld [smem:[#allocation10 + $0x9]]
    %v8936 = vstv %s8935
    %v8937 = vmul.f32 %v8936, %v8683
    %v8938 = vmul.f32 %v8936, %v8679
    %v8939 = vadd.f32 %v8933, %v8937
    %v8940 = vadd.f32 %v8934, %v8938
    %s8941 = sld [smem:[#allocation10 + $0xa]]
    %v8942 = vstv %s8941
    %v8943 = vmul.f32 %v8942, %v8683
    %v8944 = vmul.f32 %v8942, %v8679
    %8947 = vrot.lane.b32.xlu0 %v8943, 127
    %v8948 = vpop.permute.xlu0 %8947
    %8949 = vrot.lane.b32.xlu0 %v8944, 127
    %v8950 = vpop.permute.xlu0 %8949
    %v8953 = vadd.f32 %v8939, %v8948
    %v8954 = vadd.f32 %v8940, %v8950
    %s8955 = sld [smem:[#allocation10 + $0xb]]
    %v8956 = vstv %s8955
    %v8957 = vmul.f32 %v8956, %v8683
    %v8958 = vmul.f32 %v8956, %v8679
    %8961 = vrot.lane.b32.xlu0 %v8957, 126
    %v8962 = vpop.permute.xlu0 %8961
    %8963 = vrot.lane.b32.xlu0 %v8958, 126
    %v8964 = vpop.permute.xlu0 %8963
    %v8967 = vadd.f32 %v8953, %v8962
    %v8968 = vadd.f32 %v8954, %v8964
    %s8969 = sld [smem:[#allocation10 + $0xc]]
    %v8970 = vstv %s8969
    %v8971 = vmul.f32 %v8970, %v8683
    %v8972 = vmul.f32 %v8970, %v8679
    %v8973 = vmul.f32 %v8970, %v8684
    %v8977 = vrot.slane %v8971, 1
    %v8978 = vrot.slane %v8972, 1
    %v8979 = vsel %vm313, %v8977, %v8978
    %v8980 = vrot.slane %v8973, 1
    %v8981 = vsel %vm313, %v8978, %v8980
    %v8984 = vadd.f32 %v8967, %v8979
    %v8985 = vadd.f32 %v8968, %v8981
    %s8986 = sld [smem:[#allocation10 + $0xd]]
    %v8987 = vstv %s8986
    %v8988 = vmul.f32 %v8987, %v8683
    %v8989 = vmul.f32 %v8987, %v8679
    %v8990 = vmul.f32 %v8987, %v8684
    %v8994 = vrot.slane %v8988, 1
    %v8995 = vrot.slane %v8989, 1
    %v8996 = vsel %vm313, %v8994, %v8995
    %v8997 = vrot.slane %v8990, 1
    %v8998 = vsel %vm313, %v8995, %v8997
    %8999 = vrot.lane.b32.xlu0 %v8996, 127
    %v9000 = vpop.permute.xlu0 %8999
    %9001 = vrot.lane.b32.xlu0 %v8998, 127
    %v9002 = vpop.permute.xlu0 %9001
    %v9005 = vadd.f32 %v8984, %v9000
    %v9006 = vadd.f32 %v8985, %v9002
    %s9007 = sld [smem:[#allocation10 + $0xe]]
    %v9008 = vstv %s9007
    %v9009 = vmul.f32 %v9008, %v8683
    %v9010 = vmul.f32 %v9008, %v8679
    %v9011 = vmul.f32 %v9008, %v8684
    %v9015 = vrot.slane %v9009, 1
    %v9016 = vrot.slane %v9010, 1
    %v9017 = vsel %vm313, %v9015, %v9016
    %v9018 = vrot.slane %v9011, 1
    %v9019 = vsel %vm313, %v9016, %v9018
    %9020 = vrot.lane.b32.xlu0 %v9017, 126
    %v9021 = vpop.permute.xlu0 %9020
    %9022 = vrot.lane.b32.xlu0 %v9019, 126
    %v9023 = vpop.permute.xlu0 %9022
    %v9026 = vadd.f32 %v9005, %v9021
    %v9027 = vadd.f32 %v9006, %v9023
    %s9028 = sld [smem:[#allocation10 + $0xf]]
    %v9029 = vstv %s9028
    %v9030 = vmul.f32 %v9029, %v8683
    %v9031 = vmul.f32 %v9029, %v8679
    %v9032 = vmul.f32 %v9029, %v8684
    %v9036 = vrot.slane %v9030, 2
    %v9037 = vrot.slane %v9031, 2
    %v9038 = vsel %vm373, %v9036, %v9037
    %v9039 = vrot.slane %v9032, 2
    %v9040 = vsel %vm373, %v9037, %v9039
    %v9043 = vadd.f32 %v9026, %v9038
    %v9044 = vadd.f32 %v9027, %v9040
    %s9045 = sld [smem:[#allocation10 + $0x10]]
    %v9046 = vstv %s9045
    %v9047 = vmul.f32 %v9046, %v8683
    %v9048 = vmul.f32 %v9046, %v8679
    %v9049 = vmul.f32 %v9046, %v8684
    %v9053 = vrot.slane %v9047, 2
    %v9054 = vrot.slane %v9048, 2
    %v9055 = vsel %vm373, %v9053, %v9054
    %v9056 = vrot.slane %v9049, 2
    %v9057 = vsel %vm373, %v9054, %v9056
    %9058 = vrot.lane.b32.xlu0 %v9055, 127
    %v9059 = vpop.permute.xlu0 %9058
    %9060 = vrot.lane.b32.xlu0 %v9057, 127
    %v9061 = vpop.permute.xlu0 %9060
    %v9064 = vadd.f32 %v9043, %v9059
    %v9065 = vadd.f32 %v9044, %v9061
    %s9066 = sld [smem:[#allocation10 + $0x11]]
    %v9067 = vstv %s9066
    %v9068 = vmul.f32 %v9067, %v8683
    %v9069 = vmul.f32 %v9067, %v8679
    %v9070 = vmul.f32 %v9067, %v8684
    %v9074 = vrot.slane %v9068, 2
    %v9075 = vrot.slane %v9069, 2
    %v9076 = vsel %vm373, %v9074, %v9075
    %v9077 = vrot.slane %v9070, 2
    %v9078 = vsel %vm373, %v9075, %v9077
    %9079 = vrot.lane.b32.xlu0 %v9076, 126
    %v9080 = vpop.permute.xlu0 %9079
    %9081 = vrot.lane.b32.xlu0 %v9078, 126
    %v9082 = vpop.permute.xlu0 %9081
    %v9085 = vadd.f32 %v9064, %v9080
    %v9086 = vadd.f32 %v9065, %v9082
    %s9087 = sld [smem:[#allocation10 + $0x12]]
    %v9088 = vstv %s9087
    %v9089 = vmul.f32 %v9088, %v8707
    %v9090 = vmul.f32 %v9088, %v8703
    %v9091 = vadd.f32 %v9085, %v9089
    %v9092 = vadd.f32 %v9086, %v9090
    %s9093 = sld [smem:[#allocation10 + $0x13]]
    %v9094 = vstv %s9093
    %v9095 = vmul.f32 %v9094, %v8707
    %v9096 = vmul.f32 %v9094, %v8703
    %9099 = vrot.lane.b32.xlu0 %v9095, 127
    %v9100 = vpop.permute.xlu0 %9099
    %9101 = vrot.lane.b32.xlu0 %v9096, 127
    %v9102 = vpop.permute.xlu0 %9101
    %v9105 = vadd.f32 %v9091, %v9100
    %v9106 = vadd.f32 %v9092, %v9102
    %s9107 = sld [smem:[#allocation10 + $0x14]]
    %v9108 = vstv %s9107
    %v9109 = vmul.f32 %v9108, %v8707
    %v9110 = vmul.f32 %v9108, %v8703
    %9113 = vrot.lane.b32.xlu0 %v9109, 126
    %v9114 = vpop.permute.xlu0 %9113
    %9115 = vrot.lane.b32.xlu0 %v9110, 126
    %v9116 = vpop.permute.xlu0 %9115
    %v9119 = vadd.f32 %v9105, %v9114
    %v9120 = vadd.f32 %v9106, %v9116
    %s9121 = sld [smem:[#allocation10 + $0x15]]
    %v9122 = vstv %s9121
    %v9123 = vmul.f32 %v9122, %v8707
    %v9124 = vmul.f32 %v9122, %v8703
    %v9125 = vmul.f32 %v9122, %v8708
    %v9129 = vrot.slane %v9123, 1
    %v9130 = vrot.slane %v9124, 1
    %v9131 = vsel %vm313, %v9129, %v9130
    %v9132 = vrot.slane %v9125, 1
    %v9133 = vsel %vm313, %v9130, %v9132
    %v9136 = vadd.f32 %v9119, %v9131
    %v9137 = vadd.f32 %v9120, %v9133
    %s9138 = sld [smem:[#allocation10 + $0x16]]
    %v9139 = vstv %s9138
    %v9140 = vmul.f32 %v9139, %v8707
    %v9141 = vmul.f32 %v9139, %v8703
    %v9142 = vmul.f32 %v9139, %v8708
    %v9146 = vrot.slane %v9140, 1
    %v9147 = vrot.slane %v9141, 1
    %v9148 = vsel %vm313, %v9146, %v9147
    %v9149 = vrot.slane %v9142, 1
    %v9150 = vsel %vm313, %v9147, %v9149
    %9151 = vrot.lane.b32.xlu0 %v9148, 127
    %v9152 = vpop.permute.xlu0 %9151
    %9153 = vrot.lane.b32.xlu0 %v9150, 127
    %v9154 = vpop.permute.xlu0 %9153
    %v9157 = vadd.f32 %v9136, %v9152
    %v9158 = vadd.f32 %v9137, %v9154
    %s9159 = sld [smem:[#allocation10 + $0x17]]
    %v9160 = vstv %s9159
    %v9161 = vmul.f32 %v9160, %v8707
    %v9162 = vmul.f32 %v9160, %v8703
    %v9163 = vmul.f32 %v9160, %v8708
    %v9167 = vrot.slane %v9161, 1
    %v9168 = vrot.slane %v9162, 1
    %v9169 = vsel %vm313, %v9167, %v9168
    %v9170 = vrot.slane %v9163, 1
    %v9171 = vsel %vm313, %v9168, %v9170
    %9172 = vrot.lane.b32.xlu0 %v9169, 126
    %v9173 = vpop.permute.xlu0 %9172
    %9174 = vrot.lane.b32.xlu0 %v9171, 126
    %v9175 = vpop.permute.xlu0 %9174
    %v9178 = vadd.f32 %v9157, %v9173
    %v9179 = vadd.f32 %v9158, %v9175
    %s9180 = sld [smem:[#allocation10 + $0x18]]
    %v9181 = vstv %s9180
    %v9182 = vmul.f32 %v9181, %v8707
    %v9183 = vmul.f32 %v9181, %v8703
    %v9184 = vmul.f32 %v9181, %v8708
    %v9188 = vrot.slane %v9182, 2
    %v9189 = vrot.slane %v9183, 2
    %v9190 = vsel %vm373, %v9188, %v9189
    %v9191 = vrot.slane %v9184, 2
    %v9192 = vsel %vm373, %v9189, %v9191
    %v9195 = vadd.f32 %v9178, %v9190
    %v9196 = vadd.f32 %v9179, %v9192
    %s9197 = sld [smem:[#allocation10 + $0x19]]
    %v9198 = vstv %s9197
    %v9199 = vmul.f32 %v9198, %v8707
    %v9200 = vmul.f32 %v9198, %v8703
    %v9201 = vmul.f32 %v9198, %v8708
    %v9205 = vrot.slane %v9199, 2
    %v9206 = vrot.slane %v9200, 2
    %v9207 = vsel %vm373, %v9205, %v9206
    %v9208 = vrot.slane %v9201, 2
    %v9209 = vsel %vm373, %v9206, %v9208
    %9210 = vrot.lane.b32.xlu0 %v9207, 127
    %v9211 = vpop.permute.xlu0 %9210
    %9212 = vrot.lane.b32.xlu0 %v9209, 127
    %v9213 = vpop.permute.xlu0 %9212
    %v9216 = vadd.f32 %v9195, %v9211
    %v9217 = vadd.f32 %v9196, %v9213
    %s9218 = sld [smem:[#allocation10 + $0x1a]]
    %v9219 = vstv %s9218
    %v9220 = vmul.f32 %v9219, %v8707
    %v9221 = vmul.f32 %v9219, %v8703
    %v9222 = vmul.f32 %v9219, %v8708
    %v9226 = vrot.slane %v9220, 2
    %v9227 = vrot.slane %v9221, 2
    %v9228 = vsel %vm373, %v9226, %v9227
    %v9229 = vrot.slane %v9222, 2
    %v9230 = vsel %vm373, %v9227, %v9229
    %9231 = vrot.lane.b32.xlu0 %v9228, 126
    %v9232 = vpop.permute.xlu0 %9231
    %9233 = vrot.lane.b32.xlu0 %v9230, 126
    %v9234 = vpop.permute.xlu0 %9233
    %v9237 = vadd.f32 %v9216, %v9232
    %v9238 = vadd.f32 %v9217, %v9234
    %s9239 = sld [smem:[#allocation10 + $0x1b]]
    %v9240 = vstv %s9239
    %v9241 = vmul.f32 %v9240, %v8731
    %v9242 = vmul.f32 %v9240, %v8727
    %v9243 = vadd.f32 %v9237, %v9241
    %v9244 = vadd.f32 %v9238, %v9242
    %s9245 = sld [smem:[#allocation10 + $0x1c]]
    %v9246 = vstv %s9245
    %v9247 = vmul.f32 %v9246, %v8731
    %v9248 = vmul.f32 %v9246, %v8727
    %9251 = vrot.lane.b32.xlu0 %v9247, 127
    %v9252 = vpop.permute.xlu0 %9251
    %9253 = vrot.lane.b32.xlu0 %v9248, 127
    %v9254 = vpop.permute.xlu0 %9253
    %v9257 = vadd.f32 %v9243, %v9252
    %v9258 = vadd.f32 %v9244, %v9254
    %s9259 = sld [smem:[#allocation10 + $0x1d]]
    %v9260 = vstv %s9259
    %v9261 = vmul.f32 %v9260, %v8731
    %v9262 = vmul.f32 %v9260, %v8727
    %9265 = vrot.lane.b32.xlu0 %v9261, 126
    %v9266 = vpop.permute.xlu0 %9265
    %9267 = vrot.lane.b32.xlu0 %v9262, 126
    %v9268 = vpop.permute.xlu0 %9267
    %v9271 = vadd.f32 %v9257, %v9266
    %v9272 = vadd.f32 %v9258, %v9268
    %s9273 = sld [smem:[#allocation10 + $0x1e]]
    %v9274 = vstv %s9273
    %v9275 = vmul.f32 %v9274, %v8731
    %v9276 = vmul.f32 %v9274, %v8727
    %v9277 = vmul.f32 %v9274, %v8732
    %v9281 = vrot.slane %v9275, 1
    %v9282 = vrot.slane %v9276, 1
    %v9283 = vsel %vm313, %v9281, %v9282
    %v9284 = vrot.slane %v9277, 1
    %v9285 = vsel %vm313, %v9282, %v9284
    %v9288 = vadd.f32 %v9271, %v9283
    %v9289 = vadd.f32 %v9272, %v9285
    %s9290 = sld [smem:[#allocation10 + $0x1f]]
    %v9291 = vstv %s9290
    %v9292 = vmul.f32 %v9291, %v8731
    %v9293 = vmul.f32 %v9291, %v8727
    %v9294 = vmul.f32 %v9291, %v8732
    %v9298 = vrot.slane %v9292, 1
    %v9299 = vrot.slane %v9293, 1
    %v9300 = vsel %vm313, %v9298, %v9299
    %v9301 = vrot.slane %v9294, 1
    %v9302 = vsel %vm313, %v9299, %v9301
    %9303 = vrot.lane.b32.xlu0 %v9300, 127
    %v9304 = vpop.permute.xlu0 %9303
    %9305 = vrot.lane.b32.xlu0 %v9302, 127
    %v9306 = vpop.permute.xlu0 %9305
    %v9309 = vadd.f32 %v9288, %v9304
    %v9310 = vadd.f32 %v9289, %v9306
    %s9311 = sld [smem:[#allocation10 + $0x20]]
    %v9312 = vstv %s9311
    %v9313 = vmul.f32 %v9312, %v8731
    %v9314 = vmul.f32 %v9312, %v8727
    %v9315 = vmul.f32 %v9312, %v8732
    %v9319 = vrot.slane %v9313, 1
    %v9320 = vrot.slane %v9314, 1
    %v9321 = vsel %vm313, %v9319, %v9320
    %v9322 = vrot.slane %v9315, 1
    %v9323 = vsel %vm313, %v9320, %v9322
    %9324 = vrot.lane.b32.xlu0 %v9321, 126
    %v9325 = vpop.permute.xlu0 %9324
    %9326 = vrot.lane.b32.xlu0 %v9323, 126
    %v9327 = vpop.permute.xlu0 %9326
    %v9330 = vadd.f32 %v9309, %v9325
    %v9331 = vadd.f32 %v9310, %v9327
    %s9332 = sld [smem:[#allocation10 + $0x21]]
    %v9333 = vstv %s9332
    %v9334 = vmul.f32 %v9333, %v8731
    %v9335 = vmul.f32 %v9333, %v8727
    %v9336 = vmul.f32 %v9333, %v8732
    %v9340 = vrot.slane %v9334, 2
    %v9341 = vrot.slane %v9335, 2
    %v9342 = vsel %vm373, %v9340, %v9341
    %v9343 = vrot.slane %v9336, 2
    %v9344 = vsel %vm373, %v9341, %v9343
    %v9347 = vadd.f32 %v9330, %v9342
    %v9348 = vadd.f32 %v9331, %v9344
    %s9349 = sld [smem:[#allocation10 + $0x22]]
    %v9350 = vstv %s9349
    %v9351 = vmul.f32 %v9350, %v8731
    %v9352 = vmul.f32 %v9350, %v8727
    %v9353 = vmul.f32 %v9350, %v8732
    %v9357 = vrot.slane %v9351, 2
    %v9358 = vrot.slane %v9352, 2
    %v9359 = vsel %vm373, %v9357, %v9358
    %v9360 = vrot.slane %v9353, 2
    %v9361 = vsel %vm373, %v9358, %v9360
    %9362 = vrot.lane.b32.xlu0 %v9359, 127
    %v9363 = vpop.permute.xlu0 %9362
    %9364 = vrot.lane.b32.xlu0 %v9361, 127
    %v9365 = vpop.permute.xlu0 %9364
    %v9368 = vadd.f32 %v9347, %v9363
    %v9369 = vadd.f32 %v9348, %v9365
    %s9370 = sld [smem:[#allocation10 + $0x23]]
    %v9371 = vstv %s9370
    %v9372 = vmul.f32 %v9371, %v8731
    %v9373 = vmul.f32 %v9371, %v8727
    %v9374 = vmul.f32 %v9371, %v8732
    %v9378 = vrot.slane %v9372, 2
    %v9379 = vrot.slane %v9373, 2
    %v9380 = vsel %vm373, %v9378, %v9379
    %v9381 = vrot.slane %v9374, 2
    %v9382 = vsel %vm373, %v9379, %v9381
    %9383 = vrot.lane.b32.xlu0 %v9380, 126
    %v9384 = vpop.permute.xlu0 %9383
    %9385 = vrot.lane.b32.xlu0 %v9382, 126
    %v9386 = vpop.permute.xlu0 %9385
    %v9389 = vadd.f32 %v9368, %v9384
    %v9390 = vadd.f32 %v9369, %v9386
    %s9391 = sld [smem:[#allocation10 + $0x24]]
    %v9392 = vstv %s9391
    %v9393 = vmul.f32 %v9392, %v8755
    %v9394 = vmul.f32 %v9392, %v8751
    %v9395 = vadd.f32 %v9389, %v9393
    %v9396 = vadd.f32 %v9390, %v9394
    %s9397 = sld [smem:[#allocation10 + $0x25]]
    %v9398 = vstv %s9397
    %v9399 = vmul.f32 %v9398, %v8755
    %v9400 = vmul.f32 %v9398, %v8751
    %9403 = vrot.lane.b32.xlu0 %v9399, 127
    %v9404 = vpop.permute.xlu0 %9403
    %9405 = vrot.lane.b32.xlu0 %v9400, 127
    %v9406 = vpop.permute.xlu0 %9405
    %v9409 = vadd.f32 %v9395, %v9404
    %v9410 = vadd.f32 %v9396, %v9406
    %s9411 = sld [smem:[#allocation10 + $0x26]]
    %v9412 = vstv %s9411
    %v9413 = vmul.f32 %v9412, %v8755
    %v9414 = vmul.f32 %v9412, %v8751
    %9417 = vrot.lane.b32.xlu0 %v9413, 126
    %v9418 = vpop.permute.xlu0 %9417
    %9419 = vrot.lane.b32.xlu0 %v9414, 126
    %v9420 = vpop.permute.xlu0 %9419
    %v9423 = vadd.f32 %v9409, %v9418
    %v9424 = vadd.f32 %v9410, %v9420
    %s9425 = sld [smem:[#allocation10 + $0x27]]
    %v9426 = vstv %s9425
    %v9427 = vmul.f32 %v9426, %v8755
    %v9428 = vmul.f32 %v9426, %v8751
    %v9429 = vmul.f32 %v9426, %v8756
    %v9433 = vrot.slane %v9427, 1
    %v9434 = vrot.slane %v9428, 1
    %v9435 = vsel %vm313, %v9433, %v9434
    %v9436 = vrot.slane %v9429, 1
    %v9437 = vsel %vm313, %v9434, %v9436
    %v9440 = vadd.f32 %v9423, %v9435
    %v9441 = vadd.f32 %v9424, %v9437
    %s9442 = sld [smem:[#allocation10 + $0x28]]
    %v9443 = vstv %s9442
    %v9444 = vmul.f32 %v9443, %v8755
    %v9445 = vmul.f32 %v9443, %v8751
    %v9446 = vmul.f32 %v9443, %v8756
    %v9450 = vrot.slane %v9444, 1
    %v9451 = vrot.slane %v9445, 1
    %v9452 = vsel %vm313, %v9450, %v9451
    %v9453 = vrot.slane %v9446, 1
    %v9454 = vsel %vm313, %v9451, %v9453
    %9455 = vrot.lane.b32.xlu0 %v9452, 127
    %v9456 = vpop.permute.xlu0 %9455
    %9457 = vrot.lane.b32.xlu0 %v9454, 127
    %v9458 = vpop.permute.xlu0 %9457
    %v9461 = vadd.f32 %v9440, %v9456
    %v9462 = vadd.f32 %v9441, %v9458
    %s9463 = sld [smem:[#allocation10 + $0x29]]
    %v9464 = vstv %s9463
    %v9465 = vmul.f32 %v9464, %v8755
    %v9466 = vmul.f32 %v9464, %v8751
    %v9467 = vmul.f32 %v9464, %v8756
    %v9471 = vrot.slane %v9465, 1
    %v9472 = vrot.slane %v9466, 1
    %v9473 = vsel %vm313, %v9471, %v9472
    %v9474 = vrot.slane %v9467, 1
    %v9475 = vsel %vm313, %v9472, %v9474
    %9476 = vrot.lane.b32.xlu0 %v9473, 126
    %v9477 = vpop.permute.xlu0 %9476
    %9478 = vrot.lane.b32.xlu0 %v9475, 126
    %v9479 = vpop.permute.xlu0 %9478
    %v9482 = vadd.f32 %v9461, %v9477
    %v9483 = vadd.f32 %v9462, %v9479
    %s9484 = sld [smem:[#allocation10 + $0x2a]]
    %v9485 = vstv %s9484
    %v9486 = vmul.f32 %v9485, %v8755
    %v9487 = vmul.f32 %v9485, %v8751
    %v9488 = vmul.f32 %v9485, %v8756
    %v9492 = vrot.slane %v9486, 2
    %v9493 = vrot.slane %v9487, 2
    %v9494 = vsel %vm373, %v9492, %v9493
    %v9495 = vrot.slane %v9488, 2
    %v9496 = vsel %vm373, %v9493, %v9495
    %v9499 = vadd.f32 %v9482, %v9494
    %v9500 = vadd.f32 %v9483, %v9496
    %s9501 = sld [smem:[#allocation10 + $0x2b]]
    %v9502 = vstv %s9501
    %v9503 = vmul.f32 %v9502, %v8755
    %v9504 = vmul.f32 %v9502, %v8751
    %v9505 = vmul.f32 %v9502, %v8756
    %v9509 = vrot.slane %v9503, 2
    %v9510 = vrot.slane %v9504, 2
    %v9511 = vsel %vm373, %v9509, %v9510
    %v9512 = vrot.slane %v9505, 2
    %v9513 = vsel %vm373, %v9510, %v9512
    %9514 = vrot.lane.b32.xlu0 %v9511, 127
    %v9515 = vpop.permute.xlu0 %9514
    %9516 = vrot.lane.b32.xlu0 %v9513, 127
    %v9517 = vpop.permute.xlu0 %9516
    %v9520 = vadd.f32 %v9499, %v9515
    %v9521 = vadd.f32 %v9500, %v9517
    %s9522 = sld [smem:[#allocation10 + $0x2c]]
    %v9523 = vstv %s9522
    %v9524 = vmul.f32 %v9523, %v8755
    %v9525 = vmul.f32 %v9523, %v8751
    %v9526 = vmul.f32 %v9523, %v8756
    %v9530 = vrot.slane %v9524, 2
    %v9531 = vrot.slane %v9525, 2
    %v9532 = vsel %vm373, %v9530, %v9531
    %v9533 = vrot.slane %v9526, 2
    %v9534 = vsel %vm373, %v9531, %v9533
    %9535 = vrot.lane.b32.xlu0 %v9532, 126
    %v9536 = vpop.permute.xlu0 %9535
    %9537 = vrot.lane.b32.xlu0 %v9534, 126
    %v9538 = vpop.permute.xlu0 %9537
    %v9541 = vadd.f32 %v9520, %v9536
    %v9542 = vadd.f32 %v9521, %v9538
    %s9543 = sld [smem:[#allocation10 + $0x2d]]
    %v9544 = vstv %s9543
    %v9545 = vmul.f32 %v9544, %v8779
    %v9546 = vmul.f32 %v9544, %v8775
    %v9547 = vadd.f32 %v9541, %v9545
    %v9548 = vadd.f32 %v9542, %v9546
    %s9549 = sld [smem:[#allocation10 + $0x2e]]
    %v9550 = vstv %s9549
    %v9551 = vmul.f32 %v9550, %v8779
    %v9552 = vmul.f32 %v9550, %v8775
    %9555 = vrot.lane.b32.xlu0 %v9551, 127
    %v9556 = vpop.permute.xlu0 %9555
    %9557 = vrot.lane.b32.xlu0 %v9552, 127
    %v9558 = vpop.permute.xlu0 %9557
    %v9561 = vadd.f32 %v9547, %v9556
    %v9562 = vadd.f32 %v9548, %v9558
    %s9563 = sld [smem:[#allocation10 + $0x2f]]
    %v9564 = vstv %s9563
    %v9565 = vmul.f32 %v9564, %v8779
    %v9566 = vmul.f32 %v9564, %v8775
    %9569 = vrot.lane.b32.xlu0 %v9565, 126
    %v9570 = vpop.permute.xlu0 %9569
    %9571 = vrot.lane.b32.xlu0 %v9566, 126
    %v9572 = vpop.permute.xlu0 %9571
    %v9575 = vadd.f32 %v9561, %v9570
    %v9576 = vadd.f32 %v9562, %v9572
    %s9577 = sld [smem:[#allocation10 + $0x30]]
    %v9578 = vstv %s9577
    %v9579 = vmul.f32 %v9578, %v8779
    %v9580 = vmul.f32 %v9578, %v8775
    %v9581 = vmul.f32 %v9578, %v8780
    %v9585 = vrot.slane %v9579, 1
    %v9586 = vrot.slane %v9580, 1
    %v9587 = vsel %vm313, %v9585, %v9586
    %v9588 = vrot.slane %v9581, 1
    %v9589 = vsel %vm313, %v9586, %v9588
    %v9592 = vadd.f32 %v9575, %v9587
    %v9593 = vadd.f32 %v9576, %v9589
    %s9594 = sld [smem:[#allocation10 + $0x31]]
    %v9595 = vstv %s9594
    %v9596 = vmul.f32 %v9595, %v8779
    %v9597 = vmul.f32 %v9595, %v8775
    %v9598 = vmul.f32 %v9595, %v8780
    %v9602 = vrot.slane %v9596, 1
    %v9603 = vrot.slane %v9597, 1
    %v9604 = vsel %vm313, %v9602, %v9603
    %v9605 = vrot.slane %v9598, 1
    %v9606 = vsel %vm313, %v9603, %v9605
    %9607 = vrot.lane.b32.xlu0 %v9604, 127
    %v9608 = vpop.permute.xlu0 %9607
    %9609 = vrot.lane.b32.xlu0 %v9606, 127
    %v9610 = vpop.permute.xlu0 %9609
    %v9613 = vadd.f32 %v9592, %v9608
    %v9614 = vadd.f32 %v9593, %v9610
    %s9615 = sld [smem:[#allocation10 + $0x32]]
    %v9616 = vstv %s9615
    %v9617 = vmul.f32 %v9616, %v8779
    %v9618 = vmul.f32 %v9616, %v8775
    %v9619 = vmul.f32 %v9616, %v8780
    %v9623 = vrot.slane %v9617, 1
    %v9624 = vrot.slane %v9618, 1
    %v9625 = vsel %vm313, %v9623, %v9624
    %v9626 = vrot.slane %v9619, 1
    %v9627 = vsel %vm313, %v9624, %v9626
    %9628 = vrot.lane.b32.xlu0 %v9625, 126
    %v9629 = vpop.permute.xlu0 %9628
    %9630 = vrot.lane.b32.xlu0 %v9627, 126
    %v9631 = vpop.permute.xlu0 %9630
    %v9634 = vadd.f32 %v9613, %v9629
    %v9635 = vadd.f32 %v9614, %v9631
    %s9636 = sld [smem:[#allocation10 + $0x33]]
    %v9637 = vstv %s9636
    %v9638 = vmul.f32 %v9637, %v8779
    %v9639 = vmul.f32 %v9637, %v8775
    %v9640 = vmul.f32 %v9637, %v8780
    %v9644 = vrot.slane %v9638, 2
    %v9645 = vrot.slane %v9639, 2
    %v9646 = vsel %vm373, %v9644, %v9645
    %v9647 = vrot.slane %v9640, 2
    %v9648 = vsel %vm373, %v9645, %v9647
    %v9651 = vadd.f32 %v9634, %v9646
    %v9652 = vadd.f32 %v9635, %v9648
    %s9653 = sld [smem:[#allocation10 + $0x34]]
    %v9654 = vstv %s9653
    %v9655 = vmul.f32 %v9654, %v8779
    %v9656 = vmul.f32 %v9654, %v8775
    %v9657 = vmul.f32 %v9654, %v8780
    %v9661 = vrot.slane %v9655, 2
    %v9662 = vrot.slane %v9656, 2
    %v9663 = vsel %vm373, %v9661, %v9662
    %v9664 = vrot.slane %v9657, 2
    %v9665 = vsel %vm373, %v9662, %v9664
    %9666 = vrot.lane.b32.xlu0 %v9663, 127
    %v9667 = vpop.permute.xlu0 %9666
    %9668 = vrot.lane.b32.xlu0 %v9665, 127
    %v9669 = vpop.permute.xlu0 %9668
    %v9672 = vadd.f32 %v9651, %v9667
    %v9673 = vadd.f32 %v9652, %v9669
    %s9674 = sld [smem:[#allocation10 + $0x35]]
    %v9675 = vstv %s9674
    %v9676 = vmul.f32 %v9675, %v8779
    %v9677 = vmul.f32 %v9675, %v8775
    %v9678 = vmul.f32 %v9675, %v8780
    %v9682 = vrot.slane %v9676, 2
    %v9683 = vrot.slane %v9677, 2
    %v9684 = vsel %vm373, %v9682, %v9683
    %v9685 = vrot.slane %v9678, 2
    %v9686 = vsel %vm373, %v9683, %v9685
    %9687 = vrot.lane.b32.xlu0 %v9684, 126
    %v9688 = vpop.permute.xlu0 %9687
    %9689 = vrot.lane.b32.xlu0 %v9686, 126
    %v9690 = vpop.permute.xlu0 %9689
    %v9693 = vadd.f32 %v9672, %v9688
    %v9694 = vadd.f32 %v9673, %v9690
    %vm9695 = vcmask 293888
    %9696 = vst.msk [vmem:[%s7] sm:$0xff] %vm9695, %v9693
    %9697 = vst.msk [vmem:[%s7 + $0x8] sm:$0xff] %vm9695, %v9694
    // Predicated region
    $region50: #{alinet_forward.1} parent=1 // pred_check
      _
    $region51: #{alinet_forward.1} parent=1 // pred_check_branch
      %9699 = sbr.rel (0) target = $region53
    $region52: #{alinet_forward.1} parent=1 // pred_region
      _
    $region53: #{alinet_forward.1} parent=1 // pred_fallthru
      _
    // Predicated region
    $region54: #{alinet_forward.1} parent=1 // pred_check
      _
    $region55: #{alinet_forward.1} parent=1 // pred_check_branch
      %9701 = sbr.rel (0) target = $region57
    $region56: #{alinet_forward.1} parent=1 // pred_region
      _
    $region57: #{alinet_forward.1} parent=1 // pred_fallthru
      _
    %9702 = vsyncpa [#allocation4], 1
    %9703 = vsyncpa [#allocation6], 1
    %9704 = vsyncpa [#allocation9], 1

</llo_original>
